<compile_context>
chip_gen: v6e
topology: v6e:2x2x1
jax: 0.10.0
libtpu: 0.0.40
codegen_flags: <defaults>
</compile_context>

<pallas_src>
import functools

import jax
import jax.numpy as jnp
from jax.experimental import pallas as pl
from jax.experimental.pallas import tpu as pltpu

MAX_TIMESTEPS = 10
HIDDEN = 32


def _round_up(n, m):
    return ((n + m - 1) // m) * m


# ----------------------------------------------------------------------------
# Fused Pallas kernel: noisify + conv1(+temb,relu) + conv2 + masked MSE partial
# ----------------------------------------------------------------------------

def _fused_diffusion_kernel(coefs_ref, mask_ref, temb_ref, w1_ref, b1_ref,
                            w2_ref, b2_ref, img_ref, noise_ref,
                            loss_ref, hbuf_ref, *, offsets, s_lo, rows):
    """One image per grid step.

    Layout: images/noise arrive as zero-padded flat rows of the (H+2, W+2) grid,
    channels in lanes, with `s_lo` extra zero rows on each side so every 3x3 tap
    is a static in-bounds row-slice (offset = (dh-1)*(W+2) + (dw-1)).
    """
    b = pl.program_id(0)
    sab = coefs_ref[b, 0]          # sqrt(alpha_bar[t_b])
    s1m = coefs_ref[b, 1]          # sqrt(1 - alpha_bar[t_b])

    hidden = b1_ref.shape[-1]
    cch = b2_ref.shape[-1]

    # Zero the whole hidden scratch each step (keeps "parallel" grid safe on 2-TC chips
    # and guarantees the halo rows read by conv2 are exact zeros).
    hbuf_ref[...] = jnp.zeros_like(hbuf_ref)

    mask = mask_ref[...]           # (rows, 1) f32, 1.0 on interior pixels

    # ---- noisify + conv1: 9 accumulating matmuls, K = C, RHS resident ----
    acc1 = jnp.zeros((rows, hidden), jnp.float32)
    for k, off in enumerate(offsets):
        lo = s_lo + off
        img_t = img_ref[0, lo:lo + rows, :].astype(jnp.float32)
        nse_t = noise_ref[0, lo:lo + rows, :].astype(jnp.float32)
        x_t = (sab * img_t + s1m * nse_t).astype(jnp.bfloat16)     # zero outside image
        acc1 = acc1 + jnp.dot(x_t, w1_ref[k], preferred_element_type=jnp.float32)

    temb = temb_ref[0]             # (1, hidden) f32 — this image's timestep embedding
    h = jnp.maximum(acc1 + b1_ref[...] + temb, 0.0) * mask         # zero at border/pad rows
    hbuf_ref[s_lo:s_lo + rows, :] = h.astype(hbuf_ref.dtype)

    # ---- conv2: 9 accumulating matmuls, K = hidden, fused with MSE ----
    acc2 = jnp.zeros((rows, cch), jnp.float32)
    for k, off in enumerate(offsets):
        lo = s_lo + off
        acc2 = acc2 + jnp.dot(hbuf_ref[lo:lo + rows, :], w2_ref[k],
                              preferred_element_type=jnp.float32)
    pred = acc2 + b2_ref[...]

    target = noise_ref[0, s_lo:s_lo + rows, :].astype(jnp.float32)
    d = (pred - target) * mask
    loss_ref[0] = jnp.sum(d * d, keepdims=True)    # per-image partial sum (1,1)


def _to_padded_rows(x_nhwc, s_lo, ext):
    """(B,H,W,C) -> (B, EXT, C): zero 'same' padding, flat (H+2)*(W+2) rows, extra halo rows."""
    B, H, W, C = x_nhwc.shape
    P = (H + 2) * (W + 2)
    xp = jnp.pad(x_nhwc, ((0, 0), (1, 1), (1, 1), (0, 0)))
    xf = xp.reshape(B, P, C)
    return jnp.pad(xf, ((0, 0), (s_lo, ext - s_lo - P), (0, 0)))


def fused_diffusion_mse(params, coefs, temb, imgs_nhwc, noise_nhwc):
    B, H, W, C = imgs_nhwc.shape
    hidden = params["b1"].shape[0]
    Wp = W + 2
    P = (H + 2) * Wp
    rows = _round_up(P, 16)              # rows actually computed (multiple of 16 for bf16 tiles)
    s_lo = _round_up(Wp + 1, 16)         # halo >= max |tap offset| = W+3, 16-aligned h store
    ext = s_lo + rows + s_lo             # total buffer rows; all tap slices stay in-bounds

    # tap offsets in flat padded-grid rows, order matches w.reshape(9, cin, cout)
    offsets = tuple((dh - 1) * Wp + (dw - 1) for dh in range(3) for dw in range(3))

    # bf16 HBM streams (read exactly once each by the kernel)
    img_ext = _to_padded_rows(imgs_nhwc, s_lo, ext).astype(jnp.bfloat16)
    noise_ext = _to_padded_rows(noise_nhwc, s_lo, ext).astype(jnp.bfloat16)

    # interior-pixel mask over the padded-grid rows (tiny, VMEM-resident)
    r = jnp.arange(rows)
    ii, jj = r // Wp, r % Wp
    interior = (ii >= 1) & (ii <= H) & (jj >= 1) & (jj <= W) & (r < P)
    mask = interior.astype(jnp.float32).reshape(rows, 1)

    w1 = params["w1"].reshape(9, C, hidden).astype(jnp.bfloat16)
    w2 = params["w2"].reshape(9, hidden, C).astype(jnp.bfloat16)
    b1 = params["b1"].reshape(1, hidden)
    b2 = params["b2"].reshape(1, C)

    kernel = functools.partial(_fused_diffusion_kernel,
                               offsets=offsets, s_lo=s_lo, rows=rows)

    # NOTE: per-step VMEM footprint is a few hundred KiB here; at real image sizes raise
    # pltpu.CompilerParams(vmem_limit_bytes=...) and switch to row-block + halo tiling.
    partials = pl.pallas_call(
        kernel,
        out_shape=jax.ShapeDtypeStruct((B, 1, 1), jnp.float32),
        grid=(B,),
        in_specs=[
            pl.BlockSpec(memory_space=pltpu.MemorySpace.SMEM),        # coefs (B,2) scalars
            pl.BlockSpec((rows, 1), lambda b: (0, 0)),                # mask (resident)
            pl.BlockSpec((1, 1, hidden), lambda b: (b, 0, 0)),        # temb row for image b
            pl.BlockSpec((9, C, hidden), lambda b: (0, 0, 0)),        # w1 (resident)
            pl.BlockSpec((1, hidden), lambda b: (0, 0)),              # b1 (resident)
            pl.BlockSpec((9, hidden, C), lambda b: (0, 0, 0)),        # w2 (resident)
            pl.BlockSpec((1, C), lambda b: (0, 0)),                   # b2 (resident)
            pl.BlockSpec((1, ext, C), lambda b: (b, 0, 0)),           # img (bf16, read once)
            pl.BlockSpec((1, ext, C), lambda b: (b, 0, 0)),           # noise (bf16, read once)
        ],
        out_specs=pl.BlockSpec((1, 1, 1), lambda b: (b, 0, 0)),
        scratch_shapes=[pltpu.VMEM((ext, hidden), jnp.bfloat16)],     # hidden activation
        compiler_params=pltpu.CompilerParams(dimension_semantics=("parallel",)),
    )(coefs, mask, temb.reshape(B, 1, hidden), w1, b1, w2, b2, img_ext, noise_ext)

    return jnp.sum(partials) / float(B * H * W * C)


# ----------------------------------------------------------------------------
# Synthetic denoiser model params + NoiseScheduler + diffusion forward
# ----------------------------------------------------------------------------

def init_model_params(channels, hidden):
    k = jax.random.PRNGKey(42)
    k1, k2, k3 = jax.random.split(k, 3)
    return {
        # conv weights stored as (kh, kw, cin, cout)
        "w1": jax.random.normal(k1, (3, 3, channels, hidden), jnp.float32) * 0.1,
        "b1": jnp.zeros((hidden,), jnp.float32),
        "wt": jax.random.normal(k2, (1, hidden), jnp.float32) * 0.1,
        "bt": jnp.zeros((hidden,), jnp.float32),
        "w2": jax.random.normal(k3, (3, 3, hidden, channels), jnp.float32) * 0.1,
        "b2": jnp.zeros((channels,), jnp.float32),
    }


def make_noise_scheduler(max_steps):
    betas = jnp.linspace(1e-4, 0.02, max_steps, dtype=jnp.float32)
    alphas = 1.0 - betas
    alpha_bar = jnp.cumprod(alphas)
    return jnp.sqrt(alpha_bar), jnp.sqrt(1.0 - alpha_bar)


def gaussian_diffusion_forward(params, sched, imgs_nchw, key, max_timesteps):
    sqrt_ab, sqrt_1mab = sched
    B = imgs_nchw.shape[0]
    k_t, k_n = jax.random.split(key)

    # timesteps = torch.randint(max_timesteps + 1, (B, 1))
    timesteps = jax.random.randint(k_t, (B, 1), 0, max_timesteps + 1)

    # NHWC internally (single input transpose); noise drawn directly in NHWC.
    imgs = jnp.transpose(imgs_nchw, (0, 2, 3, 1))
    noise = jax.random.normal(k_n, imgs.shape, jnp.float32)

    # per-image scheduler scalars (SMEM) and timestep embedding (tiny XLA matmul)
    t_idx = timesteps[:, 0]
    coefs = jnp.stack([sqrt_ab[t_idx], sqrt_1mab[t_idx]], axis=1).astype(jnp.float32)
    t_norm = timesteps.astype(jnp.float32) / float(max_timesteps)
    temb = t_norm @ params["wt"] + params["bt"]                    # (B, hidden)

    # noisy = scheduler.noisify(imgs, t); pred = model(noisy, t); loss = mse(pred, noise)
    # all fused into one Pallas kernel:
    return fused_diffusion_mse(params, coefs, temb, imgs, noise)


# ----------------------------------------------------------------------------

if __name__ == "__main__":
    B, C, H, W = 2, 4, 16, 16

    params = init_model_params(C, HIDDEN)
    sched = make_noise_scheduler(MAX_TIMESTEPS + 1)

    key = jax.random.PRNGKey(0)
    k_img, k_fwd = jax.random.split(key)
    imgs = jax.random.normal(k_img, (B, C, H, W), jnp.float32)

    fwd = jax.jit(functools.partial(gaussian_diffusion_forward,
                                    max_timesteps=MAX_TIMESTEPS))
    loss = fwd(params, sched, imgs, k_fwd)
    loss = jax.block_until_ready(loss)
    assert loss.shape == () and bool(jnp.isfinite(loss))
    print("KERNEL_OK")
</pallas_src>

<mosaic_0001>
module attributes {stable_mosaic.version = 11 : i64} {
  func.func @_fused_diffusion_kernel(%arg0: i32, %arg1: memref<2x2xf32, #tpu.memory_space<smem>>, %arg2: memref<336x1xf32, #tpu.memory_space<vmem>>, %arg3: memref<1x1x32xf32, #tpu.memory_space<vmem>>, %arg4: memref<9x4x32xbf16, #tpu.memory_space<vmem>>, %arg5: memref<1x32xf32, #tpu.memory_space<vmem>>, %arg6: memref<9x32x4xbf16, #tpu.memory_space<vmem>>, %arg7: memref<1x4xf32, #tpu.memory_space<vmem>>, %arg8: memref<1x400x4xbf16, #tpu.memory_space<vmem>>, %arg9: memref<1x400x4xbf16, #tpu.memory_space<vmem>>, %arg10: memref<1x1x1xf32, #tpu.memory_space<vmem>>, %arg11: memref<400x32xbf16, #tpu.memory_space<vmem>>) attributes {dimension_semantics = [#tpu.dimension_semantics<parallel>], iteration_bounds = array<i64: 2>, scalar_prefetch = 0 : i64, scratch_operands = 1 : i64, tpu.core_type = #tpu.core_type<tc>, window_params = [{transform_indices = @transform_0, window_bounds = array<i64: 2, 2>}, {pipeline_mode = #tpu.pipeline_mode<synchronous>, transform_indices = @transform_1, window_bounds = array<i64: 336, 1>}, {transform_indices = @transform_2, window_bounds = array<i64: 1, 1, 32>}, {pipeline_mode = #tpu.pipeline_mode<synchronous>, transform_indices = @transform_3, window_bounds = array<i64: 9, 4, 32>}, {pipeline_mode = #tpu.pipeline_mode<synchronous>, transform_indices = @transform_4, window_bounds = array<i64: 1, 32>}, {pipeline_mode = #tpu.pipeline_mode<synchronous>, transform_indices = @transform_5, window_bounds = array<i64: 9, 32, 4>}, {pipeline_mode = #tpu.pipeline_mode<synchronous>, transform_indices = @transform_6, window_bounds = array<i64: 1, 4>}, {transform_indices = @transform_7, window_bounds = array<i64: 1, 400, 4>}, {transform_indices = @transform_8, window_bounds = array<i64: 1, 400, 4>}, {transform_indices = @transform_9, window_bounds = array<i64: 1, 1, 1>}]} {
    %0 = arith.index_cast %arg0 : i32 to index
    %c0 = arith.constant 0 : index
    %1 = memref.load %arg1[%0, %c0] : memref<2x2xf32, #tpu.memory_space<smem>>
    %2 = arith.index_cast %arg0 : i32 to index
    %c1 = arith.constant 1 : index
    %3 = memref.load %arg1[%2, %c1] : memref<2x2xf32, #tpu.memory_space<smem>>
    %cst = arith.constant 0.000000e+00 : bf16
    %4 = vector.broadcast %cst : bf16 to vector<400x32xbf16>
    %c0_0 = arith.constant 0 : index
    %c0_1 = arith.constant 0 : index
    %5 = vector.load %arg11[%c0_0, %c0_1] : memref<400x32xbf16, #tpu.memory_space<vmem>>, vector<400x32xbf16>
    tpu.vector_store %arg11[%c0_0, %c0_1], %4 {strides = array<i32>} : memref<400x32xbf16, #tpu.memory_space<vmem>>, vector<400x32xbf16>,
    %c0_2 = arith.constant 0 : index
    %c0_3 = arith.constant 0 : index
    %6 = vector.load %arg2[%c0_2, %c0_3] : memref<336x1xf32, #tpu.memory_space<vmem>>, vector<336x1xf32>
    %cst_4 = arith.constant 0.000000e+00 : f32
    %7 = vector.broadcast %cst_4 : f32 to vector<336x32xf32>
    %c0_5 = arith.constant 0 : index
    %c13 = arith.constant 13 : index
    %c0_6 = arith.constant 0 : index
    %8 = vector.load %arg8[%c0_5, %c13, %c0_6] : memref<1x400x4xbf16, #tpu.memory_space<vmem>>, vector<1x336x4xbf16>
    %9 = vector.shape_cast %8 : vector<1x336x4xbf16> to vector<336x4xbf16>
    %10 = arith.extf %9 : vector<336x4xbf16> to vector<336x4xf32>
    %c0_7 = arith.constant 0 : index
    %c13_8 = arith.constant 13 : index
    %c0_9 = arith.constant 0 : index
    %11 = vector.load %arg9[%c0_7, %c13_8, %c0_9] : memref<1x400x4xbf16, #tpu.memory_space<vmem>>, vector<1x336x4xbf16>
    %12 = vector.shape_cast %11 : vector<1x336x4xbf16> to vector<336x4xbf16>
    %13 = arith.extf %12 : vector<336x4xbf16> to vector<336x4xf32>
    %14 = vector.broadcast %1 : f32 to vector<336x4xf32>
    %15 = arith.mulf %14, %10 : vector<336x4xf32>
    %16 = vector.broadcast %3 : f32 to vector<336x4xf32>
    %17 = arith.mulf %16, %13 : vector<336x4xf32>
    %18 = arith.addf %15, %17 : vector<336x4xf32>
    %19 = arith.truncf %18 : vector<336x4xf32> to vector<336x4xbf16>
    %c0_10 = arith.constant 0 : index
    %c0_11 = arith.constant 0 : index
    %c0_12 = arith.constant 0 : index
    %20 = vector.load %arg4[%c0_10, %c0_11, %c0_12] : memref<9x4x32xbf16, #tpu.memory_space<vmem>>, vector<1x4x32xbf16>
    %21 = vector.shape_cast %20 : vector<1x4x32xbf16> to vector<4x32xbf16>
    %cst_13 = arith.constant dense<0.000000e+00> : vector<336x32xf32>
    %22 = tpu.matmul %19, %21, %cst_13 {dimension_numbers = #tpu.dot_dimension_numbers<[1], [0], [0], [1], [0, 0, 1, 1], [], []>} : vector<336x4xbf16>, vector<4x32xbf16>, vector<336x32xf32> -> vector<336x32xf32>
    %23 = arith.addf %7, %22 : vector<336x32xf32>
    %c0_14 = arith.constant 0 : index
    %c14 = arith.constant 14 : index
    %c0_15 = arith.constant 0 : index
    %24 = vector.load %arg8[%c0_14, %c14, %c0_15] : memref<1x400x4xbf16, #tpu.memory_space<vmem>>, vector<1x336x4xbf16>
    %25 = vector.shape_cast %24 : vector<1x336x4xbf16> to vector<336x4xbf16>
    %26 = arith.extf %25 : vector<336x4xbf16> to vector<336x4xf32>
    %c0_16 = arith.constant 0 : index
    %c14_17 = arith.constant 14 : index
    %c0_18 = arith.constant 0 : index
    %27 = vector.load %arg9[%c0_16, %c14_17, %c0_18] : memref<1x400x4xbf16, #tpu.memory_space<vmem>>, vector<1x336x4xbf16>
    %28 = vector.shape_cast %27 : vector<1x336x4xbf16> to vector<336x4xbf16>
    %29 = arith.extf %28 : vector<336x4xbf16> to vector<336x4xf32>
    %30 = vector.broadcast %1 : f32 to vector<336x4xf32>
    %31 = arith.mulf %30, %26 : vector<336x4xf32>
    %32 = vector.broadcast %3 : f32 to vector<336x4xf32>
    %33 = arith.mulf %32, %29 : vector<336x4xf32>
    %34 = arith.addf %31, %33 : vector<336x4xf32>
    %35 = arith.truncf %34 : vector<336x4xf32> to vector<336x4xbf16>
    %c1_19 = arith.constant 1 : index
    %c0_20 = arith.constant 0 : index
    %c0_21 = arith.constant 0 : index
    %36 = vector.load %arg4[%c1_19, %c0_20, %c0_21] : memref<9x4x32xbf16, #tpu.memory_space<vmem>>, vector<1x4x32xbf16>
    %37 = vector.shape_cast %36 : vector<1x4x32xbf16> to vector<4x32xbf16>
    %cst_22 = arith.constant dense<0.000000e+00> : vector<336x32xf32>
    %38 = tpu.matmul %35, %37, %cst_22 {dimension_numbers = #tpu.dot_dimension_numbers<[1], [0], [0], [1], [0, 0, 1, 1], [], []>} : vector<336x4xbf16>, vector<4x32xbf16>, vector<336x32xf32> -> vector<336x32xf32>
    %39 = arith.addf %23, %38 : vector<336x32xf32>
    %c0_23 = arith.constant 0 : index
    %c15 = arith.constant 15 : index
    %c0_24 = arith.constant 0 : index
    %40 = vector.load %arg8[%c0_23, %c15, %c0_24] : memref<1x400x4xbf16, #tpu.memory_space<vmem>>, vector<1x336x4xbf16>
    %41 = vector.shape_cast %40 : vector<1x336x4xbf16> to vector<336x4xbf16>
    %42 = arith.extf %41 : vector<336x4xbf16> to vector<336x4xf32>
    %c0_25 = arith.constant 0 : index
    %c15_26 = arith.constant 15 : index
    %c0_27 = arith.constant 0 : index
    %43 = vector.load %arg9[%c0_25, %c15_26, %c0_27] : memref<1x400x4xbf16, #tpu.memory_space<vmem>>, vector<1x336x4xbf16>
    %44 = vector.shape_cast %43 : vector<1x336x4xbf16> to vector<336x4xbf16>
    %45 = arith.extf %44 : vector<336x4xbf16> to vector<336x4xf32>
    %46 = vector.broadcast %1 : f32 to vector<336x4xf32>
    %47 = arith.mulf %46, %42 : vector<336x4xf32>
    %48 = vector.broadcast %3 : f32 to vector<336x4xf32>
    %49 = arith.mulf %48, %45 : vector<336x4xf32>
    %50 = arith.addf %47, %49 : vector<336x4xf32>
    %51 = arith.truncf %50 : vector<336x4xf32> to vector<336x4xbf16>
    %c2 = arith.constant 2 : index
    %c0_28 = arith.constant 0 : index
    %c0_29 = arith.constant 0 : index
    %52 = vector.load %arg4[%c2, %c0_28, %c0_29] : memref<9x4x32xbf16, #tpu.memory_space<vmem>>, vector<1x4x32xbf16>
    %53 = vector.shape_cast %52 : vector<1x4x32xbf16> to vector<4x32xbf16>
    %cst_30 = arith.constant dense<0.000000e+00> : vector<336x32xf32>
    %54 = tpu.matmul %51, %53, %cst_30 {dimension_numbers = #tpu.dot_dimension_numbers<[1], [0], [0], [1], [0, 0, 1, 1], [], []>} : vector<336x4xbf16>, vector<4x32xbf16>, vector<336x32xf32> -> vector<336x32xf32>
    %55 = arith.addf %39, %54 : vector<336x32xf32>
    %c0_31 = arith.constant 0 : index
    %c31 = arith.constant 31 : index
    %c0_32 = arith.constant 0 : index
    %56 = vector.load %arg8[%c0_31, %c31, %c0_32] : memref<1x400x4xbf16, #tpu.memory_space<vmem>>, vector<1x336x4xbf16>
    %57 = vector.shape_cast %56 : vector<1x336x4xbf16> to vector<336x4xbf16>
    %58 = arith.extf %57 : vector<336x4xbf16> to vector<336x4xf32>
    %c0_33 = arith.constant 0 : index
    %c31_34 = arith.constant 31 : index
    %c0_35 = arith.constant 0 : index
    %59 = vector.load %arg9[%c0_33, %c31_34, %c0_35] : memref<1x400x4xbf16, #tpu.memory_space<vmem>>, vector<1x336x4xbf16>
    %60 = vector.shape_cast %59 : vector<1x336x4xbf16> to vector<336x4xbf16>
    %61 = arith.extf %60 : vector<336x4xbf16> to vector<336x4xf32>
    %62 = vector.broadcast %1 : f32 to vector<336x4xf32>
    %63 = arith.mulf %62, %58 : vector<336x4xf32>
    %64 = vector.broadcast %3 : f32 to vector<336x4xf32>
    %65 = arith.mulf %64, %61 : vector<336x4xf32>
    %66 = arith.addf %63, %65 : vector<336x4xf32>
    %67 = arith.truncf %66 : vector<336x4xf32> to vector<336x4xbf16>
    %c3 = arith.constant 3 : index
    %c0_36 = arith.constant 0 : index
    %c0_37 = arith.constant 0 : index
    %68 = vector.load %arg4[%c3, %c0_36, %c0_37] : memref<9x4x32xbf16, #tpu.memory_space<vmem>>, vector<1x4x32xbf16>
    %69 = vector.shape_cast %68 : vector<1x4x32xbf16> to vector<4x32xbf16>
    %cst_38 = arith.constant dense<0.000000e+00> : vector<336x32xf32>
    %70 = tpu.matmul %67, %69, %cst_38 {dimension_numbers = #tpu.dot_dimension_numbers<[1], [0], [0], [1], [0, 0, 1, 1], [], []>} : vector<336x4xbf16>, vector<4x32xbf16>, vector<336x32xf32> -> vector<336x32xf32>
    %71 = arith.addf %55, %70 : vector<336x32xf32>
    %c0_39 = arith.constant 0 : index
    %c32 = arith.constant 32 : index
    %c0_40 = arith.constant 0 : index
    %72 = vector.load %arg8[%c0_39, %c32, %c0_40] : memref<1x400x4xbf16, #tpu.memory_space<vmem>>, vector<1x336x4xbf16>
    %73 = vector.shape_cast %72 : vector<1x336x4xbf16> to vector<336x4xbf16>
    %74 = arith.extf %73 : vector<336x4xbf16> to vector<336x4xf32>
    %c0_41 = arith.constant 0 : index
    %c32_42 = arith.constant 32 : index
    %c0_43 = arith.constant 0 : index
    %75 = vector.load %arg9[%c0_41, %c32_42, %c0_43] : memref<1x400x4xbf16, #tpu.memory_space<vmem>>, vector<1x336x4xbf16>
    %76 = vector.shape_cast %75 : vector<1x336x4xbf16> to vector<336x4xbf16>
    %77 = arith.extf %76 : vector<336x4xbf16> to vector<336x4xf32>
    %78 = vector.broadcast %1 : f32 to vector<336x4xf32>
    %79 = arith.mulf %78, %74 : vector<336x4xf32>
    %80 = vector.broadcast %3 : f32 to vector<336x4xf32>
    %81 = arith.mulf %80, %77 : vector<336x4xf32>
    %82 = arith.addf %79, %81 : vector<336x4xf32>
    %83 = arith.truncf %82 : vector<336x4xf32> to vector<336x4xbf16>
    %c4 = arith.constant 4 : index
    %c0_44 = arith.constant 0 : index
    %c0_45 = arith.constant 0 : index
    %84 = vector.load %arg4[%c4, %c0_44, %c0_45] : memref<9x4x32xbf16, #tpu.memory_space<vmem>>, vector<1x4x32xbf16>
    %85 = vector.shape_cast %84 : vector<1x4x32xbf16> to vector<4x32xbf16>
    %cst_46 = arith.constant dense<0.000000e+00> : vector<336x32xf32>
    %86 = tpu.matmul %83, %85, %cst_46 {dimension_numbers = #tpu.dot_dimension_numbers<[1], [0], [0], [1], [0, 0, 1, 1], [], []>} : vector<336x4xbf16>, vector<4x32xbf16>, vector<336x32xf32> -> vector<336x32xf32>
    %87 = arith.addf %71, %86 : vector<336x32xf32>
    %c0_47 = arith.constant 0 : index
    %c33 = arith.constant 33 : index
    %c0_48 = arith.constant 0 : index
    %88 = vector.load %arg8[%c0_47, %c33, %c0_48] : memref<1x400x4xbf16, #tpu.memory_space<vmem>>, vector<1x336x4xbf16>
    %89 = vector.shape_cast %88 : vector<1x336x4xbf16> to vector<336x4xbf16>
    %90 = arith.extf %89 : vector<336x4xbf16> to vector<336x4xf32>
    %c0_49 = arith.constant 0 : index
    %c33_50 = arith.constant 33 : index
    %c0_51 = arith.constant 0 : index
    %91 = vector.load %arg9[%c0_49, %c33_50, %c0_51] : memref<1x400x4xbf16, #tpu.memory_space<vmem>>, vector<1x336x4xbf16>
    %92 = vector.shape_cast %91 : vector<1x336x4xbf16> to vector<336x4xbf16>
    %93 = arith.extf %92 : vector<336x4xbf16> to vector<336x4xf32>
    %94 = vector.broadcast %1 : f32 to vector<336x4xf32>
    %95 = arith.mulf %94, %90 : vector<336x4xf32>
    %96 = vector.broadcast %3 : f32 to vector<336x4xf32>
    %97 = arith.mulf %96, %93 : vector<336x4xf32>
    %98 = arith.addf %95, %97 : vector<336x4xf32>
    %99 = arith.truncf %98 : vector<336x4xf32> to vector<336x4xbf16>
    %c5 = arith.constant 5 : index
    %c0_52 = arith.constant 0 : index
    %c0_53 = arith.constant 0 : index
    %100 = vector.load %arg4[%c5, %c0_52, %c0_53] : memref<9x4x32xbf16, #tpu.memory_space<vmem>>, vector<1x4x32xbf16>
    %101 = vector.shape_cast %100 : vector<1x4x32xbf16> to vector<4x32xbf16>
    %cst_54 = arith.constant dense<0.000000e+00> : vector<336x32xf32>
    %102 = tpu.matmul %99, %101, %cst_54 {dimension_numbers = #tpu.dot_dimension_numbers<[1], [0], [0], [1], [0, 0, 1, 1], [], []>} : vector<336x4xbf16>, vector<4x32xbf16>, vector<336x32xf32> -> vector<336x32xf32>
    %103 = arith.addf %87, %102 : vector<336x32xf32>
    %c0_55 = arith.constant 0 : index
    %c49 = arith.constant 49 : index
    %c0_56 = arith.constant 0 : index
    %104 = vector.load %arg8[%c0_55, %c49, %c0_56] : memref<1x400x4xbf16, #tpu.memory_space<vmem>>, vector<1x336x4xbf16>
    %105 = vector.shape_cast %104 : vector<1x336x4xbf16> to vector<336x4xbf16>
    %106 = arith.extf %105 : vector<336x4xbf16> to vector<336x4xf32>
    %c0_57 = arith.constant 0 : index
    %c49_58 = arith.constant 49 : index
    %c0_59 = arith.constant 0 : index
    %107 = vector.load %arg9[%c0_57, %c49_58, %c0_59] : memref<1x400x4xbf16, #tpu.memory_space<vmem>>, vector<1x336x4xbf16>
    %108 = vector.shape_cast %107 : vector<1x336x4xbf16> to vector<336x4xbf16>
    %109 = arith.extf %108 : vector<336x4xbf16> to vector<336x4xf32>
    %110 = vector.broadcast %1 : f32 to vector<336x4xf32>
    %111 = arith.mulf %110, %106 : vector<336x4xf32>
    %112 = vector.broadcast %3 : f32 to vector<336x4xf32>
    %113 = arith.mulf %112, %109 : vector<336x4xf32>
    %114 = arith.addf %111, %113 : vector<336x4xf32>
    %115 = arith.truncf %114 : vector<336x4xf32> to vector<336x4xbf16>
    %c6 = arith.constant 6 : index
    %c0_60 = arith.constant 0 : index
    %c0_61 = arith.constant 0 : index
    %116 = vector.load %arg4[%c6, %c0_60, %c0_61] : memref<9x4x32xbf16, #tpu.memory_space<vmem>>, vector<1x4x32xbf16>
    %117 = vector.shape_cast %116 : vector<1x4x32xbf16> to vector<4x32xbf16>
    %cst_62 = arith.constant dense<0.000000e+00> : vector<336x32xf32>
    %118 = tpu.matmul %115, %117, %cst_62 {dimension_numbers = #tpu.dot_dimension_numbers<[1], [0], [0], [1], [0, 0, 1, 1], [], []>} : vector<336x4xbf16>, vector<4x32xbf16>, vector<336x32xf32> -> vector<336x32xf32>
    %119 = arith.addf %103, %118 : vector<336x32xf32>
    %c0_63 = arith.constant 0 : index
    %c50 = arith.constant 50 : index
    %c0_64 = arith.constant 0 : index
    %120 = vector.load %arg8[%c0_63, %c50, %c0_64] : memref<1x400x4xbf16, #tpu.memory_space<vmem>>, vector<1x336x4xbf16>
    %121 = vector.shape_cast %120 : vector<1x336x4xbf16> to vector<336x4xbf16>
    %122 = arith.extf %121 : vector<336x4xbf16> to vector<336x4xf32>
    %c0_65 = arith.constant 0 : index
    %c50_66 = arith.constant 50 : index
    %c0_67 = arith.constant 0 : index
    %123 = vector.load %arg9[%c0_65, %c50_66, %c0_67] : memref<1x400x4xbf16, #tpu.memory_space<vmem>>, vector<1x336x4xbf16>
    %124 = vector.shape_cast %123 : vector<1x336x4xbf16> to vector<336x4xbf16>
    %125 = arith.extf %124 : vector<336x4xbf16> to vector<336x4xf32>
    %126 = vector.broadcast %1 : f32 to vector<336x4xf32>
    %127 = arith.mulf %126, %122 : vector<336x4xf32>
    %128 = vector.broadcast %3 : f32 to vector<336x4xf32>
    %129 = arith.mulf %128, %125 : vector<336x4xf32>
    %130 = arith.addf %127, %129 : vector<336x4xf32>
    %131 = arith.truncf %130 : vector<336x4xf32> to vector<336x4xbf16>
    %c7 = arith.constant 7 : index
    %c0_68 = arith.constant 0 : index
    %c0_69 = arith.constant 0 : index
    %132 = vector.load %arg4[%c7, %c0_68, %c0_69] : memref<9x4x32xbf16, #tpu.memory_space<vmem>>, vector<1x4x32xbf16>
    %133 = vector.shape_cast %132 : vector<1x4x32xbf16> to vector<4x32xbf16>
    %cst_70 = arith.constant dense<0.000000e+00> : vector<336x32xf32>
    %134 = tpu.matmul %131, %133, %cst_70 {dimension_numbers = #tpu.dot_dimension_numbers<[1], [0], [0], [1], [0, 0, 1, 1], [], []>} : vector<336x4xbf16>, vector<4x32xbf16>, vector<336x32xf32> -> vector<336x32xf32>
    %135 = arith.addf %119, %134 : vector<336x32xf32>
    %c0_71 = arith.constant 0 : index
    %c51 = arith.constant 51 : index
    %c0_72 = arith.constant 0 : index
    %136 = vector.load %arg8[%c0_71, %c51, %c0_72] : memref<1x400x4xbf16, #tpu.memory_space<vmem>>, vector<1x336x4xbf16>
    %137 = vector.shape_cast %136 : vector<1x336x4xbf16> to vector<336x4xbf16>
    %138 = arith.extf %137 : vector<336x4xbf16> to vector<336x4xf32>
    %c0_73 = arith.constant 0 : index
    %c51_74 = arith.constant 51 : index
    %c0_75 = arith.constant 0 : index
    %139 = vector.load %arg9[%c0_73, %c51_74, %c0_75] : memref<1x400x4xbf16, #tpu.memory_space<vmem>>, vector<1x336x4xbf16>
    %140 = vector.shape_cast %139 : vector<1x336x4xbf16> to vector<336x4xbf16>
    %141 = arith.extf %140 : vector<336x4xbf16> to vector<336x4xf32>
    %142 = vector.broadcast %1 : f32 to vector<336x4xf32>
    %143 = arith.mulf %142, %138 : vector<336x4xf32>
    %144 = vector.broadcast %3 : f32 to vector<336x4xf32>
    %145 = arith.mulf %144, %141 : vector<336x4xf32>
    %146 = arith.addf %143, %145 : vector<336x4xf32>
    %147 = arith.truncf %146 : vector<336x4xf32> to vector<336x4xbf16>
    %c8 = arith.constant 8 : index
    %c0_76 = arith.constant 0 : index
    %c0_77 = arith.constant 0 : index
    %148 = vector.load %arg4[%c8, %c0_76, %c0_77] : memref<9x4x32xbf16, #tpu.memory_space<vmem>>, vector<1x4x32xbf16>
    %149 = vector.shape_cast %148 : vector<1x4x32xbf16> to vector<4x32xbf16>
    %cst_78 = arith.constant dense<0.000000e+00> : vector<336x32xf32>
    %150 = tpu.matmul %147, %149, %cst_78 {dimension_numbers = #tpu.dot_dimension_numbers<[1], [0], [0], [1], [0, 0, 1, 1], [], []>} : vector<336x4xbf16>, vector<4x32xbf16>, vector<336x32xf32> -> vector<336x32xf32>
    %151 = arith.addf %135, %150 : vector<336x32xf32>
    %c0_79 = arith.constant 0 : index
    %c0_80 = arith.constant 0 : index
    %c0_81 = arith.constant 0 : index
    %152 = vector.load %arg3[%c0_79, %c0_80, %c0_81] : memref<1x1x32xf32, #tpu.memory_space<vmem>>, vector<1x1x32xf32>
    %153 = vector.shape_cast %152 : vector<1x1x32xf32> to vector<1x32xf32>
    %c0_82 = arith.constant 0 : index
    %c0_83 = arith.constant 0 : index
    %154 = vector.load %arg5[%c0_82, %c0_83] : memref<1x32xf32, #tpu.memory_space<vmem>>, vector<1x32xf32>
    %155 = vector.broadcast %154 : vector<1x32xf32> to vector<336x32xf32>
    %156 = arith.addf %151, %155 : vector<336x32xf32>
    %157 = vector.broadcast %153 : vector<1x32xf32> to vector<336x32xf32>
    %158 = arith.addf %156, %157 : vector<336x32xf32>
    %cst_84 = arith.constant 0.000000e+00 : f32
    %159 = vector.broadcast %cst_84 : f32 to vector<336x32xf32>
    %160 = arith.maximumf %158, %159 : vector<336x32xf32>
    %161 = vector.broadcast %6 : vector<336x1xf32> to vector<336x32xf32>
    %162 = arith.mulf %160, %161 : vector<336x32xf32>
    %163 = arith.truncf %162 : vector<336x32xf32> to vector<336x32xbf16>
    %c32_85 = arith.constant 32 : index
    %c0_86 = arith.constant 0 : index
    %164 = vector.load %arg11[%c32_85, %c0_86] : memref<400x32xbf16, #tpu.memory_space<vmem>>, vector<336x32xbf16>
    tpu.vector_store %arg11[%c32_85, %c0_86], %163 {strides = array<i32>} : memref<400x32xbf16, #tpu.memory_space<vmem>>, vector<336x32xbf16>,
    %cst_87 = arith.constant 0.000000e+00 : f32
    %165 = vector.broadcast %cst_87 : f32 to vector<336x4xf32>
    %c13_88 = arith.constant 13 : index
    %c0_89 = arith.constant 0 : index
    %166 = vector.load %arg11[%c13_88, %c0_89] : memref<400x32xbf16, #tpu.memory_space<vmem>>, vector<336x32xbf16>
    %c0_90 = arith.constant 0 : index
    %c0_91 = arith.constant 0 : index
    %c0_92 = arith.constant 0 : index
    %167 = vector.load %arg6[%c0_90, %c0_91, %c0_92] : memref<9x32x4xbf16, #tpu.memory_space<vmem>>, vector<1x32x4xbf16>
    %168 = vector.shape_cast %167 : vector<1x32x4xbf16> to vector<32x4xbf16>
    %cst_93 = arith.constant dense<0.000000e+00> : vector<336x4xf32>
    %169 = tpu.matmul %166, %168, %cst_93 {dimension_numbers = #tpu.dot_dimension_numbers<[1], [0], [0], [1], [0, 0, 1, 1], [], []>} : vector<336x32xbf16>, vector<32x4xbf16>, vector<336x4xf32> -> vector<336x4xf32>
    %170 = arith.addf %165, %169 : vector<336x4xf32>
    %c14_94 = arith.constant 14 : index
    %c0_95 = arith.constant 0 : index
    %171 = vector.load %arg11[%c14_94, %c0_95] : memref<400x32xbf16, #tpu.memory_space<vmem>>, vector<336x32xbf16>
    %c1_96 = arith.constant 1 : index
    %c0_97 = arith.constant 0 : index
    %c0_98 = arith.constant 0 : index
    %172 = vector.load %arg6[%c1_96, %c0_97, %c0_98] : memref<9x32x4xbf16, #tpu.memory_space<vmem>>, vector<1x32x4xbf16>
    %173 = vector.shape_cast %172 : vector<1x32x4xbf16> to vector<32x4xbf16>
    %cst_99 = arith.constant dense<0.000000e+00> : vector<336x4xf32>
    %174 = tpu.matmul %171, %173, %cst_99 {dimension_numbers = #tpu.dot_dimension_numbers<[1], [0], [0], [1], [0, 0, 1, 1], [], []>} : vector<336x32xbf16>, vector<32x4xbf16>, vector<336x4xf32> -> vector<336x4xf32>
    %175 = arith.addf %170, %174 : vector<336x4xf32>
    %c15_100 = arith.constant 15 : index
    %c0_101 = arith.constant 0 : index
    %176 = vector.load %arg11[%c15_100, %c0_101] : memref<400x32xbf16, #tpu.memory_space<vmem>>, vector<336x32xbf16>
    %c2_102 = arith.constant 2 : index
    %c0_103 = arith.constant 0 : index
    %c0_104 = arith.constant 0 : index
    %177 = vector.load %arg6[%c2_102, %c0_103, %c0_104] : memref<9x32x4xbf16, #tpu.memory_space<vmem>>, vector<1x32x4xbf16>
    %178 = vector.shape_cast %177 : vector<1x32x4xbf16> to vector<32x4xbf16>
    %cst_105 = arith.constant dense<0.000000e+00> : vector<336x4xf32>
    %179 = tpu.matmul %176, %178, %cst_105 {dimension_numbers = #tpu.dot_dimension_numbers<[1], [0], [0], [1], [0, 0, 1, 1], [], []>} : vector<336x32xbf16>, vector<32x4xbf16>, vector<336x4xf32> -> vector<336x4xf32>
    %180 = arith.addf %175, %179 : vector<336x4xf32>
    %c31_106 = arith.constant 31 : index
    %c0_107 = arith.constant 0 : index
    %181 = vector.load %arg11[%c31_106, %c0_107] : memref<400x32xbf16, #tpu.memory_space<vmem>>, vector<336x32xbf16>
    %c3_108 = arith.constant 3 : index
    %c0_109 = arith.constant 0 : index
    %c0_110 = arith.constant 0 : index
    %182 = vector.load %arg6[%c3_108, %c0_109, %c0_110] : memref<9x32x4xbf16, #tpu.memory_space<vmem>>, vector<1x32x4xbf16>
    %183 = vector.shape_cast %182 : vector<1x32x4xbf16> to vector<32x4xbf16>
    %cst_111 = arith.constant dense<0.000000e+00> : vector<336x4xf32>
    %184 = tpu.matmul %181, %183, %cst_111 {dimension_numbers = #tpu.dot_dimension_numbers<[1], [0], [0], [1], [0, 0, 1, 1], [], []>} : vector<336x32xbf16>, vector<32x4xbf16>, vector<336x4xf32> -> vector<336x4xf32>
    %185 = arith.addf %180, %184 : vector<336x4xf32>
    %c32_112 = arith.constant 32 : index
    %c0_113 = arith.constant 0 : index
    %186 = vector.load %arg11[%c32_112, %c0_113] : memref<400x32xbf16, #tpu.memory_space<vmem>>, vector<336x32xbf16>
    %c4_114 = arith.constant 4 : index
    %c0_115 = arith.constant 0 : index
    %c0_116 = arith.constant 0 : index
    %187 = vector.load %arg6[%c4_114, %c0_115, %c0_116] : memref<9x32x4xbf16, #tpu.memory_space<vmem>>, vector<1x32x4xbf16>
    %188 = vector.shape_cast %187 : vector<1x32x4xbf16> to vector<32x4xbf16>
    %cst_117 = arith.constant dense<0.000000e+00> : vector<336x4xf32>
    %189 = tpu.matmul %186, %188, %cst_117 {dimension_numbers = #tpu.dot_dimension_numbers<[1], [0], [0], [1], [0, 0, 1, 1], [], []>} : vector<336x32xbf16>, vector<32x4xbf16>, vector<336x4xf32> -> vector<336x4xf32>
    %190 = arith.addf %185, %189 : vector<336x4xf32>
    %c33_118 = arith.constant 33 : index
    %c0_119 = arith.constant 0 : index
    %191 = vector.load %arg11[%c33_118, %c0_119] : memref<400x32xbf16, #tpu.memory_space<vmem>>, vector<336x32xbf16>
    %c5_120 = arith.constant 5 : index
    %c0_121 = arith.constant 0 : index
    %c0_122 = arith.constant 0 : index
    %192 = vector.load %arg6[%c5_120, %c0_121, %c0_122] : memref<9x32x4xbf16, #tpu.memory_space<vmem>>, vector<1x32x4xbf16>
    %193 = vector.shape_cast %192 : vector<1x32x4xbf16> to vector<32x4xbf16>
    %cst_123 = arith.constant dense<0.000000e+00> : vector<336x4xf32>
    %194 = tpu.matmul %191, %193, %cst_123 {dimension_numbers = #tpu.dot_dimension_numbers<[1], [0], [0], [1], [0, 0, 1, 1], [], []>} : vector<336x32xbf16>, vector<32x4xbf16>, vector<336x4xf32> -> vector<336x4xf32>
    %195 = arith.addf %190, %194 : vector<336x4xf32>
    %c49_124 = arith.constant 49 : index
    %c0_125 = arith.constant 0 : index
    %196 = vector.load %arg11[%c49_124, %c0_125] : memref<400x32xbf16, #tpu.memory_space<vmem>>, vector<336x32xbf16>
    %c6_126 = arith.constant 6 : index
    %c0_127 = arith.constant 0 : index
    %c0_128 = arith.constant 0 : index
    %197 = vector.load %arg6[%c6_126, %c0_127, %c0_128] : memref<9x32x4xbf16, #tpu.memory_space<vmem>>, vector<1x32x4xbf16>
    %198 = vector.shape_cast %197 : vector<1x32x4xbf16> to vector<32x4xbf16>
    %cst_129 = arith.constant dense<0.000000e+00> : vector<336x4xf32>
    %199 = tpu.matmul %196, %198, %cst_129 {dimension_numbers = #tpu.dot_dimension_numbers<[1], [0], [0], [1], [0, 0, 1, 1], [], []>} : vector<336x32xbf16>, vector<32x4xbf16>, vector<336x4xf32> -> vector<336x4xf32>
    %200 = arith.addf %195, %199 : vector<336x4xf32>
    %c50_130 = arith.constant 50 : index
    %c0_131 = arith.constant 0 : index
    %201 = vector.load %arg11[%c50_130, %c0_131] : memref<400x32xbf16, #tpu.memory_space<vmem>>, vector<336x32xbf16>
    %c7_132 = arith.constant 7 : index
    %c0_133 = arith.constant 0 : index
    %c0_134 = arith.constant 0 : index
    %202 = vector.load %arg6[%c7_132, %c0_133, %c0_134] : memref<9x32x4xbf16, #tpu.memory_space<vmem>>, vector<1x32x4xbf16>
    %203 = vector.shape_cast %202 : vector<1x32x4xbf16> to vector<32x4xbf16>
    %cst_135 = arith.constant dense<0.000000e+00> : vector<336x4xf32>
    %204 = tpu.matmul %201, %203, %cst_135 {dimension_numbers = #tpu.dot_dimension_numbers<[1], [0], [0], [1], [0, 0, 1, 1], [], []>} : vector<336x32xbf16>, vector<32x4xbf16>, vector<336x4xf32> -> vector<336x4xf32>
    %205 = arith.addf %200, %204 : vector<336x4xf32>
    %c51_136 = arith.constant 51 : index
    %c0_137 = arith.constant 0 : index
    %206 = vector.load %arg11[%c51_136, %c0_137] : memref<400x32xbf16, #tpu.memory_space<vmem>>, vector<336x32xbf16>
    %c8_138 = arith.constant 8 : index
    %c0_139 = arith.constant 0 : index
    %c0_140 = arith.constant 0 : index
    %207 = vector.load %arg6[%c8_138, %c0_139, %c0_140] : memref<9x32x4xbf16, #tpu.memory_space<vmem>>, vector<1x32x4xbf16>
    %208 = vector.shape_cast %207 : vector<1x32x4xbf16> to vector<32x4xbf16>
    %cst_141 = arith.constant dense<0.000000e+00> : vector<336x4xf32>
    %209 = tpu.matmul %206, %208, %cst_141 {dimension_numbers = #tpu.dot_dimension_numbers<[1], [0], [0], [1], [0, 0, 1, 1], [], []>} : vector<336x32xbf16>, vector<32x4xbf16>, vector<336x4xf32> -> vector<336x4xf32>
    %210 = arith.addf %205, %209 : vector<336x4xf32>
    %c0_142 = arith.constant 0 : index
    %c0_143 = arith.constant 0 : index
    %211 = vector.load %arg7[%c0_142, %c0_143] : memref<1x4xf32, #tpu.memory_space<vmem>>, vector<1x4xf32>
    %212 = vector.broadcast %211 : vector<1x4xf32> to vector<336x4xf32>
    %213 = arith.addf %210, %212 : vector<336x4xf32>
    %c0_144 = arith.constant 0 : index
    %c32_145 = arith.constant 32 : index
    %c0_146 = arith.constant 0 : index
    %214 = vector.load %arg9[%c0_144, %c32_145, %c0_146] : memref<1x400x4xbf16, #tpu.memory_space<vmem>>, vector<1x336x4xbf16>
    %215 = vector.shape_cast %214 : vector<1x336x4xbf16> to vector<336x4xbf16>
    %216 = arith.extf %215 : vector<336x4xbf16> to vector<336x4xf32>
    %217 = arith.subf %213, %216 : vector<336x4xf32>
    %218 = vector.broadcast %6 : vector<336x1xf32> to vector<336x4xf32>
    %219 = arith.mulf %217, %218 : vector<336x4xf32>
    %220 = arith.mulf %219, %219 : vector<336x4xf32>
    %221 = vector.shape_cast %220 : vector<336x4xf32> to vector<1x336x4xf32>
    %cst_147 = arith.constant dense<0.000000e+00> : vector<1xf32>
    %222 = vector.multi_reduction <add>, %221, %cst_147 [1, 2] : vector<1x336x4xf32> to vector<1xf32>
    %223 = vector.shape_cast %222 : vector<1xf32> to vector<1x1x1xf32>
    %224 = vector.extract %223[0, 0, 0] : f32 from vector<1x1x1xf32>
    %225 = vector.broadcast %224 : f32 to vector<1x1xf32>
    %c0_148 = arith.constant 0 : index
    %c0_149 = arith.constant 0 : index
    %c0_150 = arith.constant 0 : index
    %226 = vector.load %arg10[%c0_148, %c0_149, %c0_150] : memref<1x1x1xf32, #tpu.memory_space<vmem>>, vector<1x1x1xf32>
    %227 = vector.shape_cast %226 : vector<1x1x1xf32> to vector<1x1xf32>
    %228 = vector.shape_cast %225 : vector<1x1xf32> to vector<1x1x1xf32>
    tpu.vector_store %arg10[%c0_148, %c0_149, %c0_150], %228 {strides = array<i32>} : memref<1x1x1xf32, #tpu.memory_space<vmem>>, vector<1x1x1xf32>,
    return
  }
  func.func @transform_0(%arg0: i32) -> (i32, i32) {
    %c0_i32 = arith.constant 0 : i32
    %c0_i32_0 = arith.constant 0 : i32
    %c0_i32_1 = arith.constant 0 : i32
    return %c0_i32, %c0_i32_0 : i32, i32
  }
  func.func @transform_1(%arg0: i32) -> (i32, i32) {
    %c0_i32 = arith.constant 0 : i32
    %c0_i32_0 = arith.constant 0 : i32
    %c0_i32_1 = arith.constant 0 : i32
    return %c0_i32, %c0_i32_0 : i32, i32
  }
  func.func @transform_2(%arg0: i32) -> (i32, i32, i32) {
    %c0_i32 = arith.constant 0 : i32
    %c0_i32_0 = arith.constant 0 : i32
    %c0_i32_1 = arith.constant 0 : i32
    return %arg0, %c0_i32, %c0_i32_0 : i32, i32, i32
  }
  func.func @transform_3(%arg0: i32) -> (i32, i32, i32) {
    %c0_i32 = arith.constant 0 : i32
    %c0_i32_0 = arith.constant 0 : i32
    %c0_i32_1 = arith.constant 0 : i32
    %c0_i32_2 = arith.constant 0 : i32
    return %c0_i32, %c0_i32_0, %c0_i32_1 : i32, i32, i32
  }
  func.func @transform_4(%arg0: i32) -> (i32, i32) {
    %c0_i32 = arith.constant 0 : i32
    %c0_i32_0 = arith.constant 0 : i32
    %c0_i32_1 = arith.constant 0 : i32
    return %c0_i32, %c0_i32_0 : i32, i32
  }
  func.func @transform_5(%arg0: i32) -> (i32, i32, i32) {
    %c0_i32 = arith.constant 0 : i32
    %c0_i32_0 = arith.constant 0 : i32
    %c0_i32_1 = arith.constant 0 : i32
    %c0_i32_2 = arith.constant 0 : i32
    return %c0_i32, %c0_i32_0, %c0_i32_1 : i32, i32, i32
  }
  func.func @transform_6(%arg0: i32) -> (i32, i32) {
    %c0_i32 = arith.constant 0 : i32
    %c0_i32_0 = arith.constant 0 : i32
    %c0_i32_1 = arith.constant 0 : i32
    return %c0_i32, %c0_i32_0 : i32, i32
  }
  func.func @transform_7(%arg0: i32) -> (i32, i32, i32) {
    %c0_i32 = arith.constant 0 : i32
    %c0_i32_0 = arith.constant 0 : i32
    %c0_i32_1 = arith.constant 0 : i32
    return %arg0, %c0_i32, %c0_i32_0 : i32, i32, i32
  }
  func.func @transform_8(%arg0: i32) -> (i32, i32, i32) {
    %c0_i32 = arith.constant 0 : i32
    %c0_i32_0 = arith.constant 0 : i32
    %c0_i32_1 = arith.constant 0 : i32
    return %arg0, %c0_i32, %c0_i32_0 : i32, i32, i32
  }
  func.func @transform_9(%arg0: i32) -> (i32, i32, i32) {
    %c0_i32 = arith.constant 0 : i32
    %c0_i32_0 = arith.constant 0 : i32
    %c0_i32_1 = arith.constant 0 : i32
    return %arg0, %c0_i32, %c0_i32_0 : i32, i32, i32
  }
}

</mosaic_0001>

<llo_original>
// kernel: gaussian_diffusion_forward.1
$region0: #{gaussian_diffusion_forward.1}
  #allocation0 [shape = 'u32[]', space=smem, size = 0x4, offset = 0x4, fixed_abs, tag = 'smem constant byte address 0x4 - core index']
  #allocation1 [shape = 'u32[144,128]{1,0:T(1,128)}', space=vmem, size = 0x12000, scoped, tag = 'internal scratch']
  #allocation2 [shape = 'bf16[400,32]{1,0:T(8,128)(2,1)}', space=vmem, size = 0x19000, scoped, tag = 'scratch operand']
  %s0 = inlined_call_operand.vmem [shape: f32[2,2], index: 0, kind: input, shape index: {}]
  %s1 = inlined_call_operand.vmem [shape: f32[336,1], index: 1, kind: input, shape index: {}]
  %s2 = inlined_call_operand.vmem [shape: f32[2,1,32], index: 2, kind: input, shape index: {}]
  %s3 = inlined_call_operand.vmem [shape: bf16[9,4,32], index: 3, kind: input, shape index: {}]
  %s4 = inlined_call_operand.vmem [shape: f32[1,32], index: 4, kind: input, shape index: {}]
  %s5 = inlined_call_operand.vmem [shape: bf16[9,32,4], index: 5, kind: input, shape index: {}]
  %s6 = inlined_call_operand.vmem [shape: f32[1,4], index: 6, kind: input, shape index: {}]
  %s7 = inlined_call_operand.vmem [shape: bf16[2,400,4], index: 7, kind: input, shape index: {}]
  %s8 = inlined_call_operand.vmem [shape: bf16[2,400,4], index: 8, kind: input, shape index: {}]
  %s9 = inlined_call_operand.vmem [shape: f32[2,1,1], index: 9, kind: output, shape index: {}]
  %s10 = sld [smem:[#allocation0]]
  $region73: #{gaussian_diffusion_forward.1} parent=0
    _
  %s12 = ssub.s32 1, %s10
  %s13 = scalar_select 0, %s12, %s10
  $region1: #{gaussian_diffusion_forward.1} parent=0
    #allocation3 [shape = 'u8[1024]{0}', space=smem, size = 0x400, scoped, tag = 'input window, operand 0, single buffered']
    #allocation4 [shape = 's32[2]{0}', space=sflag, size = 0x8, scoped, tag = 'scoped memory for gaussian_diffusion_forward.1']
    %14 = vsyncpa [#allocation4], 0
    loop: start=0, step=1, limit=4
    $region2: #{gaussian_diffusion_forward.1} parent=1 // loop_pre_header
      _
    $region3: #{gaussian_diffusion_forward.1} parent=1 // loop_header
      %s16 = sphi 0, %s20
      %p17 = scmp.ge.s32.totalorder %s16, 4
      %s24 = sphi 0, %s24
      %s26 = sphi 0, %s24
      %s27 = sphi 0, %s26
      %s41 = sphi 0, %s27
      %s45 = sphi 0, %s45
      %s47 = sphi 0, %s45
      %s48 = sphi 0, %s47
      %s62 = sphi 0, %s48
      %s68 = sphi 0, %s70
      %s71 = sphi 0, %s68
      %s72 = sphi 0, %s71
      %s88 = sphi 0, %s72
      %s92 = sphi 0, %s92
      %s94 = sphi 0, %s92
      %s95 = sphi 0, %s94
      %s109 = sphi 0, %s95
      %s113 = sphi 0, %s113
      %s115 = sphi 0, %s113
      %s116 = sphi 0, %s115
      %s130 = sphi 0, %s116
      %s134 = sphi 0, %s134
      %s136 = sphi 0, %s134
      %s137 = sphi 0, %s136
      %s151 = sphi 0, %s137
      %s155 = sphi 0, %s155
      %s157 = sphi 0, %s155
      %s158 = sphi 0, %s157
      %s172 = sphi 0, %s158
      %s178 = sphi 0, %s180
      %s181 = sphi 0, %s178
      %s182 = sphi 0, %s181
      %s198 = sphi 0, %s182
      %s204 = sphi 0, %s206
      %s207 = sphi 0, %s204
      %s208 = sphi 0, %s207
      %s224 = sphi 0, %s208
      %s230 = sphi 0, %s232
      %s233 = sphi 0, %s230
      %s234 = sphi 0, %s233
      %s250 = sphi 0, %s234
    $region4: #{gaussian_diffusion_forward.1} parent=1 // loop_header_branch
      %19 = sbr.rel (%p17) target = $region8
    $region5: #{gaussian_diffusion_forward.1} parent=1 // loop_body
      %s21 = ssub.s32 %s16, 1
      %s22 = ssub.s32 %s16, 2
      %s23 = sadd.s32 %s16, 1
      %s25 = sadd.s32 %s24, 1
      %p28 = scmp.eq.s32.totalorder %s16, 1
      %p29 = scmp.ne.s32.totalorder %s24, %s26
      %p30 = scmp.eq.s32.totalorder %s16, 0
      %p31 = por %p29, %p30
      %p32 = scmp.ne.s32.totalorder %s24, %s26
      %p33 = scmp.eq.s32.totalorder %s21, 1
      %p34 = por %p32, %p33
      %p35 = scmp.ne.s32.totalorder %s26, %s27
      %p36 = scmp.eq.s32.totalorder %s21, 0
      %p37 = por %p35, %p36
      %p38 = scmp.ne.s32.totalorder %s26, %s27
      %p39 = scmp.eq.s32.totalorder %s22, 1
      %p40 = por %p38, %p39
      %p42 = scmp.ne.s32.totalorder %s27, %s41
      %p43 = scmp.eq.s32.totalorder %s22, 0
      %p44 = por %p42, %p43
      %s46 = sadd.s32 %s45, 1
      %p49 = scmp.eq.s32.totalorder %s16, 1
      %p50 = scmp.ne.s32.totalorder %s45, %s47
      %p51 = scmp.eq.s32.totalorder %s16, 0
      %p52 = por %p50, %p51
      %p53 = scmp.ne.s32.totalorder %s45, %s47
      %p54 = scmp.eq.s32.totalorder %s21, 1
      %p55 = por %p53, %p54
      %p56 = scmp.ne.s32.totalorder %s47, %s48
      %p57 = scmp.eq.s32.totalorder %s21, 0
      %p58 = por %p56, %p57
      %p59 = scmp.ne.s32.totalorder %s47, %s48
      %p60 = scmp.eq.s32.totalorder %s22, 1
      %p61 = por %p59, %p60
      %p63 = scmp.ne.s32.totalorder %s48, %s62
      %p64 = scmp.eq.s32.totalorder %s22, 0
      %p65 = por %p63, %p64
      %s66 = ssub.s32 %s16, %s23
      %p67 = scmp.eq.s32.totalorder %s66, 0
      %s69 = sadd.s32 %s68, 1
      %s70 = scalar_select %p67, %s68, %s69
      %p73 = pneg %p67
      %p74 = scmp.eq.s32.totalorder %s16, 1
      %p75 = por %p73, %p74
      %p76 = scmp.ne.s32.totalorder %s68, %s71
      %p77 = scmp.eq.s32.totalorder %s16, 0
      %p78 = por %p76, %p77
      %p79 = scmp.ne.s32.totalorder %s68, %s71
      %p80 = scmp.eq.s32.totalorder %s21, 1
      %p81 = por %p79, %p80
      %p82 = scmp.ne.s32.totalorder %s71, %s72
      %p83 = scmp.eq.s32.totalorder %s21, 0
      %p84 = por %p82, %p83
      %p85 = scmp.ne.s32.totalorder %s71, %s72
      %p86 = scmp.eq.s32.totalorder %s22, 1
      %p87 = por %p85, %p86
      %p89 = scmp.ne.s32.totalorder %s72, %s88
      %p90 = scmp.eq.s32.totalorder %s22, 0
      %p91 = por %p89, %p90
      %s93 = sadd.s32 %s92, 1
      %p96 = scmp.eq.s32.totalorder %s16, 1
      %p97 = scmp.ne.s32.totalorder %s92, %s94
      %p98 = scmp.eq.s32.totalorder %s16, 0
      %p99 = por %p97, %p98
      %p100 = scmp.ne.s32.totalorder %s92, %s94
      %p101 = scmp.eq.s32.totalorder %s21, 1
      %p102 = por %p100, %p101
      %p103 = scmp.ne.s32.totalorder %s94, %s95
      %p104 = scmp.eq.s32.totalorder %s21, 0
      %p105 = por %p103, %p104
      %p106 = scmp.ne.s32.totalorder %s94, %s95
      %p107 = scmp.eq.s32.totalorder %s22, 1
      %p108 = por %p106, %p107
      %p110 = scmp.ne.s32.totalorder %s95, %s109
      %p111 = scmp.eq.s32.totalorder %s22, 0
      %p112 = por %p110, %p111
      %s114 = sadd.s32 %s113, 1
      %p117 = scmp.eq.s32.totalorder %s16, 1
      %p118 = scmp.ne.s32.totalorder %s113, %s115
      %p119 = scmp.eq.s32.totalorder %s16, 0
      %p120 = por %p118, %p119
      %p121 = scmp.ne.s32.totalorder %s113, %s115
      %p122 = scmp.eq.s32.totalorder %s21, 1
      %p123 = por %p121, %p122
      %p124 = scmp.ne.s32.totalorder %s115, %s116
      %p125 = scmp.eq.s32.totalorder %s21, 0
      %p126 = por %p124, %p125
      %p127 = scmp.ne.s32.totalorder %s115, %s116
      %p128 = scmp.eq.s32.totalorder %s22, 1
      %p129 = por %p127, %p128
      %p131 = scmp.ne.s32.totalorder %s116, %s130
      %p132 = scmp.eq.s32.totalorder %s22, 0
      %p133 = por %p131, %p132
      %s135 = sadd.s32 %s134, 1
      %p138 = scmp.eq.s32.totalorder %s16, 1
      %p139 = scmp.ne.s32.totalorder %s134, %s136
      %p140 = scmp.eq.s32.totalorder %s16, 0
      %p141 = por %p139, %p140
      %p142 = scmp.ne.s32.totalorder %s134, %s136
      %p143 = scmp.eq.s32.totalorder %s21, 1
      %p144 = por %p142, %p143
      %p145 = scmp.ne.s32.totalorder %s136, %s137
      %p146 = scmp.eq.s32.totalorder %s21, 0
      %p147 = por %p145, %p146
      %p148 = scmp.ne.s32.totalorder %s136, %s137
      %p149 = scmp.eq.s32.totalorder %s22, 1
      %p150 = por %p148, %p149
      %p152 = scmp.ne.s32.totalorder %s137, %s151
      %p153 = scmp.eq.s32.totalorder %s22, 0
      %p154 = por %p152, %p153
      %s156 = sadd.s32 %s155, 1
      %p159 = scmp.eq.s32.totalorder %s16, 1
      %p160 = scmp.ne.s32.totalorder %s155, %s157
      %p161 = scmp.eq.s32.totalorder %s16, 0
      %p162 = por %p160, %p161
      %p163 = scmp.ne.s32.totalorder %s155, %s157
      %p164 = scmp.eq.s32.totalorder %s21, 1
      %p165 = por %p163, %p164
      %p166 = scmp.ne.s32.totalorder %s157, %s158
      %p167 = scmp.eq.s32.totalorder %s21, 0
      %p168 = por %p166, %p167
      %p169 = scmp.ne.s32.totalorder %s157, %s158
      %p170 = scmp.eq.s32.totalorder %s22, 1
      %p171 = por %p169, %p170
      %p173 = scmp.ne.s32.totalorder %s158, %s172
      %p174 = scmp.eq.s32.totalorder %s22, 0
      %p175 = por %p173, %p174
      %s176 = ssub.s32 %s16, %s23
      %p177 = scmp.eq.s32.totalorder %s176, 0
      %s179 = sadd.s32 %s178, 1
      %s180 = scalar_select %p177, %s178, %s179
      %p183 = pneg %p177
      %p184 = scmp.eq.s32.totalorder %s16, 1
      %p185 = por %p183, %p184
      %p186 = scmp.ne.s32.totalorder %s178, %s181
      %p187 = scmp.eq.s32.totalorder %s16, 0
      %p188 = por %p186, %p187
      %p189 = scmp.ne.s32.totalorder %s178, %s181
      %p190 = scmp.eq.s32.totalorder %s21, 1
      %p191 = por %p189, %p190
      %p192 = scmp.ne.s32.totalorder %s181, %s182
      %p193 = scmp.eq.s32.totalorder %s21, 0
      %p194 = por %p192, %p193
      %p195 = scmp.ne.s32.totalorder %s181, %s182
      %p196 = scmp.eq.s32.totalorder %s22, 1
      %p197 = por %p195, %p196
      %p199 = scmp.ne.s32.totalorder %s182, %s198
      %p200 = scmp.eq.s32.totalorder %s22, 0
      %p201 = por %p199, %p200
      %s202 = ssub.s32 %s16, %s23
      %p203 = scmp.eq.s32.totalorder %s202, 0
      %s205 = sadd.s32 %s204, 1
      %s206 = scalar_select %p203, %s204, %s205
      %p209 = pneg %p203
      %p210 = scmp.eq.s32.totalorder %s16, 1
      %p211 = por %p209, %p210
      %p212 = scmp.ne.s32.totalorder %s204, %s207
      %p213 = scmp.eq.s32.totalorder %s16, 0
      %p214 = por %p212, %p213
      %p215 = scmp.ne.s32.totalorder %s204, %s207
      %p216 = scmp.eq.s32.totalorder %s21, 1
      %p217 = por %p215, %p216
      %p218 = scmp.ne.s32.totalorder %s207, %s208
      %p219 = scmp.eq.s32.totalorder %s21, 0
      %p220 = por %p218, %p219
      %p221 = scmp.ne.s32.totalorder %s207, %s208
      %p222 = scmp.eq.s32.totalorder %s22, 1
      %p223 = por %p221, %p222
      %p225 = scmp.ne.s32.totalorder %s208, %s224
      %p226 = scmp.eq.s32.totalorder %s22, 0
      %p227 = por %p225, %p226
      %s228 = ssub.s32 %s16, %s23
      %p229 = scmp.eq.s32.totalorder %s228, 0
      %s231 = sadd.s32 %s230, 1
      %s232 = scalar_select %p229, %s230, %s231
      %p235 = pneg %p229
      %p236 = scmp.eq.s32.totalorder %s16, 1
      %p237 = por %p235, %p236
      %p238 = scmp.ne.s32.totalorder %s230, %s233
      %p239 = scmp.eq.s32.totalorder %s16, 0
      %p240 = por %p238, %p239
      %p241 = scmp.ne.s32.totalorder %s230, %s233
      %p242 = scmp.eq.s32.totalorder %s21, 1
      %p243 = por %p241, %p242
      %p244 = scmp.ne.s32.totalorder %s233, %s234
      %p245 = scmp.eq.s32.totalorder %s21, 0
      %p246 = por %p244, %p245
      %p247 = scmp.ne.s32.totalorder %s233, %s234
      %p248 = scmp.eq.s32.totalorder %s22, 1
      %p249 = por %p247, %p248
      %p251 = scmp.ne.s32.totalorder %s234, %s250
      %p252 = scmp.eq.s32.totalorder %s22, 0
      %p253 = por %p251, %p252
      %p254 = scmp.le.s32.totalorder 1, %s16
      %p255 = scmp.lt.s32.totalorder %s16, 3
      %p256 = pnand %p254, %p255
      %p257 = pneg %p256
      // Predicated region
      $region9: #{gaussian_diffusion_forward.1} parent=5 // pred_check
        _
      $region10: #{gaussian_diffusion_forward.1} parent=5 // pred_check_branch
        %259 = sbr.rel (%p256) target = $region12
      $region11: #{gaussian_diffusion_forward.1} parent=5 // pred_region
        %s260 = ssub.s32 %s16, 1
        // Predicated region
        $region13: #{gaussian_diffusion_forward.1} parent=11 // pred_check
          %p261 = pneg %p37
        $region14: #{gaussian_diffusion_forward.1} parent=11 // pred_check_branch
          %263 = sbr.rel (%p261) target = $region16
        $region15: #{gaussian_diffusion_forward.1} parent=11 // pred_region
          %s265 = ssub.s32 32, 32
          %266 = vsyncadd [#allocation4], %s265
          %s268 = sshll.u32 %s0, 4
          %s269 = int_to_ptr.vmem [resolvable:$true] %s268
          %271 = dma.vmem_to_smem %s269, 32, [#allocation3], [#allocation4]
        $region16: #{gaussian_diffusion_forward.1} parent=11 // pred_fallthru
          _
        // Predicated region
        $region17: #{gaussian_diffusion_forward.1} parent=11 // pred_check
          %p272 = pneg %p58
        $region18: #{gaussian_diffusion_forward.1} parent=11 // pred_check_branch
          %274 = sbr.rel (%p272) target = $region20
        $region19: #{gaussian_diffusion_forward.1} parent=11 // pred_region
          _
        $region20: #{gaussian_diffusion_forward.1} parent=11 // pred_fallthru
          _
        // Predicated region
        $region21: #{gaussian_diffusion_forward.1} parent=11 // pred_check
          %p275 = pneg %p105
        $region22: #{gaussian_diffusion_forward.1} parent=11 // pred_check_branch
          %277 = sbr.rel (%p275) target = $region24
        $region23: #{gaussian_diffusion_forward.1} parent=11 // pred_region
          _
        $region24: #{gaussian_diffusion_forward.1} parent=11 // pred_fallthru
          _
        // Predicated region
        $region25: #{gaussian_diffusion_forward.1} parent=11 // pred_check
          %p278 = pneg %p126
        $region26: #{gaussian_diffusion_forward.1} parent=11 // pred_check_branch
          %280 = sbr.rel (%p278) target = $region28
        $region27: #{gaussian_diffusion_forward.1} parent=11 // pred_region
          _
        $region28: #{gaussian_diffusion_forward.1} parent=11 // pred_fallthru
          _
        // Predicated region
        $region29: #{gaussian_diffusion_forward.1} parent=11 // pred_check
          %p281 = pneg %p147
        $region30: #{gaussian_diffusion_forward.1} parent=11 // pred_check_branch
          %283 = sbr.rel (%p281) target = $region32
        $region31: #{gaussian_diffusion_forward.1} parent=11 // pred_region
          _
        $region32: #{gaussian_diffusion_forward.1} parent=11 // pred_fallthru
          _
        // Predicated region
        $region33: #{gaussian_diffusion_forward.1} parent=11 // pred_check
          %p284 = pneg %p168
        $region34: #{gaussian_diffusion_forward.1} parent=11 // pred_check_branch
          %286 = sbr.rel (%p284) target = $region36
        $region35: #{gaussian_diffusion_forward.1} parent=11 // pred_region
          _
        $region36: #{gaussian_diffusion_forward.1} parent=11 // pred_fallthru
          _
      $region12: #{gaussian_diffusion_forward.1} parent=5 // pred_fallthru
        _
      %p287 = scmp.lt.s32.totalorder %s16, 2
      // Predicated region
      $region37: #{gaussian_diffusion_forward.1} parent=5 // pred_check
        %p288 = pneg %p287
      $region38: #{gaussian_diffusion_forward.1} parent=5 // pred_check_branch
        %290 = sbr.rel (%p288) target = $region40
      $region39: #{gaussian_diffusion_forward.1} parent=5 // pred_region
        // Predicated region
        $region41: #{gaussian_diffusion_forward.1} parent=39 // pred_check
          %p291 = pneg %p78
        $region42: #{gaussian_diffusion_forward.1} parent=39 // pred_check_branch
          %293 = sbr.rel (%p291) target = $region44
        $region43: #{gaussian_diffusion_forward.1} parent=39 // pred_region
          %p294 = scmp.lt.s32.totalorder %s16, 1
          %s295 = scalar_select %p294, %s16, 1
          %s296 = scalar_lea.vmem %s2, %s295
        $region44: #{gaussian_diffusion_forward.1} parent=39 // pred_fallthru
          _
        // Predicated region
        $region45: #{gaussian_diffusion_forward.1} parent=39 // pred_check
          %p297 = pneg %p188
        $region46: #{gaussian_diffusion_forward.1} parent=39 // pred_check_branch
          %299 = sbr.rel (%p297) target = $region48
        $region47: #{gaussian_diffusion_forward.1} parent=39 // pred_region
          %p300 = scmp.lt.s32.totalorder %s16, 1
          %s301 = scalar_select %p300, %s16, 1
          %s302 = smul.addr %s301, 50
          %s303 = smul.addr %s302, 4
          %s304 = scalar_lea.vmem %s7, %s303
        $region48: #{gaussian_diffusion_forward.1} parent=39 // pred_fallthru
          _
        // Predicated region
        $region49: #{gaussian_diffusion_forward.1} parent=39 // pred_check
          %p305 = pneg %p214
        $region50: #{gaussian_diffusion_forward.1} parent=39 // pred_check_branch
          %307 = sbr.rel (%p305) target = $region52
        $region51: #{gaussian_diffusion_forward.1} parent=39 // pred_region
          %p308 = scmp.lt.s32.totalorder %s16, 1
          %s309 = scalar_select %p308, %s16, 1
          %s310 = smul.addr %s309, 50
          %s311 = smul.addr %s310, 4
          %s312 = scalar_lea.vmem %s8, %s311
        $region52: #{gaussian_diffusion_forward.1} parent=39 // pred_fallthru
          _
      $region40: #{gaussian_diffusion_forward.1} parent=5 // pred_fallthru
        _
      %p313 = scmp.le.s32.totalorder 1, %s16
      %p314 = scmp.lt.s32.totalorder %s16, 3
      %p315 = pnand %p313, %p314
      %p316 = pneg %p315
      // Predicated region
      $region53: #{gaussian_diffusion_forward.1} parent=5 // pred_check
        _
      $region54: #{gaussian_diffusion_forward.1} parent=5 // pred_check_branch
        %318 = sbr.rel (%p315) target = $region56
      $region55: #{gaussian_diffusion_forward.1} parent=5 // pred_region
        %s319 = ssub.s32 %s16, 1
        // Predicated region
        $region57: #{gaussian_diffusion_forward.1} parent=55 // pred_check
          %p320 = pneg %p37
        $region58: #{gaussian_diffusion_forward.1} parent=55 // pred_check_branch
          %322 = sbr.rel (%p320) target = $region60
        $region59: #{gaussian_diffusion_forward.1} parent=55 // pred_region
          %323 = dma.done [#allocation4], 32
        $region60: #{gaussian_diffusion_forward.1} parent=55 // pred_fallthru
          _
        %324 = sfence
        %p325 = pneg %p37
        %p326 = pneg %p34
        %p327 = pneg %p58
        %p328 = pneg %p55
        %p329 = scmp.lt.s32.totalorder %s21, 1
        %s330 = scalar_select %p329, %s21, 1
        %s331 = scalar_lea.vmem %s2, %s330
        %p332 = pneg %p84
        %p333 = pneg %p81
        %p334 = pneg %p105
        %p335 = pneg %p102
        %p336 = pneg %p126
        %p337 = pneg %p123
        %p338 = pneg %p147
        %p339 = pneg %p144
        %p340 = pneg %p168
        %p341 = pneg %p165
        %p342 = scmp.lt.s32.totalorder %s21, 1
        %s343 = scalar_select %p342, %s21, 1
        %s344 = smul.addr %s343, 50
        %s345 = smul.addr %s344, 4
        %s346 = scalar_lea.vmem %s7, %s345
        %p347 = pneg %p194
        %p348 = pneg %p191
        %p349 = scmp.lt.s32.totalorder %s21, 1
        %s350 = scalar_select %p349, %s21, 1
        %s351 = smul.addr %s350, 50
        %s352 = smul.addr %s351, 4
        %s353 = scalar_lea.vmem %s8, %s352
        %p354 = pneg %p220
        %p355 = pneg %p217
        %p356 = pneg %p246
        %p357 = pneg %p243
        %p358 = scmp.lt.s32.totalorder %s21, 1
        %s359 = scalar_select %p358, %s21, 1
        %s360 = scalar_lea.vmem %s9, %s359
        %p361 = scmp.lt.s32.totalorder %s21, 1
        %s362 = scalar_select %p361, %s21, 1
        %s363 = scalar_lea.vmem %s2, %s362
        %p364 = scmp.lt.s32.totalorder %s21, 1
        %s365 = scalar_select %p364, %s21, 1
        %s366 = smul.addr %s365, 50
        %s367 = smul.addr %s366, 4
        %s368 = scalar_lea.vmem %s7, %s367
        %p369 = scmp.lt.s32.totalorder %s21, 1
        %s370 = scalar_select %p369, %s21, 1
        %s371 = smul.addr %s370, 50
        %s372 = smul.addr %s371, 4
        %s373 = scalar_lea.vmem %s8, %s372
        %p374 = scmp.lt.s32.totalorder %s21, 1
        %s375 = scalar_select %p374, %s21, 1
        %s376 = scalar_lea.vmem %s9, %s375
        %s378 = smul.u32 %s21, 128
        %s379 = sld [smem:[#allocation3 + %s378]]
        %s380 = sadd.s32 %s378, 1
        %s381 = sld [smem:[#allocation3 + %s380]]
        %vm382 = vcmask 257024
        %383 = vst.msk [vmem:[#allocation2] sm:$0xf] %vm382, 0
        %384 = vst.msk [vmem:[#allocation2 + $0x4] sm:$0xf] %vm382, 0
        %385 = vst.msk [vmem:[#allocation2 + $0x8] sm:$0xf] %vm382, 0
        %386 = vst.msk [vmem:[#allocation2 + $0xc] sm:$0xf] %vm382, 0
        %387 = vst.msk [vmem:[#allocation2 + $0x10] sm:$0xf] %vm382, 0
        %388 = vst.msk [vmem:[#allocation2 + $0x14] sm:$0xf] %vm382, 0
        %389 = vst.msk [vmem:[#allocation2 + $0x18] sm:$0xf] %vm382, 0
        %390 = vst.msk [vmem:[#allocation2 + $0x1c] sm:$0xf] %vm382, 0
        %391 = vst.msk [vmem:[#allocation2 + $0x20] sm:$0xf] %vm382, 0
        %392 = vst.msk [vmem:[#allocation2 + $0x24] sm:$0xf] %vm382, 0
        %393 = vst.msk [vmem:[#allocation2 + $0x28] sm:$0xf] %vm382, 0
        %394 = vst.msk [vmem:[#allocation2 + $0x2c] sm:$0xf] %vm382, 0
        %395 = vst.msk [vmem:[#allocation2 + $0x30] sm:$0xf] %vm382, 0
        %396 = vst.msk [vmem:[#allocation2 + $0x34] sm:$0xf] %vm382, 0
        %397 = vst.msk [vmem:[#allocation2 + $0x38] sm:$0xf] %vm382, 0
        %398 = vst.msk [vmem:[#allocation2 + $0x3c] sm:$0xf] %vm382, 0
        %399 = vst.msk [vmem:[#allocation2 + $0x40] sm:$0xf] %vm382, 0
        %400 = vst.msk [vmem:[#allocation2 + $0x44] sm:$0xf] %vm382, 0
        %401 = vst.msk [vmem:[#allocation2 + $0x48] sm:$0xf] %vm382, 0
        %402 = vst.msk [vmem:[#allocation2 + $0x4c] sm:$0xf] %vm382, 0
        %403 = vst.msk [vmem:[#allocation2 + $0x50] sm:$0xf] %vm382, 0
        %404 = vst.msk [vmem:[#allocation2 + $0x54] sm:$0xf] %vm382, 0
        %405 = vst.msk [vmem:[#allocation2 + $0x58] sm:$0xf] %vm382, 0
        %406 = vst.msk [vmem:[#allocation2 + $0x5c] sm:$0xf] %vm382, 0
        %407 = vst.msk [vmem:[#allocation2 + $0x60] sm:$0xf] %vm382, 0
        %408 = vst.msk [vmem:[#allocation2 + $0x64] sm:$0xf] %vm382, 0
        %409 = vst.msk [vmem:[#allocation2 + $0x68] sm:$0xf] %vm382, 0
        %410 = vst.msk [vmem:[#allocation2 + $0x6c] sm:$0xf] %vm382, 0
        %411 = vst.msk [vmem:[#allocation2 + $0x70] sm:$0xf] %vm382, 0
        %412 = vst.msk [vmem:[#allocation2 + $0x74] sm:$0xf] %vm382, 0
        %413 = vst.msk [vmem:[#allocation2 + $0x78] sm:$0xf] %vm382, 0
        %414 = vst.msk [vmem:[#allocation2 + $0x7c] sm:$0xf] %vm382, 0
        %415 = vst.msk [vmem:[#allocation2 + $0x80] sm:$0xf] %vm382, 0
        %416 = vst.msk [vmem:[#allocation2 + $0x84] sm:$0xf] %vm382, 0
        %417 = vst.msk [vmem:[#allocation2 + $0x88] sm:$0xf] %vm382, 0
        %418 = vst.msk [vmem:[#allocation2 + $0x8c] sm:$0xf] %vm382, 0
        %419 = vst.msk [vmem:[#allocation2 + $0x90] sm:$0xf] %vm382, 0
        %420 = vst.msk [vmem:[#allocation2 + $0x94] sm:$0xf] %vm382, 0
        %421 = vst.msk [vmem:[#allocation2 + $0x98] sm:$0xf] %vm382, 0
        %422 = vst.msk [vmem:[#allocation2 + $0x9c] sm:$0xf] %vm382, 0
        %423 = vst.msk [vmem:[#allocation2 + $0xa0] sm:$0xf] %vm382, 0
        %424 = vst.msk [vmem:[#allocation2 + $0xa4] sm:$0xf] %vm382, 0
        %425 = vst.msk [vmem:[#allocation2 + $0xa8] sm:$0xf] %vm382, 0
        %426 = vst.msk [vmem:[#allocation2 + $0xac] sm:$0xf] %vm382, 0
        %427 = vst.msk [vmem:[#allocation2 + $0xb0] sm:$0xf] %vm382, 0
        %428 = vst.msk [vmem:[#allocation2 + $0xb4] sm:$0xf] %vm382, 0
        %429 = vst.msk [vmem:[#allocation2 + $0xb8] sm:$0xf] %vm382, 0
        %430 = vst.msk [vmem:[#allocation2 + $0xbc] sm:$0xf] %vm382, 0
        %431 = vst.msk [vmem:[#allocation2 + $0xc0] sm:$0xf] %vm382, 0
        %432 = vst.msk [vmem:[#allocation2 + $0xc4] sm:$0xf] %vm382, 0
        %v433 = vld [vmem:[%s1] sm:$0xff]
        %v434 = vld [vmem:[%s1 + $0x8] sm:$0xff]
        %v435 = vld [vmem:[%s1 + $0x10] sm:$0xff]
        %v436 = vld [vmem:[%s1 + $0x18] sm:$0xff]
        %v437 = vld [vmem:[%s1 + $0x20] sm:$0xff]
        %v438 = vld [vmem:[%s1 + $0x28] sm:$0xff]
        %v439 = vld [vmem:[%s1 + $0x30] sm:$0xff]
        %v440 = vld [vmem:[%s1 + $0x38] sm:$0xff]
        %v441 = vld [vmem:[%s1 + $0x40] sm:$0xff]
        %v442 = vld [vmem:[%s1 + $0x48] sm:$0xff]
        %v443 = vld [vmem:[%s1 + $0x50] sm:$0xff]
        %v444 = vld [vmem:[%s1 + $0x58] sm:$0xff]
        %v445 = vld [vmem:[%s1 + $0x60] sm:$0xff]
        %v446 = vld [vmem:[%s1 + $0x68] sm:$0xff]
        %v447 = vld [vmem:[%s1 + $0x70] sm:$0xff]
        %v448 = vld [vmem:[%s1 + $0x78] sm:$0xff]
        %v449 = vld [vmem:[%s1 + $0x80] sm:$0xff]
        %v450 = vld [vmem:[%s1 + $0x88] sm:$0xff]
        %v451 = vld [vmem:[%s1 + $0x90] sm:$0xff]
        %v452 = vld [vmem:[%s1 + $0x98] sm:$0xff]
        %v453 = vld [vmem:[%s1 + $0xa0] sm:$0xff]
        %v454 = vld [vmem:[%s1 + $0xa8] sm:$0xff]
        %v455 = vld [vmem:[%s1 + $0xb0] sm:$0xff]
        %v456 = vld [vmem:[%s1 + $0xb8] sm:$0xff]
        %v457 = vld [vmem:[%s1 + $0xc0] sm:$0xff]
        %v458 = vld [vmem:[%s1 + $0xc8] sm:$0xff]
        %v459 = vld [vmem:[%s1 + $0xd0] sm:$0xff]
        %v460 = vld [vmem:[%s1 + $0xd8] sm:$0xff]
        %v461 = vld [vmem:[%s1 + $0xe0] sm:$0xff]
        %v462 = vld [vmem:[%s1 + $0xe8] sm:$0xff]
        %v463 = vld [vmem:[%s1 + $0xf0] sm:$0xff]
        %v464 = vld [vmem:[%s1 + $0xf8] sm:$0xff]
        %v465 = vld [vmem:[%s1 + $0x100] sm:$0xff]
        %v466 = vld [vmem:[%s1 + $0x108] sm:$0xff]
        %v467 = vld [vmem:[%s1 + $0x110] sm:$0xff]
        %v468 = vld [vmem:[%s1 + $0x118] sm:$0xff]
        %v469 = vld [vmem:[%s1 + $0x120] sm:$0xff]
        %v470 = vld [vmem:[%s1 + $0x128] sm:$0xff]
        %v471 = vld [vmem:[%s1 + $0x130] sm:$0xff]
        %v472 = vld [vmem:[%s1 + $0x138] sm:$0xff]
        %v473 = vld [vmem:[%s1 + $0x140] sm:$0xff]
        %v474 = vld [vmem:[%s1 + $0x148] sm:$0xff]
        %v475 = vld [vmem:[%s368 + $0x4] sm:$0xc]
        %v476 = vld [vmem:[%s368 + $0x8] sm:$0xf]
        %v477 = vld [vmem:[%s368 + $0xc] sm:$0xf]
        %v478 = vld [vmem:[%s368 + $0x10] sm:$0xf]
        %v479 = vld [vmem:[%s368 + $0x14] sm:$0xf]
        %v480 = vld [vmem:[%s368 + $0x18] sm:$0xf]
        %v481 = vld [vmem:[%s368 + $0x1c] sm:$0xf]
        %v482 = vld [vmem:[%s368 + $0x20] sm:$0xf]
        %v483 = vld [vmem:[%s368 + $0x24] sm:$0xf]
        %v484 = vld [vmem:[%s368 + $0x28] sm:$0xf]
        %v485 = vld [vmem:[%s368 + $0x2c] sm:$0xf]
        %v486 = vld [vmem:[%s368 + $0x30] sm:$0xf]
        %v487 = vld [vmem:[%s368 + $0x34] sm:$0xf]
        %v488 = vld [vmem:[%s368 + $0x38] sm:$0xf]
        %v489 = vld [vmem:[%s368 + $0x3c] sm:$0xf]
        %v490 = vld [vmem:[%s368 + $0x40] sm:$0xf]
        %v491 = vld [vmem:[%s368 + $0x44] sm:$0xf]
        %v492 = vld [vmem:[%s368 + $0x48] sm:$0xf]
        %v493 = vld [vmem:[%s368 + $0x4c] sm:$0xf]
        %v494 = vld [vmem:[%s368 + $0x50] sm:$0xf]
        %v495 = vld [vmem:[%s368 + $0x54] sm:$0xf]
        %v496 = vld [vmem:[%s368 + $0x58] sm:$0xf]
        %v497 = vld [vmem:[%s368 + $0x5c] sm:$0xf]
        %v498 = vld [vmem:[%s368 + $0x60] sm:$0xf]
        %v499 = vld [vmem:[%s368 + $0x64] sm:$0xf]
        %v500 = vld [vmem:[%s368 + $0x68] sm:$0xf]
        %v501 = vld [vmem:[%s368 + $0x6c] sm:$0xf]
        %v502 = vld [vmem:[%s368 + $0x70] sm:$0xf]
        %v503 = vld [vmem:[%s368 + $0x74] sm:$0xf]
        %v504 = vld [vmem:[%s368 + $0x78] sm:$0xf]
        %v505 = vld [vmem:[%s368 + $0x7c] sm:$0xf]
        %v506 = vld [vmem:[%s368 + $0x80] sm:$0xf]
        %v507 = vld [vmem:[%s368 + $0x84] sm:$0xf]
        %v508 = vld [vmem:[%s368 + $0x88] sm:$0xf]
        %v509 = vld [vmem:[%s368 + $0x8c] sm:$0xf]
        %v510 = vld [vmem:[%s368 + $0x90] sm:$0xf]
        %v511 = vld [vmem:[%s368 + $0x94] sm:$0xf]
        %v512 = vld [vmem:[%s368 + $0x98] sm:$0xf]
        %v513 = vld [vmem:[%s368 + $0x9c] sm:$0xf]
        %v514 = vld [vmem:[%s368 + $0xa0] sm:$0xf]
        %v515 = vld [vmem:[%s368 + $0xa4] sm:$0xf]
        %v516 = vld [vmem:[%s368 + $0xa8] sm:$0xf]
        %v517 = vld [vmem:[%s368 + $0xac] sm:$0x7]
        %v518 = vunpack.c.l.bf16 %v475
        %v519 = vunpack.c.l.bf16 %v476
        %v520 = vunpack.c.l.bf16 %v477
        %v521 = vunpack.c.l.bf16 %v478
        %v522 = vunpack.c.l.bf16 %v479
        %v523 = vunpack.c.l.bf16 %v480
        %v524 = vunpack.c.l.bf16 %v481
        %v525 = vunpack.c.l.bf16 %v482
        %v526 = vunpack.c.l.bf16 %v483
        %v527 = vunpack.c.l.bf16 %v484
        %v528 = vunpack.c.l.bf16 %v485
        %v529 = vunpack.c.l.bf16 %v486
        %v530 = vunpack.c.l.bf16 %v487
        %v531 = vunpack.c.l.bf16 %v488
        %v532 = vunpack.c.l.bf16 %v489
        %v533 = vunpack.c.l.bf16 %v490
        %v534 = vunpack.c.l.bf16 %v491
        %v535 = vunpack.c.l.bf16 %v492
        %v536 = vunpack.c.l.bf16 %v493
        %v537 = vunpack.c.l.bf16 %v494
        %v538 = vunpack.c.l.bf16 %v495
        %v539 = vunpack.c.l.bf16 %v496
        %v540 = vunpack.c.l.bf16 %v497
        %v541 = vunpack.c.l.bf16 %v498
        %v542 = vunpack.c.l.bf16 %v499
        %v543 = vunpack.c.l.bf16 %v500
        %v544 = vunpack.c.l.bf16 %v501
        %v545 = vunpack.c.l.bf16 %v502
        %v546 = vunpack.c.l.bf16 %v503
        %v547 = vunpack.c.l.bf16 %v504
        %v548 = vunpack.c.l.bf16 %v505
        %v549 = vunpack.c.l.bf16 %v506
        %v550 = vunpack.c.l.bf16 %v507
        %v551 = vunpack.c.l.bf16 %v508
        %v552 = vunpack.c.l.bf16 %v509
        %v553 = vunpack.c.l.bf16 %v510
        %v554 = vunpack.c.l.bf16 %v511
        %v555 = vunpack.c.l.bf16 %v512
        %v556 = vunpack.c.l.bf16 %v513
        %v557 = vunpack.c.l.bf16 %v514
        %v558 = vunpack.c.l.bf16 %v515
        %v559 = vunpack.c.l.bf16 %v516
        %v560 = vunpack.c.l.bf16 %v517
        %v561 = vld [vmem:[%s373 + $0x4] sm:$0xc]
        %v562 = vld [vmem:[%s373 + $0x8] sm:$0xf]
        %v563 = vld [vmem:[%s373 + $0xc] sm:$0xf]
        %v564 = vld [vmem:[%s373 + $0x10] sm:$0xf]
        %v565 = vld [vmem:[%s373 + $0x14] sm:$0xf]
        %v566 = vld [vmem:[%s373 + $0x18] sm:$0xf]
        %v567 = vld [vmem:[%s373 + $0x1c] sm:$0xf]
        %v568 = vld [vmem:[%s373 + $0x20] sm:$0xf]
        %v569 = vld [vmem:[%s373 + $0x24] sm:$0xf]
        %v570 = vld [vmem:[%s373 + $0x28] sm:$0xf]
        %v571 = vld [vmem:[%s373 + $0x2c] sm:$0xf]
        %v572 = vld [vmem:[%s373 + $0x30] sm:$0xf]
        %v573 = vld [vmem:[%s373 + $0x34] sm:$0xf]
        %v574 = vld [vmem:[%s373 + $0x38] sm:$0xf]
        %v575 = vld [vmem:[%s373 + $0x3c] sm:$0xf]
        %v576 = vld [vmem:[%s373 + $0x40] sm:$0xf]
        %v577 = vld [vmem:[%s373 + $0x44] sm:$0xf]
        %v578 = vld [vmem:[%s373 + $0x48] sm:$0xf]
        %v579 = vld [vmem:[%s373 + $0x4c] sm:$0xf]
        %v580 = vld [vmem:[%s373 + $0x50] sm:$0xf]
        %v581 = vld [vmem:[%s373 + $0x54] sm:$0xf]
        %v582 = vld [vmem:[%s373 + $0x58] sm:$0xf]
        %v583 = vld [vmem:[%s373 + $0x5c] sm:$0xf]
        %v584 = vld [vmem:[%s373 + $0x60] sm:$0xf]
        %v585 = vld [vmem:[%s373 + $0x64] sm:$0xf]
        %v586 = vld [vmem:[%s373 + $0x68] sm:$0xf]
        %v587 = vld [vmem:[%s373 + $0x6c] sm:$0xf]
        %v588 = vld [vmem:[%s373 + $0x70] sm:$0xf]
        %v589 = vld [vmem:[%s373 + $0x74] sm:$0xf]
        %v590 = vld [vmem:[%s373 + $0x78] sm:$0xf]
        %v591 = vld [vmem:[%s373 + $0x7c] sm:$0xf]
        %v592 = vld [vmem:[%s373 + $0x80] sm:$0xf]
        %v593 = vld [vmem:[%s373 + $0x84] sm:$0xf]
        %v594 = vld [vmem:[%s373 + $0x88] sm:$0xf]
        %v595 = vld [vmem:[%s373 + $0x8c] sm:$0xf]
        %v596 = vld [vmem:[%s373 + $0x90] sm:$0xf]
        %v597 = vld [vmem:[%s373 + $0x94] sm:$0xf]
        %v598 = vld [vmem:[%s373 + $0x98] sm:$0xf]
        %v599 = vld [vmem:[%s373 + $0x9c] sm:$0xf]
        %v600 = vld [vmem:[%s373 + $0xa0] sm:$0xf]
        %v601 = vld [vmem:[%s373 + $0xa4] sm:$0xf]
        %v602 = vld [vmem:[%s373 + $0xa8] sm:$0xf]
        %v603 = vld [vmem:[%s373 + $0xac] sm:$0x7]
        %v604 = vunpack.c.l.bf16 %v561
        %v605 = vunpack.c.l.bf16 %v562
        %v606 = vunpack.c.l.bf16 %v563
        %v607 = vunpack.c.l.bf16 %v564
        %v608 = vunpack.c.l.bf16 %v565
        %v609 = vunpack.c.l.bf16 %v566
        %v610 = vunpack.c.l.bf16 %v567
        %v611 = vunpack.c.l.bf16 %v568
        %v612 = vunpack.c.l.bf16 %v569
        %v613 = vunpack.c.l.bf16 %v570
        %v614 = vunpack.c.l.bf16 %v571
        %v615 = vunpack.c.l.bf16 %v572
        %v616 = vunpack.c.l.bf16 %v573
        %v617 = vunpack.c.l.bf16 %v574
        %v618 = vunpack.c.l.bf16 %v575
        %v619 = vunpack.c.l.bf16 %v576
        %v620 = vunpack.c.l.bf16 %v577
        %v621 = vunpack.c.l.bf16 %v578
        %v622 = vunpack.c.l.bf16 %v579
        %v623 = vunpack.c.l.bf16 %v580
        %v624 = vunpack.c.l.bf16 %v581
        %v625 = vunpack.c.l.bf16 %v582
        %v626 = vunpack.c.l.bf16 %v583
        %v627 = vunpack.c.l.bf16 %v584
        %v628 = vunpack.c.l.bf16 %v585
        %v629 = vunpack.c.l.bf16 %v586
        %v630 = vunpack.c.l.bf16 %v587
        %v631 = vunpack.c.l.bf16 %v588
        %v632 = vunpack.c.l.bf16 %v589
        %v633 = vunpack.c.l.bf16 %v590
        %v634 = vunpack.c.l.bf16 %v591
        %v635 = vunpack.c.l.bf16 %v592
        %v636 = vunpack.c.l.bf16 %v593
        %v637 = vunpack.c.l.bf16 %v594
        %v638 = vunpack.c.l.bf16 %v595
        %v639 = vunpack.c.l.bf16 %v596
        %v640 = vunpack.c.l.bf16 %v597
        %v641 = vunpack.c.l.bf16 %v598
        %v642 = vunpack.c.l.bf16 %v599
        %v643 = vunpack.c.l.bf16 %v600
        %v644 = vunpack.c.l.bf16 %v601
        %v645 = vunpack.c.l.bf16 %v602
        %v646 = vunpack.c.l.bf16 %v603
        %v647 = vstv %s379
        %v648 = vmul.f32 %v647, %v518
        %v649 = vmul.f32 %v647, %v519
        %v650 = vmul.f32 %v647, %v520
        %v651 = vmul.f32 %v647, %v521
        %v652 = vmul.f32 %v647, %v522
        %v653 = vmul.f32 %v647, %v523
        %v654 = vmul.f32 %v647, %v524
        %v655 = vmul.f32 %v647, %v525
        %v656 = vmul.f32 %v647, %v526
        %v657 = vmul.f32 %v647, %v527
        %v658 = vmul.f32 %v647, %v528
        %v659 = vmul.f32 %v647, %v529
        %v660 = vmul.f32 %v647, %v530
        %v661 = vmul.f32 %v647, %v531
        %v662 = vmul.f32 %v647, %v532
        %v663 = vmul.f32 %v647, %v533
        %v664 = vmul.f32 %v647, %v534
        %v665 = vmul.f32 %v647, %v535
        %v666 = vmul.f32 %v647, %v536
        %v667 = vmul.f32 %v647, %v537
        %v668 = vmul.f32 %v647, %v538
        %v669 = vmul.f32 %v647, %v539
        %v670 = vmul.f32 %v647, %v540
        %v671 = vmul.f32 %v647, %v541
        %v672 = vmul.f32 %v647, %v542
        %v673 = vmul.f32 %v647, %v543
        %v674 = vmul.f32 %v647, %v544
        %v675 = vmul.f32 %v647, %v545
        %v676 = vmul.f32 %v647, %v546
        %v677 = vmul.f32 %v647, %v547
        %v678 = vmul.f32 %v647, %v548
        %v679 = vmul.f32 %v647, %v549
        %v680 = vmul.f32 %v647, %v550
        %v681 = vmul.f32 %v647, %v551
        %v682 = vmul.f32 %v647, %v552
        %v683 = vmul.f32 %v647, %v553
        %v684 = vmul.f32 %v647, %v554
        %v685 = vmul.f32 %v647, %v555
        %v686 = vmul.f32 %v647, %v556
        %v687 = vmul.f32 %v647, %v557
        %v688 = vmul.f32 %v647, %v558
        %v689 = vmul.f32 %v647, %v559
        %v690 = vmul.f32 %v647, %v560
        %v691 = vstv %s381
        %v692 = vmul.f32 %v691, %v604
        %v693 = vmul.f32 %v691, %v605
        %v694 = vmul.f32 %v691, %v606
        %v695 = vmul.f32 %v691, %v607
        %v696 = vmul.f32 %v691, %v608
        %v697 = vmul.f32 %v691, %v609
        %v698 = vmul.f32 %v691, %v610
        %v699 = vmul.f32 %v691, %v611
        %v700 = vmul.f32 %v691, %v612
        %v701 = vmul.f32 %v691, %v613
        %v702 = vmul.f32 %v691, %v614
        %v703 = vmul.f32 %v691, %v615
        %v704 = vmul.f32 %v691, %v616
        %v705 = vmul.f32 %v691, %v617
        %v706 = vmul.f32 %v691, %v618
        %v707 = vmul.f32 %v691, %v619
        %v708 = vmul.f32 %v691, %v620
        %v709 = vmul.f32 %v691, %v621
        %v710 = vmul.f32 %v691, %v622
        %v711 = vmul.f32 %v691, %v623
        %v712 = vmul.f32 %v691, %v624
        %v713 = vmul.f32 %v691, %v625
        %v714 = vmul.f32 %v691, %v626
        %v715 = vmul.f32 %v691, %v627
        %v716 = vmul.f32 %v691, %v628
        %v717 = vmul.f32 %v691, %v629
        %v718 = vmul.f32 %v691, %v630
        %v719 = vmul.f32 %v691, %v631
        %v720 = vmul.f32 %v691, %v632
        %v721 = vmul.f32 %v691, %v633
        %v722 = vmul.f32 %v691, %v634
        %v723 = vmul.f32 %v691, %v635
        %v724 = vmul.f32 %v691, %v636
        %v725 = vmul.f32 %v691, %v637
        %v726 = vmul.f32 %v691, %v638
        %v727 = vmul.f32 %v691, %v639
        %v728 = vmul.f32 %v691, %v640
        %v729 = vmul.f32 %v691, %v641
        %v730 = vmul.f32 %v691, %v642
        %v731 = vmul.f32 %v691, %v643
        %v732 = vmul.f32 %v691, %v644
        %v733 = vmul.f32 %v691, %v645
        %v734 = vmul.f32 %v691, %v646
        %v735 = vadd.f32 %v648, %v692
        %v736 = vadd.f32 %v649, %v693
        %v737 = vadd.f32 %v650, %v694
        %v738 = vadd.f32 %v651, %v695
        %v739 = vadd.f32 %v652, %v696
        %v740 = vadd.f32 %v653, %v697
        %v741 = vadd.f32 %v654, %v698
        %v742 = vadd.f32 %v655, %v699
        %v743 = vadd.f32 %v656, %v700
        %v744 = vadd.f32 %v657, %v701
        %v745 = vadd.f32 %v658, %v702
        %v746 = vadd.f32 %v659, %v703
        %v747 = vadd.f32 %v660, %v704
        %v748 = vadd.f32 %v661, %v705
        %v749 = vadd.f32 %v662, %v706
        %v750 = vadd.f32 %v663, %v707
        %v751 = vadd.f32 %v664, %v708
        %v752 = vadd.f32 %v665, %v709
        %v753 = vadd.f32 %v666, %v710
        %v754 = vadd.f32 %v667, %v711
        %v755 = vadd.f32 %v668, %v712
        %v756 = vadd.f32 %v669, %v713
        %v757 = vadd.f32 %v670, %v714
        %v758 = vadd.f32 %v671, %v715
        %v759 = vadd.f32 %v672, %v716
        %v760 = vadd.f32 %v673, %v717
        %v761 = vadd.f32 %v674, %v718
        %v762 = vadd.f32 %v675, %v719
        %v763 = vadd.f32 %v676, %v720
        %v764 = vadd.f32 %v677, %v721
        %v765 = vadd.f32 %v678, %v722
        %v766 = vadd.f32 %v679, %v723
        %v767 = vadd.f32 %v680, %v724
        %v768 = vadd.f32 %v681, %v725
        %v769 = vadd.f32 %v682, %v726
        %v770 = vadd.f32 %v683, %v727
        %v771 = vadd.f32 %v684, %v728
        %v772 = vadd.f32 %v685, %v729
        %v773 = vadd.f32 %v686, %v730
        %v774 = vadd.f32 %v687, %v731
        %v775 = vadd.f32 %v688, %v732
        %v776 = vadd.f32 %v689, %v733
        %v777 = vadd.f32 %v690, %v734
        %v778 = vpack.c.bf16 %v736, %v735
        %v779 = vpack.c.bf16 %v738, %v737
        %v780 = vpack.c.bf16 %v740, %v739
        %v781 = vpack.c.bf16 %v742, %v741
        %v782 = vpack.c.bf16 %v744, %v743
        %v783 = vpack.c.bf16 %v746, %v745
        %v784 = vpack.c.bf16 %v748, %v747
        %v785 = vpack.c.bf16 %v750, %v749
        %v786 = vpack.c.bf16 %v752, %v751
        %v787 = vpack.c.bf16 %v754, %v753
        %v788 = vpack.c.bf16 %v756, %v755
        %v789 = vpack.c.bf16 %v758, %v757
        %v790 = vpack.c.bf16 %v760, %v759
        %v791 = vpack.c.bf16 %v762, %v761
        %v792 = vpack.c.bf16 %v764, %v763
        %v793 = vpack.c.bf16 %v766, %v765
        %v794 = vpack.c.bf16 %v768, %v767
        %v795 = vpack.c.bf16 %v770, %v769
        %v796 = vpack.c.bf16 %v772, %v771
        %v797 = vpack.c.bf16 %v774, %v773
        %v798 = vpack.c.bf16 %v776, %v775
        %v799 = vpack.c.bf16 %v777, %v777
        %v800 = vld [vmem:[%s3] sm:$0x3]
        %v801 = vld [vmem:[%s368 + $0x4] sm:$0x8]
        %v802 = vunpack.c.l.bf16 %v801
        %v803 = vld [vmem:[%s373 + $0x4] sm:$0x8]
        %v804 = vunpack.c.l.bf16 %v803
        %v805 = vmul.f32 %v647, %v802
        %v806 = vmul.f32 %v691, %v804
        %v807 = vadd.f32 %v805, %v806
        %v808 = vpack.c.bf16 %v736, %v807
        %s809 = scalar_lea.vmem %s3, 2
        %v810 = vld [vmem:[%s809] sm:$0x3]
        %vm833 = vcmask 1044480
        %v834 = vrot.slane %v808, 3
        %v835 = vrot.slane %v779, 3
        %v836 = vsel %vm833, %v834, %v835
        %v837 = vrot.slane %v780, 3
        %v838 = vsel %vm833, %v835, %v837
        %v839 = vrot.slane %v781, 3
        %v840 = vsel %vm833, %v837, %v839
        %v841 = vrot.slane %v782, 3
        %v842 = vsel %vm833, %v839, %v841
        %v843 = vrot.slane %v783, 3
        %v844 = vsel %vm833, %v841, %v843
        %v845 = vrot.slane %v784, 3
        %v846 = vsel %vm833, %v843, %v845
        %v847 = vrot.slane %v785, 3
        %v848 = vsel %vm833, %v845, %v847
        %v849 = vrot.slane %v786, 3
        %v850 = vsel %vm833, %v847, %v849
        %v851 = vrot.slane %v787, 3
        %v852 = vsel %vm833, %v849, %v851
        %v853 = vrot.slane %v788, 3
        %v854 = vsel %vm833, %v851, %v853
        %v855 = vrot.slane %v789, 3
        %v856 = vsel %vm833, %v853, %v855
        %v857 = vrot.slane %v790, 3
        %v858 = vsel %vm833, %v855, %v857
        %v859 = vrot.slane %v791, 3
        %v860 = vsel %vm833, %v857, %v859
        %v861 = vrot.slane %v792, 3
        %v862 = vsel %vm833, %v859, %v861
        %v863 = vrot.slane %v793, 3
        %v864 = vsel %vm833, %v861, %v863
        %v865 = vrot.slane %v794, 3
        %v866 = vsel %vm833, %v863, %v865
        %v867 = vrot.slane %v795, 3
        %v868 = vsel %vm833, %v865, %v867
        %v869 = vrot.slane %v796, 3
        %v870 = vsel %vm833, %v867, %v869
        %v871 = vrot.slane %v797, 3
        %v872 = vsel %vm833, %v869, %v871
        %v873 = vrot.slane %v798, 3
        %v874 = vsel %vm833, %v871, %v873
        %v875 = vrot.slane %v799, 3
        %v876 = vsel %vm833, %v873, %v875
        %vm877 = vcmask 31744
        %v879 = vsel %vm877, %v836, 0
        %v882 = vsel %vm877, %v838, 0
        %v885 = vsel %vm877, %v840, 0
        %v888 = vsel %vm877, %v842, 0
        %v891 = vsel %vm877, %v844, 0
        %v894 = vsel %vm877, %v846, 0
        %v897 = vsel %vm877, %v848, 0
        %v900 = vsel %vm877, %v850, 0
        %v903 = vsel %vm877, %v852, 0
        %v906 = vsel %vm877, %v854, 0
        %v909 = vsel %vm877, %v856, 0
        %v912 = vsel %vm877, %v858, 0
        %v915 = vsel %vm877, %v860, 0
        %v918 = vsel %vm877, %v862, 0
        %v921 = vsel %vm877, %v864, 0
        %v924 = vsel %vm877, %v866, 0
        %v927 = vsel %vm877, %v868, 0
        %v930 = vsel %vm877, %v870, 0
        %v933 = vsel %vm877, %v872, 0
        %v936 = vsel %vm877, %v874, 0
        %v939 = vsel %vm877, %v876, 0
        %vm941 = vcmask 1041408
        %v943 = vsel %vm941, %v810, 0
        %945 = vmatprep.subr.bf16.mxu0 0
        %946 = vmatpush1.bf16.msra.mxu0 0
        %947 = vmatprep.subr.bf16.mxu0 0
        %948 = vmatpush1.bf16.msra.mxu0 0
        %949 = vmatprep.subr.bf16.mxu0 0
        %950 = vmatpush1.bf16.msra.mxu0 0
        %951 = vmatprep.subr.bf16.mxu0 0
        %952 = vmatpush1.bf16.msra.mxu0 0
        %953 = vmatprep.subr.bf16.mxu0 0
        %954 = vmatpush1.bf16.msra.mxu0 0
        %955 = vmatprep.subr.bf16.mxu0 0
        %956 = vmatpush1.bf16.msra.mxu0 0
        %957 = vmatprep.subr.bf16.mxu0 0
        %958 = vmatpush1.bf16.msra.mxu0 0
        %959 = vmatprep.subr.bf16.mxu0 0
        %960 = vmatpush1.bf16.msra.mxu0 %v943
        %961 = vmatprep.subr.bf16.mxu0 0
        %962 = vmatpush2.bf16.msra.mxu0 0
        %963 = vmatprep.subr.bf16.mxu0 0
        %964 = vmatpush2.bf16.msra.mxu0 0
        %965 = vmatprep.subr.bf16.mxu0 0
        %966 = vmatpush2.bf16.msra.mxu0 0
        %967 = vmatprep.subr.bf16.mxu0 0
        %968 = vmatpush2.bf16.msra.mxu0 0
        %969 = vmatprep.subr.bf16.mxu0 0
        %970 = vmatpush2.bf16.msra.mxu0 0
        %971 = vmatprep.subr.bf16.mxu0 0
        %972 = vmatpush2.bf16.msra.mxu0 0
        %973 = vmatprep.subr.bf16.mxu0 0
        %974 = vmatpush2.bf16.msra.mxu0 0
        %975 = vmatprep.subr.bf16.mxu0 0
        %976 = vmatpush2.bf16.msra.mxu0 0
        %977 = vmatprep.mubr.bf16.mxu0 0
        %978 = vmatmul.mubr.bf16.gmra.mxu0 %v879
        %v979 = vpop.f32.mrf.mxu0
        %v980 = vadd.f32 0.0, %v979
        %v981 = vpop.f32.mrf.mxu0
        %v982 = vpop.f32.mrf.mxu0
        %v983 = vadd.f32 0.0, %v982
        %v984 = vpop.f32.mrf.mxu0
        %985 = vmatprep.mubr.bf16.mxu0 0
        %986 = vmatmul.mubr.bf16.gmra.mxu0 %v882
        %v987 = vpop.f32.mrf.mxu0
        %v988 = vadd.f32 0.0, %v987
        %v989 = vpop.f32.mrf.mxu0
        %v990 = vpop.f32.mrf.mxu0
        %v991 = vadd.f32 0.0, %v990
        %v992 = vpop.f32.mrf.mxu0
        %993 = vmatprep.mubr.bf16.mxu0 0
        %994 = vmatmul.mubr.bf16.gmra.mxu0 %v885
        %v995 = vpop.f32.mrf.mxu0
        %v996 = vadd.f32 0.0, %v995
        %v997 = vpop.f32.mrf.mxu0
        %v998 = vpop.f32.mrf.mxu0
        %v999 = vadd.f32 0.0, %v998
        %v1000 = vpop.f32.mrf.mxu0
        %1001 = vmatprep.mubr.bf16.mxu0 0
        %1002 = vmatmul.mubr.bf16.gmra.mxu0 %v888
        %v1003 = vpop.f32.mrf.mxu0
        %v1004 = vadd.f32 0.0, %v1003
        %v1005 = vpop.f32.mrf.mxu0
        %v1006 = vpop.f32.mrf.mxu0
        %v1007 = vadd.f32 0.0, %v1006
        %v1008 = vpop.f32.mrf.mxu0
        %1009 = vmatprep.mubr.bf16.mxu0 0
        %1010 = vmatmul.mubr.bf16.gmra.mxu0 %v891
        %v1011 = vpop.f32.mrf.mxu0
        %v1012 = vadd.f32 0.0, %v1011
        %v1013 = vpop.f32.mrf.mxu0
        %v1014 = vpop.f32.mrf.mxu0
        %v1015 = vadd.f32 0.0, %v1014
        %v1016 = vpop.f32.mrf.mxu0
        %1017 = vmatprep.mubr.bf16.mxu0 0
        %1018 = vmatmul.mubr.bf16.gmra.mxu0 %v894
        %v1019 = vpop.f32.mrf.mxu0
        %v1020 = vadd.f32 0.0, %v1019
        %v1021 = vpop.f32.mrf.mxu0
        %v1022 = vpop.f32.mrf.mxu0
        %v1023 = vadd.f32 0.0, %v1022
        %v1024 = vpop.f32.mrf.mxu0
        %1025 = vmatprep.mubr.bf16.mxu0 0
        %1026 = vmatmul.mubr.bf16.gmra.mxu0 %v897
        %v1027 = vpop.f32.mrf.mxu0
        %v1028 = vadd.f32 0.0, %v1027
        %v1029 = vpop.f32.mrf.mxu0
        %v1030 = vpop.f32.mrf.mxu0
        %v1031 = vadd.f32 0.0, %v1030
        %v1032 = vpop.f32.mrf.mxu0
        %1033 = vmatprep.mubr.bf16.mxu0 0
        %1034 = vmatmul.mubr.bf16.gmra.mxu0 %v900
        %v1035 = vpop.f32.mrf.mxu0
        %v1036 = vadd.f32 0.0, %v1035
        %v1037 = vpop.f32.mrf.mxu0
        %v1038 = vpop.f32.mrf.mxu0
        %v1039 = vadd.f32 0.0, %v1038
        %v1040 = vpop.f32.mrf.mxu0
        %1041 = vmatprep.mubr.bf16.mxu0 0
        %1042 = vmatmul.mubr.bf16.gmra.mxu0 %v903
        %v1043 = vpop.f32.mrf.mxu0
        %v1044 = vadd.f32 0.0, %v1043
        %v1045 = vpop.f32.mrf.mxu0
        %v1046 = vpop.f32.mrf.mxu0
        %v1047 = vadd.f32 0.0, %v1046
        %v1048 = vpop.f32.mrf.mxu0
        %1049 = vmatprep.mubr.bf16.mxu0 0
        %1050 = vmatmul.mubr.bf16.gmra.mxu0 %v906
        %v1051 = vpop.f32.mrf.mxu0
        %v1052 = vadd.f32 0.0, %v1051
        %v1053 = vpop.f32.mrf.mxu0
        %v1054 = vpop.f32.mrf.mxu0
        %v1055 = vadd.f32 0.0, %v1054
        %v1056 = vpop.f32.mrf.mxu0
        %1057 = vmatprep.mubr.bf16.mxu0 0
        %1058 = vmatmul.mubr.bf16.gmra.mxu0 %v909
        %v1059 = vpop.f32.mrf.mxu0
        %v1060 = vadd.f32 0.0, %v1059
        %v1061 = vpop.f32.mrf.mxu0
        %v1062 = vpop.f32.mrf.mxu0
        %v1063 = vadd.f32 0.0, %v1062
        %v1064 = vpop.f32.mrf.mxu0
        %1065 = vmatprep.mubr.bf16.mxu0 0
        %1066 = vmatmul.mubr.bf16.gmra.mxu0 %v912
        %v1067 = vpop.f32.mrf.mxu0
        %v1068 = vadd.f32 0.0, %v1067
        %v1069 = vpop.f32.mrf.mxu0
        %v1070 = vpop.f32.mrf.mxu0
        %v1071 = vadd.f32 0.0, %v1070
        %v1072 = vpop.f32.mrf.mxu0
        %1073 = vmatprep.mubr.bf16.mxu0 0
        %1074 = vmatmul.mubr.bf16.gmra.mxu0 %v915
        %v1075 = vpop.f32.mrf.mxu0
        %v1076 = vadd.f32 0.0, %v1075
        %v1077 = vpop.f32.mrf.mxu0
        %v1078 = vpop.f32.mrf.mxu0
        %v1079 = vadd.f32 0.0, %v1078
        %v1080 = vpop.f32.mrf.mxu0
        %1081 = vmatprep.mubr.bf16.mxu0 0
        %1082 = vmatmul.mubr.bf16.gmra.mxu0 %v918
        %v1083 = vpop.f32.mrf.mxu0
        %v1084 = vadd.f32 0.0, %v1083
        %v1085 = vpop.f32.mrf.mxu0
        %v1086 = vpop.f32.mrf.mxu0
        %v1087 = vadd.f32 0.0, %v1086
        %v1088 = vpop.f32.mrf.mxu0
        %1089 = vmatprep.mubr.bf16.mxu0 0
        %1090 = vmatmul.mubr.bf16.gmra.mxu0 %v921
        %v1091 = vpop.f32.mrf.mxu0
        %v1092 = vadd.f32 0.0, %v1091
        %v1093 = vpop.f32.mrf.mxu0
        %v1094 = vpop.f32.mrf.mxu0
        %v1095 = vadd.f32 0.0, %v1094
        %v1096 = vpop.f32.mrf.mxu0
        %1097 = vmatprep.mubr.bf16.mxu0 0
        %1098 = vmatmul.mubr.bf16.gmra.mxu0 %v924
        %v1099 = vpop.f32.mrf.mxu0
        %v1100 = vadd.f32 0.0, %v1099
        %v1101 = vpop.f32.mrf.mxu0
        %v1102 = vpop.f32.mrf.mxu0
        %v1103 = vadd.f32 0.0, %v1102
        %v1104 = vpop.f32.mrf.mxu0
        %1105 = vmatprep.mubr.bf16.mxu0 0
        %1106 = vmatmul.mubr.bf16.gmra.mxu0 %v927
        %v1107 = vpop.f32.mrf.mxu0
        %v1108 = vadd.f32 0.0, %v1107
        %v1109 = vpop.f32.mrf.mxu0
        %v1110 = vpop.f32.mrf.mxu0
        %v1111 = vadd.f32 0.0, %v1110
        %v1112 = vpop.f32.mrf.mxu0
        %1113 = vmatprep.mubr.bf16.mxu0 0
        %1114 = vmatmul.mubr.bf16.gmra.mxu0 %v930
        %v1115 = vpop.f32.mrf.mxu0
        %v1116 = vadd.f32 0.0, %v1115
        %v1117 = vpop.f32.mrf.mxu0
        %v1118 = vpop.f32.mrf.mxu0
        %v1119 = vadd.f32 0.0, %v1118
        %v1120 = vpop.f32.mrf.mxu0
        %1121 = vmatprep.mubr.bf16.mxu0 0
        %1122 = vmatmul.mubr.bf16.gmra.mxu0 %v933
        %v1123 = vpop.f32.mrf.mxu0
        %v1124 = vadd.f32 0.0, %v1123
        %v1125 = vpop.f32.mrf.mxu0
        %v1126 = vpop.f32.mrf.mxu0
        %v1127 = vadd.f32 0.0, %v1126
        %v1128 = vpop.f32.mrf.mxu0
        %1129 = vmatprep.mubr.bf16.mxu0 0
        %1130 = vmatmul.mubr.bf16.gmra.mxu0 %v936
        %v1131 = vpop.f32.mrf.mxu0
        %v1132 = vadd.f32 0.0, %v1131
        %v1133 = vpop.f32.mrf.mxu0
        %v1134 = vpop.f32.mrf.mxu0
        %v1135 = vadd.f32 0.0, %v1134
        %v1136 = vpop.f32.mrf.mxu0
        %1137 = vmatprep.mubr.bf16.mxu0 0
        %1138 = vmatmul.mubr.bf16.gmra.mxu0 %v939
        %v1139 = vpop.f32.mrf.mxu0
        %v1140 = vadd.f32 0.0, %v1139
        %v1141 = vpop.f32.mrf.mxu0
        %v1142 = vpop.f32.mrf.mxu0
        %v1143 = vadd.f32 0.0, %v1142
        %v1144 = vpop.f32.mrf.mxu0
        %1145 = vdwg.mxu0
        %vm1146 = vsmask.f32 5376
        %v1148 = vshrl.u32 %v778, 16
        %v1150 = vrot.slane %v1148, 2
        %v1151 = vshll.u32 %v778, 16
        %v1153 = vrot.slane %v1151, 3
        %v1154 = vor.u32 %v1150, %v1153
        %v1156 = vshrl.u32 %v779, 16
        %v1158 = vrot.slane %v1156, 2
        %v1159 = vshll.u32 %v779, 16
        %v1161 = vrot.slane %v1159, 3
        %v1162 = vor.u32 %v1158, %v1161
        %v1163 = vsel %vm1146, %v1154, %v1162
        %v1165 = vshrl.u32 %v780, 16
        %v1167 = vrot.slane %v1165, 2
        %v1168 = vshll.u32 %v780, 16
        %v1170 = vrot.slane %v1168, 3
        %v1171 = vor.u32 %v1167, %v1170
        %v1172 = vsel %vm1146, %v1162, %v1171
        %v1174 = vshrl.u32 %v781, 16
        %v1176 = vrot.slane %v1174, 2
        %v1177 = vshll.u32 %v781, 16
        %v1179 = vrot.slane %v1177, 3
        %v1180 = vor.u32 %v1176, %v1179
        %v1181 = vsel %vm1146, %v1171, %v1180
        %v1183 = vshrl.u32 %v782, 16
        %v1185 = vrot.slane %v1183, 2
        %v1186 = vshll.u32 %v782, 16
        %v1188 = vrot.slane %v1186, 3
        %v1189 = vor.u32 %v1185, %v1188
        %v1190 = vsel %vm1146, %v1180, %v1189
        %v1192 = vshrl.u32 %v783, 16
        %v1194 = vrot.slane %v1192, 2
        %v1195 = vshll.u32 %v783, 16
        %v1197 = vrot.slane %v1195, 3
        %v1198 = vor.u32 %v1194, %v1197
        %v1199 = vsel %vm1146, %v1189, %v1198
        %v1201 = vshrl.u32 %v784, 16
        %v1203 = vrot.slane %v1201, 2
        %v1204 = vshll.u32 %v784, 16
        %v1206 = vrot.slane %v1204, 3
        %v1207 = vor.u32 %v1203, %v1206
        %v1208 = vsel %vm1146, %v1198, %v1207
        %v1210 = vshrl.u32 %v785, 16
        %v1212 = vrot.slane %v1210, 2
        %v1213 = vshll.u32 %v785, 16
        %v1215 = vrot.slane %v1213, 3
        %v1216 = vor.u32 %v1212, %v1215
        %v1217 = vsel %vm1146, %v1207, %v1216
        %v1219 = vshrl.u32 %v786, 16
        %v1221 = vrot.slane %v1219, 2
        %v1222 = vshll.u32 %v786, 16
        %v1224 = vrot.slane %v1222, 3
        %v1225 = vor.u32 %v1221, %v1224
        %v1226 = vsel %vm1146, %v1216, %v1225
        %v1228 = vshrl.u32 %v787, 16
        %v1230 = vrot.slane %v1228, 2
        %v1231 = vshll.u32 %v787, 16
        %v1233 = vrot.slane %v1231, 3
        %v1234 = vor.u32 %v1230, %v1233
        %v1235 = vsel %vm1146, %v1225, %v1234
        %v1237 = vshrl.u32 %v788, 16
        %v1239 = vrot.slane %v1237, 2
        %v1240 = vshll.u32 %v788, 16
        %v1242 = vrot.slane %v1240, 3
        %v1243 = vor.u32 %v1239, %v1242
        %v1244 = vsel %vm1146, %v1234, %v1243
        %v1246 = vshrl.u32 %v789, 16
        %v1248 = vrot.slane %v1246, 2
        %v1249 = vshll.u32 %v789, 16
        %v1251 = vrot.slane %v1249, 3
        %v1252 = vor.u32 %v1248, %v1251
        %v1253 = vsel %vm1146, %v1243, %v1252
        %v1255 = vshrl.u32 %v790, 16
        %v1257 = vrot.slane %v1255, 2
        %v1258 = vshll.u32 %v790, 16
        %v1260 = vrot.slane %v1258, 3
        %v1261 = vor.u32 %v1257, %v1260
        %v1262 = vsel %vm1146, %v1252, %v1261
        %v1264 = vshrl.u32 %v791, 16
        %v1266 = vrot.slane %v1264, 2
        %v1267 = vshll.u32 %v791, 16
        %v1269 = vrot.slane %v1267, 3
        %v1270 = vor.u32 %v1266, %v1269
        %v1271 = vsel %vm1146, %v1261, %v1270
        %v1273 = vshrl.u32 %v792, 16
        %v1275 = vrot.slane %v1273, 2
        %v1276 = vshll.u32 %v792, 16
        %v1278 = vrot.slane %v1276, 3
        %v1279 = vor.u32 %v1275, %v1278
        %v1280 = vsel %vm1146, %v1270, %v1279
        %v1282 = vshrl.u32 %v793, 16
        %v1284 = vrot.slane %v1282, 2
        %v1285 = vshll.u32 %v793, 16
        %v1287 = vrot.slane %v1285, 3
        %v1288 = vor.u32 %v1284, %v1287
        %v1289 = vsel %vm1146, %v1279, %v1288
        %v1291 = vshrl.u32 %v794, 16
        %v1293 = vrot.slane %v1291, 2
        %v1294 = vshll.u32 %v794, 16
        %v1296 = vrot.slane %v1294, 3
        %v1297 = vor.u32 %v1293, %v1296
        %v1298 = vsel %vm1146, %v1288, %v1297
        %v1300 = vshrl.u32 %v795, 16
        %v1302 = vrot.slane %v1300, 2
        %v1303 = vshll.u32 %v795, 16
        %v1305 = vrot.slane %v1303, 3
        %v1306 = vor.u32 %v1302, %v1305
        %v1307 = vsel %vm1146, %v1297, %v1306
        %v1309 = vshrl.u32 %v796, 16
        %v1311 = vrot.slane %v1309, 2
        %v1312 = vshll.u32 %v796, 16
        %v1314 = vrot.slane %v1312, 3
        %v1315 = vor.u32 %v1311, %v1314
        %v1316 = vsel %vm1146, %v1306, %v1315
        %v1318 = vshrl.u32 %v797, 16
        %v1320 = vrot.slane %v1318, 2
        %v1321 = vshll.u32 %v797, 16
        %v1323 = vrot.slane %v1321, 3
        %v1324 = vor.u32 %v1320, %v1323
        %v1325 = vsel %vm1146, %v1315, %v1324
        %v1327 = vshrl.u32 %v798, 16
        %v1329 = vrot.slane %v1327, 2
        %v1330 = vshll.u32 %v798, 16
        %v1332 = vrot.slane %v1330, 3
        %v1333 = vor.u32 %v1329, %v1332
        %v1334 = vsel %vm1146, %v1324, %v1333
        %v1336 = vshrl.u32 %v799, 16
        %v1338 = vrot.slane %v1336, 2
        %v1339 = vshll.u32 %v799, 16
        %v1341 = vrot.slane %v1339, 3
        %v1342 = vor.u32 %v1338, %v1341
        %v1343 = vsel %vm1146, %v1333, %v1342
        %v1345 = vsel %vm877, %v1163, 0
        %v1348 = vsel %vm877, %v1172, 0
        %v1351 = vsel %vm877, %v1181, 0
        %v1354 = vsel %vm877, %v1190, 0
        %v1357 = vsel %vm877, %v1199, 0
        %v1360 = vsel %vm877, %v1208, 0
        %v1363 = vsel %vm877, %v1217, 0
        %v1366 = vsel %vm877, %v1226, 0
        %v1369 = vsel %vm877, %v1235, 0
        %v1372 = vsel %vm877, %v1244, 0
        %v1375 = vsel %vm877, %v1253, 0
        %v1378 = vsel %vm877, %v1262, 0
        %v1381 = vsel %vm877, %v1271, 0
        %v1384 = vsel %vm877, %v1280, 0
        %v1387 = vsel %vm877, %v1289, 0
        %v1390 = vsel %vm877, %v1298, 0
        %v1393 = vsel %vm877, %v1307, 0
        %v1396 = vsel %vm877, %v1316, 0
        %v1399 = vsel %vm877, %v1325, 0
        %v1402 = vsel %vm877, %v1334, 0
        %v1405 = vsel %vm877, %v1343, 0
        %v1408 = vsel %vm941, %v800, 0
        %1410 = vmatprep.subr.bf16.mxu0 0
        %1411 = vmatpush1.bf16.msra.mxu0 0
        %1412 = vmatprep.subr.bf16.mxu0 0
        %1413 = vmatpush1.bf16.msra.mxu0 0
        %1414 = vmatprep.subr.bf16.mxu0 0
        %1415 = vmatpush1.bf16.msra.mxu0 0
        %1416 = vmatprep.subr.bf16.mxu0 0
        %1417 = vmatpush1.bf16.msra.mxu0 0
        %1418 = vmatprep.subr.bf16.mxu0 0
        %1419 = vmatpush1.bf16.msra.mxu0 0
        %1420 = vmatprep.subr.bf16.mxu0 0
        %1421 = vmatpush1.bf16.msra.mxu0 0
        %1422 = vmatprep.subr.bf16.mxu0 0
        %1423 = vmatpush1.bf16.msra.mxu0 0
        %1424 = vmatprep.subr.bf16.mxu0 0
        %1425 = vmatpush1.bf16.msra.mxu0 %v1408
        %1426 = vmatprep.subr.bf16.mxu0 0
        %1427 = vmatpush2.bf16.msra.mxu0 0
        %1428 = vmatprep.subr.bf16.mxu0 0
        %1429 = vmatpush2.bf16.msra.mxu0 0
        %1430 = vmatprep.subr.bf16.mxu0 0
        %1431 = vmatpush2.bf16.msra.mxu0 0
        %1432 = vmatprep.subr.bf16.mxu0 0
        %1433 = vmatpush2.bf16.msra.mxu0 0
        %1434 = vmatprep.subr.bf16.mxu0 0
        %1435 = vmatpush2.bf16.msra.mxu0 0
        %1436 = vmatprep.subr.bf16.mxu0 0
        %1437 = vmatpush2.bf16.msra.mxu0 0
        %1438 = vmatprep.subr.bf16.mxu0 0
        %1439 = vmatpush2.bf16.msra.mxu0 0
        %1440 = vmatprep.subr.bf16.mxu0 0
        %1441 = vmatpush2.bf16.msra.mxu0 0
        %1442 = vmatprep.mubr.bf16.mxu0 0
        %1443 = vmatmul.mubr.bf16.gmra.mxu0 %v1345
        %v1444 = vpop.f32.mrf.mxu0
        %v1445 = vadd.f32 %v980, %v1444
        %v1446 = vpop.f32.mrf.mxu0
        %v1447 = vpop.f32.mrf.mxu0
        %v1448 = vadd.f32 %v983, %v1447
        %v1449 = vpop.f32.mrf.mxu0
        %1450 = vmatprep.mubr.bf16.mxu0 0
        %1451 = vmatmul.mubr.bf16.gmra.mxu0 %v1348
        %v1452 = vpop.f32.mrf.mxu0
        %v1453 = vadd.f32 %v988, %v1452
        %v1454 = vpop.f32.mrf.mxu0
        %v1455 = vpop.f32.mrf.mxu0
        %v1456 = vadd.f32 %v991, %v1455
        %v1457 = vpop.f32.mrf.mxu0
        %1458 = vmatprep.mubr.bf16.mxu0 0
        %1459 = vmatmul.mubr.bf16.gmra.mxu0 %v1351
        %v1460 = vpop.f32.mrf.mxu0
        %v1461 = vadd.f32 %v996, %v1460
        %v1462 = vpop.f32.mrf.mxu0
        %v1463 = vpop.f32.mrf.mxu0
        %v1464 = vadd.f32 %v999, %v1463
        %v1465 = vpop.f32.mrf.mxu0
        %1466 = vmatprep.mubr.bf16.mxu0 0
        %1467 = vmatmul.mubr.bf16.gmra.mxu0 %v1354
        %v1468 = vpop.f32.mrf.mxu0
        %v1469 = vadd.f32 %v1004, %v1468
        %v1470 = vpop.f32.mrf.mxu0
        %v1471 = vpop.f32.mrf.mxu0
        %v1472 = vadd.f32 %v1007, %v1471
        %v1473 = vpop.f32.mrf.mxu0
        %1474 = vmatprep.mubr.bf16.mxu0 0
        %1475 = vmatmul.mubr.bf16.gmra.mxu0 %v1357
        %v1476 = vpop.f32.mrf.mxu0
        %v1477 = vadd.f32 %v1012, %v1476
        %v1478 = vpop.f32.mrf.mxu0
        %v1479 = vpop.f32.mrf.mxu0
        %v1480 = vadd.f32 %v1015, %v1479
        %v1481 = vpop.f32.mrf.mxu0
        %1482 = vmatprep.mubr.bf16.mxu0 0
        %1483 = vmatmul.mubr.bf16.gmra.mxu0 %v1360
        %v1484 = vpop.f32.mrf.mxu0
        %v1485 = vadd.f32 %v1020, %v1484
        %v1486 = vpop.f32.mrf.mxu0
        %v1487 = vpop.f32.mrf.mxu0
        %v1488 = vadd.f32 %v1023, %v1487
        %v1489 = vpop.f32.mrf.mxu0
        %1490 = vmatprep.mubr.bf16.mxu0 0
        %1491 = vmatmul.mubr.bf16.gmra.mxu0 %v1363
        %v1492 = vpop.f32.mrf.mxu0
        %v1493 = vadd.f32 %v1028, %v1492
        %v1494 = vpop.f32.mrf.mxu0
        %v1495 = vpop.f32.mrf.mxu0
        %v1496 = vadd.f32 %v1031, %v1495
        %v1497 = vpop.f32.mrf.mxu0
        %1498 = vmatprep.mubr.bf16.mxu0 0
        %1499 = vmatmul.mubr.bf16.gmra.mxu0 %v1366
        %v1500 = vpop.f32.mrf.mxu0
        %v1501 = vadd.f32 %v1036, %v1500
        %v1502 = vpop.f32.mrf.mxu0
        %v1503 = vpop.f32.mrf.mxu0
        %v1504 = vadd.f32 %v1039, %v1503
        %v1505 = vpop.f32.mrf.mxu0
        %1506 = vmatprep.mubr.bf16.mxu0 0
        %1507 = vmatmul.mubr.bf16.gmra.mxu0 %v1369
        %v1508 = vpop.f32.mrf.mxu0
        %v1509 = vadd.f32 %v1044, %v1508
        %v1510 = vpop.f32.mrf.mxu0
        %v1511 = vpop.f32.mrf.mxu0
        %v1512 = vadd.f32 %v1047, %v1511
        %v1513 = vpop.f32.mrf.mxu0
        %1514 = vmatprep.mubr.bf16.mxu0 0
        %1515 = vmatmul.mubr.bf16.gmra.mxu0 %v1372
        %v1516 = vpop.f32.mrf.mxu0
        %v1517 = vadd.f32 %v1052, %v1516
        %v1518 = vpop.f32.mrf.mxu0
        %v1519 = vpop.f32.mrf.mxu0
        %v1520 = vadd.f32 %v1055, %v1519
        %v1521 = vpop.f32.mrf.mxu0
        %1522 = vmatprep.mubr.bf16.mxu0 0
        %1523 = vmatmul.mubr.bf16.gmra.mxu0 %v1375
        %v1524 = vpop.f32.mrf.mxu0
        %v1525 = vadd.f32 %v1060, %v1524
        %v1526 = vpop.f32.mrf.mxu0
        %v1527 = vpop.f32.mrf.mxu0
        %v1528 = vadd.f32 %v1063, %v1527
        %v1529 = vpop.f32.mrf.mxu0
        %1530 = vmatprep.mubr.bf16.mxu0 0
        %1531 = vmatmul.mubr.bf16.gmra.mxu0 %v1378
        %v1532 = vpop.f32.mrf.mxu0
        %v1533 = vadd.f32 %v1068, %v1532
        %v1534 = vpop.f32.mrf.mxu0
        %v1535 = vpop.f32.mrf.mxu0
        %v1536 = vadd.f32 %v1071, %v1535
        %v1537 = vpop.f32.mrf.mxu0
        %1538 = vmatprep.mubr.bf16.mxu0 0
        %1539 = vmatmul.mubr.bf16.gmra.mxu0 %v1381
        %v1540 = vpop.f32.mrf.mxu0
        %v1541 = vadd.f32 %v1076, %v1540
        %v1542 = vpop.f32.mrf.mxu0
        %v1543 = vpop.f32.mrf.mxu0
        %v1544 = vadd.f32 %v1079, %v1543
        %v1545 = vpop.f32.mrf.mxu0
        %1546 = vmatprep.mubr.bf16.mxu0 0
        %1547 = vmatmul.mubr.bf16.gmra.mxu0 %v1384
        %v1548 = vpop.f32.mrf.mxu0
        %v1549 = vadd.f32 %v1084, %v1548
        %v1550 = vpop.f32.mrf.mxu0
        %v1551 = vpop.f32.mrf.mxu0
        %v1552 = vadd.f32 %v1087, %v1551
        %v1553 = vpop.f32.mrf.mxu0
        %1554 = vmatprep.mubr.bf16.mxu0 0
        %1555 = vmatmul.mubr.bf16.gmra.mxu0 %v1387
        %v1556 = vpop.f32.mrf.mxu0
        %v1557 = vadd.f32 %v1092, %v1556
        %v1558 = vpop.f32.mrf.mxu0
        %v1559 = vpop.f32.mrf.mxu0
        %v1560 = vadd.f32 %v1095, %v1559
        %v1561 = vpop.f32.mrf.mxu0
        %1562 = vmatprep.mubr.bf16.mxu0 0
        %1563 = vmatmul.mubr.bf16.gmra.mxu0 %v1390
        %v1564 = vpop.f32.mrf.mxu0
        %v1565 = vadd.f32 %v1100, %v1564
        %v1566 = vpop.f32.mrf.mxu0
        %v1567 = vpop.f32.mrf.mxu0
        %v1568 = vadd.f32 %v1103, %v1567
        %v1569 = vpop.f32.mrf.mxu0
        %1570 = vmatprep.mubr.bf16.mxu0 0
        %1571 = vmatmul.mubr.bf16.gmra.mxu0 %v1393
        %v1572 = vpop.f32.mrf.mxu0
        %v1573 = vadd.f32 %v1108, %v1572
        %v1574 = vpop.f32.mrf.mxu0
        %v1575 = vpop.f32.mrf.mxu0
        %v1576 = vadd.f32 %v1111, %v1575
        %v1577 = vpop.f32.mrf.mxu0
        %1578 = vmatprep.mubr.bf16.mxu0 0
        %1579 = vmatmul.mubr.bf16.gmra.mxu0 %v1396
        %v1580 = vpop.f32.mrf.mxu0
        %v1581 = vadd.f32 %v1116, %v1580
        %v1582 = vpop.f32.mrf.mxu0
        %v1583 = vpop.f32.mrf.mxu0
        %v1584 = vadd.f32 %v1119, %v1583
        %v1585 = vpop.f32.mrf.mxu0
        %1586 = vmatprep.mubr.bf16.mxu0 0
        %1587 = vmatmul.mubr.bf16.gmra.mxu0 %v1399
        %v1588 = vpop.f32.mrf.mxu0
        %v1589 = vadd.f32 %v1124, %v1588
        %v1590 = vpop.f32.mrf.mxu0
        %v1591 = vpop.f32.mrf.mxu0
        %v1592 = vadd.f32 %v1127, %v1591
        %v1593 = vpop.f32.mrf.mxu0
        %1594 = vmatprep.mubr.bf16.mxu0 0
        %1595 = vmatmul.mubr.bf16.gmra.mxu0 %v1402
        %v1596 = vpop.f32.mrf.mxu0
        %v1597 = vadd.f32 %v1132, %v1596
        %v1598 = vpop.f32.mrf.mxu0
        %v1599 = vpop.f32.mrf.mxu0
        %v1600 = vadd.f32 %v1135, %v1599
        %v1601 = vpop.f32.mrf.mxu0
        %1602 = vmatprep.mubr.bf16.mxu0 0
        %1603 = vmatmul.mubr.bf16.gmra.mxu0 %v1405
        %v1604 = vpop.f32.mrf.mxu0
        %v1605 = vadd.f32 %v1140, %v1604
        %v1606 = vpop.f32.mrf.mxu0
        %v1607 = vpop.f32.mrf.mxu0
        %v1608 = vadd.f32 %v1143, %v1607
        %v1609 = vpop.f32.mrf.mxu0
        %1610 = vdwg.mxu0
        %v1611 = vld [vmem:[%s368 + $0xac] sm:$0xf]
        %v1612 = vunpack.c.l.bf16 %v1611
        %v1613 = vld [vmem:[%s373 + $0xac] sm:$0xf]
        %v1614 = vunpack.c.l.bf16 %v1613
        %v1615 = vmul.f32 %v647, %v1612
        %v1616 = vmul.f32 %v691, %v1614
        %v1617 = vadd.f32 %v1615, %v1616
        %v1618 = vpack.c.bf16 %v1617, %v1617
        %s1619 = scalar_lea.vmem %s3, 4
        %v1620 = vld [vmem:[%s1619] sm:$0x3]
        %vm1621 = vsmask.f32 4352
        %v1623 = vshrl.u32 %v808, 16
        %v1625 = vrot.slane %v1623, 3
        %v1626 = vshll.u32 %v808, 16
        %v1628 = vrot.slane %v1626, 4
        %v1629 = vor.u32 %v1625, %v1628
        %v1630 = vrot.slane %v1156, 3
        %v1631 = vrot.slane %v1159, 4
        %v1632 = vor.u32 %v1630, %v1631
        %v1633 = vsel %vm1621, %v1629, %v1632
        %v1634 = vrot.slane %v1165, 3
        %v1635 = vrot.slane %v1168, 4
        %v1636 = vor.u32 %v1634, %v1635
        %v1637 = vsel %vm1621, %v1632, %v1636
        %v1638 = vrot.slane %v1174, 3
        %v1639 = vrot.slane %v1177, 4
        %v1640 = vor.u32 %v1638, %v1639
        %v1641 = vsel %vm1621, %v1636, %v1640
        %v1642 = vrot.slane %v1183, 3
        %v1643 = vrot.slane %v1186, 4
        %v1644 = vor.u32 %v1642, %v1643
        %v1645 = vsel %vm1621, %v1640, %v1644
        %v1646 = vrot.slane %v1192, 3
        %v1647 = vrot.slane %v1195, 4
        %v1648 = vor.u32 %v1646, %v1647
        %v1649 = vsel %vm1621, %v1644, %v1648
        %v1650 = vrot.slane %v1201, 3
        %v1651 = vrot.slane %v1204, 4
        %v1652 = vor.u32 %v1650, %v1651
        %v1653 = vsel %vm1621, %v1648, %v1652
        %v1654 = vrot.slane %v1210, 3
        %v1655 = vrot.slane %v1213, 4
        %v1656 = vor.u32 %v1654, %v1655
        %v1657 = vsel %vm1621, %v1652, %v1656
        %v1658 = vrot.slane %v1219, 3
        %v1659 = vrot.slane %v1222, 4
        %v1660 = vor.u32 %v1658, %v1659
        %v1661 = vsel %vm1621, %v1656, %v1660
        %v1662 = vrot.slane %v1228, 3
        %v1663 = vrot.slane %v1231, 4
        %v1664 = vor.u32 %v1662, %v1663
        %v1665 = vsel %vm1621, %v1660, %v1664
        %v1666 = vrot.slane %v1237, 3
        %v1667 = vrot.slane %v1240, 4
        %v1668 = vor.u32 %v1666, %v1667
        %v1669 = vsel %vm1621, %v1664, %v1668
        %v1670 = vrot.slane %v1246, 3
        %v1671 = vrot.slane %v1249, 4
        %v1672 = vor.u32 %v1670, %v1671
        %v1673 = vsel %vm1621, %v1668, %v1672
        %v1674 = vrot.slane %v1255, 3
        %v1675 = vrot.slane %v1258, 4
        %v1676 = vor.u32 %v1674, %v1675
        %v1677 = vsel %vm1621, %v1672, %v1676
        %v1678 = vrot.slane %v1264, 3
        %v1679 = vrot.slane %v1267, 4
        %v1680 = vor.u32 %v1678, %v1679
        %v1681 = vsel %vm1621, %v1676, %v1680
        %v1682 = vrot.slane %v1273, 3
        %v1683 = vrot.slane %v1276, 4
        %v1684 = vor.u32 %v1682, %v1683
        %v1685 = vsel %vm1621, %v1680, %v1684
        %v1686 = vrot.slane %v1282, 3
        %v1687 = vrot.slane %v1285, 4
        %v1688 = vor.u32 %v1686, %v1687
        %v1689 = vsel %vm1621, %v1684, %v1688
        %v1690 = vrot.slane %v1291, 3
        %v1691 = vrot.slane %v1294, 4
        %v1692 = vor.u32 %v1690, %v1691
        %v1693 = vsel %vm1621, %v1688, %v1692
        %v1694 = vrot.slane %v1300, 3
        %v1695 = vrot.slane %v1303, 4
        %v1696 = vor.u32 %v1694, %v1695
        %v1697 = vsel %vm1621, %v1692, %v1696
        %v1698 = vrot.slane %v1309, 3
        %v1699 = vrot.slane %v1312, 4
        %v1700 = vor.u32 %v1698, %v1699
        %v1701 = vsel %vm1621, %v1696, %v1700
        %v1702 = vrot.slane %v1318, 3
        %v1703 = vrot.slane %v1321, 4
        %v1704 = vor.u32 %v1702, %v1703
        %v1705 = vsel %vm1621, %v1700, %v1704
        %v1706 = vrot.slane %v1327, 3
        %v1707 = vrot.slane %v1330, 4
        %v1708 = vor.u32 %v1706, %v1707
        %v1709 = vsel %vm1621, %v1704, %v1708
        %v1711 = vshrl.u32 %v1618, 16
        %v1713 = vrot.slane %v1711, 3
        %v1714 = vshll.u32 %v1618, 16
        %v1716 = vrot.slane %v1714, 4
        %v1717 = vor.u32 %v1713, %v1716
        %v1718 = vsel %vm1621, %v1708, %v1717
        %v1720 = vsel %vm877, %v1633, 0
        %v1723 = vsel %vm877, %v1637, 0
        %v1726 = vsel %vm877, %v1641, 0
        %v1729 = vsel %vm877, %v1645, 0
        %v1732 = vsel %vm877, %v1649, 0
        %v1735 = vsel %vm877, %v1653, 0
        %v1738 = vsel %vm877, %v1657, 0
        %v1741 = vsel %vm877, %v1661, 0
        %v1744 = vsel %vm877, %v1665, 0
        %v1747 = vsel %vm877, %v1669, 0
        %v1750 = vsel %vm877, %v1673, 0
        %v1753 = vsel %vm877, %v1677, 0
        %v1756 = vsel %vm877, %v1681, 0
        %v1759 = vsel %vm877, %v1685, 0
        %v1762 = vsel %vm877, %v1689, 0
        %v1765 = vsel %vm877, %v1693, 0
        %v1768 = vsel %vm877, %v1697, 0
        %v1771 = vsel %vm877, %v1701, 0
        %v1774 = vsel %vm877, %v1705, 0
        %v1777 = vsel %vm877, %v1709, 0
        %v1780 = vsel %vm877, %v1718, 0
        %v1783 = vsel %vm941, %v1620, 0
        %1785 = vmatprep.subr.bf16.mxu0 0
        %1786 = vmatpush1.bf16.msra.mxu0 0
        %1787 = vmatprep.subr.bf16.mxu0 0
        %1788 = vmatpush1.bf16.msra.mxu0 0
        %1789 = vmatprep.subr.bf16.mxu0 0
        %1790 = vmatpush1.bf16.msra.mxu0 0
        %1791 = vmatprep.subr.bf16.mxu0 0
        %1792 = vmatpush1.bf16.msra.mxu0 0
        %1793 = vmatprep.subr.bf16.mxu0 0
        %1794 = vmatpush1.bf16.msra.mxu0 0
        %1795 = vmatprep.subr.bf16.mxu0 0
        %1796 = vmatpush1.bf16.msra.mxu0 0
        %1797 = vmatprep.subr.bf16.mxu0 0
        %1798 = vmatpush1.bf16.msra.mxu0 0
        %1799 = vmatprep.subr.bf16.mxu0 0
        %1800 = vmatpush1.bf16.msra.mxu0 %v1783
        %1801 = vmatprep.subr.bf16.mxu0 0
        %1802 = vmatpush2.bf16.msra.mxu0 0
        %1803 = vmatprep.subr.bf16.mxu0 0
        %1804 = vmatpush2.bf16.msra.mxu0 0
        %1805 = vmatprep.subr.bf16.mxu0 0
        %1806 = vmatpush2.bf16.msra.mxu0 0
        %1807 = vmatprep.subr.bf16.mxu0 0
        %1808 = vmatpush2.bf16.msra.mxu0 0
        %1809 = vmatprep.subr.bf16.mxu0 0
        %1810 = vmatpush2.bf16.msra.mxu0 0
        %1811 = vmatprep.subr.bf16.mxu0 0
        %1812 = vmatpush2.bf16.msra.mxu0 0
        %1813 = vmatprep.subr.bf16.mxu0 0
        %1814 = vmatpush2.bf16.msra.mxu0 0
        %1815 = vmatprep.subr.bf16.mxu0 0
        %1816 = vmatpush2.bf16.msra.mxu0 0
        %1817 = vmatprep.mubr.bf16.mxu0 0
        %1818 = vmatmul.mubr.bf16.gmra.mxu0 %v1720
        %v1819 = vpop.f32.mrf.mxu0
        %v1820 = vadd.f32 0.0, %v1819
        %v1821 = vpop.f32.mrf.mxu0
        %v1822 = vpop.f32.mrf.mxu0
        %v1823 = vadd.f32 0.0, %v1822
        %v1824 = vpop.f32.mrf.mxu0
        %1825 = vmatprep.mubr.bf16.mxu0 0
        %1826 = vmatmul.mubr.bf16.gmra.mxu0 %v1723
        %v1827 = vpop.f32.mrf.mxu0
        %v1828 = vadd.f32 0.0, %v1827
        %v1829 = vpop.f32.mrf.mxu0
        %v1830 = vpop.f32.mrf.mxu0
        %v1831 = vadd.f32 0.0, %v1830
        %v1832 = vpop.f32.mrf.mxu0
        %1833 = vmatprep.mubr.bf16.mxu0 0
        %1834 = vmatmul.mubr.bf16.gmra.mxu0 %v1726
        %v1835 = vpop.f32.mrf.mxu0
        %v1836 = vadd.f32 0.0, %v1835
        %v1837 = vpop.f32.mrf.mxu0
        %v1838 = vpop.f32.mrf.mxu0
        %v1839 = vadd.f32 0.0, %v1838
        %v1840 = vpop.f32.mrf.mxu0
        %1841 = vmatprep.mubr.bf16.mxu0 0
        %1842 = vmatmul.mubr.bf16.gmra.mxu0 %v1729
        %v1843 = vpop.f32.mrf.mxu0
        %v1844 = vadd.f32 0.0, %v1843
        %v1845 = vpop.f32.mrf.mxu0
        %v1846 = vpop.f32.mrf.mxu0
        %v1847 = vadd.f32 0.0, %v1846
        %v1848 = vpop.f32.mrf.mxu0
        %1849 = vmatprep.mubr.bf16.mxu0 0
        %1850 = vmatmul.mubr.bf16.gmra.mxu0 %v1732
        %v1851 = vpop.f32.mrf.mxu0
        %v1852 = vadd.f32 0.0, %v1851
        %v1853 = vpop.f32.mrf.mxu0
        %v1854 = vpop.f32.mrf.mxu0
        %v1855 = vadd.f32 0.0, %v1854
        %v1856 = vpop.f32.mrf.mxu0
        %1857 = vmatprep.mubr.bf16.mxu0 0
        %1858 = vmatmul.mubr.bf16.gmra.mxu0 %v1735
        %v1859 = vpop.f32.mrf.mxu0
        %v1860 = vadd.f32 0.0, %v1859
        %v1861 = vpop.f32.mrf.mxu0
        %v1862 = vpop.f32.mrf.mxu0
        %v1863 = vadd.f32 0.0, %v1862
        %v1864 = vpop.f32.mrf.mxu0
        %1865 = vmatprep.mubr.bf16.mxu0 0
        %1866 = vmatmul.mubr.bf16.gmra.mxu0 %v1738
        %v1867 = vpop.f32.mrf.mxu0
        %v1868 = vadd.f32 0.0, %v1867
        %v1869 = vpop.f32.mrf.mxu0
        %v1870 = vpop.f32.mrf.mxu0
        %v1871 = vadd.f32 0.0, %v1870
        %v1872 = vpop.f32.mrf.mxu0
        %1873 = vmatprep.mubr.bf16.mxu0 0
        %1874 = vmatmul.mubr.bf16.gmra.mxu0 %v1741
        %v1875 = vpop.f32.mrf.mxu0
        %v1876 = vadd.f32 0.0, %v1875
        %v1877 = vpop.f32.mrf.mxu0
        %v1878 = vpop.f32.mrf.mxu0
        %v1879 = vadd.f32 0.0, %v1878
        %v1880 = vpop.f32.mrf.mxu0
        %1881 = vmatprep.mubr.bf16.mxu0 0
        %1882 = vmatmul.mubr.bf16.gmra.mxu0 %v1744
        %v1883 = vpop.f32.mrf.mxu0
        %v1884 = vadd.f32 0.0, %v1883
        %v1885 = vpop.f32.mrf.mxu0
        %v1886 = vpop.f32.mrf.mxu0
        %v1887 = vadd.f32 0.0, %v1886
        %v1888 = vpop.f32.mrf.mxu0
        %1889 = vmatprep.mubr.bf16.mxu0 0
        %1890 = vmatmul.mubr.bf16.gmra.mxu0 %v1747
        %v1891 = vpop.f32.mrf.mxu0
        %v1892 = vadd.f32 0.0, %v1891
        %v1893 = vpop.f32.mrf.mxu0
        %v1894 = vpop.f32.mrf.mxu0
        %v1895 = vadd.f32 0.0, %v1894
        %v1896 = vpop.f32.mrf.mxu0
        %1897 = vmatprep.mubr.bf16.mxu0 0
        %1898 = vmatmul.mubr.bf16.gmra.mxu0 %v1750
        %v1899 = vpop.f32.mrf.mxu0
        %v1900 = vadd.f32 0.0, %v1899
        %v1901 = vpop.f32.mrf.mxu0
        %v1902 = vpop.f32.mrf.mxu0
        %v1903 = vadd.f32 0.0, %v1902
        %v1904 = vpop.f32.mrf.mxu0
        %1905 = vmatprep.mubr.bf16.mxu0 0
        %1906 = vmatmul.mubr.bf16.gmra.mxu0 %v1753
        %v1907 = vpop.f32.mrf.mxu0
        %v1908 = vadd.f32 0.0, %v1907
        %v1909 = vpop.f32.mrf.mxu0
        %v1910 = vpop.f32.mrf.mxu0
        %v1911 = vadd.f32 0.0, %v1910
        %v1912 = vpop.f32.mrf.mxu0
        %1913 = vmatprep.mubr.bf16.mxu0 0
        %1914 = vmatmul.mubr.bf16.gmra.mxu0 %v1756
        %v1915 = vpop.f32.mrf.mxu0
        %v1916 = vadd.f32 0.0, %v1915
        %v1917 = vpop.f32.mrf.mxu0
        %v1918 = vpop.f32.mrf.mxu0
        %v1919 = vadd.f32 0.0, %v1918
        %v1920 = vpop.f32.mrf.mxu0
        %1921 = vmatprep.mubr.bf16.mxu0 0
        %1922 = vmatmul.mubr.bf16.gmra.mxu0 %v1759
        %v1923 = vpop.f32.mrf.mxu0
        %v1924 = vadd.f32 0.0, %v1923
        %v1925 = vpop.f32.mrf.mxu0
        %v1926 = vpop.f32.mrf.mxu0
        %v1927 = vadd.f32 0.0, %v1926
        %v1928 = vpop.f32.mrf.mxu0
        %1929 = vmatprep.mubr.bf16.mxu0 0
        %1930 = vmatmul.mubr.bf16.gmra.mxu0 %v1762
        %v1931 = vpop.f32.mrf.mxu0
        %v1932 = vadd.f32 0.0, %v1931
        %v1933 = vpop.f32.mrf.mxu0
        %v1934 = vpop.f32.mrf.mxu0
        %v1935 = vadd.f32 0.0, %v1934
        %v1936 = vpop.f32.mrf.mxu0
        %1937 = vmatprep.mubr.bf16.mxu0 0
        %1938 = vmatmul.mubr.bf16.gmra.mxu0 %v1765
        %v1939 = vpop.f32.mrf.mxu0
        %v1940 = vadd.f32 0.0, %v1939
        %v1941 = vpop.f32.mrf.mxu0
        %v1942 = vpop.f32.mrf.mxu0
        %v1943 = vadd.f32 0.0, %v1942
        %v1944 = vpop.f32.mrf.mxu0
        %1945 = vmatprep.mubr.bf16.mxu0 0
        %1946 = vmatmul.mubr.bf16.gmra.mxu0 %v1768
        %v1947 = vpop.f32.mrf.mxu0
        %v1948 = vadd.f32 0.0, %v1947
        %v1949 = vpop.f32.mrf.mxu0
        %v1950 = vpop.f32.mrf.mxu0
        %v1951 = vadd.f32 0.0, %v1950
        %v1952 = vpop.f32.mrf.mxu0
        %1953 = vmatprep.mubr.bf16.mxu0 0
        %1954 = vmatmul.mubr.bf16.gmra.mxu0 %v1771
        %v1955 = vpop.f32.mrf.mxu0
        %v1956 = vadd.f32 0.0, %v1955
        %v1957 = vpop.f32.mrf.mxu0
        %v1958 = vpop.f32.mrf.mxu0
        %v1959 = vadd.f32 0.0, %v1958
        %v1960 = vpop.f32.mrf.mxu0
        %1961 = vmatprep.mubr.bf16.mxu0 0
        %1962 = vmatmul.mubr.bf16.gmra.mxu0 %v1774
        %v1963 = vpop.f32.mrf.mxu0
        %v1964 = vadd.f32 0.0, %v1963
        %v1965 = vpop.f32.mrf.mxu0
        %v1966 = vpop.f32.mrf.mxu0
        %v1967 = vadd.f32 0.0, %v1966
        %v1968 = vpop.f32.mrf.mxu0
        %1969 = vmatprep.mubr.bf16.mxu0 0
        %1970 = vmatmul.mubr.bf16.gmra.mxu0 %v1777
        %v1971 = vpop.f32.mrf.mxu0
        %v1972 = vadd.f32 0.0, %v1971
        %v1973 = vpop.f32.mrf.mxu0
        %v1974 = vpop.f32.mrf.mxu0
        %v1975 = vadd.f32 0.0, %v1974
        %v1976 = vpop.f32.mrf.mxu0
        %1977 = vmatprep.mubr.bf16.mxu0 0
        %1978 = vmatmul.mubr.bf16.gmra.mxu0 %v1780
        %v1979 = vpop.f32.mrf.mxu0
        %v1980 = vadd.f32 0.0, %v1979
        %v1981 = vpop.f32.mrf.mxu0
        %v1982 = vpop.f32.mrf.mxu0
        %v1983 = vadd.f32 0.0, %v1982
        %v1984 = vpop.f32.mrf.mxu0
        %1985 = vdwg.mxu0
        %v1986 = vadd.f32 %v1445, %v1820
        %v1987 = vadd.f32 %v1448, %v1823
        %v1988 = vadd.f32 %v1453, %v1828
        %v1989 = vadd.f32 %v1456, %v1831
        %v1990 = vadd.f32 %v1461, %v1836
        %v1991 = vadd.f32 %v1464, %v1839
        %v1992 = vadd.f32 %v1469, %v1844
        %v1993 = vadd.f32 %v1472, %v1847
        %v1994 = vadd.f32 %v1477, %v1852
        %v1995 = vadd.f32 %v1480, %v1855
        %v1996 = vadd.f32 %v1485, %v1860
        %v1997 = vadd.f32 %v1488, %v1863
        %v1998 = vadd.f32 %v1493, %v1868
        %v1999 = vadd.f32 %v1496, %v1871
        %v2000 = vadd.f32 %v1501, %v1876
        %v2001 = vadd.f32 %v1504, %v1879
        %v2002 = vadd.f32 %v1509, %v1884
        %v2003 = vadd.f32 %v1512, %v1887
        %v2004 = vadd.f32 %v1517, %v1892
        %v2005 = vadd.f32 %v1520, %v1895
        %v2006 = vadd.f32 %v1525, %v1900
        %v2007 = vadd.f32 %v1528, %v1903
        %v2008 = vadd.f32 %v1533, %v1908
        %v2009 = vadd.f32 %v1536, %v1911
        %v2010 = vadd.f32 %v1541, %v1916
        %v2011 = vadd.f32 %v1544, %v1919
        %v2012 = vadd.f32 %v1549, %v1924
        %v2013 = vadd.f32 %v1552, %v1927
        %v2014 = vadd.f32 %v1557, %v1932
        %v2015 = vadd.f32 %v1560, %v1935
        %v2016 = vadd.f32 %v1565, %v1940
        %v2017 = vadd.f32 %v1568, %v1943
        %v2018 = vadd.f32 %v1573, %v1948
        %v2019 = vadd.f32 %v1576, %v1951
        %v2020 = vadd.f32 %v1581, %v1956
        %v2021 = vadd.f32 %v1584, %v1959
        %v2022 = vadd.f32 %v1589, %v1964
        %v2023 = vadd.f32 %v1592, %v1967
        %v2024 = vadd.f32 %v1597, %v1972
        %v2025 = vadd.f32 %v1600, %v1975
        %v2026 = vadd.f32 %v1605, %v1980
        %v2027 = vadd.f32 %v1608, %v1983
        %v2028 = vld [vmem:[%s368 + $0xc] sm:$0x8]
        %v2029 = vld [vmem:[%s368 + $0x10] sm:$0xf]
        %v2030 = vld [vmem:[%s368 + $0x14] sm:$0xf]
        %v2031 = vld [vmem:[%s368 + $0x18] sm:$0xf]
        %v2032 = vld [vmem:[%s368 + $0x1c] sm:$0xf]
        %v2033 = vld [vmem:[%s368 + $0x20] sm:$0xf]
        %v2034 = vld [vmem:[%s368 + $0x24] sm:$0xf]
        %v2035 = vld [vmem:[%s368 + $0x28] sm:$0xf]
        %v2036 = vld [vmem:[%s368 + $0x2c] sm:$0xf]
        %v2037 = vld [vmem:[%s368 + $0x30] sm:$0xf]
        %v2038 = vld [vmem:[%s368 + $0x34] sm:$0xf]
        %v2039 = vld [vmem:[%s368 + $0x38] sm:$0xf]
        %v2040 = vld [vmem:[%s368 + $0x3c] sm:$0xf]
        %v2041 = vld [vmem:[%s368 + $0x40] sm:$0xf]
        %v2042 = vld [vmem:[%s368 + $0x44] sm:$0xf]
        %v2043 = vld [vmem:[%s368 + $0x48] sm:$0xf]
        %v2044 = vld [vmem:[%s368 + $0x4c] sm:$0xf]
        %v2045 = vld [vmem:[%s368 + $0x50] sm:$0xf]
        %v2046 = vld [vmem:[%s368 + $0x54] sm:$0xf]
        %v2047 = vld [vmem:[%s368 + $0x58] sm:$0xf]
        %v2048 = vld [vmem:[%s368 + $0x5c] sm:$0xf]
        %v2049 = vld [vmem:[%s368 + $0x60] sm:$0xf]
        %v2050 = vld [vmem:[%s368 + $0x64] sm:$0xf]
        %v2051 = vld [vmem:[%s368 + $0x68] sm:$0xf]
        %v2052 = vld [vmem:[%s368 + $0x6c] sm:$0xf]
        %v2053 = vld [vmem:[%s368 + $0x70] sm:$0xf]
        %v2054 = vld [vmem:[%s368 + $0x74] sm:$0xf]
        %v2055 = vld [vmem:[%s368 + $0x78] sm:$0xf]
        %v2056 = vld [vmem:[%s368 + $0x7c] sm:$0xf]
        %v2057 = vld [vmem:[%s368 + $0x80] sm:$0xf]
        %v2058 = vld [vmem:[%s368 + $0x84] sm:$0xf]
        %v2059 = vld [vmem:[%s368 + $0x88] sm:$0xf]
        %v2060 = vld [vmem:[%s368 + $0x8c] sm:$0xf]
        %v2061 = vld [vmem:[%s368 + $0x90] sm:$0xf]
        %v2062 = vld [vmem:[%s368 + $0x94] sm:$0xf]
        %v2063 = vld [vmem:[%s368 + $0x98] sm:$0xf]
        %v2064 = vld [vmem:[%s368 + $0x9c] sm:$0xf]
        %v2065 = vld [vmem:[%s368 + $0xa0] sm:$0xf]
        %v2066 = vld [vmem:[%s368 + $0xa4] sm:$0xf]
        %v2067 = vld [vmem:[%s368 + $0xa8] sm:$0xf]
        %v2068 = vld [vmem:[%s368 + $0xac] sm:$0xf]
        %v2069 = vld [vmem:[%s368 + $0xb0] sm:$0xf]
        %v2070 = vld [vmem:[%s368 + $0xb4] sm:$0xf]
        %v2071 = vunpack.c.l.bf16 %v2028
        %v2072 = vunpack.c.l.bf16 %v2029
        %v2073 = vunpack.c.l.bf16 %v2030
        %v2074 = vunpack.c.l.bf16 %v2031
        %v2075 = vunpack.c.l.bf16 %v2032
        %v2076 = vunpack.c.l.bf16 %v2033
        %v2077 = vunpack.c.l.bf16 %v2034
        %v2078 = vunpack.c.l.bf16 %v2035
        %v2079 = vunpack.c.l.bf16 %v2036
        %v2080 = vunpack.c.l.bf16 %v2037
        %v2081 = vunpack.c.l.bf16 %v2038
        %v2082 = vunpack.c.l.bf16 %v2039
        %v2083 = vunpack.c.l.bf16 %v2040
        %v2084 = vunpack.c.l.bf16 %v2041
        %v2085 = vunpack.c.l.bf16 %v2042
        %v2086 = vunpack.c.l.bf16 %v2043
        %v2087 = vunpack.c.l.bf16 %v2044
        %v2088 = vunpack.c.l.bf16 %v2045
        %v2089 = vunpack.c.l.bf16 %v2046
        %v2090 = vunpack.c.l.bf16 %v2047
        %v2091 = vunpack.c.l.bf16 %v2048
        %v2092 = vunpack.c.l.bf16 %v2049
        %v2093 = vunpack.c.l.bf16 %v2050
        %v2094 = vunpack.c.l.bf16 %v2051
        %v2095 = vunpack.c.l.bf16 %v2052
        %v2096 = vunpack.c.l.bf16 %v2053
        %v2097 = vunpack.c.l.bf16 %v2054
        %v2098 = vunpack.c.l.bf16 %v2055
        %v2099 = vunpack.c.l.bf16 %v2056
        %v2100 = vunpack.c.l.bf16 %v2057
        %v2101 = vunpack.c.l.bf16 %v2058
        %v2102 = vunpack.c.l.bf16 %v2059
        %v2103 = vunpack.c.l.bf16 %v2060
        %v2104 = vunpack.c.l.bf16 %v2061
        %v2105 = vunpack.c.l.bf16 %v2062
        %v2106 = vunpack.c.l.bf16 %v2063
        %v2107 = vunpack.c.l.bf16 %v2064
        %v2108 = vunpack.c.l.bf16 %v2065
        %v2109 = vunpack.c.l.bf16 %v2066
        %v2110 = vunpack.c.l.bf16 %v2067
        %v2111 = vunpack.c.l.bf16 %v2068
        %v2112 = vunpack.c.l.bf16 %v2069
        %v2113 = vunpack.c.l.bf16 %v2070
        %v2114 = vld [vmem:[%s373 + $0xc] sm:$0x8]
        %v2115 = vld [vmem:[%s373 + $0x10] sm:$0xf]
        %v2116 = vld [vmem:[%s373 + $0x14] sm:$0xf]
        %v2117 = vld [vmem:[%s373 + $0x18] sm:$0xf]
        %v2118 = vld [vmem:[%s373 + $0x1c] sm:$0xf]
        %v2119 = vld [vmem:[%s373 + $0x20] sm:$0xf]
        %v2120 = vld [vmem:[%s373 + $0x24] sm:$0xf]
        %v2121 = vld [vmem:[%s373 + $0x28] sm:$0xf]
        %v2122 = vld [vmem:[%s373 + $0x2c] sm:$0xf]
        %v2123 = vld [vmem:[%s373 + $0x30] sm:$0xf]
        %v2124 = vld [vmem:[%s373 + $0x34] sm:$0xf]
        %v2125 = vld [vmem:[%s373 + $0x38] sm:$0xf]
        %v2126 = vld [vmem:[%s373 + $0x3c] sm:$0xf]
        %v2127 = vld [vmem:[%s373 + $0x40] sm:$0xf]
        %v2128 = vld [vmem:[%s373 + $0x44] sm:$0xf]
        %v2129 = vld [vmem:[%s373 + $0x48] sm:$0xf]
        %v2130 = vld [vmem:[%s373 + $0x4c] sm:$0xf]
        %v2131 = vld [vmem:[%s373 + $0x50] sm:$0xf]
        %v2132 = vld [vmem:[%s373 + $0x54] sm:$0xf]
        %v2133 = vld [vmem:[%s373 + $0x58] sm:$0xf]
        %v2134 = vld [vmem:[%s373 + $0x5c] sm:$0xf]
        %v2135 = vld [vmem:[%s373 + $0x60] sm:$0xf]
        %v2136 = vld [vmem:[%s373 + $0x64] sm:$0xf]
        %v2137 = vld [vmem:[%s373 + $0x68] sm:$0xf]
        %v2138 = vld [vmem:[%s373 + $0x6c] sm:$0xf]
        %v2139 = vld [vmem:[%s373 + $0x70] sm:$0xf]
        %v2140 = vld [vmem:[%s373 + $0x74] sm:$0xf]
        %v2141 = vld [vmem:[%s373 + $0x78] sm:$0xf]
        %v2142 = vld [vmem:[%s373 + $0x7c] sm:$0xf]
        %v2143 = vld [vmem:[%s373 + $0x80] sm:$0xf]
        %v2144 = vld [vmem:[%s373 + $0x84] sm:$0xf]
        %v2145 = vld [vmem:[%s373 + $0x88] sm:$0xf]
        %v2146 = vld [vmem:[%s373 + $0x8c] sm:$0xf]
        %v2147 = vld [vmem:[%s373 + $0x90] sm:$0xf]
        %v2148 = vld [vmem:[%s373 + $0x94] sm:$0xf]
        %v2149 = vld [vmem:[%s373 + $0x98] sm:$0xf]
        %v2150 = vld [vmem:[%s373 + $0x9c] sm:$0xf]
        %v2151 = vld [vmem:[%s373 + $0xa0] sm:$0xf]
        %v2152 = vld [vmem:[%s373 + $0xa4] sm:$0xf]
        %v2153 = vld [vmem:[%s373 + $0xa8] sm:$0xf]
        %v2154 = vld [vmem:[%s373 + $0xac] sm:$0xf]
        %v2155 = vld [vmem:[%s373 + $0xb0] sm:$0xf]
        %v2156 = vld [vmem:[%s373 + $0xb4] sm:$0xf]
        %v2157 = vunpack.c.l.bf16 %v2114
        %v2158 = vunpack.c.l.bf16 %v2115
        %v2159 = vunpack.c.l.bf16 %v2116
        %v2160 = vunpack.c.l.bf16 %v2117
        %v2161 = vunpack.c.l.bf16 %v2118
        %v2162 = vunpack.c.l.bf16 %v2119
        %v2163 = vunpack.c.l.bf16 %v2120
        %v2164 = vunpack.c.l.bf16 %v2121
        %v2165 = vunpack.c.l.bf16 %v2122
        %v2166 = vunpack.c.l.bf16 %v2123
        %v2167 = vunpack.c.l.bf16 %v2124
        %v2168 = vunpack.c.l.bf16 %v2125
        %v2169 = vunpack.c.l.bf16 %v2126
        %v2170 = vunpack.c.l.bf16 %v2127
        %v2171 = vunpack.c.l.bf16 %v2128
        %v2172 = vunpack.c.l.bf16 %v2129
        %v2173 = vunpack.c.l.bf16 %v2130
        %v2174 = vunpack.c.l.bf16 %v2131
        %v2175 = vunpack.c.l.bf16 %v2132
        %v2176 = vunpack.c.l.bf16 %v2133
        %v2177 = vunpack.c.l.bf16 %v2134
        %v2178 = vunpack.c.l.bf16 %v2135
        %v2179 = vunpack.c.l.bf16 %v2136
        %v2180 = vunpack.c.l.bf16 %v2137
        %v2181 = vunpack.c.l.bf16 %v2138
        %v2182 = vunpack.c.l.bf16 %v2139
        %v2183 = vunpack.c.l.bf16 %v2140
        %v2184 = vunpack.c.l.bf16 %v2141
        %v2185 = vunpack.c.l.bf16 %v2142
        %v2186 = vunpack.c.l.bf16 %v2143
        %v2187 = vunpack.c.l.bf16 %v2144
        %v2188 = vunpack.c.l.bf16 %v2145
        %v2189 = vunpack.c.l.bf16 %v2146
        %v2190 = vunpack.c.l.bf16 %v2147
        %v2191 = vunpack.c.l.bf16 %v2148
        %v2192 = vunpack.c.l.bf16 %v2149
        %v2193 = vunpack.c.l.bf16 %v2150
        %v2194 = vunpack.c.l.bf16 %v2151
        %v2195 = vunpack.c.l.bf16 %v2152
        %v2196 = vunpack.c.l.bf16 %v2153
        %v2197 = vunpack.c.l.bf16 %v2154
        %v2198 = vunpack.c.l.bf16 %v2155
        %v2199 = vunpack.c.l.bf16 %v2156
        %v2200 = vmul.f32 %v647, %v2071
        %v2201 = vmul.f32 %v647, %v2072
        %v2202 = vmul.f32 %v647, %v2073
        %v2203 = vmul.f32 %v647, %v2074
        %v2204 = vmul.f32 %v647, %v2075
        %v2205 = vmul.f32 %v647, %v2076
        %v2206 = vmul.f32 %v647, %v2077
        %v2207 = vmul.f32 %v647, %v2078
        %v2208 = vmul.f32 %v647, %v2079
        %v2209 = vmul.f32 %v647, %v2080
        %v2210 = vmul.f32 %v647, %v2081
        %v2211 = vmul.f32 %v647, %v2082
        %v2212 = vmul.f32 %v647, %v2083
        %v2213 = vmul.f32 %v647, %v2084
        %v2214 = vmul.f32 %v647, %v2085
        %v2215 = vmul.f32 %v647, %v2086
        %v2216 = vmul.f32 %v647, %v2087
        %v2217 = vmul.f32 %v647, %v2088
        %v2218 = vmul.f32 %v647, %v2089
        %v2219 = vmul.f32 %v647, %v2090
        %v2220 = vmul.f32 %v647, %v2091
        %v2221 = vmul.f32 %v647, %v2092
        %v2222 = vmul.f32 %v647, %v2093
        %v2223 = vmul.f32 %v647, %v2094
        %v2224 = vmul.f32 %v647, %v2095
        %v2225 = vmul.f32 %v647, %v2096
        %v2226 = vmul.f32 %v647, %v2097
        %v2227 = vmul.f32 %v647, %v2098
        %v2228 = vmul.f32 %v647, %v2099
        %v2229 = vmul.f32 %v647, %v2100
        %v2230 = vmul.f32 %v647, %v2101
        %v2231 = vmul.f32 %v647, %v2102
        %v2232 = vmul.f32 %v647, %v2103
        %v2233 = vmul.f32 %v647, %v2104
        %v2234 = vmul.f32 %v647, %v2105
        %v2235 = vmul.f32 %v647, %v2106
        %v2236 = vmul.f32 %v647, %v2107
        %v2237 = vmul.f32 %v647, %v2108
        %v2238 = vmul.f32 %v647, %v2109
        %v2239 = vmul.f32 %v647, %v2110
        %v2240 = vmul.f32 %v647, %v2111
        %v2241 = vmul.f32 %v647, %v2112
        %v2242 = vmul.f32 %v647, %v2113
        %v2243 = vmul.f32 %v691, %v2157
        %v2244 = vmul.f32 %v691, %v2158
        %v2245 = vmul.f32 %v691, %v2159
        %v2246 = vmul.f32 %v691, %v2160
        %v2247 = vmul.f32 %v691, %v2161
        %v2248 = vmul.f32 %v691, %v2162
        %v2249 = vmul.f32 %v691, %v2163
        %v2250 = vmul.f32 %v691, %v2164
        %v2251 = vmul.f32 %v691, %v2165
        %v2252 = vmul.f32 %v691, %v2166
        %v2253 = vmul.f32 %v691, %v2167
        %v2254 = vmul.f32 %v691, %v2168
        %v2255 = vmul.f32 %v691, %v2169
        %v2256 = vmul.f32 %v691, %v2170
        %v2257 = vmul.f32 %v691, %v2171
        %v2258 = vmul.f32 %v691, %v2172
        %v2259 = vmul.f32 %v691, %v2173
        %v2260 = vmul.f32 %v691, %v2174
        %v2261 = vmul.f32 %v691, %v2175
        %v2262 = vmul.f32 %v691, %v2176
        %v2263 = vmul.f32 %v691, %v2177
        %v2264 = vmul.f32 %v691, %v2178
        %v2265 = vmul.f32 %v691, %v2179
        %v2266 = vmul.f32 %v691, %v2180
        %v2267 = vmul.f32 %v691, %v2181
        %v2268 = vmul.f32 %v691, %v2182
        %v2269 = vmul.f32 %v691, %v2183
        %v2270 = vmul.f32 %v691, %v2184
        %v2271 = vmul.f32 %v691, %v2185
        %v2272 = vmul.f32 %v691, %v2186
        %v2273 = vmul.f32 %v691, %v2187
        %v2274 = vmul.f32 %v691, %v2188
        %v2275 = vmul.f32 %v691, %v2189
        %v2276 = vmul.f32 %v691, %v2190
        %v2277 = vmul.f32 %v691, %v2191
        %v2278 = vmul.f32 %v691, %v2192
        %v2279 = vmul.f32 %v691, %v2193
        %v2280 = vmul.f32 %v691, %v2194
        %v2281 = vmul.f32 %v691, %v2195
        %v2282 = vmul.f32 %v691, %v2196
        %v2283 = vmul.f32 %v691, %v2197
        %v2284 = vmul.f32 %v691, %v2198
        %v2285 = vmul.f32 %v691, %v2199
        %v2286 = vadd.f32 %v2200, %v2243
        %v2287 = vadd.f32 %v2201, %v2244
        %v2288 = vadd.f32 %v2202, %v2245
        %v2289 = vadd.f32 %v2203, %v2246
        %v2290 = vadd.f32 %v2204, %v2247
        %v2291 = vadd.f32 %v2205, %v2248
        %v2292 = vadd.f32 %v2206, %v2249
        %v2293 = vadd.f32 %v2207, %v2250
        %v2294 = vadd.f32 %v2208, %v2251
        %v2295 = vadd.f32 %v2209, %v2252
        %v2296 = vadd.f32 %v2210, %v2253
        %v2297 = vadd.f32 %v2211, %v2254
        %v2298 = vadd.f32 %v2212, %v2255
        %v2299 = vadd.f32 %v2213, %v2256
        %v2300 = vadd.f32 %v2214, %v2257
        %v2301 = vadd.f32 %v2215, %v2258
        %v2302 = vadd.f32 %v2216, %v2259
        %v2303 = vadd.f32 %v2217, %v2260
        %v2304 = vadd.f32 %v2218, %v2261
        %v2305 = vadd.f32 %v2219, %v2262
        %v2306 = vadd.f32 %v2220, %v2263
        %v2307 = vadd.f32 %v2221, %v2264
        %v2308 = vadd.f32 %v2222, %v2265
        %v2309 = vadd.f32 %v2223, %v2266
        %v2310 = vadd.f32 %v2224, %v2267
        %v2311 = vadd.f32 %v2225, %v2268
        %v2312 = vadd.f32 %v2226, %v2269
        %v2313 = vadd.f32 %v2227, %v2270
        %v2314 = vadd.f32 %v2228, %v2271
        %v2315 = vadd.f32 %v2229, %v2272
        %v2316 = vadd.f32 %v2230, %v2273
        %v2317 = vadd.f32 %v2231, %v2274
        %v2318 = vadd.f32 %v2232, %v2275
        %v2319 = vadd.f32 %v2233, %v2276
        %v2320 = vadd.f32 %v2234, %v2277
        %v2321 = vadd.f32 %v2235, %v2278
        %v2322 = vadd.f32 %v2236, %v2279
        %v2323 = vadd.f32 %v2237, %v2280
        %v2324 = vadd.f32 %v2238, %v2281
        %v2325 = vadd.f32 %v2239, %v2282
        %v2326 = vadd.f32 %v2240, %v2283
        %v2327 = vadd.f32 %v2241, %v2284
        %v2328 = vadd.f32 %v2242, %v2285
        %v2329 = vpack.c.bf16 %v2287, %v2286
        %v2330 = vpack.c.bf16 %v2289, %v2288
        %v2331 = vpack.c.bf16 %v2291, %v2290
        %v2332 = vpack.c.bf16 %v2293, %v2292
        %v2333 = vpack.c.bf16 %v2295, %v2294
        %v2334 = vpack.c.bf16 %v2297, %v2296
        %v2335 = vpack.c.bf16 %v2299, %v2298
        %v2336 = vpack.c.bf16 %v2301, %v2300
        %v2337 = vpack.c.bf16 %v2303, %v2302
        %v2338 = vpack.c.bf16 %v2305, %v2304
        %v2339 = vpack.c.bf16 %v2307, %v2306
        %v2340 = vpack.c.bf16 %v2309, %v2308
        %v2341 = vpack.c.bf16 %v2311, %v2310
        %v2342 = vpack.c.bf16 %v2313, %v2312
        %v2343 = vpack.c.bf16 %v2315, %v2314
        %v2344 = vpack.c.bf16 %v2317, %v2316
        %v2345 = vpack.c.bf16 %v2319, %v2318
        %v2346 = vpack.c.bf16 %v2321, %v2320
        %v2347 = vpack.c.bf16 %v2323, %v2322
        %v2348 = vpack.c.bf16 %v2325, %v2324
        %v2349 = vpack.c.bf16 %v2327, %v2326
        %v2350 = vpack.c.bf16 %v2328, %v2328
        %s2351 = scalar_lea.vmem %s3, 6
        %v2352 = vld [vmem:[%s2351] sm:$0x3]
        %v2354 = vshrl.u32 %v2329, 16
        %v2356 = vrot.slane %v2354, 3
        %v2357 = vshll.u32 %v2329, 16
        %v2359 = vrot.slane %v2357, 4
        %v2360 = vor.u32 %v2356, %v2359
        %v2362 = vshrl.u32 %v2330, 16
        %v2364 = vrot.slane %v2362, 3
        %v2365 = vshll.u32 %v2330, 16
        %v2367 = vrot.slane %v2365, 4
        %v2368 = vor.u32 %v2364, %v2367
        %v2369 = vsel %vm1621, %v2360, %v2368
        %v2371 = vshrl.u32 %v2331, 16
        %v2373 = vrot.slane %v2371, 3
        %v2374 = vshll.u32 %v2331, 16
        %v2376 = vrot.slane %v2374, 4
        %v2377 = vor.u32 %v2373, %v2376
        %v2378 = vsel %vm1621, %v2368, %v2377
        %v2380 = vshrl.u32 %v2332, 16
        %v2382 = vrot.slane %v2380, 3
        %v2383 = vshll.u32 %v2332, 16
        %v2385 = vrot.slane %v2383, 4
        %v2386 = vor.u32 %v2382, %v2385
        %v2387 = vsel %vm1621, %v2377, %v2386
        %v2389 = vshrl.u32 %v2333, 16
        %v2391 = vrot.slane %v2389, 3
        %v2392 = vshll.u32 %v2333, 16
        %v2394 = vrot.slane %v2392, 4
        %v2395 = vor.u32 %v2391, %v2394
        %v2396 = vsel %vm1621, %v2386, %v2395
        %v2398 = vshrl.u32 %v2334, 16
        %v2400 = vrot.slane %v2398, 3
        %v2401 = vshll.u32 %v2334, 16
        %v2403 = vrot.slane %v2401, 4
        %v2404 = vor.u32 %v2400, %v2403
        %v2405 = vsel %vm1621, %v2395, %v2404
        %v2407 = vshrl.u32 %v2335, 16
        %v2409 = vrot.slane %v2407, 3
        %v2410 = vshll.u32 %v2335, 16
        %v2412 = vrot.slane %v2410, 4
        %v2413 = vor.u32 %v2409, %v2412
        %v2414 = vsel %vm1621, %v2404, %v2413
        %v2416 = vshrl.u32 %v2336, 16
        %v2418 = vrot.slane %v2416, 3
        %v2419 = vshll.u32 %v2336, 16
        %v2421 = vrot.slane %v2419, 4
        %v2422 = vor.u32 %v2418, %v2421
        %v2423 = vsel %vm1621, %v2413, %v2422
        %v2425 = vshrl.u32 %v2337, 16
        %v2427 = vrot.slane %v2425, 3
        %v2428 = vshll.u32 %v2337, 16
        %v2430 = vrot.slane %v2428, 4
        %v2431 = vor.u32 %v2427, %v2430
        %v2432 = vsel %vm1621, %v2422, %v2431
        %v2434 = vshrl.u32 %v2338, 16
        %v2436 = vrot.slane %v2434, 3
        %v2437 = vshll.u32 %v2338, 16
        %v2439 = vrot.slane %v2437, 4
        %v2440 = vor.u32 %v2436, %v2439
        %v2441 = vsel %vm1621, %v2431, %v2440
        %v2443 = vshrl.u32 %v2339, 16
        %v2445 = vrot.slane %v2443, 3
        %v2446 = vshll.u32 %v2339, 16
        %v2448 = vrot.slane %v2446, 4
        %v2449 = vor.u32 %v2445, %v2448
        %v2450 = vsel %vm1621, %v2440, %v2449
        %v2452 = vshrl.u32 %v2340, 16
        %v2454 = vrot.slane %v2452, 3
        %v2455 = vshll.u32 %v2340, 16
        %v2457 = vrot.slane %v2455, 4
        %v2458 = vor.u32 %v2454, %v2457
        %v2459 = vsel %vm1621, %v2449, %v2458
        %v2461 = vshrl.u32 %v2341, 16
        %v2463 = vrot.slane %v2461, 3
        %v2464 = vshll.u32 %v2341, 16
        %v2466 = vrot.slane %v2464, 4
        %v2467 = vor.u32 %v2463, %v2466
        %v2468 = vsel %vm1621, %v2458, %v2467
        %v2470 = vshrl.u32 %v2342, 16
        %v2472 = vrot.slane %v2470, 3
        %v2473 = vshll.u32 %v2342, 16
        %v2475 = vrot.slane %v2473, 4
        %v2476 = vor.u32 %v2472, %v2475
        %v2477 = vsel %vm1621, %v2467, %v2476
        %v2479 = vshrl.u32 %v2343, 16
        %v2481 = vrot.slane %v2479, 3
        %v2482 = vshll.u32 %v2343, 16
        %v2484 = vrot.slane %v2482, 4
        %v2485 = vor.u32 %v2481, %v2484
        %v2486 = vsel %vm1621, %v2476, %v2485
        %v2488 = vshrl.u32 %v2344, 16
        %v2490 = vrot.slane %v2488, 3
        %v2491 = vshll.u32 %v2344, 16
        %v2493 = vrot.slane %v2491, 4
        %v2494 = vor.u32 %v2490, %v2493
        %v2495 = vsel %vm1621, %v2485, %v2494
        %v2497 = vshrl.u32 %v2345, 16
        %v2499 = vrot.slane %v2497, 3
        %v2500 = vshll.u32 %v2345, 16
        %v2502 = vrot.slane %v2500, 4
        %v2503 = vor.u32 %v2499, %v2502
        %v2504 = vsel %vm1621, %v2494, %v2503
        %v2506 = vshrl.u32 %v2346, 16
        %v2508 = vrot.slane %v2506, 3
        %v2509 = vshll.u32 %v2346, 16
        %v2511 = vrot.slane %v2509, 4
        %v2512 = vor.u32 %v2508, %v2511
        %v2513 = vsel %vm1621, %v2503, %v2512
        %v2515 = vshrl.u32 %v2347, 16
        %v2517 = vrot.slane %v2515, 3
        %v2518 = vshll.u32 %v2347, 16
        %v2520 = vrot.slane %v2518, 4
        %v2521 = vor.u32 %v2517, %v2520
        %v2522 = vsel %vm1621, %v2512, %v2521
        %v2524 = vshrl.u32 %v2348, 16
        %v2526 = vrot.slane %v2524, 3
        %v2527 = vshll.u32 %v2348, 16
        %v2529 = vrot.slane %v2527, 4
        %v2530 = vor.u32 %v2526, %v2529
        %v2531 = vsel %vm1621, %v2521, %v2530
        %v2533 = vshrl.u32 %v2349, 16
        %v2535 = vrot.slane %v2533, 3
        %v2536 = vshll.u32 %v2349, 16
        %v2538 = vrot.slane %v2536, 4
        %v2539 = vor.u32 %v2535, %v2538
        %v2540 = vsel %vm1621, %v2530, %v2539
        %v2542 = vshrl.u32 %v2350, 16
        %v2544 = vrot.slane %v2542, 3
        %v2545 = vshll.u32 %v2350, 16
        %v2547 = vrot.slane %v2545, 4
        %v2548 = vor.u32 %v2544, %v2547
        %v2549 = vsel %vm1621, %v2539, %v2548
        %v2551 = vsel %vm877, %v2369, 0
        %v2554 = vsel %vm877, %v2378, 0
        %v2557 = vsel %vm877, %v2387, 0
        %v2560 = vsel %vm877, %v2396, 0
        %v2563 = vsel %vm877, %v2405, 0
        %v2566 = vsel %vm877, %v2414, 0
        %v2569 = vsel %vm877, %v2423, 0
        %v2572 = vsel %vm877, %v2432, 0
        %v2575 = vsel %vm877, %v2441, 0
        %v2578 = vsel %vm877, %v2450, 0
        %v2581 = vsel %vm877, %v2459, 0
        %v2584 = vsel %vm877, %v2468, 0
        %v2587 = vsel %vm877, %v2477, 0
        %v2590 = vsel %vm877, %v2486, 0
        %v2593 = vsel %vm877, %v2495, 0
        %v2596 = vsel %vm877, %v2504, 0
        %v2599 = vsel %vm877, %v2513, 0
        %v2602 = vsel %vm877, %v2522, 0
        %v2605 = vsel %vm877, %v2531, 0
        %v2608 = vsel %vm877, %v2540, 0
        %v2611 = vsel %vm877, %v2549, 0
        %v2614 = vsel %vm941, %v2352, 0
        %2616 = vmatprep.subr.bf16.mxu0 0
        %2617 = vmatpush1.bf16.msra.mxu0 0
        %2618 = vmatprep.subr.bf16.mxu0 0
        %2619 = vmatpush1.bf16.msra.mxu0 0
        %2620 = vmatprep.subr.bf16.mxu0 0
        %2621 = vmatpush1.bf16.msra.mxu0 0
        %2622 = vmatprep.subr.bf16.mxu0 0
        %2623 = vmatpush1.bf16.msra.mxu0 0
        %2624 = vmatprep.subr.bf16.mxu0 0
        %2625 = vmatpush1.bf16.msra.mxu0 0
        %2626 = vmatprep.subr.bf16.mxu0 0
        %2627 = vmatpush1.bf16.msra.mxu0 0
        %2628 = vmatprep.subr.bf16.mxu0 0
        %2629 = vmatpush1.bf16.msra.mxu0 0
        %2630 = vmatprep.subr.bf16.mxu0 0
        %2631 = vmatpush1.bf16.msra.mxu0 %v2614
        %2632 = vmatprep.subr.bf16.mxu0 0
        %2633 = vmatpush2.bf16.msra.mxu0 0
        %2634 = vmatprep.subr.bf16.mxu0 0
        %2635 = vmatpush2.bf16.msra.mxu0 0
        %2636 = vmatprep.subr.bf16.mxu0 0
        %2637 = vmatpush2.bf16.msra.mxu0 0
        %2638 = vmatprep.subr.bf16.mxu0 0
        %2639 = vmatpush2.bf16.msra.mxu0 0
        %2640 = vmatprep.subr.bf16.mxu0 0
        %2641 = vmatpush2.bf16.msra.mxu0 0
        %2642 = vmatprep.subr.bf16.mxu0 0
        %2643 = vmatpush2.bf16.msra.mxu0 0
        %2644 = vmatprep.subr.bf16.mxu0 0
        %2645 = vmatpush2.bf16.msra.mxu0 0
        %2646 = vmatprep.subr.bf16.mxu0 0
        %2647 = vmatpush2.bf16.msra.mxu0 0
        %2648 = vmatprep.mubr.bf16.mxu0 0
        %2649 = vmatmul.mubr.bf16.gmra.mxu0 %v2551
        %v2650 = vpop.f32.mrf.mxu0
        %v2651 = vadd.f32 0.0, %v2650
        %v2652 = vpop.f32.mrf.mxu0
        %v2653 = vpop.f32.mrf.mxu0
        %v2654 = vadd.f32 0.0, %v2653
        %v2655 = vpop.f32.mrf.mxu0
        %2656 = vmatprep.mubr.bf16.mxu0 0
        %2657 = vmatmul.mubr.bf16.gmra.mxu0 %v2554
        %v2658 = vpop.f32.mrf.mxu0
        %v2659 = vadd.f32 0.0, %v2658
        %v2660 = vpop.f32.mrf.mxu0
        %v2661 = vpop.f32.mrf.mxu0
        %v2662 = vadd.f32 0.0, %v2661
        %v2663 = vpop.f32.mrf.mxu0
        %2664 = vmatprep.mubr.bf16.mxu0 0
        %2665 = vmatmul.mubr.bf16.gmra.mxu0 %v2557
        %v2666 = vpop.f32.mrf.mxu0
        %v2667 = vadd.f32 0.0, %v2666
        %v2668 = vpop.f32.mrf.mxu0
        %v2669 = vpop.f32.mrf.mxu0
        %v2670 = vadd.f32 0.0, %v2669
        %v2671 = vpop.f32.mrf.mxu0
        %2672 = vmatprep.mubr.bf16.mxu0 0
        %2673 = vmatmul.mubr.bf16.gmra.mxu0 %v2560
        %v2674 = vpop.f32.mrf.mxu0
        %v2675 = vadd.f32 0.0, %v2674
        %v2676 = vpop.f32.mrf.mxu0
        %v2677 = vpop.f32.mrf.mxu0
        %v2678 = vadd.f32 0.0, %v2677
        %v2679 = vpop.f32.mrf.mxu0
        %2680 = vmatprep.mubr.bf16.mxu0 0
        %2681 = vmatmul.mubr.bf16.gmra.mxu0 %v2563
        %v2682 = vpop.f32.mrf.mxu0
        %v2683 = vadd.f32 0.0, %v2682
        %v2684 = vpop.f32.mrf.mxu0
        %v2685 = vpop.f32.mrf.mxu0
        %v2686 = vadd.f32 0.0, %v2685
        %v2687 = vpop.f32.mrf.mxu0
        %2688 = vmatprep.mubr.bf16.mxu0 0
        %2689 = vmatmul.mubr.bf16.gmra.mxu0 %v2566
        %v2690 = vpop.f32.mrf.mxu0
        %v2691 = vadd.f32 0.0, %v2690
        %v2692 = vpop.f32.mrf.mxu0
        %v2693 = vpop.f32.mrf.mxu0
        %v2694 = vadd.f32 0.0, %v2693
        %v2695 = vpop.f32.mrf.mxu0
        %2696 = vmatprep.mubr.bf16.mxu0 0
        %2697 = vmatmul.mubr.bf16.gmra.mxu0 %v2569
        %v2698 = vpop.f32.mrf.mxu0
        %v2699 = vadd.f32 0.0, %v2698
        %v2700 = vpop.f32.mrf.mxu0
        %v2701 = vpop.f32.mrf.mxu0
        %v2702 = vadd.f32 0.0, %v2701
        %v2703 = vpop.f32.mrf.mxu0
        %2704 = vmatprep.mubr.bf16.mxu0 0
        %2705 = vmatmul.mubr.bf16.gmra.mxu0 %v2572
        %v2706 = vpop.f32.mrf.mxu0
        %v2707 = vadd.f32 0.0, %v2706
        %v2708 = vpop.f32.mrf.mxu0
        %v2709 = vpop.f32.mrf.mxu0
        %v2710 = vadd.f32 0.0, %v2709
        %v2711 = vpop.f32.mrf.mxu0
        %2712 = vmatprep.mubr.bf16.mxu0 0
        %2713 = vmatmul.mubr.bf16.gmra.mxu0 %v2575
        %v2714 = vpop.f32.mrf.mxu0
        %v2715 = vadd.f32 0.0, %v2714
        %v2716 = vpop.f32.mrf.mxu0
        %v2717 = vpop.f32.mrf.mxu0
        %v2718 = vadd.f32 0.0, %v2717
        %v2719 = vpop.f32.mrf.mxu0
        %2720 = vmatprep.mubr.bf16.mxu0 0
        %2721 = vmatmul.mubr.bf16.gmra.mxu0 %v2578
        %v2722 = vpop.f32.mrf.mxu0
        %v2723 = vadd.f32 0.0, %v2722
        %v2724 = vpop.f32.mrf.mxu0
        %v2725 = vpop.f32.mrf.mxu0
        %v2726 = vadd.f32 0.0, %v2725
        %v2727 = vpop.f32.mrf.mxu0
        %2728 = vmatprep.mubr.bf16.mxu0 0
        %2729 = vmatmul.mubr.bf16.gmra.mxu0 %v2581
        %v2730 = vpop.f32.mrf.mxu0
        %v2731 = vadd.f32 0.0, %v2730
        %v2732 = vpop.f32.mrf.mxu0
        %v2733 = vpop.f32.mrf.mxu0
        %v2734 = vadd.f32 0.0, %v2733
        %v2735 = vpop.f32.mrf.mxu0
        %2736 = vmatprep.mubr.bf16.mxu0 0
        %2737 = vmatmul.mubr.bf16.gmra.mxu0 %v2584
        %v2738 = vpop.f32.mrf.mxu0
        %v2739 = vadd.f32 0.0, %v2738
        %v2740 = vpop.f32.mrf.mxu0
        %v2741 = vpop.f32.mrf.mxu0
        %v2742 = vadd.f32 0.0, %v2741
        %v2743 = vpop.f32.mrf.mxu0
        %2744 = vmatprep.mubr.bf16.mxu0 0
        %2745 = vmatmul.mubr.bf16.gmra.mxu0 %v2587
        %v2746 = vpop.f32.mrf.mxu0
        %v2747 = vadd.f32 0.0, %v2746
        %v2748 = vpop.f32.mrf.mxu0
        %v2749 = vpop.f32.mrf.mxu0
        %v2750 = vadd.f32 0.0, %v2749
        %v2751 = vpop.f32.mrf.mxu0
        %2752 = vmatprep.mubr.bf16.mxu0 0
        %2753 = vmatmul.mubr.bf16.gmra.mxu0 %v2590
        %v2754 = vpop.f32.mrf.mxu0
        %v2755 = vadd.f32 0.0, %v2754
        %v2756 = vpop.f32.mrf.mxu0
        %v2757 = vpop.f32.mrf.mxu0
        %v2758 = vadd.f32 0.0, %v2757
        %v2759 = vpop.f32.mrf.mxu0
        %2760 = vmatprep.mubr.bf16.mxu0 0
        %2761 = vmatmul.mubr.bf16.gmra.mxu0 %v2593
        %v2762 = vpop.f32.mrf.mxu0
        %v2763 = vadd.f32 0.0, %v2762
        %v2764 = vpop.f32.mrf.mxu0
        %v2765 = vpop.f32.mrf.mxu0
        %v2766 = vadd.f32 0.0, %v2765
        %v2767 = vpop.f32.mrf.mxu0
        %2768 = vmatprep.mubr.bf16.mxu0 0
        %2769 = vmatmul.mubr.bf16.gmra.mxu0 %v2596
        %v2770 = vpop.f32.mrf.mxu0
        %v2771 = vadd.f32 0.0, %v2770
        %v2772 = vpop.f32.mrf.mxu0
        %v2773 = vpop.f32.mrf.mxu0
        %v2774 = vadd.f32 0.0, %v2773
        %v2775 = vpop.f32.mrf.mxu0
        %2776 = vmatprep.mubr.bf16.mxu0 0
        %2777 = vmatmul.mubr.bf16.gmra.mxu0 %v2599
        %v2778 = vpop.f32.mrf.mxu0
        %v2779 = vadd.f32 0.0, %v2778
        %v2780 = vpop.f32.mrf.mxu0
        %v2781 = vpop.f32.mrf.mxu0
        %v2782 = vadd.f32 0.0, %v2781
        %v2783 = vpop.f32.mrf.mxu0
        %2784 = vmatprep.mubr.bf16.mxu0 0
        %2785 = vmatmul.mubr.bf16.gmra.mxu0 %v2602
        %v2786 = vpop.f32.mrf.mxu0
        %v2787 = vadd.f32 0.0, %v2786
        %v2788 = vpop.f32.mrf.mxu0
        %v2789 = vpop.f32.mrf.mxu0
        %v2790 = vadd.f32 0.0, %v2789
        %v2791 = vpop.f32.mrf.mxu0
        %2792 = vmatprep.mubr.bf16.mxu0 0
        %2793 = vmatmul.mubr.bf16.gmra.mxu0 %v2605
        %v2794 = vpop.f32.mrf.mxu0
        %v2795 = vadd.f32 0.0, %v2794
        %v2796 = vpop.f32.mrf.mxu0
        %v2797 = vpop.f32.mrf.mxu0
        %v2798 = vadd.f32 0.0, %v2797
        %v2799 = vpop.f32.mrf.mxu0
        %2800 = vmatprep.mubr.bf16.mxu0 0
        %2801 = vmatmul.mubr.bf16.gmra.mxu0 %v2608
        %v2802 = vpop.f32.mrf.mxu0
        %v2803 = vadd.f32 0.0, %v2802
        %v2804 = vpop.f32.mrf.mxu0
        %v2805 = vpop.f32.mrf.mxu0
        %v2806 = vadd.f32 0.0, %v2805
        %v2807 = vpop.f32.mrf.mxu0
        %2808 = vmatprep.mubr.bf16.mxu0 0
        %2809 = vmatmul.mubr.bf16.gmra.mxu0 %v2611
        %v2810 = vpop.f32.mrf.mxu0
        %v2811 = vadd.f32 0.0, %v2810
        %v2812 = vpop.f32.mrf.mxu0
        %v2813 = vpop.f32.mrf.mxu0
        %v2814 = vadd.f32 0.0, %v2813
        %v2815 = vpop.f32.mrf.mxu0
        %2816 = vdwg.mxu0
        %v2817 = vadd.f32 %v1986, %v2651
        %v2818 = vadd.f32 %v1987, %v2654
        %v2819 = vadd.f32 %v1988, %v2659
        %v2820 = vadd.f32 %v1989, %v2662
        %v2821 = vadd.f32 %v1990, %v2667
        %v2822 = vadd.f32 %v1991, %v2670
        %v2823 = vadd.f32 %v1992, %v2675
        %v2824 = vadd.f32 %v1993, %v2678
        %v2825 = vadd.f32 %v1994, %v2683
        %v2826 = vadd.f32 %v1995, %v2686
        %v2827 = vadd.f32 %v1996, %v2691
        %v2828 = vadd.f32 %v1997, %v2694
        %v2829 = vadd.f32 %v1998, %v2699
        %v2830 = vadd.f32 %v1999, %v2702
        %v2831 = vadd.f32 %v2000, %v2707
        %v2832 = vadd.f32 %v2001, %v2710
        %v2833 = vadd.f32 %v2002, %v2715
        %v2834 = vadd.f32 %v2003, %v2718
        %v2835 = vadd.f32 %v2004, %v2723
        %v2836 = vadd.f32 %v2005, %v2726
        %v2837 = vadd.f32 %v2006, %v2731
        %v2838 = vadd.f32 %v2007, %v2734
        %v2839 = vadd.f32 %v2008, %v2739
        %v2840 = vadd.f32 %v2009, %v2742
        %v2841 = vadd.f32 %v2010, %v2747
        %v2842 = vadd.f32 %v2011, %v2750
        %v2843 = vadd.f32 %v2012, %v2755
        %v2844 = vadd.f32 %v2013, %v2758
        %v2845 = vadd.f32 %v2014, %v2763
        %v2846 = vadd.f32 %v2015, %v2766
        %v2847 = vadd.f32 %v2016, %v2771
        %v2848 = vadd.f32 %v2017, %v2774
        %v2849 = vadd.f32 %v2018, %v2779
        %v2850 = vadd.f32 %v2019, %v2782
        %v2851 = vadd.f32 %v2020, %v2787
        %v2852 = vadd.f32 %v2021, %v2790
        %v2853 = vadd.f32 %v2022, %v2795
        %v2854 = vadd.f32 %v2023, %v2798
        %v2855 = vadd.f32 %v2024, %v2803
        %v2856 = vadd.f32 %v2025, %v2806
        %v2857 = vadd.f32 %v2026, %v2811
        %v2858 = vadd.f32 %v2027, %v2814
        %v2859 = vpack.c.bf16 %v2288, %v2287
        %v2860 = vpack.c.bf16 %v2290, %v2289
        %v2861 = vpack.c.bf16 %v2292, %v2291
        %v2862 = vpack.c.bf16 %v2294, %v2293
        %v2863 = vpack.c.bf16 %v2296, %v2295
        %v2864 = vpack.c.bf16 %v2298, %v2297
        %v2865 = vpack.c.bf16 %v2300, %v2299
        %v2866 = vpack.c.bf16 %v2302, %v2301
        %v2867 = vpack.c.bf16 %v2304, %v2303
        %v2868 = vpack.c.bf16 %v2306, %v2305
        %v2869 = vpack.c.bf16 %v2308, %v2307
        %v2870 = vpack.c.bf16 %v2310, %v2309
        %v2871 = vpack.c.bf16 %v2312, %v2311
        %v2872 = vpack.c.bf16 %v2314, %v2313
        %v2873 = vpack.c.bf16 %v2316, %v2315
        %v2874 = vpack.c.bf16 %v2318, %v2317
        %v2875 = vpack.c.bf16 %v2320, %v2319
        %v2876 = vpack.c.bf16 %v2322, %v2321
        %v2877 = vpack.c.bf16 %v2324, %v2323
        %v2878 = vpack.c.bf16 %v2326, %v2325
        %v2879 = vpack.c.bf16 %v2328, %v2327
        %s2880 = scalar_lea.vmem %s3, 8
        %v2881 = vld [vmem:[%s2880] sm:$0x3]
        %v2883 = vsel %vm877, %v2859, 0
        %v2886 = vsel %vm877, %v2860, 0
        %v2889 = vsel %vm877, %v2861, 0
        %v2892 = vsel %vm877, %v2862, 0
        %v2895 = vsel %vm877, %v2863, 0
        %v2898 = vsel %vm877, %v2864, 0
        %v2901 = vsel %vm877, %v2865, 0
        %v2904 = vsel %vm877, %v2866, 0
        %v2907 = vsel %vm877, %v2867, 0
        %v2910 = vsel %vm877, %v2868, 0
        %v2913 = vsel %vm877, %v2869, 0
        %v2916 = vsel %vm877, %v2870, 0
        %v2919 = vsel %vm877, %v2871, 0
        %v2922 = vsel %vm877, %v2872, 0
        %v2925 = vsel %vm877, %v2873, 0
        %v2928 = vsel %vm877, %v2874, 0
        %v2931 = vsel %vm877, %v2875, 0
        %v2934 = vsel %vm877, %v2876, 0
        %v2937 = vsel %vm877, %v2877, 0
        %v2940 = vsel %vm877, %v2878, 0
        %v2943 = vsel %vm877, %v2879, 0
        %v2946 = vsel %vm941, %v2881, 0
        %2948 = vmatprep.subr.bf16.mxu0 0
        %2949 = vmatpush1.bf16.msra.mxu0 0
        %2950 = vmatprep.subr.bf16.mxu0 0
        %2951 = vmatpush1.bf16.msra.mxu0 0
        %2952 = vmatprep.subr.bf16.mxu0 0
        %2953 = vmatpush1.bf16.msra.mxu0 0
        %2954 = vmatprep.subr.bf16.mxu0 0
        %2955 = vmatpush1.bf16.msra.mxu0 0
        %2956 = vmatprep.subr.bf16.mxu0 0
        %2957 = vmatpush1.bf16.msra.mxu0 0
        %2958 = vmatprep.subr.bf16.mxu0 0
        %2959 = vmatpush1.bf16.msra.mxu0 0
        %2960 = vmatprep.subr.bf16.mxu0 0
        %2961 = vmatpush1.bf16.msra.mxu0 0
        %2962 = vmatprep.subr.bf16.mxu0 0
        %2963 = vmatpush1.bf16.msra.mxu0 %v2946
        %2964 = vmatprep.subr.bf16.mxu0 0
        %2965 = vmatpush2.bf16.msra.mxu0 0
        %2966 = vmatprep.subr.bf16.mxu0 0
        %2967 = vmatpush2.bf16.msra.mxu0 0
        %2968 = vmatprep.subr.bf16.mxu0 0
        %2969 = vmatpush2.bf16.msra.mxu0 0
        %2970 = vmatprep.subr.bf16.mxu0 0
        %2971 = vmatpush2.bf16.msra.mxu0 0
        %2972 = vmatprep.subr.bf16.mxu0 0
        %2973 = vmatpush2.bf16.msra.mxu0 0
        %2974 = vmatprep.subr.bf16.mxu0 0
        %2975 = vmatpush2.bf16.msra.mxu0 0
        %2976 = vmatprep.subr.bf16.mxu0 0
        %2977 = vmatpush2.bf16.msra.mxu0 0
        %2978 = vmatprep.subr.bf16.mxu0 0
        %2979 = vmatpush2.bf16.msra.mxu0 0
        %2980 = vmatprep.mubr.bf16.mxu0 0
        %2981 = vmatmul.mubr.bf16.gmra.mxu0 %v2883
        %v2982 = vpop.f32.mrf.mxu0
        %v2983 = vadd.f32 0.0, %v2982
        %v2984 = vpop.f32.mrf.mxu0
        %v2985 = vpop.f32.mrf.mxu0
        %v2986 = vadd.f32 0.0, %v2985
        %v2987 = vpop.f32.mrf.mxu0
        %2988 = vmatprep.mubr.bf16.mxu0 0
        %2989 = vmatmul.mubr.bf16.gmra.mxu0 %v2886
        %v2990 = vpop.f32.mrf.mxu0
        %v2991 = vadd.f32 0.0, %v2990
        %v2992 = vpop.f32.mrf.mxu0
        %v2993 = vpop.f32.mrf.mxu0
        %v2994 = vadd.f32 0.0, %v2993
        %v2995 = vpop.f32.mrf.mxu0
        %2996 = vmatprep.mubr.bf16.mxu0 0
        %2997 = vmatmul.mubr.bf16.gmra.mxu0 %v2889
        %v2998 = vpop.f32.mrf.mxu0
        %v2999 = vadd.f32 0.0, %v2998
        %v3000 = vpop.f32.mrf.mxu0
        %v3001 = vpop.f32.mrf.mxu0
        %v3002 = vadd.f32 0.0, %v3001
        %v3003 = vpop.f32.mrf.mxu0
        %3004 = vmatprep.mubr.bf16.mxu0 0
        %3005 = vmatmul.mubr.bf16.gmra.mxu0 %v2892
        %v3006 = vpop.f32.mrf.mxu0
        %v3007 = vadd.f32 0.0, %v3006
        %v3008 = vpop.f32.mrf.mxu0
        %v3009 = vpop.f32.mrf.mxu0
        %v3010 = vadd.f32 0.0, %v3009
        %v3011 = vpop.f32.mrf.mxu0
        %3012 = vmatprep.mubr.bf16.mxu0 0
        %3013 = vmatmul.mubr.bf16.gmra.mxu0 %v2895
        %v3014 = vpop.f32.mrf.mxu0
        %v3015 = vadd.f32 0.0, %v3014
        %v3016 = vpop.f32.mrf.mxu0
        %v3017 = vpop.f32.mrf.mxu0
        %v3018 = vadd.f32 0.0, %v3017
        %v3019 = vpop.f32.mrf.mxu0
        %3020 = vmatprep.mubr.bf16.mxu0 0
        %3021 = vmatmul.mubr.bf16.gmra.mxu0 %v2898
        %v3022 = vpop.f32.mrf.mxu0
        %v3023 = vadd.f32 0.0, %v3022
        %v3024 = vpop.f32.mrf.mxu0
        %v3025 = vpop.f32.mrf.mxu0
        %v3026 = vadd.f32 0.0, %v3025
        %v3027 = vpop.f32.mrf.mxu0
        %3028 = vmatprep.mubr.bf16.mxu0 0
        %3029 = vmatmul.mubr.bf16.gmra.mxu0 %v2901
        %v3030 = vpop.f32.mrf.mxu0
        %v3031 = vadd.f32 0.0, %v3030
        %v3032 = vpop.f32.mrf.mxu0
        %v3033 = vpop.f32.mrf.mxu0
        %v3034 = vadd.f32 0.0, %v3033
        %v3035 = vpop.f32.mrf.mxu0
        %3036 = vmatprep.mubr.bf16.mxu0 0
        %3037 = vmatmul.mubr.bf16.gmra.mxu0 %v2904
        %v3038 = vpop.f32.mrf.mxu0
        %v3039 = vadd.f32 0.0, %v3038
        %v3040 = vpop.f32.mrf.mxu0
        %v3041 = vpop.f32.mrf.mxu0
        %v3042 = vadd.f32 0.0, %v3041
        %v3043 = vpop.f32.mrf.mxu0
        %3044 = vmatprep.mubr.bf16.mxu0 0
        %3045 = vmatmul.mubr.bf16.gmra.mxu0 %v2907
        %v3046 = vpop.f32.mrf.mxu0
        %v3047 = vadd.f32 0.0, %v3046
        %v3048 = vpop.f32.mrf.mxu0
        %v3049 = vpop.f32.mrf.mxu0
        %v3050 = vadd.f32 0.0, %v3049
        %v3051 = vpop.f32.mrf.mxu0
        %3052 = vmatprep.mubr.bf16.mxu0 0
        %3053 = vmatmul.mubr.bf16.gmra.mxu0 %v2910
        %v3054 = vpop.f32.mrf.mxu0
        %v3055 = vadd.f32 0.0, %v3054
        %v3056 = vpop.f32.mrf.mxu0
        %v3057 = vpop.f32.mrf.mxu0
        %v3058 = vadd.f32 0.0, %v3057
        %v3059 = vpop.f32.mrf.mxu0
        %3060 = vmatprep.mubr.bf16.mxu0 0
        %3061 = vmatmul.mubr.bf16.gmra.mxu0 %v2913
        %v3062 = vpop.f32.mrf.mxu0
        %v3063 = vadd.f32 0.0, %v3062
        %v3064 = vpop.f32.mrf.mxu0
        %v3065 = vpop.f32.mrf.mxu0
        %v3066 = vadd.f32 0.0, %v3065
        %v3067 = vpop.f32.mrf.mxu0
        %3068 = vmatprep.mubr.bf16.mxu0 0
        %3069 = vmatmul.mubr.bf16.gmra.mxu0 %v2916
        %v3070 = vpop.f32.mrf.mxu0
        %v3071 = vadd.f32 0.0, %v3070
        %v3072 = vpop.f32.mrf.mxu0
        %v3073 = vpop.f32.mrf.mxu0
        %v3074 = vadd.f32 0.0, %v3073
        %v3075 = vpop.f32.mrf.mxu0
        %3076 = vmatprep.mubr.bf16.mxu0 0
        %3077 = vmatmul.mubr.bf16.gmra.mxu0 %v2919
        %v3078 = vpop.f32.mrf.mxu0
        %v3079 = vadd.f32 0.0, %v3078
        %v3080 = vpop.f32.mrf.mxu0
        %v3081 = vpop.f32.mrf.mxu0
        %v3082 = vadd.f32 0.0, %v3081
        %v3083 = vpop.f32.mrf.mxu0
        %3084 = vmatprep.mubr.bf16.mxu0 0
        %3085 = vmatmul.mubr.bf16.gmra.mxu0 %v2922
        %v3086 = vpop.f32.mrf.mxu0
        %v3087 = vadd.f32 0.0, %v3086
        %v3088 = vpop.f32.mrf.mxu0
        %v3089 = vpop.f32.mrf.mxu0
        %v3090 = vadd.f32 0.0, %v3089
        %v3091 = vpop.f32.mrf.mxu0
        %3092 = vmatprep.mubr.bf16.mxu0 0
        %3093 = vmatmul.mubr.bf16.gmra.mxu0 %v2925
        %v3094 = vpop.f32.mrf.mxu0
        %v3095 = vadd.f32 0.0, %v3094
        %v3096 = vpop.f32.mrf.mxu0
        %v3097 = vpop.f32.mrf.mxu0
        %v3098 = vadd.f32 0.0, %v3097
        %v3099 = vpop.f32.mrf.mxu0
        %3100 = vmatprep.mubr.bf16.mxu0 0
        %3101 = vmatmul.mubr.bf16.gmra.mxu0 %v2928
        %v3102 = vpop.f32.mrf.mxu0
        %v3103 = vadd.f32 0.0, %v3102
        %v3104 = vpop.f32.mrf.mxu0
        %v3105 = vpop.f32.mrf.mxu0
        %v3106 = vadd.f32 0.0, %v3105
        %v3107 = vpop.f32.mrf.mxu0
        %3108 = vmatprep.mubr.bf16.mxu0 0
        %3109 = vmatmul.mubr.bf16.gmra.mxu0 %v2931
        %v3110 = vpop.f32.mrf.mxu0
        %v3111 = vadd.f32 0.0, %v3110
        %v3112 = vpop.f32.mrf.mxu0
        %v3113 = vpop.f32.mrf.mxu0
        %v3114 = vadd.f32 0.0, %v3113
        %v3115 = vpop.f32.mrf.mxu0
        %3116 = vmatprep.mubr.bf16.mxu0 0
        %3117 = vmatmul.mubr.bf16.gmra.mxu0 %v2934
        %v3118 = vpop.f32.mrf.mxu0
        %v3119 = vadd.f32 0.0, %v3118
        %v3120 = vpop.f32.mrf.mxu0
        %v3121 = vpop.f32.mrf.mxu0
        %v3122 = vadd.f32 0.0, %v3121
        %v3123 = vpop.f32.mrf.mxu0
        %3124 = vmatprep.mubr.bf16.mxu0 0
        %3125 = vmatmul.mubr.bf16.gmra.mxu0 %v2937
        %v3126 = vpop.f32.mrf.mxu0
        %v3127 = vadd.f32 0.0, %v3126
        %v3128 = vpop.f32.mrf.mxu0
        %v3129 = vpop.f32.mrf.mxu0
        %v3130 = vadd.f32 0.0, %v3129
        %v3131 = vpop.f32.mrf.mxu0
        %3132 = vmatprep.mubr.bf16.mxu0 0
        %3133 = vmatmul.mubr.bf16.gmra.mxu0 %v2940
        %v3134 = vpop.f32.mrf.mxu0
        %v3135 = vadd.f32 0.0, %v3134
        %v3136 = vpop.f32.mrf.mxu0
        %v3137 = vpop.f32.mrf.mxu0
        %v3138 = vadd.f32 0.0, %v3137
        %v3139 = vpop.f32.mrf.mxu0
        %3140 = vmatprep.mubr.bf16.mxu0 0
        %3141 = vmatmul.mubr.bf16.gmra.mxu0 %v2943
        %v3142 = vpop.f32.mrf.mxu0
        %v3143 = vadd.f32 0.0, %v3142
        %v3144 = vpop.f32.mrf.mxu0
        %v3145 = vpop.f32.mrf.mxu0
        %v3146 = vadd.f32 0.0, %v3145
        %v3147 = vpop.f32.mrf.mxu0
        %3148 = vdwg.mxu0
        %v3149 = vadd.f32 %v2817, %v2983
        %v3150 = vadd.f32 %v2818, %v2986
        %v3151 = vadd.f32 %v2819, %v2991
        %v3152 = vadd.f32 %v2820, %v2994
        %v3153 = vadd.f32 %v2821, %v2999
        %v3154 = vadd.f32 %v2822, %v3002
        %v3155 = vadd.f32 %v2823, %v3007
        %v3156 = vadd.f32 %v2824, %v3010
        %v3157 = vadd.f32 %v2825, %v3015
        %v3158 = vadd.f32 %v2826, %v3018
        %v3159 = vadd.f32 %v2827, %v3023
        %v3160 = vadd.f32 %v2828, %v3026
        %v3161 = vadd.f32 %v2829, %v3031
        %v3162 = vadd.f32 %v2830, %v3034
        %v3163 = vadd.f32 %v2831, %v3039
        %v3164 = vadd.f32 %v2832, %v3042
        %v3165 = vadd.f32 %v2833, %v3047
        %v3166 = vadd.f32 %v2834, %v3050
        %v3167 = vadd.f32 %v2835, %v3055
        %v3168 = vadd.f32 %v2836, %v3058
        %v3169 = vadd.f32 %v2837, %v3063
        %v3170 = vadd.f32 %v2838, %v3066
        %v3171 = vadd.f32 %v2839, %v3071
        %v3172 = vadd.f32 %v2840, %v3074
        %v3173 = vadd.f32 %v2841, %v3079
        %v3174 = vadd.f32 %v2842, %v3082
        %v3175 = vadd.f32 %v2843, %v3087
        %v3176 = vadd.f32 %v2844, %v3090
        %v3177 = vadd.f32 %v2845, %v3095
        %v3178 = vadd.f32 %v2846, %v3098
        %v3179 = vadd.f32 %v2847, %v3103
        %v3180 = vadd.f32 %v2848, %v3106
        %v3181 = vadd.f32 %v2849, %v3111
        %v3182 = vadd.f32 %v2850, %v3114
        %v3183 = vadd.f32 %v2851, %v3119
        %v3184 = vadd.f32 %v2852, %v3122
        %v3185 = vadd.f32 %v2853, %v3127
        %v3186 = vadd.f32 %v2854, %v3130
        %v3187 = vadd.f32 %v2855, %v3135
        %v3188 = vadd.f32 %v2856, %v3138
        %v3189 = vadd.f32 %v2857, %v3143
        %v3190 = vadd.f32 %v2858, %v3146
        %v3191 = vld [vmem:[%s368 + $0x10] sm:$0xf]
        %v3192 = vld [vmem:[%s368 + $0x14] sm:$0xf]
        %v3193 = vld [vmem:[%s368 + $0x18] sm:$0xf]
        %v3194 = vld [vmem:[%s368 + $0x1c] sm:$0xf]
        %v3195 = vld [vmem:[%s368 + $0x20] sm:$0xf]
        %v3196 = vld [vmem:[%s368 + $0x24] sm:$0xf]
        %v3197 = vld [vmem:[%s368 + $0x28] sm:$0xf]
        %v3198 = vld [vmem:[%s368 + $0x2c] sm:$0xf]
        %v3199 = vld [vmem:[%s368 + $0x30] sm:$0xf]
        %v3200 = vld [vmem:[%s368 + $0x34] sm:$0xf]
        %v3201 = vld [vmem:[%s368 + $0x38] sm:$0xf]
        %v3202 = vld [vmem:[%s368 + $0x3c] sm:$0xf]
        %v3203 = vld [vmem:[%s368 + $0x40] sm:$0xf]
        %v3204 = vld [vmem:[%s368 + $0x44] sm:$0xf]
        %v3205 = vld [vmem:[%s368 + $0x48] sm:$0xf]
        %v3206 = vld [vmem:[%s368 + $0x4c] sm:$0xf]
        %v3207 = vld [vmem:[%s368 + $0x50] sm:$0xf]
        %v3208 = vld [vmem:[%s368 + $0x54] sm:$0xf]
        %v3209 = vld [vmem:[%s368 + $0x58] sm:$0xf]
        %v3210 = vld [vmem:[%s368 + $0x5c] sm:$0xf]
        %v3211 = vld [vmem:[%s368 + $0x60] sm:$0xf]
        %v3212 = vld [vmem:[%s368 + $0x64] sm:$0xf]
        %v3213 = vld [vmem:[%s368 + $0x68] sm:$0xf]
        %v3214 = vld [vmem:[%s368 + $0x6c] sm:$0xf]
        %v3215 = vld [vmem:[%s368 + $0x70] sm:$0xf]
        %v3216 = vld [vmem:[%s368 + $0x74] sm:$0xf]
        %v3217 = vld [vmem:[%s368 + $0x78] sm:$0xf]
        %v3218 = vld [vmem:[%s368 + $0x7c] sm:$0xf]
        %v3219 = vld [vmem:[%s368 + $0x80] sm:$0xf]
        %v3220 = vld [vmem:[%s368 + $0x84] sm:$0xf]
        %v3221 = vld [vmem:[%s368 + $0x88] sm:$0xf]
        %v3222 = vld [vmem:[%s368 + $0x8c] sm:$0xf]
        %v3223 = vld [vmem:[%s368 + $0x90] sm:$0xf]
        %v3224 = vld [vmem:[%s368 + $0x94] sm:$0xf]
        %v3225 = vld [vmem:[%s368 + $0x98] sm:$0xf]
        %v3226 = vld [vmem:[%s368 + $0x9c] sm:$0xf]
        %v3227 = vld [vmem:[%s368 + $0xa0] sm:$0xf]
        %v3228 = vld [vmem:[%s368 + $0xa4] sm:$0xf]
        %v3229 = vld [vmem:[%s368 + $0xa8] sm:$0xf]
        %v3230 = vld [vmem:[%s368 + $0xac] sm:$0xf]
        %v3231 = vld [vmem:[%s368 + $0xb0] sm:$0xf]
        %v3232 = vld [vmem:[%s368 + $0xb4] sm:$0xf]
        %v3233 = vld [vmem:[%s368 + $0xb8] sm:$0x1]
        %v3234 = vunpack.c.l.bf16 %v3191
        %v3235 = vunpack.c.l.bf16 %v3192
        %v3236 = vunpack.c.l.bf16 %v3193
        %v3237 = vunpack.c.l.bf16 %v3194
        %v3238 = vunpack.c.l.bf16 %v3195
        %v3239 = vunpack.c.l.bf16 %v3196
        %v3240 = vunpack.c.l.bf16 %v3197
        %v3241 = vunpack.c.l.bf16 %v3198
        %v3242 = vunpack.c.l.bf16 %v3199
        %v3243 = vunpack.c.l.bf16 %v3200
        %v3244 = vunpack.c.l.bf16 %v3201
        %v3245 = vunpack.c.l.bf16 %v3202
        %v3246 = vunpack.c.l.bf16 %v3203
        %v3247 = vunpack.c.l.bf16 %v3204
        %v3248 = vunpack.c.l.bf16 %v3205
        %v3249 = vunpack.c.l.bf16 %v3206
        %v3250 = vunpack.c.l.bf16 %v3207
        %v3251 = vunpack.c.l.bf16 %v3208
        %v3252 = vunpack.c.l.bf16 %v3209
        %v3253 = vunpack.c.l.bf16 %v3210
        %v3254 = vunpack.c.l.bf16 %v3211
        %v3255 = vunpack.c.l.bf16 %v3212
        %v3256 = vunpack.c.l.bf16 %v3213
        %v3257 = vunpack.c.l.bf16 %v3214
        %v3258 = vunpack.c.l.bf16 %v3215
        %v3259 = vunpack.c.l.bf16 %v3216
        %v3260 = vunpack.c.l.bf16 %v3217
        %v3261 = vunpack.c.l.bf16 %v3218
        %v3262 = vunpack.c.l.bf16 %v3219
        %v3263 = vunpack.c.l.bf16 %v3220
        %v3264 = vunpack.c.l.bf16 %v3221
        %v3265 = vunpack.c.l.bf16 %v3222
        %v3266 = vunpack.c.l.bf16 %v3223
        %v3267 = vunpack.c.l.bf16 %v3224
        %v3268 = vunpack.c.l.bf16 %v3225
        %v3269 = vunpack.c.l.bf16 %v3226
        %v3270 = vunpack.c.l.bf16 %v3227
        %v3271 = vunpack.c.l.bf16 %v3228
        %v3272 = vunpack.c.l.bf16 %v3229
        %v3273 = vunpack.c.l.bf16 %v3230
        %v3274 = vunpack.c.l.bf16 %v3231
        %v3275 = vunpack.c.l.bf16 %v3232
        %v3276 = vunpack.c.l.bf16 %v3233
        %v3277 = vld [vmem:[%s373 + $0x10] sm:$0xf]
        %v3278 = vld [vmem:[%s373 + $0x14] sm:$0xf]
        %v3279 = vld [vmem:[%s373 + $0x18] sm:$0xf]
        %v3280 = vld [vmem:[%s373 + $0x1c] sm:$0xf]
        %v3281 = vld [vmem:[%s373 + $0x20] sm:$0xf]
        %v3282 = vld [vmem:[%s373 + $0x24] sm:$0xf]
        %v3283 = vld [vmem:[%s373 + $0x28] sm:$0xf]
        %v3284 = vld [vmem:[%s373 + $0x2c] sm:$0xf]
        %v3285 = vld [vmem:[%s373 + $0x30] sm:$0xf]
        %v3286 = vld [vmem:[%s373 + $0x34] sm:$0xf]
        %v3287 = vld [vmem:[%s373 + $0x38] sm:$0xf]
        %v3288 = vld [vmem:[%s373 + $0x3c] sm:$0xf]
        %v3289 = vld [vmem:[%s373 + $0x40] sm:$0xf]
        %v3290 = vld [vmem:[%s373 + $0x44] sm:$0xf]
        %v3291 = vld [vmem:[%s373 + $0x48] sm:$0xf]
        %v3292 = vld [vmem:[%s373 + $0x4c] sm:$0xf]
        %v3293 = vld [vmem:[%s373 + $0x50] sm:$0xf]
        %v3294 = vld [vmem:[%s373 + $0x54] sm:$0xf]
        %v3295 = vld [vmem:[%s373 + $0x58] sm:$0xf]
        %v3296 = vld [vmem:[%s373 + $0x5c] sm:$0xf]
        %v3297 = vld [vmem:[%s373 + $0x60] sm:$0xf]
        %v3298 = vld [vmem:[%s373 + $0x64] sm:$0xf]
        %v3299 = vld [vmem:[%s373 + $0x68] sm:$0xf]
        %v3300 = vld [vmem:[%s373 + $0x6c] sm:$0xf]
        %v3301 = vld [vmem:[%s373 + $0x70] sm:$0xf]
        %v3302 = vld [vmem:[%s373 + $0x74] sm:$0xf]
        %v3303 = vld [vmem:[%s373 + $0x78] sm:$0xf]
        %v3304 = vld [vmem:[%s373 + $0x7c] sm:$0xf]
        %v3305 = vld [vmem:[%s373 + $0x80] sm:$0xf]
        %v3306 = vld [vmem:[%s373 + $0x84] sm:$0xf]
        %v3307 = vld [vmem:[%s373 + $0x88] sm:$0xf]
        %v3308 = vld [vmem:[%s373 + $0x8c] sm:$0xf]
        %v3309 = vld [vmem:[%s373 + $0x90] sm:$0xf]
        %v3310 = vld [vmem:[%s373 + $0x94] sm:$0xf]
        %v3311 = vld [vmem:[%s373 + $0x98] sm:$0xf]
        %v3312 = vld [vmem:[%s373 + $0x9c] sm:$0xf]
        %v3313 = vld [vmem:[%s373 + $0xa0] sm:$0xf]
        %v3314 = vld [vmem:[%s373 + $0xa4] sm:$0xf]
        %v3315 = vld [vmem:[%s373 + $0xa8] sm:$0xf]
        %v3316 = vld [vmem:[%s373 + $0xac] sm:$0xf]
        %v3317 = vld [vmem:[%s373 + $0xb0] sm:$0xf]
        %v3318 = vld [vmem:[%s373 + $0xb4] sm:$0xf]
        %v3319 = vld [vmem:[%s373 + $0xb8] sm:$0x1]
        %v3320 = vunpack.c.l.bf16 %v3277
        %v3321 = vunpack.c.l.bf16 %v3278
        %v3322 = vunpack.c.l.bf16 %v3279
        %v3323 = vunpack.c.l.bf16 %v3280
        %v3324 = vunpack.c.l.bf16 %v3281
        %v3325 = vunpack.c.l.bf16 %v3282
        %v3326 = vunpack.c.l.bf16 %v3283
        %v3327 = vunpack.c.l.bf16 %v3284
        %v3328 = vunpack.c.l.bf16 %v3285
        %v3329 = vunpack.c.l.bf16 %v3286
        %v3330 = vunpack.c.l.bf16 %v3287
        %v3331 = vunpack.c.l.bf16 %v3288
        %v3332 = vunpack.c.l.bf16 %v3289
        %v3333 = vunpack.c.l.bf16 %v3290
        %v3334 = vunpack.c.l.bf16 %v3291
        %v3335 = vunpack.c.l.bf16 %v3292
        %v3336 = vunpack.c.l.bf16 %v3293
        %v3337 = vunpack.c.l.bf16 %v3294
        %v3338 = vunpack.c.l.bf16 %v3295
        %v3339 = vunpack.c.l.bf16 %v3296
        %v3340 = vunpack.c.l.bf16 %v3297
        %v3341 = vunpack.c.l.bf16 %v3298
        %v3342 = vunpack.c.l.bf16 %v3299
        %v3343 = vunpack.c.l.bf16 %v3300
        %v3344 = vunpack.c.l.bf16 %v3301
        %v3345 = vunpack.c.l.bf16 %v3302
        %v3346 = vunpack.c.l.bf16 %v3303
        %v3347 = vunpack.c.l.bf16 %v3304
        %v3348 = vunpack.c.l.bf16 %v3305
        %v3349 = vunpack.c.l.bf16 %v3306
        %v3350 = vunpack.c.l.bf16 %v3307
        %v3351 = vunpack.c.l.bf16 %v3308
        %v3352 = vunpack.c.l.bf16 %v3309
        %v3353 = vunpack.c.l.bf16 %v3310
        %v3354 = vunpack.c.l.bf16 %v3311
        %v3355 = vunpack.c.l.bf16 %v3312
        %v3356 = vunpack.c.l.bf16 %v3313
        %v3357 = vunpack.c.l.bf16 %v3314
        %v3358 = vunpack.c.l.bf16 %v3315
        %v3359 = vunpack.c.l.bf16 %v3316
        %v3360 = vunpack.c.l.bf16 %v3317
        %v3361 = vunpack.c.l.bf16 %v3318
        %v3362 = vunpack.c.l.bf16 %v3319
        %v3363 = vmul.f32 %v647, %v3234
        %v3364 = vmul.f32 %v647, %v3235
        %v3365 = vmul.f32 %v647, %v3236
        %v3366 = vmul.f32 %v647, %v3237
        %v3367 = vmul.f32 %v647, %v3238
        %v3368 = vmul.f32 %v647, %v3239
        %v3369 = vmul.f32 %v647, %v3240
        %v3370 = vmul.f32 %v647, %v3241
        %v3371 = vmul.f32 %v647, %v3242
        %v3372 = vmul.f32 %v647, %v3243
        %v3373 = vmul.f32 %v647, %v3244
        %v3374 = vmul.f32 %v647, %v3245
        %v3375 = vmul.f32 %v647, %v3246
        %v3376 = vmul.f32 %v647, %v3247
        %v3377 = vmul.f32 %v647, %v3248
        %v3378 = vmul.f32 %v647, %v3249
        %v3379 = vmul.f32 %v647, %v3250
        %v3380 = vmul.f32 %v647, %v3251
        %v3381 = vmul.f32 %v647, %v3252
        %v3382 = vmul.f32 %v647, %v3253
        %v3383 = vmul.f32 %v647, %v3254
        %v3384 = vmul.f32 %v647, %v3255
        %v3385 = vmul.f32 %v647, %v3256
        %v3386 = vmul.f32 %v647, %v3257
        %v3387 = vmul.f32 %v647, %v3258
        %v3388 = vmul.f32 %v647, %v3259
        %v3389 = vmul.f32 %v647, %v3260
        %v3390 = vmul.f32 %v647, %v3261
        %v3391 = vmul.f32 %v647, %v3262
        %v3392 = vmul.f32 %v647, %v3263
        %v3393 = vmul.f32 %v647, %v3264
        %v3394 = vmul.f32 %v647, %v3265
        %v3395 = vmul.f32 %v647, %v3266
        %v3396 = vmul.f32 %v647, %v3267
        %v3397 = vmul.f32 %v647, %v3268
        %v3398 = vmul.f32 %v647, %v3269
        %v3399 = vmul.f32 %v647, %v3270
        %v3400 = vmul.f32 %v647, %v3271
        %v3401 = vmul.f32 %v647, %v3272
        %v3402 = vmul.f32 %v647, %v3273
        %v3403 = vmul.f32 %v647, %v3274
        %v3404 = vmul.f32 %v647, %v3275
        %v3405 = vmul.f32 %v647, %v3276
        %v3406 = vmul.f32 %v691, %v3320
        %v3407 = vmul.f32 %v691, %v3321
        %v3408 = vmul.f32 %v691, %v3322
        %v3409 = vmul.f32 %v691, %v3323
        %v3410 = vmul.f32 %v691, %v3324
        %v3411 = vmul.f32 %v691, %v3325
        %v3412 = vmul.f32 %v691, %v3326
        %v3413 = vmul.f32 %v691, %v3327
        %v3414 = vmul.f32 %v691, %v3328
        %v3415 = vmul.f32 %v691, %v3329
        %v3416 = vmul.f32 %v691, %v3330
        %v3417 = vmul.f32 %v691, %v3331
        %v3418 = vmul.f32 %v691, %v3332
        %v3419 = vmul.f32 %v691, %v3333
        %v3420 = vmul.f32 %v691, %v3334
        %v3421 = vmul.f32 %v691, %v3335
        %v3422 = vmul.f32 %v691, %v3336
        %v3423 = vmul.f32 %v691, %v3337
        %v3424 = vmul.f32 %v691, %v3338
        %v3425 = vmul.f32 %v691, %v3339
        %v3426 = vmul.f32 %v691, %v3340
        %v3427 = vmul.f32 %v691, %v3341
        %v3428 = vmul.f32 %v691, %v3342
        %v3429 = vmul.f32 %v691, %v3343
        %v3430 = vmul.f32 %v691, %v3344
        %v3431 = vmul.f32 %v691, %v3345
        %v3432 = vmul.f32 %v691, %v3346
        %v3433 = vmul.f32 %v691, %v3347
        %v3434 = vmul.f32 %v691, %v3348
        %v3435 = vmul.f32 %v691, %v3349
        %v3436 = vmul.f32 %v691, %v3350
        %v3437 = vmul.f32 %v691, %v3351
        %v3438 = vmul.f32 %v691, %v3352
        %v3439 = vmul.f32 %v691, %v3353
        %v3440 = vmul.f32 %v691, %v3354
        %v3441 = vmul.f32 %v691, %v3355
        %v3442 = vmul.f32 %v691, %v3356
        %v3443 = vmul.f32 %v691, %v3357
        %v3444 = vmul.f32 %v691, %v3358
        %v3445 = vmul.f32 %v691, %v3359
        %v3446 = vmul.f32 %v691, %v3360
        %v3447 = vmul.f32 %v691, %v3361
        %v3448 = vmul.f32 %v691, %v3362
        %v3449 = vadd.f32 %v3363, %v3406
        %v3450 = vadd.f32 %v3364, %v3407
        %v3451 = vadd.f32 %v3365, %v3408
        %v3452 = vadd.f32 %v3366, %v3409
        %v3453 = vadd.f32 %v3367, %v3410
        %v3454 = vadd.f32 %v3368, %v3411
        %v3455 = vadd.f32 %v3369, %v3412
        %v3456 = vadd.f32 %v3370, %v3413
        %v3457 = vadd.f32 %v3371, %v3414
        %v3458 = vadd.f32 %v3372, %v3415
        %v3459 = vadd.f32 %v3373, %v3416
        %v3460 = vadd.f32 %v3374, %v3417
        %v3461 = vadd.f32 %v3375, %v3418
        %v3462 = vadd.f32 %v3376, %v3419
        %v3463 = vadd.f32 %v3377, %v3420
        %v3464 = vadd.f32 %v3378, %v3421
        %v3465 = vadd.f32 %v3379, %v3422
        %v3466 = vadd.f32 %v3380, %v3423
        %v3467 = vadd.f32 %v3381, %v3424
        %v3468 = vadd.f32 %v3382, %v3425
        %v3469 = vadd.f32 %v3383, %v3426
        %v3470 = vadd.f32 %v3384, %v3427
        %v3471 = vadd.f32 %v3385, %v3428
        %v3472 = vadd.f32 %v3386, %v3429
        %v3473 = vadd.f32 %v3387, %v3430
        %v3474 = vadd.f32 %v3388, %v3431
        %v3475 = vadd.f32 %v3389, %v3432
        %v3476 = vadd.f32 %v3390, %v3433
        %v3477 = vadd.f32 %v3391, %v3434
        %v3478 = vadd.f32 %v3392, %v3435
        %v3479 = vadd.f32 %v3393, %v3436
        %v3480 = vadd.f32 %v3394, %v3437
        %v3481 = vadd.f32 %v3395, %v3438
        %v3482 = vadd.f32 %v3396, %v3439
        %v3483 = vadd.f32 %v3397, %v3440
        %v3484 = vadd.f32 %v3398, %v3441
        %v3485 = vadd.f32 %v3399, %v3442
        %v3486 = vadd.f32 %v3400, %v3443
        %v3487 = vadd.f32 %v3401, %v3444
        %v3488 = vadd.f32 %v3402, %v3445
        %v3489 = vadd.f32 %v3403, %v3446
        %v3490 = vadd.f32 %v3404, %v3447
        %v3491 = vadd.f32 %v3405, %v3448
        %v3492 = vpack.c.bf16 %v3450, %v3449
        %v3493 = vpack.c.bf16 %v3452, %v3451
        %v3494 = vpack.c.bf16 %v3454, %v3453
        %v3495 = vpack.c.bf16 %v3456, %v3455
        %v3496 = vpack.c.bf16 %v3458, %v3457
        %v3497 = vpack.c.bf16 %v3460, %v3459
        %v3498 = vpack.c.bf16 %v3462, %v3461
        %v3499 = vpack.c.bf16 %v3464, %v3463
        %v3500 = vpack.c.bf16 %v3466, %v3465
        %v3501 = vpack.c.bf16 %v3468, %v3467
        %v3502 = vpack.c.bf16 %v3470, %v3469
        %v3503 = vpack.c.bf16 %v3472, %v3471
        %v3504 = vpack.c.bf16 %v3474, %v3473
        %v3505 = vpack.c.bf16 %v3476, %v3475
        %v3506 = vpack.c.bf16 %v3478, %v3477
        %v3507 = vpack.c.bf16 %v3480, %v3479
        %v3508 = vpack.c.bf16 %v3482, %v3481
        %v3509 = vpack.c.bf16 %v3484, %v3483
        %v3510 = vpack.c.bf16 %v3486, %v3485
        %v3511 = vpack.c.bf16 %v3488, %v3487
        %v3512 = vpack.c.bf16 %v3490, %v3489
        %v3513 = vpack.c.bf16 %v3491, %v3491
        %s3514 = scalar_lea.vmem %s3, 10
        %v3515 = vld [vmem:[%s3514] sm:$0x3]
        %vm3516 = vsmask.f32 7424
        %v3518 = vshrl.u32 %v3492, 16
        %v3520 = vshll.u32 %v3492, 16
        %v3522 = vrot.slane %v3520, 1
        %v3523 = vor.u32 %v3518, %v3522
        %v3525 = vshll.u32 %v3493, 16
        %v3527 = vrot.slane %v3525, 1
        %v3528 = vsel %vm3516, %v3523, %v3527
        %v3529 = vshrl.u32 %v3493, 16
        %v3531 = vor.u32 %v3529, %v3527
        %v3533 = vshll.u32 %v3494, 16
        %v3535 = vrot.slane %v3533, 1
        %v3536 = vsel %vm3516, %v3531, %v3535
        %v3537 = vshrl.u32 %v3494, 16
        %v3539 = vor.u32 %v3537, %v3535
        %v3541 = vshll.u32 %v3495, 16
        %v3543 = vrot.slane %v3541, 1
        %v3544 = vsel %vm3516, %v3539, %v3543
        %v3545 = vshrl.u32 %v3495, 16
        %v3547 = vor.u32 %v3545, %v3543
        %v3549 = vshll.u32 %v3496, 16
        %v3551 = vrot.slane %v3549, 1
        %v3552 = vsel %vm3516, %v3547, %v3551
        %v3553 = vshrl.u32 %v3496, 16
        %v3555 = vor.u32 %v3553, %v3551
        %v3557 = vshll.u32 %v3497, 16
        %v3559 = vrot.slane %v3557, 1
        %v3560 = vsel %vm3516, %v3555, %v3559
        %v3561 = vshrl.u32 %v3497, 16
        %v3563 = vor.u32 %v3561, %v3559
        %v3565 = vshll.u32 %v3498, 16
        %v3567 = vrot.slane %v3565, 1
        %v3568 = vsel %vm3516, %v3563, %v3567
        %v3569 = vshrl.u32 %v3498, 16
        %v3571 = vor.u32 %v3569, %v3567
        %v3573 = vshll.u32 %v3499, 16
        %v3575 = vrot.slane %v3573, 1
        %v3576 = vsel %vm3516, %v3571, %v3575
        %v3577 = vshrl.u32 %v3499, 16
        %v3579 = vor.u32 %v3577, %v3575
        %v3581 = vshll.u32 %v3500, 16
        %v3583 = vrot.slane %v3581, 1
        %v3584 = vsel %vm3516, %v3579, %v3583
        %v3585 = vshrl.u32 %v3500, 16
        %v3587 = vor.u32 %v3585, %v3583
        %v3589 = vshll.u32 %v3501, 16
        %v3591 = vrot.slane %v3589, 1
        %v3592 = vsel %vm3516, %v3587, %v3591
        %v3593 = vshrl.u32 %v3501, 16
        %v3595 = vor.u32 %v3593, %v3591
        %v3597 = vshll.u32 %v3502, 16
        %v3599 = vrot.slane %v3597, 1
        %v3600 = vsel %vm3516, %v3595, %v3599
        %v3601 = vshrl.u32 %v3502, 16
        %v3603 = vor.u32 %v3601, %v3599
        %v3605 = vshll.u32 %v3503, 16
        %v3607 = vrot.slane %v3605, 1
        %v3608 = vsel %vm3516, %v3603, %v3607
        %v3609 = vshrl.u32 %v3503, 16
        %v3611 = vor.u32 %v3609, %v3607
        %v3613 = vshll.u32 %v3504, 16
        %v3615 = vrot.slane %v3613, 1
        %v3616 = vsel %vm3516, %v3611, %v3615
        %v3617 = vshrl.u32 %v3504, 16
        %v3619 = vor.u32 %v3617, %v3615
        %v3621 = vshll.u32 %v3505, 16
        %v3623 = vrot.slane %v3621, 1
        %v3624 = vsel %vm3516, %v3619, %v3623
        %v3625 = vshrl.u32 %v3505, 16
        %v3627 = vor.u32 %v3625, %v3623
        %v3629 = vshll.u32 %v3506, 16
        %v3631 = vrot.slane %v3629, 1
        %v3632 = vsel %vm3516, %v3627, %v3631
        %v3633 = vshrl.u32 %v3506, 16
        %v3635 = vor.u32 %v3633, %v3631
        %v3637 = vshll.u32 %v3507, 16
        %v3639 = vrot.slane %v3637, 1
        %v3640 = vsel %vm3516, %v3635, %v3639
        %v3641 = vshrl.u32 %v3507, 16
        %v3643 = vor.u32 %v3641, %v3639
        %v3645 = vshll.u32 %v3508, 16
        %v3647 = vrot.slane %v3645, 1
        %v3648 = vsel %vm3516, %v3643, %v3647
        %v3649 = vshrl.u32 %v3508, 16
        %v3651 = vor.u32 %v3649, %v3647
        %v3653 = vshll.u32 %v3509, 16
        %v3655 = vrot.slane %v3653, 1
        %v3656 = vsel %vm3516, %v3651, %v3655
        %v3657 = vshrl.u32 %v3509, 16
        %v3659 = vor.u32 %v3657, %v3655
        %v3661 = vshll.u32 %v3510, 16
        %v3663 = vrot.slane %v3661, 1
        %v3664 = vsel %vm3516, %v3659, %v3663
        %v3665 = vshrl.u32 %v3510, 16
        %v3667 = vor.u32 %v3665, %v3663
        %v3669 = vshll.u32 %v3511, 16
        %v3671 = vrot.slane %v3669, 1
        %v3672 = vsel %vm3516, %v3667, %v3671
        %v3673 = vshrl.u32 %v3511, 16
        %v3675 = vor.u32 %v3673, %v3671
        %v3677 = vshll.u32 %v3512, 16
        %v3679 = vrot.slane %v3677, 1
        %v3680 = vsel %vm3516, %v3675, %v3679
        %v3681 = vshrl.u32 %v3512, 16
        %v3683 = vor.u32 %v3681, %v3679
        %v3685 = vshll.u32 %v3513, 16
        %v3687 = vrot.slane %v3685, 1
        %v3688 = vsel %vm3516, %v3683, %v3687
        %v3690 = vsel %vm877, %v3528, 0
        %v3693 = vsel %vm877, %v3536, 0
        %v3696 = vsel %vm877, %v3544, 0
        %v3699 = vsel %vm877, %v3552, 0
        %v3702 = vsel %vm877, %v3560, 0
        %v3705 = vsel %vm877, %v3568, 0
        %v3708 = vsel %vm877, %v3576, 0
        %v3711 = vsel %vm877, %v3584, 0
        %v3714 = vsel %vm877, %v3592, 0
        %v3717 = vsel %vm877, %v3600, 0
        %v3720 = vsel %vm877, %v3608, 0
        %v3723 = vsel %vm877, %v3616, 0
        %v3726 = vsel %vm877, %v3624, 0
        %v3729 = vsel %vm877, %v3632, 0
        %v3732 = vsel %vm877, %v3640, 0
        %v3735 = vsel %vm877, %v3648, 0
        %v3738 = vsel %vm877, %v3656, 0
        %v3741 = vsel %vm877, %v3664, 0
        %v3744 = vsel %vm877, %v3672, 0
        %v3747 = vsel %vm877, %v3680, 0
        %v3750 = vsel %vm877, %v3688, 0
        %v3753 = vsel %vm941, %v3515, 0
        %3755 = vmatprep.subr.bf16.mxu0 0
        %3756 = vmatpush1.bf16.msra.mxu0 0
        %3757 = vmatprep.subr.bf16.mxu0 0
        %3758 = vmatpush1.bf16.msra.mxu0 0
        %3759 = vmatprep.subr.bf16.mxu0 0
        %3760 = vmatpush1.bf16.msra.mxu0 0
        %3761 = vmatprep.subr.bf16.mxu0 0
        %3762 = vmatpush1.bf16.msra.mxu0 0
        %3763 = vmatprep.subr.bf16.mxu0 0
        %3764 = vmatpush1.bf16.msra.mxu0 0
        %3765 = vmatprep.subr.bf16.mxu0 0
        %3766 = vmatpush1.bf16.msra.mxu0 0
        %3767 = vmatprep.subr.bf16.mxu0 0
        %3768 = vmatpush1.bf16.msra.mxu0 0
        %3769 = vmatprep.subr.bf16.mxu0 0
        %3770 = vmatpush1.bf16.msra.mxu0 %v3753
        %3771 = vmatprep.subr.bf16.mxu0 0
        %3772 = vmatpush2.bf16.msra.mxu0 0
        %3773 = vmatprep.subr.bf16.mxu0 0
        %3774 = vmatpush2.bf16.msra.mxu0 0
        %3775 = vmatprep.subr.bf16.mxu0 0
        %3776 = vmatpush2.bf16.msra.mxu0 0
        %3777 = vmatprep.subr.bf16.mxu0 0
        %3778 = vmatpush2.bf16.msra.mxu0 0
        %3779 = vmatprep.subr.bf16.mxu0 0
        %3780 = vmatpush2.bf16.msra.mxu0 0
        %3781 = vmatprep.subr.bf16.mxu0 0
        %3782 = vmatpush2.bf16.msra.mxu0 0
        %3783 = vmatprep.subr.bf16.mxu0 0
        %3784 = vmatpush2.bf16.msra.mxu0 0
        %3785 = vmatprep.subr.bf16.mxu0 0
        %3786 = vmatpush2.bf16.msra.mxu0 0
        %3787 = vmatprep.mubr.bf16.mxu0 0
        %3788 = vmatmul.mubr.bf16.gmra.mxu0 %v3690
        %v3789 = vpop.f32.mrf.mxu0
        %v3790 = vadd.f32 0.0, %v3789
        %v3791 = vpop.f32.mrf.mxu0
        %v3792 = vpop.f32.mrf.mxu0
        %v3793 = vadd.f32 0.0, %v3792
        %v3794 = vpop.f32.mrf.mxu0
        %3795 = vmatprep.mubr.bf16.mxu0 0
        %3796 = vmatmul.mubr.bf16.gmra.mxu0 %v3693
        %v3797 = vpop.f32.mrf.mxu0
        %v3798 = vadd.f32 0.0, %v3797
        %v3799 = vpop.f32.mrf.mxu0
        %v3800 = vpop.f32.mrf.mxu0
        %v3801 = vadd.f32 0.0, %v3800
        %v3802 = vpop.f32.mrf.mxu0
        %3803 = vmatprep.mubr.bf16.mxu0 0
        %3804 = vmatmul.mubr.bf16.gmra.mxu0 %v3696
        %v3805 = vpop.f32.mrf.mxu0
        %v3806 = vadd.f32 0.0, %v3805
        %v3807 = vpop.f32.mrf.mxu0
        %v3808 = vpop.f32.mrf.mxu0
        %v3809 = vadd.f32 0.0, %v3808
        %v3810 = vpop.f32.mrf.mxu0
        %3811 = vmatprep.mubr.bf16.mxu0 0
        %3812 = vmatmul.mubr.bf16.gmra.mxu0 %v3699
        %v3813 = vpop.f32.mrf.mxu0
        %v3814 = vadd.f32 0.0, %v3813
        %v3815 = vpop.f32.mrf.mxu0
        %v3816 = vpop.f32.mrf.mxu0
        %v3817 = vadd.f32 0.0, %v3816
        %v3818 = vpop.f32.mrf.mxu0
        %3819 = vmatprep.mubr.bf16.mxu0 0
        %3820 = vmatmul.mubr.bf16.gmra.mxu0 %v3702
        %v3821 = vpop.f32.mrf.mxu0
        %v3822 = vadd.f32 0.0, %v3821
        %v3823 = vpop.f32.mrf.mxu0
        %v3824 = vpop.f32.mrf.mxu0
        %v3825 = vadd.f32 0.0, %v3824
        %v3826 = vpop.f32.mrf.mxu0
        %3827 = vmatprep.mubr.bf16.mxu0 0
        %3828 = vmatmul.mubr.bf16.gmra.mxu0 %v3705
        %v3829 = vpop.f32.mrf.mxu0
        %v3830 = vadd.f32 0.0, %v3829
        %v3831 = vpop.f32.mrf.mxu0
        %v3832 = vpop.f32.mrf.mxu0
        %v3833 = vadd.f32 0.0, %v3832
        %v3834 = vpop.f32.mrf.mxu0
        %3835 = vmatprep.mubr.bf16.mxu0 0
        %3836 = vmatmul.mubr.bf16.gmra.mxu0 %v3708
        %v3837 = vpop.f32.mrf.mxu0
        %v3838 = vadd.f32 0.0, %v3837
        %v3839 = vpop.f32.mrf.mxu0
        %v3840 = vpop.f32.mrf.mxu0
        %v3841 = vadd.f32 0.0, %v3840
        %v3842 = vpop.f32.mrf.mxu0
        %3843 = vmatprep.mubr.bf16.mxu0 0
        %3844 = vmatmul.mubr.bf16.gmra.mxu0 %v3711
        %v3845 = vpop.f32.mrf.mxu0
        %v3846 = vadd.f32 0.0, %v3845
        %v3847 = vpop.f32.mrf.mxu0
        %v3848 = vpop.f32.mrf.mxu0
        %v3849 = vadd.f32 0.0, %v3848
        %v3850 = vpop.f32.mrf.mxu0
        %3851 = vmatprep.mubr.bf16.mxu0 0
        %3852 = vmatmul.mubr.bf16.gmra.mxu0 %v3714
        %v3853 = vpop.f32.mrf.mxu0
        %v3854 = vadd.f32 0.0, %v3853
        %v3855 = vpop.f32.mrf.mxu0
        %v3856 = vpop.f32.mrf.mxu0
        %v3857 = vadd.f32 0.0, %v3856
        %v3858 = vpop.f32.mrf.mxu0
        %3859 = vmatprep.mubr.bf16.mxu0 0
        %3860 = vmatmul.mubr.bf16.gmra.mxu0 %v3717
        %v3861 = vpop.f32.mrf.mxu0
        %v3862 = vadd.f32 0.0, %v3861
        %v3863 = vpop.f32.mrf.mxu0
        %v3864 = vpop.f32.mrf.mxu0
        %v3865 = vadd.f32 0.0, %v3864
        %v3866 = vpop.f32.mrf.mxu0
        %3867 = vmatprep.mubr.bf16.mxu0 0
        %3868 = vmatmul.mubr.bf16.gmra.mxu0 %v3720
        %v3869 = vpop.f32.mrf.mxu0
        %v3870 = vadd.f32 0.0, %v3869
        %v3871 = vpop.f32.mrf.mxu0
        %v3872 = vpop.f32.mrf.mxu0
        %v3873 = vadd.f32 0.0, %v3872
        %v3874 = vpop.f32.mrf.mxu0
        %3875 = vmatprep.mubr.bf16.mxu0 0
        %3876 = vmatmul.mubr.bf16.gmra.mxu0 %v3723
        %v3877 = vpop.f32.mrf.mxu0
        %v3878 = vadd.f32 0.0, %v3877
        %v3879 = vpop.f32.mrf.mxu0
        %v3880 = vpop.f32.mrf.mxu0
        %v3881 = vadd.f32 0.0, %v3880
        %v3882 = vpop.f32.mrf.mxu0
        %3883 = vmatprep.mubr.bf16.mxu0 0
        %3884 = vmatmul.mubr.bf16.gmra.mxu0 %v3726
        %v3885 = vpop.f32.mrf.mxu0
        %v3886 = vadd.f32 0.0, %v3885
        %v3887 = vpop.f32.mrf.mxu0
        %v3888 = vpop.f32.mrf.mxu0
        %v3889 = vadd.f32 0.0, %v3888
        %v3890 = vpop.f32.mrf.mxu0
        %3891 = vmatprep.mubr.bf16.mxu0 0
        %3892 = vmatmul.mubr.bf16.gmra.mxu0 %v3729
        %v3893 = vpop.f32.mrf.mxu0
        %v3894 = vadd.f32 0.0, %v3893
        %v3895 = vpop.f32.mrf.mxu0
        %v3896 = vpop.f32.mrf.mxu0
        %v3897 = vadd.f32 0.0, %v3896
        %v3898 = vpop.f32.mrf.mxu0
        %3899 = vmatprep.mubr.bf16.mxu0 0
        %3900 = vmatmul.mubr.bf16.gmra.mxu0 %v3732
        %v3901 = vpop.f32.mrf.mxu0
        %v3902 = vadd.f32 0.0, %v3901
        %v3903 = vpop.f32.mrf.mxu0
        %v3904 = vpop.f32.mrf.mxu0
        %v3905 = vadd.f32 0.0, %v3904
        %v3906 = vpop.f32.mrf.mxu0
        %3907 = vmatprep.mubr.bf16.mxu0 0
        %3908 = vmatmul.mubr.bf16.gmra.mxu0 %v3735
        %v3909 = vpop.f32.mrf.mxu0
        %v3910 = vadd.f32 0.0, %v3909
        %v3911 = vpop.f32.mrf.mxu0
        %v3912 = vpop.f32.mrf.mxu0
        %v3913 = vadd.f32 0.0, %v3912
        %v3914 = vpop.f32.mrf.mxu0
        %3915 = vmatprep.mubr.bf16.mxu0 0
        %3916 = vmatmul.mubr.bf16.gmra.mxu0 %v3738
        %v3917 = vpop.f32.mrf.mxu0
        %v3918 = vadd.f32 0.0, %v3917
        %v3919 = vpop.f32.mrf.mxu0
        %v3920 = vpop.f32.mrf.mxu0
        %v3921 = vadd.f32 0.0, %v3920
        %v3922 = vpop.f32.mrf.mxu0
        %3923 = vmatprep.mubr.bf16.mxu0 0
        %3924 = vmatmul.mubr.bf16.gmra.mxu0 %v3741
        %v3925 = vpop.f32.mrf.mxu0
        %v3926 = vadd.f32 0.0, %v3925
        %v3927 = vpop.f32.mrf.mxu0
        %v3928 = vpop.f32.mrf.mxu0
        %v3929 = vadd.f32 0.0, %v3928
        %v3930 = vpop.f32.mrf.mxu0
        %3931 = vmatprep.mubr.bf16.mxu0 0
        %3932 = vmatmul.mubr.bf16.gmra.mxu0 %v3744
        %v3933 = vpop.f32.mrf.mxu0
        %v3934 = vadd.f32 0.0, %v3933
        %v3935 = vpop.f32.mrf.mxu0
        %v3936 = vpop.f32.mrf.mxu0
        %v3937 = vadd.f32 0.0, %v3936
        %v3938 = vpop.f32.mrf.mxu0
        %3939 = vmatprep.mubr.bf16.mxu0 0
        %3940 = vmatmul.mubr.bf16.gmra.mxu0 %v3747
        %v3941 = vpop.f32.mrf.mxu0
        %v3942 = vadd.f32 0.0, %v3941
        %v3943 = vpop.f32.mrf.mxu0
        %v3944 = vpop.f32.mrf.mxu0
        %v3945 = vadd.f32 0.0, %v3944
        %v3946 = vpop.f32.mrf.mxu0
        %3947 = vmatprep.mubr.bf16.mxu0 0
        %3948 = vmatmul.mubr.bf16.gmra.mxu0 %v3750
        %v3949 = vpop.f32.mrf.mxu0
        %v3950 = vadd.f32 0.0, %v3949
        %v3951 = vpop.f32.mrf.mxu0
        %v3952 = vpop.f32.mrf.mxu0
        %v3953 = vadd.f32 0.0, %v3952
        %v3954 = vpop.f32.mrf.mxu0
        %3955 = vdwg.mxu0
        %v3956 = vadd.f32 %v3149, %v3790
        %v3957 = vadd.f32 %v3150, %v3793
        %v3958 = vadd.f32 %v3151, %v3798
        %v3959 = vadd.f32 %v3152, %v3801
        %v3960 = vadd.f32 %v3153, %v3806
        %v3961 = vadd.f32 %v3154, %v3809
        %v3962 = vadd.f32 %v3155, %v3814
        %v3963 = vadd.f32 %v3156, %v3817
        %v3964 = vadd.f32 %v3157, %v3822
        %v3965 = vadd.f32 %v3158, %v3825
        %v3966 = vadd.f32 %v3159, %v3830
        %v3967 = vadd.f32 %v3160, %v3833
        %v3968 = vadd.f32 %v3161, %v3838
        %v3969 = vadd.f32 %v3162, %v3841
        %v3970 = vadd.f32 %v3163, %v3846
        %v3971 = vadd.f32 %v3164, %v3849
        %v3972 = vadd.f32 %v3165, %v3854
        %v3973 = vadd.f32 %v3166, %v3857
        %v3974 = vadd.f32 %v3167, %v3862
        %v3975 = vadd.f32 %v3168, %v3865
        %v3976 = vadd.f32 %v3169, %v3870
        %v3977 = vadd.f32 %v3170, %v3873
        %v3978 = vadd.f32 %v3171, %v3878
        %v3979 = vadd.f32 %v3172, %v3881
        %v3980 = vadd.f32 %v3173, %v3886
        %v3981 = vadd.f32 %v3174, %v3889
        %v3982 = vadd.f32 %v3175, %v3894
        %v3983 = vadd.f32 %v3176, %v3897
        %v3984 = vadd.f32 %v3177, %v3902
        %v3985 = vadd.f32 %v3178, %v3905
        %v3986 = vadd.f32 %v3179, %v3910
        %v3987 = vadd.f32 %v3180, %v3913
        %v3988 = vadd.f32 %v3181, %v3918
        %v3989 = vadd.f32 %v3182, %v3921
        %v3990 = vadd.f32 %v3183, %v3926
        %v3991 = vadd.f32 %v3184, %v3929
        %v3992 = vadd.f32 %v3185, %v3934
        %v3993 = vadd.f32 %v3186, %v3937
        %v3994 = vadd.f32 %v3187, %v3942
        %v3995 = vadd.f32 %v3188, %v3945
        %v3996 = vadd.f32 %v3189, %v3950
        %v3997 = vadd.f32 %v3190, %v3953
        %v3998 = vld [vmem:[%s368 + $0x18] sm:$0xf]
        %v3999 = vld [vmem:[%s368 + $0x1c] sm:$0xf]
        %v4000 = vld [vmem:[%s368 + $0x20] sm:$0xf]
        %v4001 = vld [vmem:[%s368 + $0x24] sm:$0xf]
        %v4002 = vld [vmem:[%s368 + $0x28] sm:$0xf]
        %v4003 = vld [vmem:[%s368 + $0x2c] sm:$0xf]
        %v4004 = vld [vmem:[%s368 + $0x30] sm:$0xf]
        %v4005 = vld [vmem:[%s368 + $0x34] sm:$0xf]
        %v4006 = vld [vmem:[%s368 + $0x38] sm:$0xf]
        %v4007 = vld [vmem:[%s368 + $0x3c] sm:$0xf]
        %v4008 = vld [vmem:[%s368 + $0x40] sm:$0xf]
        %v4009 = vld [vmem:[%s368 + $0x44] sm:$0xf]
        %v4010 = vld [vmem:[%s368 + $0x48] sm:$0xf]
        %v4011 = vld [vmem:[%s368 + $0x4c] sm:$0xf]
        %v4012 = vld [vmem:[%s368 + $0x50] sm:$0xf]
        %v4013 = vld [vmem:[%s368 + $0x54] sm:$0xf]
        %v4014 = vld [vmem:[%s368 + $0x58] sm:$0xf]
        %v4015 = vld [vmem:[%s368 + $0x5c] sm:$0xf]
        %v4016 = vld [vmem:[%s368 + $0x60] sm:$0xf]
        %v4017 = vld [vmem:[%s368 + $0x64] sm:$0xf]
        %v4018 = vld [vmem:[%s368 + $0x68] sm:$0xf]
        %v4019 = vld [vmem:[%s368 + $0x6c] sm:$0xf]
        %v4020 = vld [vmem:[%s368 + $0x70] sm:$0xf]
        %v4021 = vld [vmem:[%s368 + $0x74] sm:$0xf]
        %v4022 = vld [vmem:[%s368 + $0x78] sm:$0xf]
        %v4023 = vld [vmem:[%s368 + $0x7c] sm:$0xf]
        %v4024 = vld [vmem:[%s368 + $0x80] sm:$0xf]
        %v4025 = vld [vmem:[%s368 + $0x84] sm:$0xf]
        %v4026 = vld [vmem:[%s368 + $0x88] sm:$0xf]
        %v4027 = vld [vmem:[%s368 + $0x8c] sm:$0xf]
        %v4028 = vld [vmem:[%s368 + $0x90] sm:$0xf]
        %v4029 = vld [vmem:[%s368 + $0x94] sm:$0xf]
        %v4030 = vld [vmem:[%s368 + $0x98] sm:$0xf]
        %v4031 = vld [vmem:[%s368 + $0x9c] sm:$0xf]
        %v4032 = vld [vmem:[%s368 + $0xa0] sm:$0xf]
        %v4033 = vld [vmem:[%s368 + $0xa4] sm:$0xf]
        %v4034 = vld [vmem:[%s368 + $0xa8] sm:$0xf]
        %v4035 = vld [vmem:[%s368 + $0xac] sm:$0xf]
        %v4036 = vld [vmem:[%s368 + $0xb0] sm:$0xf]
        %v4037 = vld [vmem:[%s368 + $0xb4] sm:$0xf]
        %v4038 = vld [vmem:[%s368 + $0xb8] sm:$0xf]
        %v4039 = vld [vmem:[%s368 + $0xbc] sm:$0xf]
        %v4040 = vld [vmem:[%s368 + $0xc0] sm:$0x1]
        %v4041 = vunpack.c.l.bf16 %v3998
        %v4042 = vunpack.c.l.bf16 %v3999
        %v4043 = vunpack.c.l.bf16 %v4000
        %v4044 = vunpack.c.l.bf16 %v4001
        %v4045 = vunpack.c.l.bf16 %v4002
        %v4046 = vunpack.c.l.bf16 %v4003
        %v4047 = vunpack.c.l.bf16 %v4004
        %v4048 = vunpack.c.l.bf16 %v4005
        %v4049 = vunpack.c.l.bf16 %v4006
        %v4050 = vunpack.c.l.bf16 %v4007
        %v4051 = vunpack.c.l.bf16 %v4008
        %v4052 = vunpack.c.l.bf16 %v4009
        %v4053 = vunpack.c.l.bf16 %v4010
        %v4054 = vunpack.c.l.bf16 %v4011
        %v4055 = vunpack.c.l.bf16 %v4012
        %v4056 = vunpack.c.l.bf16 %v4013
        %v4057 = vunpack.c.l.bf16 %v4014
        %v4058 = vunpack.c.l.bf16 %v4015
        %v4059 = vunpack.c.l.bf16 %v4016
        %v4060 = vunpack.c.l.bf16 %v4017
        %v4061 = vunpack.c.l.bf16 %v4018
        %v4062 = vunpack.c.l.bf16 %v4019
        %v4063 = vunpack.c.l.bf16 %v4020
        %v4064 = vunpack.c.l.bf16 %v4021
        %v4065 = vunpack.c.l.bf16 %v4022
        %v4066 = vunpack.c.l.bf16 %v4023
        %v4067 = vunpack.c.l.bf16 %v4024
        %v4068 = vunpack.c.l.bf16 %v4025
        %v4069 = vunpack.c.l.bf16 %v4026
        %v4070 = vunpack.c.l.bf16 %v4027
        %v4071 = vunpack.c.l.bf16 %v4028
        %v4072 = vunpack.c.l.bf16 %v4029
        %v4073 = vunpack.c.l.bf16 %v4030
        %v4074 = vunpack.c.l.bf16 %v4031
        %v4075 = vunpack.c.l.bf16 %v4032
        %v4076 = vunpack.c.l.bf16 %v4033
        %v4077 = vunpack.c.l.bf16 %v4034
        %v4078 = vunpack.c.l.bf16 %v4035
        %v4079 = vunpack.c.l.bf16 %v4036
        %v4080 = vunpack.c.l.bf16 %v4037
        %v4081 = vunpack.c.l.bf16 %v4038
        %v4082 = vunpack.c.l.bf16 %v4039
        %v4083 = vunpack.c.l.bf16 %v4040
        %v4084 = vld [vmem:[%s373 + $0x18] sm:$0xf]
        %v4085 = vld [vmem:[%s373 + $0x1c] sm:$0xf]
        %v4086 = vld [vmem:[%s373 + $0x20] sm:$0xf]
        %v4087 = vld [vmem:[%s373 + $0x24] sm:$0xf]
        %v4088 = vld [vmem:[%s373 + $0x28] sm:$0xf]
        %v4089 = vld [vmem:[%s373 + $0x2c] sm:$0xf]
        %v4090 = vld [vmem:[%s373 + $0x30] sm:$0xf]
        %v4091 = vld [vmem:[%s373 + $0x34] sm:$0xf]
        %v4092 = vld [vmem:[%s373 + $0x38] sm:$0xf]
        %v4093 = vld [vmem:[%s373 + $0x3c] sm:$0xf]
        %v4094 = vld [vmem:[%s373 + $0x40] sm:$0xf]
        %v4095 = vld [vmem:[%s373 + $0x44] sm:$0xf]
        %v4096 = vld [vmem:[%s373 + $0x48] sm:$0xf]
        %v4097 = vld [vmem:[%s373 + $0x4c] sm:$0xf]
        %v4098 = vld [vmem:[%s373 + $0x50] sm:$0xf]
        %v4099 = vld [vmem:[%s373 + $0x54] sm:$0xf]
        %v4100 = vld [vmem:[%s373 + $0x58] sm:$0xf]
        %v4101 = vld [vmem:[%s373 + $0x5c] sm:$0xf]
        %v4102 = vld [vmem:[%s373 + $0x60] sm:$0xf]
        %v4103 = vld [vmem:[%s373 + $0x64] sm:$0xf]
        %v4104 = vld [vmem:[%s373 + $0x68] sm:$0xf]
        %v4105 = vld [vmem:[%s373 + $0x6c] sm:$0xf]
        %v4106 = vld [vmem:[%s373 + $0x70] sm:$0xf]
        %v4107 = vld [vmem:[%s373 + $0x74] sm:$0xf]
        %v4108 = vld [vmem:[%s373 + $0x78] sm:$0xf]
        %v4109 = vld [vmem:[%s373 + $0x7c] sm:$0xf]
        %v4110 = vld [vmem:[%s373 + $0x80] sm:$0xf]
        %v4111 = vld [vmem:[%s373 + $0x84] sm:$0xf]
        %v4112 = vld [vmem:[%s373 + $0x88] sm:$0xf]
        %v4113 = vld [vmem:[%s373 + $0x8c] sm:$0xf]
        %v4114 = vld [vmem:[%s373 + $0x90] sm:$0xf]
        %v4115 = vld [vmem:[%s373 + $0x94] sm:$0xf]
        %v4116 = vld [vmem:[%s373 + $0x98] sm:$0xf]
        %v4117 = vld [vmem:[%s373 + $0x9c] sm:$0xf]
        %v4118 = vld [vmem:[%s373 + $0xa0] sm:$0xf]
        %v4119 = vld [vmem:[%s373 + $0xa4] sm:$0xf]
        %v4120 = vld [vmem:[%s373 + $0xa8] sm:$0xf]
        %v4121 = vld [vmem:[%s373 + $0xac] sm:$0xf]
        %v4122 = vld [vmem:[%s373 + $0xb0] sm:$0xf]
        %v4123 = vld [vmem:[%s373 + $0xb4] sm:$0xf]
        %v4124 = vld [vmem:[%s373 + $0xb8] sm:$0xf]
        %v4125 = vld [vmem:[%s373 + $0xbc] sm:$0xf]
        %v4126 = vld [vmem:[%s373 + $0xc0] sm:$0x1]
        %v4127 = vunpack.c.l.bf16 %v4084
        %v4128 = vunpack.c.l.bf16 %v4085
        %v4129 = vunpack.c.l.bf16 %v4086
        %v4130 = vunpack.c.l.bf16 %v4087
        %v4131 = vunpack.c.l.bf16 %v4088
        %v4132 = vunpack.c.l.bf16 %v4089
        %v4133 = vunpack.c.l.bf16 %v4090
        %v4134 = vunpack.c.l.bf16 %v4091
        %v4135 = vunpack.c.l.bf16 %v4092
        %v4136 = vunpack.c.l.bf16 %v4093
        %v4137 = vunpack.c.l.bf16 %v4094
        %v4138 = vunpack.c.l.bf16 %v4095
        %v4139 = vunpack.c.l.bf16 %v4096
        %v4140 = vunpack.c.l.bf16 %v4097
        %v4141 = vunpack.c.l.bf16 %v4098
        %v4142 = vunpack.c.l.bf16 %v4099
        %v4143 = vunpack.c.l.bf16 %v4100
        %v4144 = vunpack.c.l.bf16 %v4101
        %v4145 = vunpack.c.l.bf16 %v4102
        %v4146 = vunpack.c.l.bf16 %v4103
        %v4147 = vunpack.c.l.bf16 %v4104
        %v4148 = vunpack.c.l.bf16 %v4105
        %v4149 = vunpack.c.l.bf16 %v4106
        %v4150 = vunpack.c.l.bf16 %v4107
        %v4151 = vunpack.c.l.bf16 %v4108
        %v4152 = vunpack.c.l.bf16 %v4109
        %v4153 = vunpack.c.l.bf16 %v4110
        %v4154 = vunpack.c.l.bf16 %v4111
        %v4155 = vunpack.c.l.bf16 %v4112
        %v4156 = vunpack.c.l.bf16 %v4113
        %v4157 = vunpack.c.l.bf16 %v4114
        %v4158 = vunpack.c.l.bf16 %v4115
        %v4159 = vunpack.c.l.bf16 %v4116
        %v4160 = vunpack.c.l.bf16 %v4117
        %v4161 = vunpack.c.l.bf16 %v4118
        %v4162 = vunpack.c.l.bf16 %v4119
        %v4163 = vunpack.c.l.bf16 %v4120
        %v4164 = vunpack.c.l.bf16 %v4121
        %v4165 = vunpack.c.l.bf16 %v4122
        %v4166 = vunpack.c.l.bf16 %v4123
        %v4167 = vunpack.c.l.bf16 %v4124
        %v4168 = vunpack.c.l.bf16 %v4125
        %v4169 = vunpack.c.l.bf16 %v4126
        %v4170 = vmul.f32 %v647, %v4041
        %v4171 = vmul.f32 %v647, %v4042
        %v4172 = vmul.f32 %v647, %v4043
        %v4173 = vmul.f32 %v647, %v4044
        %v4174 = vmul.f32 %v647, %v4045
        %v4175 = vmul.f32 %v647, %v4046
        %v4176 = vmul.f32 %v647, %v4047
        %v4177 = vmul.f32 %v647, %v4048
        %v4178 = vmul.f32 %v647, %v4049
        %v4179 = vmul.f32 %v647, %v4050
        %v4180 = vmul.f32 %v647, %v4051
        %v4181 = vmul.f32 %v647, %v4052
        %v4182 = vmul.f32 %v647, %v4053
        %v4183 = vmul.f32 %v647, %v4054
        %v4184 = vmul.f32 %v647, %v4055
        %v4185 = vmul.f32 %v647, %v4056
        %v4186 = vmul.f32 %v647, %v4057
        %v4187 = vmul.f32 %v647, %v4058
        %v4188 = vmul.f32 %v647, %v4059
        %v4189 = vmul.f32 %v647, %v4060
        %v4190 = vmul.f32 %v647, %v4061
        %v4191 = vmul.f32 %v647, %v4062
        %v4192 = vmul.f32 %v647, %v4063
        %v4193 = vmul.f32 %v647, %v4064
        %v4194 = vmul.f32 %v647, %v4065
        %v4195 = vmul.f32 %v647, %v4066
        %v4196 = vmul.f32 %v647, %v4067
        %v4197 = vmul.f32 %v647, %v4068
        %v4198 = vmul.f32 %v647, %v4069
        %v4199 = vmul.f32 %v647, %v4070
        %v4200 = vmul.f32 %v647, %v4071
        %v4201 = vmul.f32 %v647, %v4072
        %v4202 = vmul.f32 %v647, %v4073
        %v4203 = vmul.f32 %v647, %v4074
        %v4204 = vmul.f32 %v647, %v4075
        %v4205 = vmul.f32 %v647, %v4076
        %v4206 = vmul.f32 %v647, %v4077
        %v4207 = vmul.f32 %v647, %v4078
        %v4208 = vmul.f32 %v647, %v4079
        %v4209 = vmul.f32 %v647, %v4080
        %v4210 = vmul.f32 %v647, %v4081
        %v4211 = vmul.f32 %v647, %v4082
        %v4212 = vmul.f32 %v647, %v4083
        %v4213 = vmul.f32 %v691, %v4127
        %v4214 = vmul.f32 %v691, %v4128
        %v4215 = vmul.f32 %v691, %v4129
        %v4216 = vmul.f32 %v691, %v4130
        %v4217 = vmul.f32 %v691, %v4131
        %v4218 = vmul.f32 %v691, %v4132
        %v4219 = vmul.f32 %v691, %v4133
        %v4220 = vmul.f32 %v691, %v4134
        %v4221 = vmul.f32 %v691, %v4135
        %v4222 = vmul.f32 %v691, %v4136
        %v4223 = vmul.f32 %v691, %v4137
        %v4224 = vmul.f32 %v691, %v4138
        %v4225 = vmul.f32 %v691, %v4139
        %v4226 = vmul.f32 %v691, %v4140
        %v4227 = vmul.f32 %v691, %v4141
        %v4228 = vmul.f32 %v691, %v4142
        %v4229 = vmul.f32 %v691, %v4143
        %v4230 = vmul.f32 %v691, %v4144
        %v4231 = vmul.f32 %v691, %v4145
        %v4232 = vmul.f32 %v691, %v4146
        %v4233 = vmul.f32 %v691, %v4147
        %v4234 = vmul.f32 %v691, %v4148
        %v4235 = vmul.f32 %v691, %v4149
        %v4236 = vmul.f32 %v691, %v4150
        %v4237 = vmul.f32 %v691, %v4151
        %v4238 = vmul.f32 %v691, %v4152
        %v4239 = vmul.f32 %v691, %v4153
        %v4240 = vmul.f32 %v691, %v4154
        %v4241 = vmul.f32 %v691, %v4155
        %v4242 = vmul.f32 %v691, %v4156
        %v4243 = vmul.f32 %v691, %v4157
        %v4244 = vmul.f32 %v691, %v4158
        %v4245 = vmul.f32 %v691, %v4159
        %v4246 = vmul.f32 %v691, %v4160
        %v4247 = vmul.f32 %v691, %v4161
        %v4248 = vmul.f32 %v691, %v4162
        %v4249 = vmul.f32 %v691, %v4163
        %v4250 = vmul.f32 %v691, %v4164
        %v4251 = vmul.f32 %v691, %v4165
        %v4252 = vmul.f32 %v691, %v4166
        %v4253 = vmul.f32 %v691, %v4167
        %v4254 = vmul.f32 %v691, %v4168
        %v4255 = vmul.f32 %v691, %v4169
        %v4256 = vadd.f32 %v4170, %v4213
        %v4257 = vadd.f32 %v4171, %v4214
        %v4258 = vadd.f32 %v4172, %v4215
        %v4259 = vadd.f32 %v4173, %v4216
        %v4260 = vadd.f32 %v4174, %v4217
        %v4261 = vadd.f32 %v4175, %v4218
        %v4262 = vadd.f32 %v4176, %v4219
        %v4263 = vadd.f32 %v4177, %v4220
        %v4264 = vadd.f32 %v4178, %v4221
        %v4265 = vadd.f32 %v4179, %v4222
        %v4266 = vadd.f32 %v4180, %v4223
        %v4267 = vadd.f32 %v4181, %v4224
        %v4268 = vadd.f32 %v4182, %v4225
        %v4269 = vadd.f32 %v4183, %v4226
        %v4270 = vadd.f32 %v4184, %v4227
        %v4271 = vadd.f32 %v4185, %v4228
        %v4272 = vadd.f32 %v4186, %v4229
        %v4273 = vadd.f32 %v4187, %v4230
        %v4274 = vadd.f32 %v4188, %v4231
        %v4275 = vadd.f32 %v4189, %v4232
        %v4276 = vadd.f32 %v4190, %v4233
        %v4277 = vadd.f32 %v4191, %v4234
        %v4278 = vadd.f32 %v4192, %v4235
        %v4279 = vadd.f32 %v4193, %v4236
        %v4280 = vadd.f32 %v4194, %v4237
        %v4281 = vadd.f32 %v4195, %v4238
        %v4282 = vadd.f32 %v4196, %v4239
        %v4283 = vadd.f32 %v4197, %v4240
        %v4284 = vadd.f32 %v4198, %v4241
        %v4285 = vadd.f32 %v4199, %v4242
        %v4286 = vadd.f32 %v4200, %v4243
        %v4287 = vadd.f32 %v4201, %v4244
        %v4288 = vadd.f32 %v4202, %v4245
        %v4289 = vadd.f32 %v4203, %v4246
        %v4290 = vadd.f32 %v4204, %v4247
        %v4291 = vadd.f32 %v4205, %v4248
        %v4292 = vadd.f32 %v4206, %v4249
        %v4293 = vadd.f32 %v4207, %v4250
        %v4294 = vadd.f32 %v4208, %v4251
        %v4295 = vadd.f32 %v4209, %v4252
        %v4296 = vadd.f32 %v4210, %v4253
        %v4297 = vadd.f32 %v4211, %v4254
        %v4298 = vadd.f32 %v4212, %v4255
        %v4299 = vpack.c.bf16 %v4257, %v4256
        %v4300 = vpack.c.bf16 %v4259, %v4258
        %v4301 = vpack.c.bf16 %v4261, %v4260
        %v4302 = vpack.c.bf16 %v4263, %v4262
        %v4303 = vpack.c.bf16 %v4265, %v4264
        %v4304 = vpack.c.bf16 %v4267, %v4266
        %v4305 = vpack.c.bf16 %v4269, %v4268
        %v4306 = vpack.c.bf16 %v4271, %v4270
        %v4307 = vpack.c.bf16 %v4273, %v4272
        %v4308 = vpack.c.bf16 %v4275, %v4274
        %v4309 = vpack.c.bf16 %v4277, %v4276
        %v4310 = vpack.c.bf16 %v4279, %v4278
        %v4311 = vpack.c.bf16 %v4281, %v4280
        %v4312 = vpack.c.bf16 %v4283, %v4282
        %v4313 = vpack.c.bf16 %v4285, %v4284
        %v4314 = vpack.c.bf16 %v4287, %v4286
        %v4315 = vpack.c.bf16 %v4289, %v4288
        %v4316 = vpack.c.bf16 %v4291, %v4290
        %v4317 = vpack.c.bf16 %v4293, %v4292
        %v4318 = vpack.c.bf16 %v4295, %v4294
        %v4319 = vpack.c.bf16 %v4297, %v4296
        %v4320 = vpack.c.bf16 %v4298, %v4298
        %s4321 = scalar_lea.vmem %s3, 12
        %v4322 = vld [vmem:[%s4321] sm:$0x3]
        %v4324 = vshrl.u32 %v4299, 16
        %v4326 = vshll.u32 %v4299, 16
        %v4328 = vrot.slane %v4326, 1
        %v4329 = vor.u32 %v4324, %v4328
        %v4331 = vshll.u32 %v4300, 16
        %v4333 = vrot.slane %v4331, 1
        %v4334 = vsel %vm3516, %v4329, %v4333
        %v4335 = vshrl.u32 %v4300, 16
        %v4337 = vor.u32 %v4335, %v4333
        %v4339 = vshll.u32 %v4301, 16
        %v4341 = vrot.slane %v4339, 1
        %v4342 = vsel %vm3516, %v4337, %v4341
        %v4343 = vshrl.u32 %v4301, 16
        %v4345 = vor.u32 %v4343, %v4341
        %v4347 = vshll.u32 %v4302, 16
        %v4349 = vrot.slane %v4347, 1
        %v4350 = vsel %vm3516, %v4345, %v4349
        %v4351 = vshrl.u32 %v4302, 16
        %v4353 = vor.u32 %v4351, %v4349
        %v4355 = vshll.u32 %v4303, 16
        %v4357 = vrot.slane %v4355, 1
        %v4358 = vsel %vm3516, %v4353, %v4357
        %v4359 = vshrl.u32 %v4303, 16
        %v4361 = vor.u32 %v4359, %v4357
        %v4363 = vshll.u32 %v4304, 16
        %v4365 = vrot.slane %v4363, 1
        %v4366 = vsel %vm3516, %v4361, %v4365
        %v4367 = vshrl.u32 %v4304, 16
        %v4369 = vor.u32 %v4367, %v4365
        %v4371 = vshll.u32 %v4305, 16
        %v4373 = vrot.slane %v4371, 1
        %v4374 = vsel %vm3516, %v4369, %v4373
        %v4375 = vshrl.u32 %v4305, 16
        %v4377 = vor.u32 %v4375, %v4373
        %v4379 = vshll.u32 %v4306, 16
        %v4381 = vrot.slane %v4379, 1
        %v4382 = vsel %vm3516, %v4377, %v4381
        %v4383 = vshrl.u32 %v4306, 16
        %v4385 = vor.u32 %v4383, %v4381
        %v4387 = vshll.u32 %v4307, 16
        %v4389 = vrot.slane %v4387, 1
        %v4390 = vsel %vm3516, %v4385, %v4389
        %v4391 = vshrl.u32 %v4307, 16
        %v4393 = vor.u32 %v4391, %v4389
        %v4395 = vshll.u32 %v4308, 16
        %v4397 = vrot.slane %v4395, 1
        %v4398 = vsel %vm3516, %v4393, %v4397
        %v4399 = vshrl.u32 %v4308, 16
        %v4401 = vor.u32 %v4399, %v4397
        %v4403 = vshll.u32 %v4309, 16
        %v4405 = vrot.slane %v4403, 1
        %v4406 = vsel %vm3516, %v4401, %v4405
        %v4407 = vshrl.u32 %v4309, 16
        %v4409 = vor.u32 %v4407, %v4405
        %v4411 = vshll.u32 %v4310, 16
        %v4413 = vrot.slane %v4411, 1
        %v4414 = vsel %vm3516, %v4409, %v4413
        %v4415 = vshrl.u32 %v4310, 16
        %v4417 = vor.u32 %v4415, %v4413
        %v4419 = vshll.u32 %v4311, 16
        %v4421 = vrot.slane %v4419, 1
        %v4422 = vsel %vm3516, %v4417, %v4421
        %v4423 = vshrl.u32 %v4311, 16
        %v4425 = vor.u32 %v4423, %v4421
        %v4427 = vshll.u32 %v4312, 16
        %v4429 = vrot.slane %v4427, 1
        %v4430 = vsel %vm3516, %v4425, %v4429
        %v4431 = vshrl.u32 %v4312, 16
        %v4433 = vor.u32 %v4431, %v4429
        %v4435 = vshll.u32 %v4313, 16
        %v4437 = vrot.slane %v4435, 1
        %v4438 = vsel %vm3516, %v4433, %v4437
        %v4439 = vshrl.u32 %v4313, 16
        %v4441 = vor.u32 %v4439, %v4437
        %v4443 = vshll.u32 %v4314, 16
        %v4445 = vrot.slane %v4443, 1
        %v4446 = vsel %vm3516, %v4441, %v4445
        %v4447 = vshrl.u32 %v4314, 16
        %v4449 = vor.u32 %v4447, %v4445
        %v4451 = vshll.u32 %v4315, 16
        %v4453 = vrot.slane %v4451, 1
        %v4454 = vsel %vm3516, %v4449, %v4453
        %v4455 = vshrl.u32 %v4315, 16
        %v4457 = vor.u32 %v4455, %v4453
        %v4459 = vshll.u32 %v4316, 16
        %v4461 = vrot.slane %v4459, 1
        %v4462 = vsel %vm3516, %v4457, %v4461
        %v4463 = vshrl.u32 %v4316, 16
        %v4465 = vor.u32 %v4463, %v4461
        %v4467 = vshll.u32 %v4317, 16
        %v4469 = vrot.slane %v4467, 1
        %v4470 = vsel %vm3516, %v4465, %v4469
        %v4471 = vshrl.u32 %v4317, 16
        %v4473 = vor.u32 %v4471, %v4469
        %v4475 = vshll.u32 %v4318, 16
        %v4477 = vrot.slane %v4475, 1
        %v4478 = vsel %vm3516, %v4473, %v4477
        %v4479 = vshrl.u32 %v4318, 16
        %v4481 = vor.u32 %v4479, %v4477
        %v4483 = vshll.u32 %v4319, 16
        %v4485 = vrot.slane %v4483, 1
        %v4486 = vsel %vm3516, %v4481, %v4485
        %v4487 = vshrl.u32 %v4319, 16
        %v4489 = vor.u32 %v4487, %v4485
        %v4491 = vshll.u32 %v4320, 16
        %v4493 = vrot.slane %v4491, 1
        %v4494 = vsel %vm3516, %v4489, %v4493
        %v4496 = vsel %vm877, %v4334, 0
        %v4499 = vsel %vm877, %v4342, 0
        %v4502 = vsel %vm877, %v4350, 0
        %v4505 = vsel %vm877, %v4358, 0
        %v4508 = vsel %vm877, %v4366, 0
        %v4511 = vsel %vm877, %v4374, 0
        %v4514 = vsel %vm877, %v4382, 0
        %v4517 = vsel %vm877, %v4390, 0
        %v4520 = vsel %vm877, %v4398, 0
        %v4523 = vsel %vm877, %v4406, 0
        %v4526 = vsel %vm877, %v4414, 0
        %v4529 = vsel %vm877, %v4422, 0
        %v4532 = vsel %vm877, %v4430, 0
        %v4535 = vsel %vm877, %v4438, 0
        %v4538 = vsel %vm877, %v4446, 0
        %v4541 = vsel %vm877, %v4454, 0
        %v4544 = vsel %vm877, %v4462, 0
        %v4547 = vsel %vm877, %v4470, 0
        %v4550 = vsel %vm877, %v4478, 0
        %v4553 = vsel %vm877, %v4486, 0
        %v4556 = vsel %vm877, %v4494, 0
        %v4559 = vsel %vm941, %v4322, 0
        %4561 = vmatprep.subr.bf16.mxu0 0
        %4562 = vmatpush1.bf16.msra.mxu0 0
        %4563 = vmatprep.subr.bf16.mxu0 0
        %4564 = vmatpush1.bf16.msra.mxu0 0
        %4565 = vmatprep.subr.bf16.mxu0 0
        %4566 = vmatpush1.bf16.msra.mxu0 0
        %4567 = vmatprep.subr.bf16.mxu0 0
        %4568 = vmatpush1.bf16.msra.mxu0 0
        %4569 = vmatprep.subr.bf16.mxu0 0
        %4570 = vmatpush1.bf16.msra.mxu0 0
        %4571 = vmatprep.subr.bf16.mxu0 0
        %4572 = vmatpush1.bf16.msra.mxu0 0
        %4573 = vmatprep.subr.bf16.mxu0 0
        %4574 = vmatpush1.bf16.msra.mxu0 0
        %4575 = vmatprep.subr.bf16.mxu0 0
        %4576 = vmatpush1.bf16.msra.mxu0 %v4559
        %4577 = vmatprep.subr.bf16.mxu0 0
        %4578 = vmatpush2.bf16.msra.mxu0 0
        %4579 = vmatprep.subr.bf16.mxu0 0
        %4580 = vmatpush2.bf16.msra.mxu0 0
        %4581 = vmatprep.subr.bf16.mxu0 0
        %4582 = vmatpush2.bf16.msra.mxu0 0
        %4583 = vmatprep.subr.bf16.mxu0 0
        %4584 = vmatpush2.bf16.msra.mxu0 0
        %4585 = vmatprep.subr.bf16.mxu0 0
        %4586 = vmatpush2.bf16.msra.mxu0 0
        %4587 = vmatprep.subr.bf16.mxu0 0
        %4588 = vmatpush2.bf16.msra.mxu0 0
        %4589 = vmatprep.subr.bf16.mxu0 0
        %4590 = vmatpush2.bf16.msra.mxu0 0
        %4591 = vmatprep.subr.bf16.mxu0 0
        %4592 = vmatpush2.bf16.msra.mxu0 0
        %4593 = vmatprep.mubr.bf16.mxu0 0
        %4594 = vmatmul.mubr.bf16.gmra.mxu0 %v4496
        %v4595 = vpop.f32.mrf.mxu0
        %v4596 = vadd.f32 0.0, %v4595
        %v4597 = vpop.f32.mrf.mxu0
        %v4598 = vpop.f32.mrf.mxu0
        %v4599 = vadd.f32 0.0, %v4598
        %v4600 = vpop.f32.mrf.mxu0
        %4601 = vmatprep.mubr.bf16.mxu0 0
        %4602 = vmatmul.mubr.bf16.gmra.mxu0 %v4499
        %v4603 = vpop.f32.mrf.mxu0
        %v4604 = vadd.f32 0.0, %v4603
        %v4605 = vpop.f32.mrf.mxu0
        %v4606 = vpop.f32.mrf.mxu0
        %v4607 = vadd.f32 0.0, %v4606
        %v4608 = vpop.f32.mrf.mxu0
        %4609 = vmatprep.mubr.bf16.mxu0 0
        %4610 = vmatmul.mubr.bf16.gmra.mxu0 %v4502
        %v4611 = vpop.f32.mrf.mxu0
        %v4612 = vadd.f32 0.0, %v4611
        %v4613 = vpop.f32.mrf.mxu0
        %v4614 = vpop.f32.mrf.mxu0
        %v4615 = vadd.f32 0.0, %v4614
        %v4616 = vpop.f32.mrf.mxu0
        %4617 = vmatprep.mubr.bf16.mxu0 0
        %4618 = vmatmul.mubr.bf16.gmra.mxu0 %v4505
        %v4619 = vpop.f32.mrf.mxu0
        %v4620 = vadd.f32 0.0, %v4619
        %v4621 = vpop.f32.mrf.mxu0
        %v4622 = vpop.f32.mrf.mxu0
        %v4623 = vadd.f32 0.0, %v4622
        %v4624 = vpop.f32.mrf.mxu0
        %4625 = vmatprep.mubr.bf16.mxu0 0
        %4626 = vmatmul.mubr.bf16.gmra.mxu0 %v4508
        %v4627 = vpop.f32.mrf.mxu0
        %v4628 = vadd.f32 0.0, %v4627
        %v4629 = vpop.f32.mrf.mxu0
        %v4630 = vpop.f32.mrf.mxu0
        %v4631 = vadd.f32 0.0, %v4630
        %v4632 = vpop.f32.mrf.mxu0
        %4633 = vmatprep.mubr.bf16.mxu0 0
        %4634 = vmatmul.mubr.bf16.gmra.mxu0 %v4511
        %v4635 = vpop.f32.mrf.mxu0
        %v4636 = vadd.f32 0.0, %v4635
        %v4637 = vpop.f32.mrf.mxu0
        %v4638 = vpop.f32.mrf.mxu0
        %v4639 = vadd.f32 0.0, %v4638
        %v4640 = vpop.f32.mrf.mxu0
        %4641 = vmatprep.mubr.bf16.mxu0 0
        %4642 = vmatmul.mubr.bf16.gmra.mxu0 %v4514
        %v4643 = vpop.f32.mrf.mxu0
        %v4644 = vadd.f32 0.0, %v4643
        %v4645 = vpop.f32.mrf.mxu0
        %v4646 = vpop.f32.mrf.mxu0
        %v4647 = vadd.f32 0.0, %v4646
        %v4648 = vpop.f32.mrf.mxu0
        %4649 = vmatprep.mubr.bf16.mxu0 0
        %4650 = vmatmul.mubr.bf16.gmra.mxu0 %v4517
        %v4651 = vpop.f32.mrf.mxu0
        %v4652 = vadd.f32 0.0, %v4651
        %v4653 = vpop.f32.mrf.mxu0
        %v4654 = vpop.f32.mrf.mxu0
        %v4655 = vadd.f32 0.0, %v4654
        %v4656 = vpop.f32.mrf.mxu0
        %4657 = vmatprep.mubr.bf16.mxu0 0
        %4658 = vmatmul.mubr.bf16.gmra.mxu0 %v4520
        %v4659 = vpop.f32.mrf.mxu0
        %v4660 = vadd.f32 0.0, %v4659
        %v4661 = vpop.f32.mrf.mxu0
        %v4662 = vpop.f32.mrf.mxu0
        %v4663 = vadd.f32 0.0, %v4662
        %v4664 = vpop.f32.mrf.mxu0
        %4665 = vmatprep.mubr.bf16.mxu0 0
        %4666 = vmatmul.mubr.bf16.gmra.mxu0 %v4523
        %v4667 = vpop.f32.mrf.mxu0
        %v4668 = vadd.f32 0.0, %v4667
        %v4669 = vpop.f32.mrf.mxu0
        %v4670 = vpop.f32.mrf.mxu0
        %v4671 = vadd.f32 0.0, %v4670
        %v4672 = vpop.f32.mrf.mxu0
        %4673 = vmatprep.mubr.bf16.mxu0 0
        %4674 = vmatmul.mubr.bf16.gmra.mxu0 %v4526
        %v4675 = vpop.f32.mrf.mxu0
        %v4676 = vadd.f32 0.0, %v4675
        %v4677 = vpop.f32.mrf.mxu0
        %v4678 = vpop.f32.mrf.mxu0
        %v4679 = vadd.f32 0.0, %v4678
        %v4680 = vpop.f32.mrf.mxu0
        %4681 = vmatprep.mubr.bf16.mxu0 0
        %4682 = vmatmul.mubr.bf16.gmra.mxu0 %v4529
        %v4683 = vpop.f32.mrf.mxu0
        %v4684 = vadd.f32 0.0, %v4683
        %v4685 = vpop.f32.mrf.mxu0
        %v4686 = vpop.f32.mrf.mxu0
        %v4687 = vadd.f32 0.0, %v4686
        %v4688 = vpop.f32.mrf.mxu0
        %4689 = vmatprep.mubr.bf16.mxu0 0
        %4690 = vmatmul.mubr.bf16.gmra.mxu0 %v4532
        %v4691 = vpop.f32.mrf.mxu0
        %v4692 = vadd.f32 0.0, %v4691
        %v4693 = vpop.f32.mrf.mxu0
        %v4694 = vpop.f32.mrf.mxu0
        %v4695 = vadd.f32 0.0, %v4694
        %v4696 = vpop.f32.mrf.mxu0
        %4697 = vmatprep.mubr.bf16.mxu0 0
        %4698 = vmatmul.mubr.bf16.gmra.mxu0 %v4535
        %v4699 = vpop.f32.mrf.mxu0
        %v4700 = vadd.f32 0.0, %v4699
        %v4701 = vpop.f32.mrf.mxu0
        %v4702 = vpop.f32.mrf.mxu0
        %v4703 = vadd.f32 0.0, %v4702
        %v4704 = vpop.f32.mrf.mxu0
        %4705 = vmatprep.mubr.bf16.mxu0 0
        %4706 = vmatmul.mubr.bf16.gmra.mxu0 %v4538
        %v4707 = vpop.f32.mrf.mxu0
        %v4708 = vadd.f32 0.0, %v4707
        %v4709 = vpop.f32.mrf.mxu0
        %v4710 = vpop.f32.mrf.mxu0
        %v4711 = vadd.f32 0.0, %v4710
        %v4712 = vpop.f32.mrf.mxu0
        %4713 = vmatprep.mubr.bf16.mxu0 0
        %4714 = vmatmul.mubr.bf16.gmra.mxu0 %v4541
        %v4715 = vpop.f32.mrf.mxu0
        %v4716 = vadd.f32 0.0, %v4715
        %v4717 = vpop.f32.mrf.mxu0
        %v4718 = vpop.f32.mrf.mxu0
        %v4719 = vadd.f32 0.0, %v4718
        %v4720 = vpop.f32.mrf.mxu0
        %4721 = vmatprep.mubr.bf16.mxu0 0
        %4722 = vmatmul.mubr.bf16.gmra.mxu0 %v4544
        %v4723 = vpop.f32.mrf.mxu0
        %v4724 = vadd.f32 0.0, %v4723
        %v4725 = vpop.f32.mrf.mxu0
        %v4726 = vpop.f32.mrf.mxu0
        %v4727 = vadd.f32 0.0, %v4726
        %v4728 = vpop.f32.mrf.mxu0
        %4729 = vmatprep.mubr.bf16.mxu0 0
        %4730 = vmatmul.mubr.bf16.gmra.mxu0 %v4547
        %v4731 = vpop.f32.mrf.mxu0
        %v4732 = vadd.f32 0.0, %v4731
        %v4733 = vpop.f32.mrf.mxu0
        %v4734 = vpop.f32.mrf.mxu0
        %v4735 = vadd.f32 0.0, %v4734
        %v4736 = vpop.f32.mrf.mxu0
        %4737 = vmatprep.mubr.bf16.mxu0 0
        %4738 = vmatmul.mubr.bf16.gmra.mxu0 %v4550
        %v4739 = vpop.f32.mrf.mxu0
        %v4740 = vadd.f32 0.0, %v4739
        %v4741 = vpop.f32.mrf.mxu0
        %v4742 = vpop.f32.mrf.mxu0
        %v4743 = vadd.f32 0.0, %v4742
        %v4744 = vpop.f32.mrf.mxu0
        %4745 = vmatprep.mubr.bf16.mxu0 0
        %4746 = vmatmul.mubr.bf16.gmra.mxu0 %v4553
        %v4747 = vpop.f32.mrf.mxu0
        %v4748 = vadd.f32 0.0, %v4747
        %v4749 = vpop.f32.mrf.mxu0
        %v4750 = vpop.f32.mrf.mxu0
        %v4751 = vadd.f32 0.0, %v4750
        %v4752 = vpop.f32.mrf.mxu0
        %4753 = vmatprep.mubr.bf16.mxu0 0
        %4754 = vmatmul.mubr.bf16.gmra.mxu0 %v4556
        %v4755 = vpop.f32.mrf.mxu0
        %v4756 = vadd.f32 0.0, %v4755
        %v4757 = vpop.f32.mrf.mxu0
        %v4758 = vpop.f32.mrf.mxu0
        %v4759 = vadd.f32 0.0, %v4758
        %v4760 = vpop.f32.mrf.mxu0
        %4761 = vdwg.mxu0
        %v4762 = vadd.f32 %v3956, %v4596
        %v4763 = vadd.f32 %v3957, %v4599
        %v4764 = vadd.f32 %v3958, %v4604
        %v4765 = vadd.f32 %v3959, %v4607
        %v4766 = vadd.f32 %v3960, %v4612
        %v4767 = vadd.f32 %v3961, %v4615
        %v4768 = vadd.f32 %v3962, %v4620
        %v4769 = vadd.f32 %v3963, %v4623
        %v4770 = vadd.f32 %v3964, %v4628
        %v4771 = vadd.f32 %v3965, %v4631
        %v4772 = vadd.f32 %v3966, %v4636
        %v4773 = vadd.f32 %v3967, %v4639
        %v4774 = vadd.f32 %v3968, %v4644
        %v4775 = vadd.f32 %v3969, %v4647
        %v4776 = vadd.f32 %v3970, %v4652
        %v4777 = vadd.f32 %v3971, %v4655
        %v4778 = vadd.f32 %v3972, %v4660
        %v4779 = vadd.f32 %v3973, %v4663
        %v4780 = vadd.f32 %v3974, %v4668
        %v4781 = vadd.f32 %v3975, %v4671
        %v4782 = vadd.f32 %v3976, %v4676
        %v4783 = vadd.f32 %v3977, %v4679
        %v4784 = vadd.f32 %v3978, %v4684
        %v4785 = vadd.f32 %v3979, %v4687
        %v4786 = vadd.f32 %v3980, %v4692
        %v4787 = vadd.f32 %v3981, %v4695
        %v4788 = vadd.f32 %v3982, %v4700
        %v4789 = vadd.f32 %v3983, %v4703
        %v4790 = vadd.f32 %v3984, %v4708
        %v4791 = vadd.f32 %v3985, %v4711
        %v4792 = vadd.f32 %v3986, %v4716
        %v4793 = vadd.f32 %v3987, %v4719
        %v4794 = vadd.f32 %v3988, %v4724
        %v4795 = vadd.f32 %v3989, %v4727
        %v4796 = vadd.f32 %v3990, %v4732
        %v4797 = vadd.f32 %v3991, %v4735
        %v4798 = vadd.f32 %v3992, %v4740
        %v4799 = vadd.f32 %v3993, %v4743
        %v4800 = vadd.f32 %v3994, %v4748
        %v4801 = vadd.f32 %v3995, %v4751
        %v4802 = vadd.f32 %v3996, %v4756
        %v4803 = vadd.f32 %v3997, %v4759
        %v4804 = vld [vmem:[%s368 + $0x18] sm:$0xe]
        %v4805 = vunpack.c.l.bf16 %v4804
        %v4806 = vld [vmem:[%s373 + $0x18] sm:$0xe]
        %v4807 = vunpack.c.l.bf16 %v4806
        %v4808 = vmul.f32 %v647, %v4805
        %v4809 = vmul.f32 %v691, %v4807
        %v4810 = vadd.f32 %v4808, %v4809
        %v4811 = vpack.c.bf16 %v4257, %v4810
        %s4812 = scalar_lea.vmem %s3, 14
        %v4813 = vld [vmem:[%s4812] sm:$0x3]
        %vm4836 = vcmask 1046528
        %v4837 = vrot.slane %v4811, 1
        %v4838 = vrot.slane %v4300, 1
        %v4839 = vsel %vm4836, %v4837, %v4838
        %v4840 = vrot.slane %v4301, 1
        %v4841 = vsel %vm4836, %v4838, %v4840
        %v4842 = vrot.slane %v4302, 1
        %v4843 = vsel %vm4836, %v4840, %v4842
        %v4844 = vrot.slane %v4303, 1
        %v4845 = vsel %vm4836, %v4842, %v4844
        %v4846 = vrot.slane %v4304, 1
        %v4847 = vsel %vm4836, %v4844, %v4846
        %v4848 = vrot.slane %v4305, 1
        %v4849 = vsel %vm4836, %v4846, %v4848
        %v4850 = vrot.slane %v4306, 1
        %v4851 = vsel %vm4836, %v4848, %v4850
        %v4852 = vrot.slane %v4307, 1
        %v4853 = vsel %vm4836, %v4850, %v4852
        %v4854 = vrot.slane %v4308, 1
        %v4855 = vsel %vm4836, %v4852, %v4854
        %v4856 = vrot.slane %v4309, 1
        %v4857 = vsel %vm4836, %v4854, %v4856
        %v4858 = vrot.slane %v4310, 1
        %v4859 = vsel %vm4836, %v4856, %v4858
        %v4860 = vrot.slane %v4311, 1
        %v4861 = vsel %vm4836, %v4858, %v4860
        %v4862 = vrot.slane %v4312, 1
        %v4863 = vsel %vm4836, %v4860, %v4862
        %v4864 = vrot.slane %v4313, 1
        %v4865 = vsel %vm4836, %v4862, %v4864
        %v4866 = vrot.slane %v4314, 1
        %v4867 = vsel %vm4836, %v4864, %v4866
        %v4868 = vrot.slane %v4315, 1
        %v4869 = vsel %vm4836, %v4866, %v4868
        %v4870 = vrot.slane %v4316, 1
        %v4871 = vsel %vm4836, %v4868, %v4870
        %v4872 = vrot.slane %v4317, 1
        %v4873 = vsel %vm4836, %v4870, %v4872
        %v4874 = vrot.slane %v4318, 1
        %v4875 = vsel %vm4836, %v4872, %v4874
        %v4876 = vrot.slane %v4319, 1
        %v4877 = vsel %vm4836, %v4874, %v4876
        %v4878 = vrot.slane %v4320, 1
        %v4879 = vsel %vm4836, %v4876, %v4878
        %v4881 = vsel %vm877, %v4839, 0
        %v4884 = vsel %vm877, %v4841, 0
        %v4887 = vsel %vm877, %v4843, 0
        %v4890 = vsel %vm877, %v4845, 0
        %v4893 = vsel %vm877, %v4847, 0
        %v4896 = vsel %vm877, %v4849, 0
        %v4899 = vsel %vm877, %v4851, 0
        %v4902 = vsel %vm877, %v4853, 0
        %v4905 = vsel %vm877, %v4855, 0
        %v4908 = vsel %vm877, %v4857, 0
        %v4911 = vsel %vm877, %v4859, 0
        %v4914 = vsel %vm877, %v4861, 0
        %v4917 = vsel %vm877, %v4863, 0
        %v4920 = vsel %vm877, %v4865, 0
        %v4923 = vsel %vm877, %v4867, 0
        %v4926 = vsel %vm877, %v4869, 0
        %v4929 = vsel %vm877, %v4871, 0
        %v4932 = vsel %vm877, %v4873, 0
        %v4935 = vsel %vm877, %v4875, 0
        %v4938 = vsel %vm877, %v4877, 0
        %v4941 = vsel %vm877, %v4879, 0
        %v4944 = vsel %vm941, %v4813, 0
        %4946 = vmatprep.subr.bf16.mxu0 0
        %4947 = vmatpush1.bf16.msra.mxu0 0
        %4948 = vmatprep.subr.bf16.mxu0 0
        %4949 = vmatpush1.bf16.msra.mxu0 0
        %4950 = vmatprep.subr.bf16.mxu0 0
        %4951 = vmatpush1.bf16.msra.mxu0 0
        %4952 = vmatprep.subr.bf16.mxu0 0
        %4953 = vmatpush1.bf16.msra.mxu0 0
        %4954 = vmatprep.subr.bf16.mxu0 0
        %4955 = vmatpush1.bf16.msra.mxu0 0
        %4956 = vmatprep.subr.bf16.mxu0 0
        %4957 = vmatpush1.bf16.msra.mxu0 0
        %4958 = vmatprep.subr.bf16.mxu0 0
        %4959 = vmatpush1.bf16.msra.mxu0 0
        %4960 = vmatprep.subr.bf16.mxu0 0
        %4961 = vmatpush1.bf16.msra.mxu0 %v4944
        %4962 = vmatprep.subr.bf16.mxu0 0
        %4963 = vmatpush2.bf16.msra.mxu0 0
        %4964 = vmatprep.subr.bf16.mxu0 0
        %4965 = vmatpush2.bf16.msra.mxu0 0
        %4966 = vmatprep.subr.bf16.mxu0 0
        %4967 = vmatpush2.bf16.msra.mxu0 0
        %4968 = vmatprep.subr.bf16.mxu0 0
        %4969 = vmatpush2.bf16.msra.mxu0 0
        %4970 = vmatprep.subr.bf16.mxu0 0
        %4971 = vmatpush2.bf16.msra.mxu0 0
        %4972 = vmatprep.subr.bf16.mxu0 0
        %4973 = vmatpush2.bf16.msra.mxu0 0
        %4974 = vmatprep.subr.bf16.mxu0 0
        %4975 = vmatpush2.bf16.msra.mxu0 0
        %4976 = vmatprep.subr.bf16.mxu0 0
        %4977 = vmatpush2.bf16.msra.mxu0 0
        %4978 = vmatprep.mubr.bf16.mxu0 0
        %4979 = vmatmul.mubr.bf16.gmra.mxu0 %v4881
        %v4980 = vpop.f32.mrf.mxu0
        %v4981 = vadd.f32 0.0, %v4980
        %v4982 = vpop.f32.mrf.mxu0
        %v4983 = vpop.f32.mrf.mxu0
        %v4984 = vadd.f32 0.0, %v4983
        %v4985 = vpop.f32.mrf.mxu0
        %4986 = vmatprep.mubr.bf16.mxu0 0
        %4987 = vmatmul.mubr.bf16.gmra.mxu0 %v4884
        %v4988 = vpop.f32.mrf.mxu0
        %v4989 = vadd.f32 0.0, %v4988
        %v4990 = vpop.f32.mrf.mxu0
        %v4991 = vpop.f32.mrf.mxu0
        %v4992 = vadd.f32 0.0, %v4991
        %v4993 = vpop.f32.mrf.mxu0
        %4994 = vmatprep.mubr.bf16.mxu0 0
        %4995 = vmatmul.mubr.bf16.gmra.mxu0 %v4887
        %v4996 = vpop.f32.mrf.mxu0
        %v4997 = vadd.f32 0.0, %v4996
        %v4998 = vpop.f32.mrf.mxu0
        %v4999 = vpop.f32.mrf.mxu0
        %v5000 = vadd.f32 0.0, %v4999
        %v5001 = vpop.f32.mrf.mxu0
        %5002 = vmatprep.mubr.bf16.mxu0 0
        %5003 = vmatmul.mubr.bf16.gmra.mxu0 %v4890
        %v5004 = vpop.f32.mrf.mxu0
        %v5005 = vadd.f32 0.0, %v5004
        %v5006 = vpop.f32.mrf.mxu0
        %v5007 = vpop.f32.mrf.mxu0
        %v5008 = vadd.f32 0.0, %v5007
        %v5009 = vpop.f32.mrf.mxu0
        %5010 = vmatprep.mubr.bf16.mxu0 0
        %5011 = vmatmul.mubr.bf16.gmra.mxu0 %v4893
        %v5012 = vpop.f32.mrf.mxu0
        %v5013 = vadd.f32 0.0, %v5012
        %v5014 = vpop.f32.mrf.mxu0
        %v5015 = vpop.f32.mrf.mxu0
        %v5016 = vadd.f32 0.0, %v5015
        %v5017 = vpop.f32.mrf.mxu0
        %5018 = vmatprep.mubr.bf16.mxu0 0
        %5019 = vmatmul.mubr.bf16.gmra.mxu0 %v4896
        %v5020 = vpop.f32.mrf.mxu0
        %v5021 = vadd.f32 0.0, %v5020
        %v5022 = vpop.f32.mrf.mxu0
        %v5023 = vpop.f32.mrf.mxu0
        %v5024 = vadd.f32 0.0, %v5023
        %v5025 = vpop.f32.mrf.mxu0
        %5026 = vmatprep.mubr.bf16.mxu0 0
        %5027 = vmatmul.mubr.bf16.gmra.mxu0 %v4899
        %v5028 = vpop.f32.mrf.mxu0
        %v5029 = vadd.f32 0.0, %v5028
        %v5030 = vpop.f32.mrf.mxu0
        %v5031 = vpop.f32.mrf.mxu0
        %v5032 = vadd.f32 0.0, %v5031
        %v5033 = vpop.f32.mrf.mxu0
        %5034 = vmatprep.mubr.bf16.mxu0 0
        %5035 = vmatmul.mubr.bf16.gmra.mxu0 %v4902
        %v5036 = vpop.f32.mrf.mxu0
        %v5037 = vadd.f32 0.0, %v5036
        %v5038 = vpop.f32.mrf.mxu0
        %v5039 = vpop.f32.mrf.mxu0
        %v5040 = vadd.f32 0.0, %v5039
        %v5041 = vpop.f32.mrf.mxu0
        %5042 = vmatprep.mubr.bf16.mxu0 0
        %5043 = vmatmul.mubr.bf16.gmra.mxu0 %v4905
        %v5044 = vpop.f32.mrf.mxu0
        %v5045 = vadd.f32 0.0, %v5044
        %v5046 = vpop.f32.mrf.mxu0
        %v5047 = vpop.f32.mrf.mxu0
        %v5048 = vadd.f32 0.0, %v5047
        %v5049 = vpop.f32.mrf.mxu0
        %5050 = vmatprep.mubr.bf16.mxu0 0
        %5051 = vmatmul.mubr.bf16.gmra.mxu0 %v4908
        %v5052 = vpop.f32.mrf.mxu0
        %v5053 = vadd.f32 0.0, %v5052
        %v5054 = vpop.f32.mrf.mxu0
        %v5055 = vpop.f32.mrf.mxu0
        %v5056 = vadd.f32 0.0, %v5055
        %v5057 = vpop.f32.mrf.mxu0
        %5058 = vmatprep.mubr.bf16.mxu0 0
        %5059 = vmatmul.mubr.bf16.gmra.mxu0 %v4911
        %v5060 = vpop.f32.mrf.mxu0
        %v5061 = vadd.f32 0.0, %v5060
        %v5062 = vpop.f32.mrf.mxu0
        %v5063 = vpop.f32.mrf.mxu0
        %v5064 = vadd.f32 0.0, %v5063
        %v5065 = vpop.f32.mrf.mxu0
        %5066 = vmatprep.mubr.bf16.mxu0 0
        %5067 = vmatmul.mubr.bf16.gmra.mxu0 %v4914
        %v5068 = vpop.f32.mrf.mxu0
        %v5069 = vadd.f32 0.0, %v5068
        %v5070 = vpop.f32.mrf.mxu0
        %v5071 = vpop.f32.mrf.mxu0
        %v5072 = vadd.f32 0.0, %v5071
        %v5073 = vpop.f32.mrf.mxu0
        %5074 = vmatprep.mubr.bf16.mxu0 0
        %5075 = vmatmul.mubr.bf16.gmra.mxu0 %v4917
        %v5076 = vpop.f32.mrf.mxu0
        %v5077 = vadd.f32 0.0, %v5076
        %v5078 = vpop.f32.mrf.mxu0
        %v5079 = vpop.f32.mrf.mxu0
        %v5080 = vadd.f32 0.0, %v5079
        %v5081 = vpop.f32.mrf.mxu0
        %5082 = vmatprep.mubr.bf16.mxu0 0
        %5083 = vmatmul.mubr.bf16.gmra.mxu0 %v4920
        %v5084 = vpop.f32.mrf.mxu0
        %v5085 = vadd.f32 0.0, %v5084
        %v5086 = vpop.f32.mrf.mxu0
        %v5087 = vpop.f32.mrf.mxu0
        %v5088 = vadd.f32 0.0, %v5087
        %v5089 = vpop.f32.mrf.mxu0
        %5090 = vmatprep.mubr.bf16.mxu0 0
        %5091 = vmatmul.mubr.bf16.gmra.mxu0 %v4923
        %v5092 = vpop.f32.mrf.mxu0
        %v5093 = vadd.f32 0.0, %v5092
        %v5094 = vpop.f32.mrf.mxu0
        %v5095 = vpop.f32.mrf.mxu0
        %v5096 = vadd.f32 0.0, %v5095
        %v5097 = vpop.f32.mrf.mxu0
        %5098 = vmatprep.mubr.bf16.mxu0 0
        %5099 = vmatmul.mubr.bf16.gmra.mxu0 %v4926
        %v5100 = vpop.f32.mrf.mxu0
        %v5101 = vadd.f32 0.0, %v5100
        %v5102 = vpop.f32.mrf.mxu0
        %v5103 = vpop.f32.mrf.mxu0
        %v5104 = vadd.f32 0.0, %v5103
        %v5105 = vpop.f32.mrf.mxu0
        %5106 = vmatprep.mubr.bf16.mxu0 0
        %5107 = vmatmul.mubr.bf16.gmra.mxu0 %v4929
        %v5108 = vpop.f32.mrf.mxu0
        %v5109 = vadd.f32 0.0, %v5108
        %v5110 = vpop.f32.mrf.mxu0
        %v5111 = vpop.f32.mrf.mxu0
        %v5112 = vadd.f32 0.0, %v5111
        %v5113 = vpop.f32.mrf.mxu0
        %5114 = vmatprep.mubr.bf16.mxu0 0
        %5115 = vmatmul.mubr.bf16.gmra.mxu0 %v4932
        %v5116 = vpop.f32.mrf.mxu0
        %v5117 = vadd.f32 0.0, %v5116
        %v5118 = vpop.f32.mrf.mxu0
        %v5119 = vpop.f32.mrf.mxu0
        %v5120 = vadd.f32 0.0, %v5119
        %v5121 = vpop.f32.mrf.mxu0
        %5122 = vmatprep.mubr.bf16.mxu0 0
        %5123 = vmatmul.mubr.bf16.gmra.mxu0 %v4935
        %v5124 = vpop.f32.mrf.mxu0
        %v5125 = vadd.f32 0.0, %v5124
        %v5126 = vpop.f32.mrf.mxu0
        %v5127 = vpop.f32.mrf.mxu0
        %v5128 = vadd.f32 0.0, %v5127
        %v5129 = vpop.f32.mrf.mxu0
        %5130 = vmatprep.mubr.bf16.mxu0 0
        %5131 = vmatmul.mubr.bf16.gmra.mxu0 %v4938
        %v5132 = vpop.f32.mrf.mxu0
        %v5133 = vadd.f32 0.0, %v5132
        %v5134 = vpop.f32.mrf.mxu0
        %v5135 = vpop.f32.mrf.mxu0
        %v5136 = vadd.f32 0.0, %v5135
        %v5137 = vpop.f32.mrf.mxu0
        %5138 = vmatprep.mubr.bf16.mxu0 0
        %5139 = vmatmul.mubr.bf16.gmra.mxu0 %v4941
        %v5140 = vpop.f32.mrf.mxu0
        %v5141 = vadd.f32 0.0, %v5140
        %v5142 = vpop.f32.mrf.mxu0
        %v5143 = vpop.f32.mrf.mxu0
        %v5144 = vadd.f32 0.0, %v5143
        %v5145 = vpop.f32.mrf.mxu0
        %5146 = vdwg.mxu0
        %v5147 = vadd.f32 %v4762, %v4981
        %v5148 = vadd.f32 %v4763, %v4984
        %v5149 = vadd.f32 %v4764, %v4989
        %v5150 = vadd.f32 %v4765, %v4992
        %v5151 = vadd.f32 %v4766, %v4997
        %v5152 = vadd.f32 %v4767, %v5000
        %v5153 = vadd.f32 %v4768, %v5005
        %v5154 = vadd.f32 %v4769, %v5008
        %v5155 = vadd.f32 %v4770, %v5013
        %v5156 = vadd.f32 %v4771, %v5016
        %v5157 = vadd.f32 %v4772, %v5021
        %v5158 = vadd.f32 %v4773, %v5024
        %v5159 = vadd.f32 %v4774, %v5029
        %v5160 = vadd.f32 %v4775, %v5032
        %v5161 = vadd.f32 %v4776, %v5037
        %v5162 = vadd.f32 %v4777, %v5040
        %v5163 = vadd.f32 %v4778, %v5045
        %v5164 = vadd.f32 %v4779, %v5048
        %v5165 = vadd.f32 %v4780, %v5053
        %v5166 = vadd.f32 %v4781, %v5056
        %v5167 = vadd.f32 %v4782, %v5061
        %v5168 = vadd.f32 %v4783, %v5064
        %v5169 = vadd.f32 %v4784, %v5069
        %v5170 = vadd.f32 %v4785, %v5072
        %v5171 = vadd.f32 %v4786, %v5077
        %v5172 = vadd.f32 %v4787, %v5080
        %v5173 = vadd.f32 %v4788, %v5085
        %v5174 = vadd.f32 %v4789, %v5088
        %v5175 = vadd.f32 %v4790, %v5093
        %v5176 = vadd.f32 %v4791, %v5096
        %v5177 = vadd.f32 %v4792, %v5101
        %v5178 = vadd.f32 %v4793, %v5104
        %v5179 = vadd.f32 %v4794, %v5109
        %v5180 = vadd.f32 %v4795, %v5112
        %v5181 = vadd.f32 %v4796, %v5117
        %v5182 = vadd.f32 %v4797, %v5120
        %v5183 = vadd.f32 %v4798, %v5125
        %v5184 = vadd.f32 %v4799, %v5128
        %v5185 = vadd.f32 %v4800, %v5133
        %v5186 = vadd.f32 %v4801, %v5136
        %v5187 = vadd.f32 %v4802, %v5141
        %v5188 = vadd.f32 %v4803, %v5144
        %v5189 = vld [vmem:[%s368 + $0xc0] sm:$0x3]
        %v5190 = vunpack.c.l.bf16 %v5189
        %v5191 = vld [vmem:[%s373 + $0xc0] sm:$0x3]
        %v5192 = vunpack.c.l.bf16 %v5191
        %v5193 = vmul.f32 %v647, %v5190
        %v5194 = vmul.f32 %v691, %v5192
        %v5195 = vadd.f32 %v5193, %v5194
        %v5196 = vpack.c.bf16 %v5195, %v5195
        %s5197 = scalar_lea.vmem %s3, 16
        %v5198 = vld [vmem:[%s5197] sm:$0x3]
        %vm5199 = vsmask.f32 6400
        %v5201 = vshrl.u32 %v4811, 16
        %v5203 = vrot.slane %v5201, 1
        %v5204 = vshll.u32 %v4811, 16
        %v5206 = vrot.slane %v5204, 2
        %v5207 = vor.u32 %v5203, %v5206
        %v5208 = vrot.slane %v4335, 1
        %v5209 = vrot.slane %v4331, 2
        %v5210 = vor.u32 %v5208, %v5209
        %v5211 = vsel %vm5199, %v5207, %v5210
        %v5212 = vrot.slane %v4343, 1
        %v5213 = vrot.slane %v4339, 2
        %v5214 = vor.u32 %v5212, %v5213
        %v5215 = vsel %vm5199, %v5210, %v5214
        %v5216 = vrot.slane %v4351, 1
        %v5217 = vrot.slane %v4347, 2
        %v5218 = vor.u32 %v5216, %v5217
        %v5219 = vsel %vm5199, %v5214, %v5218
        %v5220 = vrot.slane %v4359, 1
        %v5221 = vrot.slane %v4355, 2
        %v5222 = vor.u32 %v5220, %v5221
        %v5223 = vsel %vm5199, %v5218, %v5222
        %v5224 = vrot.slane %v4367, 1
        %v5225 = vrot.slane %v4363, 2
        %v5226 = vor.u32 %v5224, %v5225
        %v5227 = vsel %vm5199, %v5222, %v5226
        %v5228 = vrot.slane %v4375, 1
        %v5229 = vrot.slane %v4371, 2
        %v5230 = vor.u32 %v5228, %v5229
        %v5231 = vsel %vm5199, %v5226, %v5230
        %v5232 = vrot.slane %v4383, 1
        %v5233 = vrot.slane %v4379, 2
        %v5234 = vor.u32 %v5232, %v5233
        %v5235 = vsel %vm5199, %v5230, %v5234
        %v5236 = vrot.slane %v4391, 1
        %v5237 = vrot.slane %v4387, 2
        %v5238 = vor.u32 %v5236, %v5237
        %v5239 = vsel %vm5199, %v5234, %v5238
        %v5240 = vrot.slane %v4399, 1
        %v5241 = vrot.slane %v4395, 2
        %v5242 = vor.u32 %v5240, %v5241
        %v5243 = vsel %vm5199, %v5238, %v5242
        %v5244 = vrot.slane %v4407, 1
        %v5245 = vrot.slane %v4403, 2
        %v5246 = vor.u32 %v5244, %v5245
        %v5247 = vsel %vm5199, %v5242, %v5246
        %v5248 = vrot.slane %v4415, 1
        %v5249 = vrot.slane %v4411, 2
        %v5250 = vor.u32 %v5248, %v5249
        %v5251 = vsel %vm5199, %v5246, %v5250
        %v5252 = vrot.slane %v4423, 1
        %v5253 = vrot.slane %v4419, 2
        %v5254 = vor.u32 %v5252, %v5253
        %v5255 = vsel %vm5199, %v5250, %v5254
        %v5256 = vrot.slane %v4431, 1
        %v5257 = vrot.slane %v4427, 2
        %v5258 = vor.u32 %v5256, %v5257
        %v5259 = vsel %vm5199, %v5254, %v5258
        %v5260 = vrot.slane %v4439, 1
        %v5261 = vrot.slane %v4435, 2
        %v5262 = vor.u32 %v5260, %v5261
        %v5263 = vsel %vm5199, %v5258, %v5262
        %v5264 = vrot.slane %v4447, 1
        %v5265 = vrot.slane %v4443, 2
        %v5266 = vor.u32 %v5264, %v5265
        %v5267 = vsel %vm5199, %v5262, %v5266
        %v5268 = vrot.slane %v4455, 1
        %v5269 = vrot.slane %v4451, 2
        %v5270 = vor.u32 %v5268, %v5269
        %v5271 = vsel %vm5199, %v5266, %v5270
        %v5272 = vrot.slane %v4463, 1
        %v5273 = vrot.slane %v4459, 2
        %v5274 = vor.u32 %v5272, %v5273
        %v5275 = vsel %vm5199, %v5270, %v5274
        %v5276 = vrot.slane %v4471, 1
        %v5277 = vrot.slane %v4467, 2
        %v5278 = vor.u32 %v5276, %v5277
        %v5279 = vsel %vm5199, %v5274, %v5278
        %v5280 = vrot.slane %v4479, 1
        %v5281 = vrot.slane %v4475, 2
        %v5282 = vor.u32 %v5280, %v5281
        %v5283 = vsel %vm5199, %v5278, %v5282
        %v5284 = vrot.slane %v4487, 1
        %v5285 = vrot.slane %v4483, 2
        %v5286 = vor.u32 %v5284, %v5285
        %v5287 = vsel %vm5199, %v5282, %v5286
        %v5289 = vshrl.u32 %v5196, 16
        %v5291 = vrot.slane %v5289, 1
        %v5292 = vshll.u32 %v5196, 16
        %v5294 = vrot.slane %v5292, 2
        %v5295 = vor.u32 %v5291, %v5294
        %v5296 = vsel %vm5199, %v5286, %v5295
        %v5298 = vsel %vm877, %v5211, 0
        %v5301 = vsel %vm877, %v5215, 0
        %v5304 = vsel %vm877, %v5219, 0
        %v5307 = vsel %vm877, %v5223, 0
        %v5310 = vsel %vm877, %v5227, 0
        %v5313 = vsel %vm877, %v5231, 0
        %v5316 = vsel %vm877, %v5235, 0
        %v5319 = vsel %vm877, %v5239, 0
        %v5322 = vsel %vm877, %v5243, 0
        %v5325 = vsel %vm877, %v5247, 0
        %v5328 = vsel %vm877, %v5251, 0
        %v5331 = vsel %vm877, %v5255, 0
        %v5334 = vsel %vm877, %v5259, 0
        %v5337 = vsel %vm877, %v5263, 0
        %v5340 = vsel %vm877, %v5267, 0
        %v5343 = vsel %vm877, %v5271, 0
        %v5346 = vsel %vm877, %v5275, 0
        %v5349 = vsel %vm877, %v5279, 0
        %v5352 = vsel %vm877, %v5283, 0
        %v5355 = vsel %vm877, %v5287, 0
        %v5358 = vsel %vm877, %v5296, 0
        %v5361 = vsel %vm941, %v5198, 0
        %5363 = vmatprep.subr.bf16.mxu0 0
        %5364 = vmatpush1.bf16.msra.mxu0 0
        %5365 = vmatprep.subr.bf16.mxu0 0
        %5366 = vmatpush1.bf16.msra.mxu0 0
        %5367 = vmatprep.subr.bf16.mxu0 0
        %5368 = vmatpush1.bf16.msra.mxu0 0
        %5369 = vmatprep.subr.bf16.mxu0 0
        %5370 = vmatpush1.bf16.msra.mxu0 0
        %5371 = vmatprep.subr.bf16.mxu0 0
        %5372 = vmatpush1.bf16.msra.mxu0 0
        %5373 = vmatprep.subr.bf16.mxu0 0
        %5374 = vmatpush1.bf16.msra.mxu0 0
        %5375 = vmatprep.subr.bf16.mxu0 0
        %5376 = vmatpush1.bf16.msra.mxu0 0
        %5377 = vmatprep.subr.bf16.mxu0 0
        %5378 = vmatpush1.bf16.msra.mxu0 %v5361
        %5379 = vmatprep.subr.bf16.mxu0 0
        %5380 = vmatpush2.bf16.msra.mxu0 0
        %5381 = vmatprep.subr.bf16.mxu0 0
        %5382 = vmatpush2.bf16.msra.mxu0 0
        %5383 = vmatprep.subr.bf16.mxu0 0
        %5384 = vmatpush2.bf16.msra.mxu0 0
        %5385 = vmatprep.subr.bf16.mxu0 0
        %5386 = vmatpush2.bf16.msra.mxu0 0
        %5387 = vmatprep.subr.bf16.mxu0 0
        %5388 = vmatpush2.bf16.msra.mxu0 0
        %5389 = vmatprep.subr.bf16.mxu0 0
        %5390 = vmatpush2.bf16.msra.mxu0 0
        %5391 = vmatprep.subr.bf16.mxu0 0
        %5392 = vmatpush2.bf16.msra.mxu0 0
        %5393 = vmatprep.subr.bf16.mxu0 0
        %5394 = vmatpush2.bf16.msra.mxu0 0
        %5395 = vmatprep.mubr.bf16.mxu0 0
        %5396 = vmatmul.mubr.bf16.gmra.mxu0 %v5298
        %v5397 = vpop.f32.mrf.mxu0
        %v5398 = vadd.f32 0.0, %v5397
        %v5399 = vpop.f32.mrf.mxu0
        %v5400 = vpop.f32.mrf.mxu0
        %v5401 = vadd.f32 0.0, %v5400
        %v5402 = vpop.f32.mrf.mxu0
        %5403 = vmatprep.mubr.bf16.mxu0 0
        %5404 = vmatmul.mubr.bf16.gmra.mxu0 %v5301
        %v5405 = vpop.f32.mrf.mxu0
        %v5406 = vadd.f32 0.0, %v5405
        %v5407 = vpop.f32.mrf.mxu0
        %v5408 = vpop.f32.mrf.mxu0
        %v5409 = vadd.f32 0.0, %v5408
        %v5410 = vpop.f32.mrf.mxu0
        %5411 = vmatprep.mubr.bf16.mxu0 0
        %5412 = vmatmul.mubr.bf16.gmra.mxu0 %v5304
        %v5413 = vpop.f32.mrf.mxu0
        %v5414 = vadd.f32 0.0, %v5413
        %v5415 = vpop.f32.mrf.mxu0
        %v5416 = vpop.f32.mrf.mxu0
        %v5417 = vadd.f32 0.0, %v5416
        %v5418 = vpop.f32.mrf.mxu0
        %5419 = vmatprep.mubr.bf16.mxu0 0
        %5420 = vmatmul.mubr.bf16.gmra.mxu0 %v5307
        %v5421 = vpop.f32.mrf.mxu0
        %v5422 = vadd.f32 0.0, %v5421
        %v5423 = vpop.f32.mrf.mxu0
        %v5424 = vpop.f32.mrf.mxu0
        %v5425 = vadd.f32 0.0, %v5424
        %v5426 = vpop.f32.mrf.mxu0
        %5427 = vmatprep.mubr.bf16.mxu0 0
        %5428 = vmatmul.mubr.bf16.gmra.mxu0 %v5310
        %v5429 = vpop.f32.mrf.mxu0
        %v5430 = vadd.f32 0.0, %v5429
        %v5431 = vpop.f32.mrf.mxu0
        %v5432 = vpop.f32.mrf.mxu0
        %v5433 = vadd.f32 0.0, %v5432
        %v5434 = vpop.f32.mrf.mxu0
        %5435 = vmatprep.mubr.bf16.mxu0 0
        %5436 = vmatmul.mubr.bf16.gmra.mxu0 %v5313
        %v5437 = vpop.f32.mrf.mxu0
        %v5438 = vadd.f32 0.0, %v5437
        %v5439 = vpop.f32.mrf.mxu0
        %v5440 = vpop.f32.mrf.mxu0
        %v5441 = vadd.f32 0.0, %v5440
        %v5442 = vpop.f32.mrf.mxu0
        %5443 = vmatprep.mubr.bf16.mxu0 0
        %5444 = vmatmul.mubr.bf16.gmra.mxu0 %v5316
        %v5445 = vpop.f32.mrf.mxu0
        %v5446 = vadd.f32 0.0, %v5445
        %v5447 = vpop.f32.mrf.mxu0
        %v5448 = vpop.f32.mrf.mxu0
        %v5449 = vadd.f32 0.0, %v5448
        %v5450 = vpop.f32.mrf.mxu0
        %5451 = vmatprep.mubr.bf16.mxu0 0
        %5452 = vmatmul.mubr.bf16.gmra.mxu0 %v5319
        %v5453 = vpop.f32.mrf.mxu0
        %v5454 = vadd.f32 0.0, %v5453
        %v5455 = vpop.f32.mrf.mxu0
        %v5456 = vpop.f32.mrf.mxu0
        %v5457 = vadd.f32 0.0, %v5456
        %v5458 = vpop.f32.mrf.mxu0
        %5459 = vmatprep.mubr.bf16.mxu0 0
        %5460 = vmatmul.mubr.bf16.gmra.mxu0 %v5322
        %v5461 = vpop.f32.mrf.mxu0
        %v5462 = vadd.f32 0.0, %v5461
        %v5463 = vpop.f32.mrf.mxu0
        %v5464 = vpop.f32.mrf.mxu0
        %v5465 = vadd.f32 0.0, %v5464
        %v5466 = vpop.f32.mrf.mxu0
        %5467 = vmatprep.mubr.bf16.mxu0 0
        %5468 = vmatmul.mubr.bf16.gmra.mxu0 %v5325
        %v5469 = vpop.f32.mrf.mxu0
        %v5470 = vadd.f32 0.0, %v5469
        %v5471 = vpop.f32.mrf.mxu0
        %v5472 = vpop.f32.mrf.mxu0
        %v5473 = vadd.f32 0.0, %v5472
        %v5474 = vpop.f32.mrf.mxu0
        %5475 = vmatprep.mubr.bf16.mxu0 0
        %5476 = vmatmul.mubr.bf16.gmra.mxu0 %v5328
        %v5477 = vpop.f32.mrf.mxu0
        %v5478 = vadd.f32 0.0, %v5477
        %v5479 = vpop.f32.mrf.mxu0
        %v5480 = vpop.f32.mrf.mxu0
        %v5481 = vadd.f32 0.0, %v5480
        %v5482 = vpop.f32.mrf.mxu0
        %5483 = vmatprep.mubr.bf16.mxu0 0
        %5484 = vmatmul.mubr.bf16.gmra.mxu0 %v5331
        %v5485 = vpop.f32.mrf.mxu0
        %v5486 = vadd.f32 0.0, %v5485
        %v5487 = vpop.f32.mrf.mxu0
        %v5488 = vpop.f32.mrf.mxu0
        %v5489 = vadd.f32 0.0, %v5488
        %v5490 = vpop.f32.mrf.mxu0
        %5491 = vmatprep.mubr.bf16.mxu0 0
        %5492 = vmatmul.mubr.bf16.gmra.mxu0 %v5334
        %v5493 = vpop.f32.mrf.mxu0
        %v5494 = vadd.f32 0.0, %v5493
        %v5495 = vpop.f32.mrf.mxu0
        %v5496 = vpop.f32.mrf.mxu0
        %v5497 = vadd.f32 0.0, %v5496
        %v5498 = vpop.f32.mrf.mxu0
        %5499 = vmatprep.mubr.bf16.mxu0 0
        %5500 = vmatmul.mubr.bf16.gmra.mxu0 %v5337
        %v5501 = vpop.f32.mrf.mxu0
        %v5502 = vadd.f32 0.0, %v5501
        %v5503 = vpop.f32.mrf.mxu0
        %v5504 = vpop.f32.mrf.mxu0
        %v5505 = vadd.f32 0.0, %v5504
        %v5506 = vpop.f32.mrf.mxu0
        %5507 = vmatprep.mubr.bf16.mxu0 0
        %5508 = vmatmul.mubr.bf16.gmra.mxu0 %v5340
        %v5509 = vpop.f32.mrf.mxu0
        %v5510 = vadd.f32 0.0, %v5509
        %v5511 = vpop.f32.mrf.mxu0
        %v5512 = vpop.f32.mrf.mxu0
        %v5513 = vadd.f32 0.0, %v5512
        %v5514 = vpop.f32.mrf.mxu0
        %5515 = vmatprep.mubr.bf16.mxu0 0
        %5516 = vmatmul.mubr.bf16.gmra.mxu0 %v5343
        %v5517 = vpop.f32.mrf.mxu0
        %v5518 = vadd.f32 0.0, %v5517
        %v5519 = vpop.f32.mrf.mxu0
        %v5520 = vpop.f32.mrf.mxu0
        %v5521 = vadd.f32 0.0, %v5520
        %v5522 = vpop.f32.mrf.mxu0
        %5523 = vmatprep.mubr.bf16.mxu0 0
        %5524 = vmatmul.mubr.bf16.gmra.mxu0 %v5346
        %v5525 = vpop.f32.mrf.mxu0
        %v5526 = vadd.f32 0.0, %v5525
        %v5527 = vpop.f32.mrf.mxu0
        %v5528 = vpop.f32.mrf.mxu0
        %v5529 = vadd.f32 0.0, %v5528
        %v5530 = vpop.f32.mrf.mxu0
        %5531 = vmatprep.mubr.bf16.mxu0 0
        %5532 = vmatmul.mubr.bf16.gmra.mxu0 %v5349
        %v5533 = vpop.f32.mrf.mxu0
        %v5534 = vadd.f32 0.0, %v5533
        %v5535 = vpop.f32.mrf.mxu0
        %v5536 = vpop.f32.mrf.mxu0
        %v5537 = vadd.f32 0.0, %v5536
        %v5538 = vpop.f32.mrf.mxu0
        %5539 = vmatprep.mubr.bf16.mxu0 0
        %5540 = vmatmul.mubr.bf16.gmra.mxu0 %v5352
        %v5541 = vpop.f32.mrf.mxu0
        %v5542 = vadd.f32 0.0, %v5541
        %v5543 = vpop.f32.mrf.mxu0
        %v5544 = vpop.f32.mrf.mxu0
        %v5545 = vadd.f32 0.0, %v5544
        %v5546 = vpop.f32.mrf.mxu0
        %5547 = vmatprep.mubr.bf16.mxu0 0
        %5548 = vmatmul.mubr.bf16.gmra.mxu0 %v5355
        %v5549 = vpop.f32.mrf.mxu0
        %v5550 = vadd.f32 0.0, %v5549
        %v5551 = vpop.f32.mrf.mxu0
        %v5552 = vpop.f32.mrf.mxu0
        %v5553 = vadd.f32 0.0, %v5552
        %v5554 = vpop.f32.mrf.mxu0
        %5555 = vmatprep.mubr.bf16.mxu0 0
        %5556 = vmatmul.mubr.bf16.gmra.mxu0 %v5358
        %v5557 = vpop.f32.mrf.mxu0
        %v5558 = vadd.f32 0.0, %v5557
        %v5559 = vpop.f32.mrf.mxu0
        %v5560 = vpop.f32.mrf.mxu0
        %v5561 = vadd.f32 0.0, %v5560
        %v5562 = vpop.f32.mrf.mxu0
        %5563 = vdwg.mxu0
        %v5564 = vadd.f32 %v5147, %v5398
        %v5565 = vadd.f32 %v5148, %v5401
        %v5566 = vadd.f32 %v5149, %v5406
        %v5567 = vadd.f32 %v5150, %v5409
        %v5568 = vadd.f32 %v5151, %v5414
        %v5569 = vadd.f32 %v5152, %v5417
        %v5570 = vadd.f32 %v5153, %v5422
        %v5571 = vadd.f32 %v5154, %v5425
        %v5572 = vadd.f32 %v5155, %v5430
        %v5573 = vadd.f32 %v5156, %v5433
        %v5574 = vadd.f32 %v5157, %v5438
        %v5575 = vadd.f32 %v5158, %v5441
        %v5576 = vadd.f32 %v5159, %v5446
        %v5577 = vadd.f32 %v5160, %v5449
        %v5578 = vadd.f32 %v5161, %v5454
        %v5579 = vadd.f32 %v5162, %v5457
        %v5580 = vadd.f32 %v5163, %v5462
        %v5581 = vadd.f32 %v5164, %v5465
        %v5582 = vadd.f32 %v5165, %v5470
        %v5583 = vadd.f32 %v5166, %v5473
        %v5584 = vadd.f32 %v5167, %v5478
        %v5585 = vadd.f32 %v5168, %v5481
        %v5586 = vadd.f32 %v5169, %v5486
        %v5587 = vadd.f32 %v5170, %v5489
        %v5588 = vadd.f32 %v5171, %v5494
        %v5589 = vadd.f32 %v5172, %v5497
        %v5590 = vadd.f32 %v5173, %v5502
        %v5591 = vadd.f32 %v5174, %v5505
        %v5592 = vadd.f32 %v5175, %v5510
        %v5593 = vadd.f32 %v5176, %v5513
        %v5594 = vadd.f32 %v5177, %v5518
        %v5595 = vadd.f32 %v5178, %v5521
        %v5596 = vadd.f32 %v5179, %v5526
        %v5597 = vadd.f32 %v5180, %v5529
        %v5598 = vadd.f32 %v5181, %v5534
        %v5599 = vadd.f32 %v5182, %v5537
        %v5600 = vadd.f32 %v5183, %v5542
        %v5601 = vadd.f32 %v5184, %v5545
        %v5602 = vadd.f32 %v5185, %v5550
        %v5603 = vadd.f32 %v5186, %v5553
        %v5604 = vadd.f32 %v5187, %v5558
        %v5605 = vadd.f32 %v5188, %v5561
        %v5606 = vld [vmem:[%s363] sm:$0x1]
        %v5607 = vld [vmem:[%s4] sm:$0x1]
        %v5609 = vlaneseq
        %v5610 = vshrl.u32 %v5609, 7
        %v5611 = vsub.s32 0, %v5610
        %v5612 = vrot.slane %v5607, %v5611
        %v5614 = vadd.f32 %v5564, %v5612
        %v5615 = vadd.f32 %v5565, %v5612
        %v5616 = vadd.f32 %v5566, %v5612
        %v5617 = vadd.f32 %v5567, %v5612
        %v5618 = vadd.f32 %v5568, %v5612
        %v5619 = vadd.f32 %v5569, %v5612
        %v5620 = vadd.f32 %v5570, %v5612
        %v5621 = vadd.f32 %v5571, %v5612
        %v5622 = vadd.f32 %v5572, %v5612
        %v5623 = vadd.f32 %v5573, %v5612
        %v5624 = vadd.f32 %v5574, %v5612
        %v5625 = vadd.f32 %v5575, %v5612
        %v5626 = vadd.f32 %v5576, %v5612
        %v5627 = vadd.f32 %v5577, %v5612
        %v5628 = vadd.f32 %v5578, %v5612
        %v5629 = vadd.f32 %v5579, %v5612
        %v5630 = vadd.f32 %v5580, %v5612
        %v5631 = vadd.f32 %v5581, %v5612
        %v5632 = vadd.f32 %v5582, %v5612
        %v5633 = vadd.f32 %v5583, %v5612
        %v5634 = vadd.f32 %v5584, %v5612
        %v5635 = vadd.f32 %v5585, %v5612
        %v5636 = vadd.f32 %v5586, %v5612
        %v5637 = vadd.f32 %v5587, %v5612
        %v5638 = vadd.f32 %v5588, %v5612
        %v5639 = vadd.f32 %v5589, %v5612
        %v5640 = vadd.f32 %v5590, %v5612
        %v5641 = vadd.f32 %v5591, %v5612
        %v5642 = vadd.f32 %v5592, %v5612
        %v5643 = vadd.f32 %v5593, %v5612
        %v5644 = vadd.f32 %v5594, %v5612
        %v5645 = vadd.f32 %v5595, %v5612
        %v5646 = vadd.f32 %v5596, %v5612
        %v5647 = vadd.f32 %v5597, %v5612
        %v5648 = vadd.f32 %v5598, %v5612
        %v5649 = vadd.f32 %v5599, %v5612
        %v5650 = vadd.f32 %v5600, %v5612
        %v5651 = vadd.f32 %v5601, %v5612
        %v5652 = vadd.f32 %v5602, %v5612
        %v5653 = vadd.f32 %v5603, %v5612
        %v5654 = vadd.f32 %v5604, %v5612
        %v5655 = vadd.f32 %v5605, %v5612
        %v5657 = vlaneseq
        %v5658 = vshrl.u32 %v5657, 7
        %v5659 = vsub.s32 0, %v5658
        %v5660 = vrot.slane %v5606, %v5659
        %v5662 = vadd.f32 %v5614, %v5660
        %v5663 = vadd.f32 %v5615, %v5660
        %v5664 = vadd.f32 %v5616, %v5660
        %v5665 = vadd.f32 %v5617, %v5660
        %v5666 = vadd.f32 %v5618, %v5660
        %v5667 = vadd.f32 %v5619, %v5660
        %v5668 = vadd.f32 %v5620, %v5660
        %v5669 = vadd.f32 %v5621, %v5660
        %v5670 = vadd.f32 %v5622, %v5660
        %v5671 = vadd.f32 %v5623, %v5660
        %v5672 = vadd.f32 %v5624, %v5660
        %v5673 = vadd.f32 %v5625, %v5660
        %v5674 = vadd.f32 %v5626, %v5660
        %v5675 = vadd.f32 %v5627, %v5660
        %v5676 = vadd.f32 %v5628, %v5660
        %v5677 = vadd.f32 %v5629, %v5660
        %v5678 = vadd.f32 %v5630, %v5660
        %v5679 = vadd.f32 %v5631, %v5660
        %v5680 = vadd.f32 %v5632, %v5660
        %v5681 = vadd.f32 %v5633, %v5660
        %v5682 = vadd.f32 %v5634, %v5660
        %v5683 = vadd.f32 %v5635, %v5660
        %v5684 = vadd.f32 %v5636, %v5660
        %v5685 = vadd.f32 %v5637, %v5660
        %v5686 = vadd.f32 %v5638, %v5660
        %v5687 = vadd.f32 %v5639, %v5660
        %v5688 = vadd.f32 %v5640, %v5660
        %v5689 = vadd.f32 %v5641, %v5660
        %v5690 = vadd.f32 %v5642, %v5660
        %v5691 = vadd.f32 %v5643, %v5660
        %v5692 = vadd.f32 %v5644, %v5660
        %v5693 = vadd.f32 %v5645, %v5660
        %v5694 = vadd.f32 %v5646, %v5660
        %v5695 = vadd.f32 %v5647, %v5660
        %v5696 = vadd.f32 %v5648, %v5660
        %v5697 = vadd.f32 %v5649, %v5660
        %v5698 = vadd.f32 %v5650, %v5660
        %v5699 = vadd.f32 %v5651, %v5660
        %v5700 = vadd.f32 %v5652, %v5660
        %v5701 = vadd.f32 %v5653, %v5660
        %v5702 = vadd.f32 %v5654, %v5660
        %v5703 = vadd.f32 %v5655, %v5660
        %v5704 = vmax.f32 %v5662, 0.0
        %v5705 = vmax.f32 %v5663, 0.0
        %v5706 = vmax.f32 %v5664, 0.0
        %v5707 = vmax.f32 %v5665, 0.0
        %v5708 = vmax.f32 %v5666, 0.0
        %v5709 = vmax.f32 %v5667, 0.0
        %v5710 = vmax.f32 %v5668, 0.0
        %v5711 = vmax.f32 %v5669, 0.0
        %v5712 = vmax.f32 %v5670, 0.0
        %v5713 = vmax.f32 %v5671, 0.0
        %v5714 = vmax.f32 %v5672, 0.0
        %v5715 = vmax.f32 %v5673, 0.0
        %v5716 = vmax.f32 %v5674, 0.0
        %v5717 = vmax.f32 %v5675, 0.0
        %v5718 = vmax.f32 %v5676, 0.0
        %v5719 = vmax.f32 %v5677, 0.0
        %v5720 = vmax.f32 %v5678, 0.0
        %v5721 = vmax.f32 %v5679, 0.0
        %v5722 = vmax.f32 %v5680, 0.0
        %v5723 = vmax.f32 %v5681, 0.0
        %v5724 = vmax.f32 %v5682, 0.0
        %v5725 = vmax.f32 %v5683, 0.0
        %v5726 = vmax.f32 %v5684, 0.0
        %v5727 = vmax.f32 %v5685, 0.0
        %v5728 = vmax.f32 %v5686, 0.0
        %v5729 = vmax.f32 %v5687, 0.0
        %v5730 = vmax.f32 %v5688, 0.0
        %v5731 = vmax.f32 %v5689, 0.0
        %v5732 = vmax.f32 %v5690, 0.0
        %v5733 = vmax.f32 %v5691, 0.0
        %v5734 = vmax.f32 %v5692, 0.0
        %v5735 = vmax.f32 %v5693, 0.0
        %v5736 = vmax.f32 %v5694, 0.0
        %v5737 = vmax.f32 %v5695, 0.0
        %v5738 = vmax.f32 %v5696, 0.0
        %v5739 = vmax.f32 %v5697, 0.0
        %v5740 = vmax.f32 %v5698, 0.0
        %v5741 = vmax.f32 %v5699, 0.0
        %v5742 = vmax.f32 %v5700, 0.0
        %v5743 = vmax.f32 %v5701, 0.0
        %v5744 = vmax.f32 %v5702, 0.0
        %v5745 = vmax.f32 %v5703, 0.0
        %5747 = vset.pattern.permute.xlu0 0
        %5748 = vperm.xlu0 %5747, %v433
        %v5749 = vpop.permute.xlu0 %5748
        %5752 = vset.pattern.permute.xlu0 0
        %5753 = vperm.xlu0 %5752, %v434
        %v5754 = vpop.permute.xlu0 %5753
        %5757 = vset.pattern.permute.xlu0 0
        %5758 = vperm.xlu0 %5757, %v435
        %v5759 = vpop.permute.xlu0 %5758
        %5762 = vset.pattern.permute.xlu0 0
        %5763 = vperm.xlu0 %5762, %v436
        %v5764 = vpop.permute.xlu0 %5763
        %5767 = vset.pattern.permute.xlu0 0
        %5768 = vperm.xlu0 %5767, %v437
        %v5769 = vpop.permute.xlu0 %5768
        %5772 = vset.pattern.permute.xlu0 0
        %5773 = vperm.xlu0 %5772, %v438
        %v5774 = vpop.permute.xlu0 %5773
        %5777 = vset.pattern.permute.xlu0 0
        %5778 = vperm.xlu0 %5777, %v439
        %v5779 = vpop.permute.xlu0 %5778
        %5782 = vset.pattern.permute.xlu0 0
        %5783 = vperm.xlu0 %5782, %v440
        %v5784 = vpop.permute.xlu0 %5783
        %5787 = vset.pattern.permute.xlu0 0
        %5788 = vperm.xlu0 %5787, %v441
        %v5789 = vpop.permute.xlu0 %5788
        %5792 = vset.pattern.permute.xlu0 0
        %5793 = vperm.xlu0 %5792, %v442
        %v5794 = vpop.permute.xlu0 %5793
        %5797 = vset.pattern.permute.xlu0 0
        %5798 = vperm.xlu0 %5797, %v443
        %v5799 = vpop.permute.xlu0 %5798
        %5802 = vset.pattern.permute.xlu0 0
        %5803 = vperm.xlu0 %5802, %v444
        %v5804 = vpop.permute.xlu0 %5803
        %5807 = vset.pattern.permute.xlu0 0
        %5808 = vperm.xlu0 %5807, %v445
        %v5809 = vpop.permute.xlu0 %5808
        %5812 = vset.pattern.permute.xlu0 0
        %5813 = vperm.xlu0 %5812, %v446
        %v5814 = vpop.permute.xlu0 %5813
        %5817 = vset.pattern.permute.xlu0 0
        %5818 = vperm.xlu0 %5817, %v447
        %v5819 = vpop.permute.xlu0 %5818
        %5822 = vset.pattern.permute.xlu0 0
        %5823 = vperm.xlu0 %5822, %v448
        %v5824 = vpop.permute.xlu0 %5823
        %5827 = vset.pattern.permute.xlu0 0
        %5828 = vperm.xlu0 %5827, %v449
        %v5829 = vpop.permute.xlu0 %5828
        %5832 = vset.pattern.permute.xlu0 0
        %5833 = vperm.xlu0 %5832, %v450
        %v5834 = vpop.permute.xlu0 %5833
        %5837 = vset.pattern.permute.xlu0 0
        %5838 = vperm.xlu0 %5837, %v451
        %v5839 = vpop.permute.xlu0 %5838
        %5842 = vset.pattern.permute.xlu0 0
        %5843 = vperm.xlu0 %5842, %v452
        %v5844 = vpop.permute.xlu0 %5843
        %5847 = vset.pattern.permute.xlu0 0
        %5848 = vperm.xlu0 %5847, %v453
        %v5849 = vpop.permute.xlu0 %5848
        %5852 = vset.pattern.permute.xlu0 0
        %5853 = vperm.xlu0 %5852, %v454
        %v5854 = vpop.permute.xlu0 %5853
        %5857 = vset.pattern.permute.xlu0 0
        %5858 = vperm.xlu0 %5857, %v455
        %v5859 = vpop.permute.xlu0 %5858
        %5862 = vset.pattern.permute.xlu0 0
        %5863 = vperm.xlu0 %5862, %v456
        %v5864 = vpop.permute.xlu0 %5863
        %5867 = vset.pattern.permute.xlu0 0
        %5868 = vperm.xlu0 %5867, %v457
        %v5869 = vpop.permute.xlu0 %5868
        %5872 = vset.pattern.permute.xlu0 0
        %5873 = vperm.xlu0 %5872, %v458
        %v5874 = vpop.permute.xlu0 %5873
        %5877 = vset.pattern.permute.xlu0 0
        %5878 = vperm.xlu0 %5877, %v459
        %v5879 = vpop.permute.xlu0 %5878
        %5882 = vset.pattern.permute.xlu0 0
        %5883 = vperm.xlu0 %5882, %v460
        %v5884 = vpop.permute.xlu0 %5883
        %5887 = vset.pattern.permute.xlu0 0
        %5888 = vperm.xlu0 %5887, %v461
        %v5889 = vpop.permute.xlu0 %5888
        %5892 = vset.pattern.permute.xlu0 0
        %5893 = vperm.xlu0 %5892, %v462
        %v5894 = vpop.permute.xlu0 %5893
        %5897 = vset.pattern.permute.xlu0 0
        %5898 = vperm.xlu0 %5897, %v463
        %v5899 = vpop.permute.xlu0 %5898
        %5902 = vset.pattern.permute.xlu0 0
        %5903 = vperm.xlu0 %5902, %v464
        %v5904 = vpop.permute.xlu0 %5903
        %5907 = vset.pattern.permute.xlu0 0
        %5908 = vperm.xlu0 %5907, %v465
        %v5909 = vpop.permute.xlu0 %5908
        %5912 = vset.pattern.permute.xlu0 0
        %5913 = vperm.xlu0 %5912, %v466
        %v5914 = vpop.permute.xlu0 %5913
        %5917 = vset.pattern.permute.xlu0 0
        %5918 = vperm.xlu0 %5917, %v467
        %v5919 = vpop.permute.xlu0 %5918
        %5922 = vset.pattern.permute.xlu0 0
        %5923 = vperm.xlu0 %5922, %v468
        %v5924 = vpop.permute.xlu0 %5923
        %5927 = vset.pattern.permute.xlu0 0
        %5928 = vperm.xlu0 %5927, %v469
        %v5929 = vpop.permute.xlu0 %5928
        %5932 = vset.pattern.permute.xlu0 0
        %5933 = vperm.xlu0 %5932, %v470
        %v5934 = vpop.permute.xlu0 %5933
        %5937 = vset.pattern.permute.xlu0 0
        %5938 = vperm.xlu0 %5937, %v471
        %v5939 = vpop.permute.xlu0 %5938
        %5942 = vset.pattern.permute.xlu0 0
        %5943 = vperm.xlu0 %5942, %v472
        %v5944 = vpop.permute.xlu0 %5943
        %5947 = vset.pattern.permute.xlu0 0
        %5948 = vperm.xlu0 %5947, %v473
        %v5949 = vpop.permute.xlu0 %5948
        %5952 = vset.pattern.permute.xlu0 0
        %5953 = vperm.xlu0 %5952, %v474
        %v5954 = vpop.permute.xlu0 %5953
        %v5956 = vmul.f32 %v5704, %v5749
        %v5957 = vmul.f32 %v5705, %v5754
        %v5958 = vmul.f32 %v5706, %v5759
        %v5959 = vmul.f32 %v5707, %v5764
        %v5960 = vmul.f32 %v5708, %v5769
        %v5961 = vmul.f32 %v5709, %v5774
        %v5962 = vmul.f32 %v5710, %v5779
        %v5963 = vmul.f32 %v5711, %v5784
        %v5964 = vmul.f32 %v5712, %v5789
        %v5965 = vmul.f32 %v5713, %v5794
        %v5966 = vmul.f32 %v5714, %v5799
        %v5967 = vmul.f32 %v5715, %v5804
        %v5968 = vmul.f32 %v5716, %v5809
        %v5969 = vmul.f32 %v5717, %v5814
        %v5970 = vmul.f32 %v5718, %v5819
        %v5971 = vmul.f32 %v5719, %v5824
        %v5972 = vmul.f32 %v5720, %v5829
        %v5973 = vmul.f32 %v5721, %v5834
        %v5974 = vmul.f32 %v5722, %v5839
        %v5975 = vmul.f32 %v5723, %v5844
        %v5976 = vmul.f32 %v5724, %v5849
        %v5977 = vmul.f32 %v5725, %v5854
        %v5978 = vmul.f32 %v5726, %v5859
        %v5979 = vmul.f32 %v5727, %v5864
        %v5980 = vmul.f32 %v5728, %v5869
        %v5981 = vmul.f32 %v5729, %v5874
        %v5982 = vmul.f32 %v5730, %v5879
        %v5983 = vmul.f32 %v5731, %v5884
        %v5984 = vmul.f32 %v5732, %v5889
        %v5985 = vmul.f32 %v5733, %v5894
        %v5986 = vmul.f32 %v5734, %v5899
        %v5987 = vmul.f32 %v5735, %v5904
        %v5988 = vmul.f32 %v5736, %v5909
        %v5989 = vmul.f32 %v5737, %v5914
        %v5990 = vmul.f32 %v5738, %v5919
        %v5991 = vmul.f32 %v5739, %v5924
        %v5992 = vmul.f32 %v5740, %v5929
        %v5993 = vmul.f32 %v5741, %v5934
        %v5994 = vmul.f32 %v5742, %v5939
        %v5995 = vmul.f32 %v5743, %v5944
        %v5996 = vmul.f32 %v5744, %v5949
        %v5997 = vmul.f32 %v5745, %v5954
        %v5998 = vpack.c.bf16 %v5957, %v5956
        %v5999 = vpack.c.bf16 %v5959, %v5958
        %v6000 = vpack.c.bf16 %v5961, %v5960
        %v6001 = vpack.c.bf16 %v5963, %v5962
        %v6002 = vpack.c.bf16 %v5965, %v5964
        %v6003 = vpack.c.bf16 %v5967, %v5966
        %v6004 = vpack.c.bf16 %v5969, %v5968
        %v6005 = vpack.c.bf16 %v5971, %v5970
        %v6006 = vpack.c.bf16 %v5973, %v5972
        %v6007 = vpack.c.bf16 %v5975, %v5974
        %v6008 = vpack.c.bf16 %v5977, %v5976
        %v6009 = vpack.c.bf16 %v5979, %v5978
        %v6010 = vpack.c.bf16 %v5981, %v5980
        %v6011 = vpack.c.bf16 %v5983, %v5982
        %v6012 = vpack.c.bf16 %v5985, %v5984
        %v6013 = vpack.c.bf16 %v5987, %v5986
        %v6014 = vpack.c.bf16 %v5989, %v5988
        %v6015 = vpack.c.bf16 %v5991, %v5990
        %v6016 = vpack.c.bf16 %v5993, %v5992
        %v6017 = vpack.c.bf16 %v5995, %v5994
        %v6018 = vpack.c.bf16 %v5997, %v5996
        %v6040 = vunpack.c.l.b16 %v5998
        %v6041 = vunpack.c.h.b16 %v5998
        %v6042 = vunpack.c.l.b16 %v5999
        %v6043 = vunpack.c.h.b16 %v5999
        %v6044 = vunpack.c.l.b16 %v6000
        %v6045 = vunpack.c.h.b16 %v6000
        %v6046 = vunpack.c.l.b16 %v6001
        %v6047 = vunpack.c.h.b16 %v6001
        %v6048 = vunpack.c.l.b16 %v6002
        %v6049 = vunpack.c.h.b16 %v6002
        %v6050 = vunpack.c.l.b16 %v6003
        %v6051 = vunpack.c.h.b16 %v6003
        %v6052 = vunpack.c.l.b16 %v6004
        %v6053 = vunpack.c.h.b16 %v6004
        %v6054 = vunpack.c.l.b16 %v6005
        %v6055 = vunpack.c.h.b16 %v6005
        %v6056 = vunpack.c.l.b16 %v6006
        %v6057 = vunpack.c.h.b16 %v6006
        %v6058 = vunpack.c.l.b16 %v6007
        %v6059 = vunpack.c.h.b16 %v6007
        %v6060 = vunpack.c.l.b16 %v6008
        %v6061 = vunpack.c.h.b16 %v6008
        %v6062 = vunpack.c.l.b16 %v6009
        %v6063 = vunpack.c.h.b16 %v6009
        %v6064 = vunpack.c.l.b16 %v6010
        %v6065 = vunpack.c.h.b16 %v6010
        %v6066 = vunpack.c.l.b16 %v6011
        %v6067 = vunpack.c.h.b16 %v6011
        %v6068 = vunpack.c.l.b16 %v6012
        %v6069 = vunpack.c.h.b16 %v6012
        %v6070 = vunpack.c.l.b16 %v6013
        %v6071 = vunpack.c.h.b16 %v6013
        %v6072 = vunpack.c.l.b16 %v6014
        %v6073 = vunpack.c.h.b16 %v6014
        %v6074 = vunpack.c.l.b16 %v6015
        %v6075 = vunpack.c.h.b16 %v6015
        %v6076 = vunpack.c.l.b16 %v6016
        %v6077 = vunpack.c.h.b16 %v6016
        %v6078 = vunpack.c.l.b16 %v6017
        %v6079 = vunpack.c.h.b16 %v6017
        %v6080 = vunpack.c.l.b16 %v6018
        %v6081 = vunpack.c.h.b16 %v6018
        %v6082 = vpack.c.b16 %v6040, %v6040
        %v6083 = vpack.c.b16 %v6041, %v6041
        %v6084 = vpack.c.b16 %v6042, %v6042
        %v6085 = vpack.c.b16 %v6043, %v6043
        %v6086 = vpack.c.b16 %v6044, %v6044
        %v6087 = vpack.c.b16 %v6045, %v6045
        %v6088 = vpack.c.b16 %v6046, %v6046
        %v6089 = vpack.c.b16 %v6047, %v6047
        %v6090 = vpack.c.b16 %v6048, %v6048
        %v6091 = vpack.c.b16 %v6049, %v6049
        %v6092 = vpack.c.b16 %v6050, %v6050
        %v6093 = vpack.c.b16 %v6051, %v6051
        %v6094 = vpack.c.b16 %v6052, %v6052
        %v6095 = vpack.c.b16 %v6053, %v6053
        %v6096 = vpack.c.b16 %v6054, %v6054
        %v6097 = vpack.c.b16 %v6055, %v6055
        %v6098 = vpack.c.b16 %v6056, %v6056
        %v6099 = vpack.c.b16 %v6057, %v6057
        %v6100 = vpack.c.b16 %v6058, %v6058
        %v6101 = vpack.c.b16 %v6059, %v6059
        %v6102 = vpack.c.b16 %v6060, %v6060
        %v6103 = vpack.c.b16 %v6061, %v6061
        %v6104 = vpack.c.b16 %v6062, %v6062
        %v6105 = vpack.c.b16 %v6063, %v6063
        %v6106 = vpack.c.b16 %v6064, %v6064
        %v6107 = vpack.c.b16 %v6065, %v6065
        %v6108 = vpack.c.b16 %v6066, %v6066
        %v6109 = vpack.c.b16 %v6067, %v6067
        %v6110 = vpack.c.b16 %v6068, %v6068
        %v6111 = vpack.c.b16 %v6069, %v6069
        %v6112 = vpack.c.b16 %v6070, %v6070
        %v6113 = vpack.c.b16 %v6071, %v6071
        %v6114 = vpack.c.b16 %v6072, %v6072
        %v6115 = vpack.c.b16 %v6073, %v6073
        %v6116 = vpack.c.b16 %v6074, %v6074
        %v6117 = vpack.c.b16 %v6075, %v6075
        %v6118 = vpack.c.b16 %v6076, %v6076
        %v6119 = vpack.c.b16 %v6077, %v6077
        %v6120 = vpack.c.b16 %v6078, %v6078
        %v6121 = vpack.c.b16 %v6079, %v6079
        %v6122 = vpack.c.b16 %v6080, %v6080
        %v6123 = vpack.c.b16 %v6081, %v6081
        %6166 = vst.msk [vmem:[#allocation2 + $0x10] sm:$0xf] %vm382, %v6082
        %6167 = vst.msk [vmem:[#allocation2 + $0x14] sm:$0xf] %vm382, %v6083
        %6168 = vst.msk [vmem:[#allocation2 + $0x18] sm:$0xf] %vm382, %v6084
        %6169 = vst.msk [vmem:[#allocation2 + $0x1c] sm:$0xf] %vm382, %v6085
        %6170 = vst.msk [vmem:[#allocation2 + $0x20] sm:$0xf] %vm382, %v6086
        %6171 = vst.msk [vmem:[#allocation2 + $0x24] sm:$0xf] %vm382, %v6087
        %6172 = vst.msk [vmem:[#allocation2 + $0x28] sm:$0xf] %vm382, %v6088
        %6173 = vst.msk [vmem:[#allocation2 + $0x2c] sm:$0xf] %vm382, %v6089
        %6174 = vst.msk [vmem:[#allocation2 + $0x30] sm:$0xf] %vm382, %v6090
        %6175 = vst.msk [vmem:[#allocation2 + $0x34] sm:$0xf] %vm382, %v6091
        %6176 = vst.msk [vmem:[#allocation2 + $0x38] sm:$0xf] %vm382, %v6092
        %6177 = vst.msk [vmem:[#allocation2 + $0x3c] sm:$0xf] %vm382, %v6093
        %6178 = vst.msk [vmem:[#allocation2 + $0x40] sm:$0xf] %vm382, %v6094
        %6179 = vst.msk [vmem:[#allocation2 + $0x44] sm:$0xf] %vm382, %v6095
        %6180 = vst.msk [vmem:[#allocation2 + $0x48] sm:$0xf] %vm382, %v6096
        %6181 = vst.msk [vmem:[#allocation2 + $0x4c] sm:$0xf] %vm382, %v6097
        %6182 = vst.msk [vmem:[#allocation2 + $0x50] sm:$0xf] %vm382, %v6098
        %6183 = vst.msk [vmem:[#allocation2 + $0x54] sm:$0xf] %vm382, %v6099
        %6184 = vst.msk [vmem:[#allocation2 + $0x58] sm:$0xf] %vm382, %v6100
        %6185 = vst.msk [vmem:[#allocation2 + $0x5c] sm:$0xf] %vm382, %v6101
        %6186 = vst.msk [vmem:[#allocation2 + $0x60] sm:$0xf] %vm382, %v6102
        %6187 = vst.msk [vmem:[#allocation2 + $0x64] sm:$0xf] %vm382, %v6103
        %6188 = vst.msk [vmem:[#allocation2 + $0x68] sm:$0xf] %vm382, %v6104
        %6189 = vst.msk [vmem:[#allocation2 + $0x6c] sm:$0xf] %vm382, %v6105
        %6190 = vst.msk [vmem:[#allocation2 + $0x70] sm:$0xf] %vm382, %v6106
        %6191 = vst.msk [vmem:[#allocation2 + $0x74] sm:$0xf] %vm382, %v6107
        %6192 = vst.msk [vmem:[#allocation2 + $0x78] sm:$0xf] %vm382, %v6108
        %6193 = vst.msk [vmem:[#allocation2 + $0x7c] sm:$0xf] %vm382, %v6109
        %6194 = vst.msk [vmem:[#allocation2 + $0x80] sm:$0xf] %vm382, %v6110
        %6195 = vst.msk [vmem:[#allocation2 + $0x84] sm:$0xf] %vm382, %v6111
        %6196 = vst.msk [vmem:[#allocation2 + $0x88] sm:$0xf] %vm382, %v6112
        %6197 = vst.msk [vmem:[#allocation2 + $0x8c] sm:$0xf] %vm382, %v6113
        %6198 = vst.msk [vmem:[#allocation2 + $0x90] sm:$0xf] %vm382, %v6114
        %6199 = vst.msk [vmem:[#allocation2 + $0x94] sm:$0xf] %vm382, %v6115
        %6200 = vst.msk [vmem:[#allocation2 + $0x98] sm:$0xf] %vm382, %v6116
        %6201 = vst.msk [vmem:[#allocation2 + $0x9c] sm:$0xf] %vm382, %v6117
        %6202 = vst.msk [vmem:[#allocation2 + $0xa0] sm:$0xf] %vm382, %v6118
        %6203 = vst.msk [vmem:[#allocation2 + $0xa4] sm:$0xf] %vm382, %v6119
        %6204 = vst.msk [vmem:[#allocation2 + $0xa8] sm:$0xf] %vm382, %v6120
        %6205 = vst.msk [vmem:[#allocation2 + $0xac] sm:$0xf] %vm382, %v6121
        %6206 = vst.msk [vmem:[#allocation2 + $0xb0] sm:$0xf] %vm382, %v6122
        %6207 = vst.msk [vmem:[#allocation2 + $0xb4] sm:$0xf] %vm382, %v6123
        %v6208 = vld [vmem:[#allocation2 + $0x4] sm:$0xc]
        %v6209 = vld [vmem:[#allocation2 + $0x8] sm:$0xf]
        %v6210 = vld [vmem:[#allocation2 + $0xc] sm:$0xf]
        %v6211 = vld [vmem:[#allocation2 + $0x10] sm:$0xf]
        %v6212 = vld [vmem:[#allocation2 + $0x14] sm:$0xf]
        %v6213 = vld [vmem:[#allocation2 + $0x18] sm:$0xf]
        %v6214 = vld [vmem:[#allocation2 + $0x1c] sm:$0xf]
        %v6215 = vld [vmem:[#allocation2 + $0x20] sm:$0xf]
        %v6216 = vld [vmem:[#allocation2 + $0x24] sm:$0xf]
        %v6217 = vld [vmem:[#allocation2 + $0x28] sm:$0xf]
        %v6218 = vld [vmem:[#allocation2 + $0x2c] sm:$0xf]
        %v6219 = vld [vmem:[#allocation2 + $0x30] sm:$0xf]
        %v6220 = vld [vmem:[#allocation2 + $0x34] sm:$0xf]
        %v6221 = vld [vmem:[#allocation2 + $0x38] sm:$0xf]
        %v6222 = vld [vmem:[#allocation2 + $0x3c] sm:$0xf]
        %v6223 = vld [vmem:[#allocation2 + $0x40] sm:$0xf]
        %v6224 = vld [vmem:[#allocation2 + $0x44] sm:$0xf]
        %v6225 = vld [vmem:[#allocation2 + $0x48] sm:$0xf]
        %v6226 = vld [vmem:[#allocation2 + $0x4c] sm:$0xf]
        %v6227 = vld [vmem:[#allocation2 + $0x50] sm:$0xf]
        %v6228 = vld [vmem:[#allocation2 + $0x54] sm:$0xf]
        %v6229 = vld [vmem:[#allocation2 + $0x58] sm:$0xf]
        %v6230 = vld [vmem:[#allocation2 + $0x5c] sm:$0xf]
        %v6231 = vld [vmem:[#allocation2 + $0x60] sm:$0xf]
        %v6232 = vld [vmem:[#allocation2 + $0x64] sm:$0xf]
        %v6233 = vld [vmem:[#allocation2 + $0x68] sm:$0xf]
        %v6234 = vld [vmem:[#allocation2 + $0x6c] sm:$0xf]
        %v6235 = vld [vmem:[#allocation2 + $0x70] sm:$0xf]
        %v6236 = vld [vmem:[#allocation2 + $0x74] sm:$0xf]
        %v6237 = vld [vmem:[#allocation2 + $0x78] sm:$0xf]
        %v6238 = vld [vmem:[#allocation2 + $0x7c] sm:$0xf]
        %v6239 = vld [vmem:[#allocation2 + $0x80] sm:$0xf]
        %v6240 = vld [vmem:[#allocation2 + $0x84] sm:$0xf]
        %v6241 = vld [vmem:[#allocation2 + $0x88] sm:$0xf]
        %v6242 = vld [vmem:[#allocation2 + $0x8c] sm:$0xf]
        %v6243 = vld [vmem:[#allocation2 + $0x90] sm:$0xf]
        %v6244 = vld [vmem:[#allocation2 + $0x94] sm:$0xf]
        %v6245 = vld [vmem:[#allocation2 + $0x98] sm:$0xf]
        %v6246 = vld [vmem:[#allocation2 + $0x9c] sm:$0xf]
        %v6247 = vld [vmem:[#allocation2 + $0xa0] sm:$0xf]
        %v6248 = vld [vmem:[#allocation2 + $0xa4] sm:$0xf]
        %v6249 = vld [vmem:[#allocation2 + $0xa8] sm:$0xf]
        %v6250 = vld [vmem:[#allocation2 + $0xac] sm:$0x7]
        %v6251 = vld [vmem:[%s5] sm:$0xf]
        %v6252 = vld [vmem:[%s5 + $0x4] sm:$0xf]
        %v6253 = vld [vmem:[%s5 + $0x8] sm:$0xf]
        %v6254 = vld [vmem:[%s5 + $0xc] sm:$0xf]
        %v6255 = vld [vmem:[#allocation2 + $0x4] sm:$0x8]
        %s6256 = scalar_lea.vmem %s5, 16
        %v6257 = vld [vmem:[%s6256] sm:$0xf]
        %v6258 = vld [vmem:[%s6256 + $0x4] sm:$0xf]
        %v6259 = vld [vmem:[%s6256 + $0x8] sm:$0xf]
        %v6260 = vld [vmem:[%s6256 + $0xc] sm:$0xf]
        %v6304 = vunpack.c.l.b16 %v6255
        %v6305 = vunpack.c.l.b16 %v6209
        %v6306 = vunpack.c.l.b16 %v6210
        %v6307 = vunpack.c.l.b16 %v6211
        %v6308 = vunpack.c.l.b16 %v6212
        %v6309 = vunpack.c.l.b16 %v6213
        %v6310 = vunpack.c.l.b16 %v6214
        %v6311 = vunpack.c.l.b16 %v6215
        %v6312 = vunpack.c.l.b16 %v6216
        %v6313 = vunpack.c.l.b16 %v6217
        %v6314 = vunpack.c.l.b16 %v6218
        %v6315 = vunpack.c.l.b16 %v6219
        %v6316 = vunpack.c.l.b16 %v6220
        %v6317 = vunpack.c.l.b16 %v6221
        %v6318 = vunpack.c.l.b16 %v6222
        %v6319 = vunpack.c.l.b16 %v6223
        %v6320 = vunpack.c.l.b16 %v6224
        %v6321 = vunpack.c.l.b16 %v6225
        %v6322 = vunpack.c.l.b16 %v6226
        %v6323 = vunpack.c.l.b16 %v6227
        %v6324 = vunpack.c.l.b16 %v6228
        %v6325 = vunpack.c.l.b16 %v6229
        %v6326 = vunpack.c.l.b16 %v6230
        %v6327 = vunpack.c.l.b16 %v6231
        %v6328 = vunpack.c.l.b16 %v6232
        %v6329 = vunpack.c.l.b16 %v6233
        %v6330 = vunpack.c.l.b16 %v6234
        %v6331 = vunpack.c.l.b16 %v6235
        %v6332 = vunpack.c.l.b16 %v6236
        %v6333 = vunpack.c.l.b16 %v6237
        %v6334 = vunpack.c.l.b16 %v6238
        %v6335 = vunpack.c.l.b16 %v6239
        %v6336 = vunpack.c.l.b16 %v6240
        %v6337 = vunpack.c.l.b16 %v6241
        %v6338 = vunpack.c.l.b16 %v6242
        %v6339 = vunpack.c.l.b16 %v6243
        %v6340 = vunpack.c.l.b16 %v6244
        %v6341 = vunpack.c.l.b16 %v6245
        %v6342 = vunpack.c.l.b16 %v6246
        %v6343 = vunpack.c.l.b16 %v6247
        %v6344 = vunpack.c.l.b16 %v6248
        %v6345 = vunpack.c.l.b16 %v6249
        %v6346 = vunpack.c.l.b16 %v6250
        %v6347 = vpack.c.b16 %v6305, %v6304
        %v6348 = vpack.c.b16 %v6307, %v6306
        %v6349 = vpack.c.b16 %v6309, %v6308
        %v6350 = vpack.c.b16 %v6311, %v6310
        %v6351 = vpack.c.b16 %v6313, %v6312
        %v6352 = vpack.c.b16 %v6315, %v6314
        %v6353 = vpack.c.b16 %v6317, %v6316
        %v6354 = vpack.c.b16 %v6319, %v6318
        %v6355 = vpack.c.b16 %v6321, %v6320
        %v6356 = vpack.c.b16 %v6323, %v6322
        %v6357 = vpack.c.b16 %v6325, %v6324
        %v6358 = vpack.c.b16 %v6327, %v6326
        %v6359 = vpack.c.b16 %v6329, %v6328
        %v6360 = vpack.c.b16 %v6331, %v6330
        %v6361 = vpack.c.b16 %v6333, %v6332
        %v6362 = vpack.c.b16 %v6335, %v6334
        %v6363 = vpack.c.b16 %v6337, %v6336
        %v6364 = vpack.c.b16 %v6339, %v6338
        %v6365 = vpack.c.b16 %v6341, %v6340
        %v6366 = vpack.c.b16 %v6343, %v6342
        %v6367 = vpack.c.b16 %v6345, %v6344
        %v6368 = vpack.c.b16 %v6346, %v6346
        %v6369 = vrot.slane %v6347, 3
        %v6370 = vrot.slane %v6348, 3
        %v6371 = vsel %vm833, %v6369, %v6370
        %v6372 = vrot.slane %v6349, 3
        %v6373 = vsel %vm833, %v6370, %v6372
        %v6374 = vrot.slane %v6350, 3
        %v6375 = vsel %vm833, %v6372, %v6374
        %v6376 = vrot.slane %v6351, 3
        %v6377 = vsel %vm833, %v6374, %v6376
        %v6378 = vrot.slane %v6352, 3
        %v6379 = vsel %vm833, %v6376, %v6378
        %v6380 = vrot.slane %v6353, 3
        %v6381 = vsel %vm833, %v6378, %v6380
        %v6382 = vrot.slane %v6354, 3
        %v6383 = vsel %vm833, %v6380, %v6382
        %v6384 = vrot.slane %v6355, 3
        %v6385 = vsel %vm833, %v6382, %v6384
        %v6386 = vrot.slane %v6356, 3
        %v6387 = vsel %vm833, %v6384, %v6386
        %v6388 = vrot.slane %v6357, 3
        %v6389 = vsel %vm833, %v6386, %v6388
        %v6390 = vrot.slane %v6358, 3
        %v6391 = vsel %vm833, %v6388, %v6390
        %v6392 = vrot.slane %v6359, 3
        %v6393 = vsel %vm833, %v6390, %v6392
        %v6394 = vrot.slane %v6360, 3
        %v6395 = vsel %vm833, %v6392, %v6394
        %v6396 = vrot.slane %v6361, 3
        %v6397 = vsel %vm833, %v6394, %v6396
        %v6398 = vrot.slane %v6362, 3
        %v6399 = vsel %vm833, %v6396, %v6398
        %v6400 = vrot.slane %v6363, 3
        %v6401 = vsel %vm833, %v6398, %v6400
        %v6402 = vrot.slane %v6364, 3
        %v6403 = vsel %vm833, %v6400, %v6402
        %v6404 = vrot.slane %v6365, 3
        %v6405 = vsel %vm833, %v6402, %v6404
        %v6406 = vrot.slane %v6366, 3
        %v6407 = vsel %vm833, %v6404, %v6406
        %v6408 = vrot.slane %v6367, 3
        %v6409 = vsel %vm833, %v6406, %v6408
        %v6410 = vrot.slane %v6368, 3
        %v6411 = vsel %vm833, %v6408, %v6410
        %v6416 = vunpack.c.l.b16 %v6257
        %v6417 = vunpack.c.l.b16 %v6258
        %v6418 = vunpack.c.l.b16 %v6259
        %v6419 = vunpack.c.l.b16 %v6260
        %v6420 = vpack.c.b16 %v6417, %v6416
        %v6421 = vpack.c.b16 %v6419, %v6418
        %vm6424 = vcmask 261120
        %v6426 = vsel %vm6424, %v6371, 0
        %v6429 = vsel %vm6424, %v6373, 0
        %v6432 = vsel %vm6424, %v6375, 0
        %v6435 = vsel %vm6424, %v6377, 0
        %v6438 = vsel %vm6424, %v6379, 0
        %v6441 = vsel %vm6424, %v6381, 0
        %v6444 = vsel %vm6424, %v6383, 0
        %v6447 = vsel %vm6424, %v6385, 0
        %v6450 = vsel %vm6424, %v6387, 0
        %v6453 = vsel %vm6424, %v6389, 0
        %v6456 = vsel %vm6424, %v6391, 0
        %v6459 = vsel %vm6424, %v6393, 0
        %v6462 = vsel %vm6424, %v6395, 0
        %v6465 = vsel %vm6424, %v6397, 0
        %v6468 = vsel %vm6424, %v6399, 0
        %v6471 = vsel %vm6424, %v6401, 0
        %v6474 = vsel %vm6424, %v6403, 0
        %v6477 = vsel %vm6424, %v6405, 0
        %v6480 = vsel %vm6424, %v6407, 0
        %v6483 = vsel %vm6424, %v6409, 0
        %v6486 = vsel %vm6424, %v6411, 0
        %6488 = vmatprep.subr.bf16.mxu0 0
        %6489 = vmatpush1.bf16.msra.mxu0 0
        %6490 = vmatprep.subr.bf16.mxu0 0
        %6491 = vmatpush1.bf16.msra.mxu0 0
        %6492 = vmatprep.subr.bf16.mxu0 0
        %6493 = vmatpush1.bf16.msra.mxu0 0
        %6494 = vmatprep.subr.bf16.mxu0 0
        %6495 = vmatpush1.bf16.msra.mxu0 0
        %6496 = vmatprep.subr.bf16.mxu0 0
        %6497 = vmatpush1.bf16.msra.mxu0 0
        %6498 = vmatprep.subr.bf16.mxu0 0
        %6499 = vmatpush1.bf16.msra.mxu0 0
        %6500 = vmatprep.subr.bf16.mxu0 0
        %6501 = vmatpush1.bf16.msra.mxu0 %v6421
        %6502 = vmatprep.subr.bf16.mxu0 0
        %6503 = vmatpush1.bf16.msra.mxu0 %v6420
        %6504 = vmatprep.subr.bf16.mxu0 0
        %6505 = vmatpush2.bf16.msra.mxu0 0
        %6506 = vmatprep.subr.bf16.mxu0 0
        %6507 = vmatpush2.bf16.msra.mxu0 0
        %6508 = vmatprep.subr.bf16.mxu0 0
        %6509 = vmatpush2.bf16.msra.mxu0 0
        %6510 = vmatprep.subr.bf16.mxu0 0
        %6511 = vmatpush2.bf16.msra.mxu0 0
        %6512 = vmatprep.subr.bf16.mxu0 0
        %6513 = vmatpush2.bf16.msra.mxu0 0
        %6514 = vmatprep.subr.bf16.mxu0 0
        %6515 = vmatpush2.bf16.msra.mxu0 0
        %6516 = vmatprep.subr.bf16.mxu0 0
        %6517 = vmatpush2.bf16.msra.mxu0 0
        %6518 = vmatprep.subr.bf16.mxu0 0
        %6519 = vmatpush2.bf16.msra.mxu0 0
        %6520 = vmatprep.mubr.bf16.mxu0 0
        %6521 = vmatmul.mubr.bf16.gmra.mxu0 %v6426
        %v6522 = vpop.f32.mrf.mxu0
        %v6523 = vadd.f32 0.0, %v6522
        %v6524 = vpop.f32.mrf.mxu0
        %v6525 = vpop.f32.mrf.mxu0
        %v6526 = vadd.f32 0.0, %v6525
        %v6527 = vpop.f32.mrf.mxu0
        %6528 = vmatprep.mubr.bf16.mxu0 0
        %6529 = vmatmul.mubr.bf16.gmra.mxu0 %v6429
        %v6530 = vpop.f32.mrf.mxu0
        %v6531 = vadd.f32 0.0, %v6530
        %v6532 = vpop.f32.mrf.mxu0
        %v6533 = vpop.f32.mrf.mxu0
        %v6534 = vadd.f32 0.0, %v6533
        %v6535 = vpop.f32.mrf.mxu0
        %6536 = vmatprep.mubr.bf16.mxu0 0
        %6537 = vmatmul.mubr.bf16.gmra.mxu0 %v6432
        %v6538 = vpop.f32.mrf.mxu0
        %v6539 = vadd.f32 0.0, %v6538
        %v6540 = vpop.f32.mrf.mxu0
        %v6541 = vpop.f32.mrf.mxu0
        %v6542 = vadd.f32 0.0, %v6541
        %v6543 = vpop.f32.mrf.mxu0
        %6544 = vmatprep.mubr.bf16.mxu0 0
        %6545 = vmatmul.mubr.bf16.gmra.mxu0 %v6435
        %v6546 = vpop.f32.mrf.mxu0
        %v6547 = vadd.f32 0.0, %v6546
        %v6548 = vpop.f32.mrf.mxu0
        %v6549 = vpop.f32.mrf.mxu0
        %v6550 = vadd.f32 0.0, %v6549
        %v6551 = vpop.f32.mrf.mxu0
        %6552 = vmatprep.mubr.bf16.mxu0 0
        %6553 = vmatmul.mubr.bf16.gmra.mxu0 %v6438
        %v6554 = vpop.f32.mrf.mxu0
        %v6555 = vadd.f32 0.0, %v6554
        %v6556 = vpop.f32.mrf.mxu0
        %v6557 = vpop.f32.mrf.mxu0
        %v6558 = vadd.f32 0.0, %v6557
        %v6559 = vpop.f32.mrf.mxu0
        %6560 = vmatprep.mubr.bf16.mxu0 0
        %6561 = vmatmul.mubr.bf16.gmra.mxu0 %v6441
        %v6562 = vpop.f32.mrf.mxu0
        %v6563 = vadd.f32 0.0, %v6562
        %v6564 = vpop.f32.mrf.mxu0
        %v6565 = vpop.f32.mrf.mxu0
        %v6566 = vadd.f32 0.0, %v6565
        %v6567 = vpop.f32.mrf.mxu0
        %6568 = vmatprep.mubr.bf16.mxu0 0
        %6569 = vmatmul.mubr.bf16.gmra.mxu0 %v6444
        %v6570 = vpop.f32.mrf.mxu0
        %v6571 = vadd.f32 0.0, %v6570
        %v6572 = vpop.f32.mrf.mxu0
        %v6573 = vpop.f32.mrf.mxu0
        %v6574 = vadd.f32 0.0, %v6573
        %v6575 = vpop.f32.mrf.mxu0
        %6576 = vmatprep.mubr.bf16.mxu0 0
        %6577 = vmatmul.mubr.bf16.gmra.mxu0 %v6447
        %v6578 = vpop.f32.mrf.mxu0
        %v6579 = vadd.f32 0.0, %v6578
        %v6580 = vpop.f32.mrf.mxu0
        %v6581 = vpop.f32.mrf.mxu0
        %v6582 = vadd.f32 0.0, %v6581
        %v6583 = vpop.f32.mrf.mxu0
        %6584 = vmatprep.mubr.bf16.mxu0 0
        %6585 = vmatmul.mubr.bf16.gmra.mxu0 %v6450
        %v6586 = vpop.f32.mrf.mxu0
        %v6587 = vadd.f32 0.0, %v6586
        %v6588 = vpop.f32.mrf.mxu0
        %v6589 = vpop.f32.mrf.mxu0
        %v6590 = vadd.f32 0.0, %v6589
        %v6591 = vpop.f32.mrf.mxu0
        %6592 = vmatprep.mubr.bf16.mxu0 0
        %6593 = vmatmul.mubr.bf16.gmra.mxu0 %v6453
        %v6594 = vpop.f32.mrf.mxu0
        %v6595 = vadd.f32 0.0, %v6594
        %v6596 = vpop.f32.mrf.mxu0
        %v6597 = vpop.f32.mrf.mxu0
        %v6598 = vadd.f32 0.0, %v6597
        %v6599 = vpop.f32.mrf.mxu0
        %6600 = vmatprep.mubr.bf16.mxu0 0
        %6601 = vmatmul.mubr.bf16.gmra.mxu0 %v6456
        %v6602 = vpop.f32.mrf.mxu0
        %v6603 = vadd.f32 0.0, %v6602
        %v6604 = vpop.f32.mrf.mxu0
        %v6605 = vpop.f32.mrf.mxu0
        %v6606 = vadd.f32 0.0, %v6605
        %v6607 = vpop.f32.mrf.mxu0
        %6608 = vmatprep.mubr.bf16.mxu0 0
        %6609 = vmatmul.mubr.bf16.gmra.mxu0 %v6459
        %v6610 = vpop.f32.mrf.mxu0
        %v6611 = vadd.f32 0.0, %v6610
        %v6612 = vpop.f32.mrf.mxu0
        %v6613 = vpop.f32.mrf.mxu0
        %v6614 = vadd.f32 0.0, %v6613
        %v6615 = vpop.f32.mrf.mxu0
        %6616 = vmatprep.mubr.bf16.mxu0 0
        %6617 = vmatmul.mubr.bf16.gmra.mxu0 %v6462
        %v6618 = vpop.f32.mrf.mxu0
        %v6619 = vadd.f32 0.0, %v6618
        %v6620 = vpop.f32.mrf.mxu0
        %v6621 = vpop.f32.mrf.mxu0
        %v6622 = vadd.f32 0.0, %v6621
        %v6623 = vpop.f32.mrf.mxu0
        %6624 = vmatprep.mubr.bf16.mxu0 0
        %6625 = vmatmul.mubr.bf16.gmra.mxu0 %v6465
        %v6626 = vpop.f32.mrf.mxu0
        %v6627 = vadd.f32 0.0, %v6626
        %v6628 = vpop.f32.mrf.mxu0
        %v6629 = vpop.f32.mrf.mxu0
        %v6630 = vadd.f32 0.0, %v6629
        %v6631 = vpop.f32.mrf.mxu0
        %6632 = vmatprep.mubr.bf16.mxu0 0
        %6633 = vmatmul.mubr.bf16.gmra.mxu0 %v6468
        %v6634 = vpop.f32.mrf.mxu0
        %v6635 = vadd.f32 0.0, %v6634
        %v6636 = vpop.f32.mrf.mxu0
        %v6637 = vpop.f32.mrf.mxu0
        %v6638 = vadd.f32 0.0, %v6637
        %v6639 = vpop.f32.mrf.mxu0
        %6640 = vmatprep.mubr.bf16.mxu0 0
        %6641 = vmatmul.mubr.bf16.gmra.mxu0 %v6471
        %v6642 = vpop.f32.mrf.mxu0
        %v6643 = vadd.f32 0.0, %v6642
        %v6644 = vpop.f32.mrf.mxu0
        %v6645 = vpop.f32.mrf.mxu0
        %v6646 = vadd.f32 0.0, %v6645
        %v6647 = vpop.f32.mrf.mxu0
        %6648 = vmatprep.mubr.bf16.mxu0 0
        %6649 = vmatmul.mubr.bf16.gmra.mxu0 %v6474
        %v6650 = vpop.f32.mrf.mxu0
        %v6651 = vadd.f32 0.0, %v6650
        %v6652 = vpop.f32.mrf.mxu0
        %v6653 = vpop.f32.mrf.mxu0
        %v6654 = vadd.f32 0.0, %v6653
        %v6655 = vpop.f32.mrf.mxu0
        %6656 = vmatprep.mubr.bf16.mxu0 0
        %6657 = vmatmul.mubr.bf16.gmra.mxu0 %v6477
        %v6658 = vpop.f32.mrf.mxu0
        %v6659 = vadd.f32 0.0, %v6658
        %v6660 = vpop.f32.mrf.mxu0
        %v6661 = vpop.f32.mrf.mxu0
        %v6662 = vadd.f32 0.0, %v6661
        %v6663 = vpop.f32.mrf.mxu0
        %6664 = vmatprep.mubr.bf16.mxu0 0
        %6665 = vmatmul.mubr.bf16.gmra.mxu0 %v6480
        %v6666 = vpop.f32.mrf.mxu0
        %v6667 = vadd.f32 0.0, %v6666
        %v6668 = vpop.f32.mrf.mxu0
        %v6669 = vpop.f32.mrf.mxu0
        %v6670 = vadd.f32 0.0, %v6669
        %v6671 = vpop.f32.mrf.mxu0
        %6672 = vmatprep.mubr.bf16.mxu0 0
        %6673 = vmatmul.mubr.bf16.gmra.mxu0 %v6483
        %v6674 = vpop.f32.mrf.mxu0
        %v6675 = vadd.f32 0.0, %v6674
        %v6676 = vpop.f32.mrf.mxu0
        %v6677 = vpop.f32.mrf.mxu0
        %v6678 = vadd.f32 0.0, %v6677
        %v6679 = vpop.f32.mrf.mxu0
        %6680 = vmatprep.mubr.bf16.mxu0 0
        %6681 = vmatmul.mubr.bf16.gmra.mxu0 %v6486
        %v6682 = vpop.f32.mrf.mxu0
        %v6683 = vadd.f32 0.0, %v6682
        %v6684 = vpop.f32.mrf.mxu0
        %v6685 = vpop.f32.mrf.mxu0
        %v6686 = vadd.f32 0.0, %v6685
        %v6687 = vpop.f32.mrf.mxu0
        %6688 = vdwg.mxu0
        %v6690 = vunpack.c.l.b16 %v6208
        %v6691 = vpack.c.b16 %v6305, %v6690
        %v6693 = vshrl.u32 %v6691, 16
        %v6695 = vrot.slane %v6693, 2
        %v6696 = vshll.u32 %v6691, 16
        %v6698 = vrot.slane %v6696, 3
        %v6699 = vor.u32 %v6695, %v6698
        %v6701 = vshrl.u32 %v6348, 16
        %v6703 = vrot.slane %v6701, 2
        %v6704 = vshll.u32 %v6348, 16
        %v6706 = vrot.slane %v6704, 3
        %v6707 = vor.u32 %v6703, %v6706
        %v6708 = vsel %vm1146, %v6699, %v6707
        %v6710 = vshrl.u32 %v6349, 16
        %v6712 = vrot.slane %v6710, 2
        %v6713 = vshll.u32 %v6349, 16
        %v6715 = vrot.slane %v6713, 3
        %v6716 = vor.u32 %v6712, %v6715
        %v6717 = vsel %vm1146, %v6707, %v6716
        %v6719 = vshrl.u32 %v6350, 16
        %v6721 = vrot.slane %v6719, 2
        %v6722 = vshll.u32 %v6350, 16
        %v6724 = vrot.slane %v6722, 3
        %v6725 = vor.u32 %v6721, %v6724
        %v6726 = vsel %vm1146, %v6716, %v6725
        %v6728 = vshrl.u32 %v6351, 16
        %v6730 = vrot.slane %v6728, 2
        %v6731 = vshll.u32 %v6351, 16
        %v6733 = vrot.slane %v6731, 3
        %v6734 = vor.u32 %v6730, %v6733
        %v6735 = vsel %vm1146, %v6725, %v6734
        %v6737 = vshrl.u32 %v6352, 16
        %v6739 = vrot.slane %v6737, 2
        %v6740 = vshll.u32 %v6352, 16
        %v6742 = vrot.slane %v6740, 3
        %v6743 = vor.u32 %v6739, %v6742
        %v6744 = vsel %vm1146, %v6734, %v6743
        %v6746 = vshrl.u32 %v6353, 16
        %v6748 = vrot.slane %v6746, 2
        %v6749 = vshll.u32 %v6353, 16
        %v6751 = vrot.slane %v6749, 3
        %v6752 = vor.u32 %v6748, %v6751
        %v6753 = vsel %vm1146, %v6743, %v6752
        %v6755 = vshrl.u32 %v6354, 16
        %v6757 = vrot.slane %v6755, 2
        %v6758 = vshll.u32 %v6354, 16
        %v6760 = vrot.slane %v6758, 3
        %v6761 = vor.u32 %v6757, %v6760
        %v6762 = vsel %vm1146, %v6752, %v6761
        %v6764 = vshrl.u32 %v6355, 16
        %v6766 = vrot.slane %v6764, 2
        %v6767 = vshll.u32 %v6355, 16
        %v6769 = vrot.slane %v6767, 3
        %v6770 = vor.u32 %v6766, %v6769
        %v6771 = vsel %vm1146, %v6761, %v6770
        %v6773 = vshrl.u32 %v6356, 16
        %v6775 = vrot.slane %v6773, 2
        %v6776 = vshll.u32 %v6356, 16
        %v6778 = vrot.slane %v6776, 3
        %v6779 = vor.u32 %v6775, %v6778
        %v6780 = vsel %vm1146, %v6770, %v6779
        %v6782 = vshrl.u32 %v6357, 16
        %v6784 = vrot.slane %v6782, 2
        %v6785 = vshll.u32 %v6357, 16
        %v6787 = vrot.slane %v6785, 3
        %v6788 = vor.u32 %v6784, %v6787
        %v6789 = vsel %vm1146, %v6779, %v6788
        %v6791 = vshrl.u32 %v6358, 16
        %v6793 = vrot.slane %v6791, 2
        %v6794 = vshll.u32 %v6358, 16
        %v6796 = vrot.slane %v6794, 3
        %v6797 = vor.u32 %v6793, %v6796
        %v6798 = vsel %vm1146, %v6788, %v6797
        %v6800 = vshrl.u32 %v6359, 16
        %v6802 = vrot.slane %v6800, 2
        %v6803 = vshll.u32 %v6359, 16
        %v6805 = vrot.slane %v6803, 3
        %v6806 = vor.u32 %v6802, %v6805
        %v6807 = vsel %vm1146, %v6797, %v6806
        %v6809 = vshrl.u32 %v6360, 16
        %v6811 = vrot.slane %v6809, 2
        %v6812 = vshll.u32 %v6360, 16
        %v6814 = vrot.slane %v6812, 3
        %v6815 = vor.u32 %v6811, %v6814
        %v6816 = vsel %vm1146, %v6806, %v6815
        %v6818 = vshrl.u32 %v6361, 16
        %v6820 = vrot.slane %v6818, 2
        %v6821 = vshll.u32 %v6361, 16
        %v6823 = vrot.slane %v6821, 3
        %v6824 = vor.u32 %v6820, %v6823
        %v6825 = vsel %vm1146, %v6815, %v6824
        %v6827 = vshrl.u32 %v6362, 16
        %v6829 = vrot.slane %v6827, 2
        %v6830 = vshll.u32 %v6362, 16
        %v6832 = vrot.slane %v6830, 3
        %v6833 = vor.u32 %v6829, %v6832
        %v6834 = vsel %vm1146, %v6824, %v6833
        %v6836 = vshrl.u32 %v6363, 16
        %v6838 = vrot.slane %v6836, 2
        %v6839 = vshll.u32 %v6363, 16
        %v6841 = vrot.slane %v6839, 3
        %v6842 = vor.u32 %v6838, %v6841
        %v6843 = vsel %vm1146, %v6833, %v6842
        %v6845 = vshrl.u32 %v6364, 16
        %v6847 = vrot.slane %v6845, 2
        %v6848 = vshll.u32 %v6364, 16
        %v6850 = vrot.slane %v6848, 3
        %v6851 = vor.u32 %v6847, %v6850
        %v6852 = vsel %vm1146, %v6842, %v6851
        %v6854 = vshrl.u32 %v6365, 16
        %v6856 = vrot.slane %v6854, 2
        %v6857 = vshll.u32 %v6365, 16
        %v6859 = vrot.slane %v6857, 3
        %v6860 = vor.u32 %v6856, %v6859
        %v6861 = vsel %vm1146, %v6851, %v6860
        %v6863 = vshrl.u32 %v6366, 16
        %v6865 = vrot.slane %v6863, 2
        %v6866 = vshll.u32 %v6366, 16
        %v6868 = vrot.slane %v6866, 3
        %v6869 = vor.u32 %v6865, %v6868
        %v6870 = vsel %vm1146, %v6860, %v6869
        %v6872 = vshrl.u32 %v6367, 16
        %v6874 = vrot.slane %v6872, 2
        %v6875 = vshll.u32 %v6367, 16
        %v6877 = vrot.slane %v6875, 3
        %v6878 = vor.u32 %v6874, %v6877
        %v6879 = vsel %vm1146, %v6869, %v6878
        %v6881 = vshrl.u32 %v6368, 16
        %v6883 = vrot.slane %v6881, 2
        %v6884 = vshll.u32 %v6368, 16
        %v6886 = vrot.slane %v6884, 3
        %v6887 = vor.u32 %v6883, %v6886
        %v6888 = vsel %vm1146, %v6878, %v6887
        %v6893 = vunpack.c.l.b16 %v6251
        %v6894 = vunpack.c.l.b16 %v6252
        %v6895 = vunpack.c.l.b16 %v6253
        %v6896 = vunpack.c.l.b16 %v6254
        %v6897 = vpack.c.b16 %v6894, %v6893
        %v6898 = vpack.c.b16 %v6896, %v6895
        %v6902 = vsel %vm6424, %v6708, 0
        %v6905 = vsel %vm6424, %v6717, 0
        %v6908 = vsel %vm6424, %v6726, 0
        %v6911 = vsel %vm6424, %v6735, 0
        %v6914 = vsel %vm6424, %v6744, 0
        %v6917 = vsel %vm6424, %v6753, 0
        %v6920 = vsel %vm6424, %v6762, 0
        %v6923 = vsel %vm6424, %v6771, 0
        %v6926 = vsel %vm6424, %v6780, 0
        %v6929 = vsel %vm6424, %v6789, 0
        %v6932 = vsel %vm6424, %v6798, 0
        %v6935 = vsel %vm6424, %v6807, 0
        %v6938 = vsel %vm6424, %v6816, 0
        %v6941 = vsel %vm6424, %v6825, 0
        %v6944 = vsel %vm6424, %v6834, 0
        %v6947 = vsel %vm6424, %v6843, 0
        %v6950 = vsel %vm6424, %v6852, 0
        %v6953 = vsel %vm6424, %v6861, 0
        %v6956 = vsel %vm6424, %v6870, 0
        %v6959 = vsel %vm6424, %v6879, 0
        %v6962 = vsel %vm6424, %v6888, 0
        %6964 = vmatprep.subr.bf16.mxu0 0
        %6965 = vmatpush1.bf16.msra.mxu0 0
        %6966 = vmatprep.subr.bf16.mxu0 0
        %6967 = vmatpush1.bf16.msra.mxu0 0
        %6968 = vmatprep.subr.bf16.mxu0 0
        %6969 = vmatpush1.bf16.msra.mxu0 0
        %6970 = vmatprep.subr.bf16.mxu0 0
        %6971 = vmatpush1.bf16.msra.mxu0 0
        %6972 = vmatprep.subr.bf16.mxu0 0
        %6973 = vmatpush1.bf16.msra.mxu0 0
        %6974 = vmatprep.subr.bf16.mxu0 0
        %6975 = vmatpush1.bf16.msra.mxu0 0
        %6976 = vmatprep.subr.bf16.mxu0 0
        %6977 = vmatpush1.bf16.msra.mxu0 %v6898
        %6978 = vmatprep.subr.bf16.mxu0 0
        %6979 = vmatpush1.bf16.msra.mxu0 %v6897
        %6980 = vmatprep.subr.bf16.mxu0 0
        %6981 = vmatpush2.bf16.msra.mxu0 0
        %6982 = vmatprep.subr.bf16.mxu0 0
        %6983 = vmatpush2.bf16.msra.mxu0 0
        %6984 = vmatprep.subr.bf16.mxu0 0
        %6985 = vmatpush2.bf16.msra.mxu0 0
        %6986 = vmatprep.subr.bf16.mxu0 0
        %6987 = vmatpush2.bf16.msra.mxu0 0
        %6988 = vmatprep.subr.bf16.mxu0 0
        %6989 = vmatpush2.bf16.msra.mxu0 0
        %6990 = vmatprep.subr.bf16.mxu0 0
        %6991 = vmatpush2.bf16.msra.mxu0 0
        %6992 = vmatprep.subr.bf16.mxu0 0
        %6993 = vmatpush2.bf16.msra.mxu0 0
        %6994 = vmatprep.subr.bf16.mxu0 0
        %6995 = vmatpush2.bf16.msra.mxu0 0
        %6996 = vmatprep.mubr.bf16.mxu0 0
        %6997 = vmatmul.mubr.bf16.gmra.mxu0 %v6902
        %v6998 = vpop.f32.mrf.mxu0
        %v6999 = vadd.f32 %v6523, %v6998
        %v7000 = vpop.f32.mrf.mxu0
        %v7001 = vpop.f32.mrf.mxu0
        %v7002 = vadd.f32 %v6526, %v7001
        %v7003 = vpop.f32.mrf.mxu0
        %7004 = vmatprep.mubr.bf16.mxu0 0
        %7005 = vmatmul.mubr.bf16.gmra.mxu0 %v6905
        %v7006 = vpop.f32.mrf.mxu0
        %v7007 = vadd.f32 %v6531, %v7006
        %v7008 = vpop.f32.mrf.mxu0
        %v7009 = vpop.f32.mrf.mxu0
        %v7010 = vadd.f32 %v6534, %v7009
        %v7011 = vpop.f32.mrf.mxu0
        %7012 = vmatprep.mubr.bf16.mxu0 0
        %7013 = vmatmul.mubr.bf16.gmra.mxu0 %v6908
        %v7014 = vpop.f32.mrf.mxu0
        %v7015 = vadd.f32 %v6539, %v7014
        %v7016 = vpop.f32.mrf.mxu0
        %v7017 = vpop.f32.mrf.mxu0
        %v7018 = vadd.f32 %v6542, %v7017
        %v7019 = vpop.f32.mrf.mxu0
        %7020 = vmatprep.mubr.bf16.mxu0 0
        %7021 = vmatmul.mubr.bf16.gmra.mxu0 %v6911
        %v7022 = vpop.f32.mrf.mxu0
        %v7023 = vadd.f32 %v6547, %v7022
        %v7024 = vpop.f32.mrf.mxu0
        %v7025 = vpop.f32.mrf.mxu0
        %v7026 = vadd.f32 %v6550, %v7025
        %v7027 = vpop.f32.mrf.mxu0
        %7028 = vmatprep.mubr.bf16.mxu0 0
        %7029 = vmatmul.mubr.bf16.gmra.mxu0 %v6914
        %v7030 = vpop.f32.mrf.mxu0
        %v7031 = vadd.f32 %v6555, %v7030
        %v7032 = vpop.f32.mrf.mxu0
        %v7033 = vpop.f32.mrf.mxu0
        %v7034 = vadd.f32 %v6558, %v7033
        %v7035 = vpop.f32.mrf.mxu0
        %7036 = vmatprep.mubr.bf16.mxu0 0
        %7037 = vmatmul.mubr.bf16.gmra.mxu0 %v6917
        %v7038 = vpop.f32.mrf.mxu0
        %v7039 = vadd.f32 %v6563, %v7038
        %v7040 = vpop.f32.mrf.mxu0
        %v7041 = vpop.f32.mrf.mxu0
        %v7042 = vadd.f32 %v6566, %v7041
        %v7043 = vpop.f32.mrf.mxu0
        %7044 = vmatprep.mubr.bf16.mxu0 0
        %7045 = vmatmul.mubr.bf16.gmra.mxu0 %v6920
        %v7046 = vpop.f32.mrf.mxu0
        %v7047 = vadd.f32 %v6571, %v7046
        %v7048 = vpop.f32.mrf.mxu0
        %v7049 = vpop.f32.mrf.mxu0
        %v7050 = vadd.f32 %v6574, %v7049
        %v7051 = vpop.f32.mrf.mxu0
        %7052 = vmatprep.mubr.bf16.mxu0 0
        %7053 = vmatmul.mubr.bf16.gmra.mxu0 %v6923
        %v7054 = vpop.f32.mrf.mxu0
        %v7055 = vadd.f32 %v6579, %v7054
        %v7056 = vpop.f32.mrf.mxu0
        %v7057 = vpop.f32.mrf.mxu0
        %v7058 = vadd.f32 %v6582, %v7057
        %v7059 = vpop.f32.mrf.mxu0
        %7060 = vmatprep.mubr.bf16.mxu0 0
        %7061 = vmatmul.mubr.bf16.gmra.mxu0 %v6926
        %v7062 = vpop.f32.mrf.mxu0
        %v7063 = vadd.f32 %v6587, %v7062
        %v7064 = vpop.f32.mrf.mxu0
        %v7065 = vpop.f32.mrf.mxu0
        %v7066 = vadd.f32 %v6590, %v7065
        %v7067 = vpop.f32.mrf.mxu0
        %7068 = vmatprep.mubr.bf16.mxu0 0
        %7069 = vmatmul.mubr.bf16.gmra.mxu0 %v6929
        %v7070 = vpop.f32.mrf.mxu0
        %v7071 = vadd.f32 %v6595, %v7070
        %v7072 = vpop.f32.mrf.mxu0
        %v7073 = vpop.f32.mrf.mxu0
        %v7074 = vadd.f32 %v6598, %v7073
        %v7075 = vpop.f32.mrf.mxu0
        %7076 = vmatprep.mubr.bf16.mxu0 0
        %7077 = vmatmul.mubr.bf16.gmra.mxu0 %v6932
        %v7078 = vpop.f32.mrf.mxu0
        %v7079 = vadd.f32 %v6603, %v7078
        %v7080 = vpop.f32.mrf.mxu0
        %v7081 = vpop.f32.mrf.mxu0
        %v7082 = vadd.f32 %v6606, %v7081
        %v7083 = vpop.f32.mrf.mxu0
        %7084 = vmatprep.mubr.bf16.mxu0 0
        %7085 = vmatmul.mubr.bf16.gmra.mxu0 %v6935
        %v7086 = vpop.f32.mrf.mxu0
        %v7087 = vadd.f32 %v6611, %v7086
        %v7088 = vpop.f32.mrf.mxu0
        %v7089 = vpop.f32.mrf.mxu0
        %v7090 = vadd.f32 %v6614, %v7089
        %v7091 = vpop.f32.mrf.mxu0
        %7092 = vmatprep.mubr.bf16.mxu0 0
        %7093 = vmatmul.mubr.bf16.gmra.mxu0 %v6938
        %v7094 = vpop.f32.mrf.mxu0
        %v7095 = vadd.f32 %v6619, %v7094
        %v7096 = vpop.f32.mrf.mxu0
        %v7097 = vpop.f32.mrf.mxu0
        %v7098 = vadd.f32 %v6622, %v7097
        %v7099 = vpop.f32.mrf.mxu0
        %7100 = vmatprep.mubr.bf16.mxu0 0
        %7101 = vmatmul.mubr.bf16.gmra.mxu0 %v6941
        %v7102 = vpop.f32.mrf.mxu0
        %v7103 = vadd.f32 %v6627, %v7102
        %v7104 = vpop.f32.mrf.mxu0
        %v7105 = vpop.f32.mrf.mxu0
        %v7106 = vadd.f32 %v6630, %v7105
        %v7107 = vpop.f32.mrf.mxu0
        %7108 = vmatprep.mubr.bf16.mxu0 0
        %7109 = vmatmul.mubr.bf16.gmra.mxu0 %v6944
        %v7110 = vpop.f32.mrf.mxu0
        %v7111 = vadd.f32 %v6635, %v7110
        %v7112 = vpop.f32.mrf.mxu0
        %v7113 = vpop.f32.mrf.mxu0
        %v7114 = vadd.f32 %v6638, %v7113
        %v7115 = vpop.f32.mrf.mxu0
        %7116 = vmatprep.mubr.bf16.mxu0 0
        %7117 = vmatmul.mubr.bf16.gmra.mxu0 %v6947
        %v7118 = vpop.f32.mrf.mxu0
        %v7119 = vadd.f32 %v6643, %v7118
        %v7120 = vpop.f32.mrf.mxu0
        %v7121 = vpop.f32.mrf.mxu0
        %v7122 = vadd.f32 %v6646, %v7121
        %v7123 = vpop.f32.mrf.mxu0
        %7124 = vmatprep.mubr.bf16.mxu0 0
        %7125 = vmatmul.mubr.bf16.gmra.mxu0 %v6950
        %v7126 = vpop.f32.mrf.mxu0
        %v7127 = vadd.f32 %v6651, %v7126
        %v7128 = vpop.f32.mrf.mxu0
        %v7129 = vpop.f32.mrf.mxu0
        %v7130 = vadd.f32 %v6654, %v7129
        %v7131 = vpop.f32.mrf.mxu0
        %7132 = vmatprep.mubr.bf16.mxu0 0
        %7133 = vmatmul.mubr.bf16.gmra.mxu0 %v6953
        %v7134 = vpop.f32.mrf.mxu0
        %v7135 = vadd.f32 %v6659, %v7134
        %v7136 = vpop.f32.mrf.mxu0
        %v7137 = vpop.f32.mrf.mxu0
        %v7138 = vadd.f32 %v6662, %v7137
        %v7139 = vpop.f32.mrf.mxu0
        %7140 = vmatprep.mubr.bf16.mxu0 0
        %7141 = vmatmul.mubr.bf16.gmra.mxu0 %v6956
        %v7142 = vpop.f32.mrf.mxu0
        %v7143 = vadd.f32 %v6667, %v7142
        %v7144 = vpop.f32.mrf.mxu0
        %v7145 = vpop.f32.mrf.mxu0
        %v7146 = vadd.f32 %v6670, %v7145
        %v7147 = vpop.f32.mrf.mxu0
        %7148 = vmatprep.mubr.bf16.mxu0 0
        %7149 = vmatmul.mubr.bf16.gmra.mxu0 %v6959
        %v7150 = vpop.f32.mrf.mxu0
        %v7151 = vadd.f32 %v6675, %v7150
        %v7152 = vpop.f32.mrf.mxu0
        %v7153 = vpop.f32.mrf.mxu0
        %v7154 = vadd.f32 %v6678, %v7153
        %v7155 = vpop.f32.mrf.mxu0
        %7156 = vmatprep.mubr.bf16.mxu0 0
        %7157 = vmatmul.mubr.bf16.gmra.mxu0 %v6962
        %v7158 = vpop.f32.mrf.mxu0
        %v7159 = vadd.f32 %v6683, %v7158
        %v7160 = vpop.f32.mrf.mxu0
        %v7161 = vpop.f32.mrf.mxu0
        %v7162 = vadd.f32 %v6686, %v7161
        %v7163 = vpop.f32.mrf.mxu0
        %7164 = vdwg.mxu0
        %v7165 = vld [vmem:[#allocation2 + $0xac] sm:$0xf]
        %s7166 = scalar_lea.vmem %s5, 32
        %v7167 = vld [vmem:[%s7166] sm:$0xf]
        %v7168 = vld [vmem:[%s7166 + $0x4] sm:$0xf]
        %v7169 = vld [vmem:[%s7166 + $0x8] sm:$0xf]
        %v7170 = vld [vmem:[%s7166 + $0xc] sm:$0xf]
        %v7172 = vunpack.c.l.b16 %v7165
        %v7173 = vpack.c.b16 %v7172, %v7172
        %v7175 = vshrl.u32 %v6347, 16
        %v7177 = vrot.slane %v7175, 3
        %v7178 = vshll.u32 %v6347, 16
        %v7180 = vrot.slane %v7178, 4
        %v7181 = vor.u32 %v7177, %v7180
        %v7182 = vrot.slane %v6701, 3
        %v7183 = vrot.slane %v6704, 4
        %v7184 = vor.u32 %v7182, %v7183
        %v7185 = vsel %vm1621, %v7181, %v7184
        %v7186 = vrot.slane %v6710, 3
        %v7187 = vrot.slane %v6713, 4
        %v7188 = vor.u32 %v7186, %v7187
        %v7189 = vsel %vm1621, %v7184, %v7188
        %v7190 = vrot.slane %v6719, 3
        %v7191 = vrot.slane %v6722, 4
        %v7192 = vor.u32 %v7190, %v7191
        %v7193 = vsel %vm1621, %v7188, %v7192
        %v7194 = vrot.slane %v6728, 3
        %v7195 = vrot.slane %v6731, 4
        %v7196 = vor.u32 %v7194, %v7195
        %v7197 = vsel %vm1621, %v7192, %v7196
        %v7198 = vrot.slane %v6737, 3
        %v7199 = vrot.slane %v6740, 4
        %v7200 = vor.u32 %v7198, %v7199
        %v7201 = vsel %vm1621, %v7196, %v7200
        %v7202 = vrot.slane %v6746, 3
        %v7203 = vrot.slane %v6749, 4
        %v7204 = vor.u32 %v7202, %v7203
        %v7205 = vsel %vm1621, %v7200, %v7204
        %v7206 = vrot.slane %v6755, 3
        %v7207 = vrot.slane %v6758, 4
        %v7208 = vor.u32 %v7206, %v7207
        %v7209 = vsel %vm1621, %v7204, %v7208
        %v7210 = vrot.slane %v6764, 3
        %v7211 = vrot.slane %v6767, 4
        %v7212 = vor.u32 %v7210, %v7211
        %v7213 = vsel %vm1621, %v7208, %v7212
        %v7214 = vrot.slane %v6773, 3
        %v7215 = vrot.slane %v6776, 4
        %v7216 = vor.u32 %v7214, %v7215
        %v7217 = vsel %vm1621, %v7212, %v7216
        %v7218 = vrot.slane %v6782, 3
        %v7219 = vrot.slane %v6785, 4
        %v7220 = vor.u32 %v7218, %v7219
        %v7221 = vsel %vm1621, %v7216, %v7220
        %v7222 = vrot.slane %v6791, 3
        %v7223 = vrot.slane %v6794, 4
        %v7224 = vor.u32 %v7222, %v7223
        %v7225 = vsel %vm1621, %v7220, %v7224
        %v7226 = vrot.slane %v6800, 3
        %v7227 = vrot.slane %v6803, 4
        %v7228 = vor.u32 %v7226, %v7227
        %v7229 = vsel %vm1621, %v7224, %v7228
        %v7230 = vrot.slane %v6809, 3
        %v7231 = vrot.slane %v6812, 4
        %v7232 = vor.u32 %v7230, %v7231
        %v7233 = vsel %vm1621, %v7228, %v7232
        %v7234 = vrot.slane %v6818, 3
        %v7235 = vrot.slane %v6821, 4
        %v7236 = vor.u32 %v7234, %v7235
        %v7237 = vsel %vm1621, %v7232, %v7236
        %v7238 = vrot.slane %v6827, 3
        %v7239 = vrot.slane %v6830, 4
        %v7240 = vor.u32 %v7238, %v7239
        %v7241 = vsel %vm1621, %v7236, %v7240
        %v7242 = vrot.slane %v6836, 3
        %v7243 = vrot.slane %v6839, 4
        %v7244 = vor.u32 %v7242, %v7243
        %v7245 = vsel %vm1621, %v7240, %v7244
        %v7246 = vrot.slane %v6845, 3
        %v7247 = vrot.slane %v6848, 4
        %v7248 = vor.u32 %v7246, %v7247
        %v7249 = vsel %vm1621, %v7244, %v7248
        %v7250 = vrot.slane %v6854, 3
        %v7251 = vrot.slane %v6857, 4
        %v7252 = vor.u32 %v7250, %v7251
        %v7253 = vsel %vm1621, %v7248, %v7252
        %v7254 = vrot.slane %v6863, 3
        %v7255 = vrot.slane %v6866, 4
        %v7256 = vor.u32 %v7254, %v7255
        %v7257 = vsel %vm1621, %v7252, %v7256
        %v7258 = vrot.slane %v6872, 3
        %v7259 = vrot.slane %v6875, 4
        %v7260 = vor.u32 %v7258, %v7259
        %v7261 = vsel %vm1621, %v7256, %v7260
        %v7263 = vshrl.u32 %v7173, 16
        %v7265 = vrot.slane %v7263, 3
        %v7266 = vshll.u32 %v7173, 16
        %v7268 = vrot.slane %v7266, 4
        %v7269 = vor.u32 %v7265, %v7268
        %v7270 = vsel %vm1621, %v7260, %v7269
        %v7275 = vunpack.c.l.b16 %v7167
        %v7276 = vunpack.c.l.b16 %v7168
        %v7277 = vunpack.c.l.b16 %v7169
        %v7278 = vunpack.c.l.b16 %v7170
        %v7279 = vpack.c.b16 %v7276, %v7275
        %v7280 = vpack.c.b16 %v7278, %v7277
        %v7284 = vsel %vm6424, %v7185, 0
        %v7287 = vsel %vm6424, %v7189, 0
        %v7290 = vsel %vm6424, %v7193, 0
        %v7293 = vsel %vm6424, %v7197, 0
        %v7296 = vsel %vm6424, %v7201, 0
        %v7299 = vsel %vm6424, %v7205, 0
        %v7302 = vsel %vm6424, %v7209, 0
        %v7305 = vsel %vm6424, %v7213, 0
        %v7308 = vsel %vm6424, %v7217, 0
        %v7311 = vsel %vm6424, %v7221, 0
        %v7314 = vsel %vm6424, %v7225, 0
        %v7317 = vsel %vm6424, %v7229, 0
        %v7320 = vsel %vm6424, %v7233, 0
        %v7323 = vsel %vm6424, %v7237, 0
        %v7326 = vsel %vm6424, %v7241, 0
        %v7329 = vsel %vm6424, %v7245, 0
        %v7332 = vsel %vm6424, %v7249, 0
        %v7335 = vsel %vm6424, %v7253, 0
        %v7338 = vsel %vm6424, %v7257, 0
        %v7341 = vsel %vm6424, %v7261, 0
        %v7344 = vsel %vm6424, %v7270, 0
        %7346 = vmatprep.subr.bf16.mxu0 0
        %7347 = vmatpush1.bf16.msra.mxu0 0
        %7348 = vmatprep.subr.bf16.mxu0 0
        %7349 = vmatpush1.bf16.msra.mxu0 0
        %7350 = vmatprep.subr.bf16.mxu0 0
        %7351 = vmatpush1.bf16.msra.mxu0 0
        %7352 = vmatprep.subr.bf16.mxu0 0
        %7353 = vmatpush1.bf16.msra.mxu0 0
        %7354 = vmatprep.subr.bf16.mxu0 0
        %7355 = vmatpush1.bf16.msra.mxu0 0
        %7356 = vmatprep.subr.bf16.mxu0 0
        %7357 = vmatpush1.bf16.msra.mxu0 0
        %7358 = vmatprep.subr.bf16.mxu0 0
        %7359 = vmatpush1.bf16.msra.mxu0 %v7280
        %7360 = vmatprep.subr.bf16.mxu0 0
        %7361 = vmatpush1.bf16.msra.mxu0 %v7279
        %7362 = vmatprep.subr.bf16.mxu0 0
        %7363 = vmatpush2.bf16.msra.mxu0 0
        %7364 = vmatprep.subr.bf16.mxu0 0
        %7365 = vmatpush2.bf16.msra.mxu0 0
        %7366 = vmatprep.subr.bf16.mxu0 0
        %7367 = vmatpush2.bf16.msra.mxu0 0
        %7368 = vmatprep.subr.bf16.mxu0 0
        %7369 = vmatpush2.bf16.msra.mxu0 0
        %7370 = vmatprep.subr.bf16.mxu0 0
        %7371 = vmatpush2.bf16.msra.mxu0 0
        %7372 = vmatprep.subr.bf16.mxu0 0
        %7373 = vmatpush2.bf16.msra.mxu0 0
        %7374 = vmatprep.subr.bf16.mxu0 0
        %7375 = vmatpush2.bf16.msra.mxu0 0
        %7376 = vmatprep.subr.bf16.mxu0 0
        %7377 = vmatpush2.bf16.msra.mxu0 0
        %7378 = vmatprep.mubr.bf16.mxu0 0
        %7379 = vmatmul.mubr.bf16.gmra.mxu0 %v7284
        %v7380 = vpop.f32.mrf.mxu0
        %v7381 = vadd.f32 0.0, %v7380
        %v7382 = vpop.f32.mrf.mxu0
        %v7383 = vpop.f32.mrf.mxu0
        %v7384 = vadd.f32 0.0, %v7383
        %v7385 = vpop.f32.mrf.mxu0
        %7386 = vmatprep.mubr.bf16.mxu0 0
        %7387 = vmatmul.mubr.bf16.gmra.mxu0 %v7287
        %v7388 = vpop.f32.mrf.mxu0
        %v7389 = vadd.f32 0.0, %v7388
        %v7390 = vpop.f32.mrf.mxu0
        %v7391 = vpop.f32.mrf.mxu0
        %v7392 = vadd.f32 0.0, %v7391
        %v7393 = vpop.f32.mrf.mxu0
        %7394 = vmatprep.mubr.bf16.mxu0 0
        %7395 = vmatmul.mubr.bf16.gmra.mxu0 %v7290
        %v7396 = vpop.f32.mrf.mxu0
        %v7397 = vadd.f32 0.0, %v7396
        %v7398 = vpop.f32.mrf.mxu0
        %v7399 = vpop.f32.mrf.mxu0
        %v7400 = vadd.f32 0.0, %v7399
        %v7401 = vpop.f32.mrf.mxu0
        %7402 = vmatprep.mubr.bf16.mxu0 0
        %7403 = vmatmul.mubr.bf16.gmra.mxu0 %v7293
        %v7404 = vpop.f32.mrf.mxu0
        %v7405 = vadd.f32 0.0, %v7404
        %v7406 = vpop.f32.mrf.mxu0
        %v7407 = vpop.f32.mrf.mxu0
        %v7408 = vadd.f32 0.0, %v7407
        %v7409 = vpop.f32.mrf.mxu0
        %7410 = vmatprep.mubr.bf16.mxu0 0
        %7411 = vmatmul.mubr.bf16.gmra.mxu0 %v7296
        %v7412 = vpop.f32.mrf.mxu0
        %v7413 = vadd.f32 0.0, %v7412
        %v7414 = vpop.f32.mrf.mxu0
        %v7415 = vpop.f32.mrf.mxu0
        %v7416 = vadd.f32 0.0, %v7415
        %v7417 = vpop.f32.mrf.mxu0
        %7418 = vmatprep.mubr.bf16.mxu0 0
        %7419 = vmatmul.mubr.bf16.gmra.mxu0 %v7299
        %v7420 = vpop.f32.mrf.mxu0
        %v7421 = vadd.f32 0.0, %v7420
        %v7422 = vpop.f32.mrf.mxu0
        %v7423 = vpop.f32.mrf.mxu0
        %v7424 = vadd.f32 0.0, %v7423
        %v7425 = vpop.f32.mrf.mxu0
        %7426 = vmatprep.mubr.bf16.mxu0 0
        %7427 = vmatmul.mubr.bf16.gmra.mxu0 %v7302
        %v7428 = vpop.f32.mrf.mxu0
        %v7429 = vadd.f32 0.0, %v7428
        %v7430 = vpop.f32.mrf.mxu0
        %v7431 = vpop.f32.mrf.mxu0
        %v7432 = vadd.f32 0.0, %v7431
        %v7433 = vpop.f32.mrf.mxu0
        %7434 = vmatprep.mubr.bf16.mxu0 0
        %7435 = vmatmul.mubr.bf16.gmra.mxu0 %v7305
        %v7436 = vpop.f32.mrf.mxu0
        %v7437 = vadd.f32 0.0, %v7436
        %v7438 = vpop.f32.mrf.mxu0
        %v7439 = vpop.f32.mrf.mxu0
        %v7440 = vadd.f32 0.0, %v7439
        %v7441 = vpop.f32.mrf.mxu0
        %7442 = vmatprep.mubr.bf16.mxu0 0
        %7443 = vmatmul.mubr.bf16.gmra.mxu0 %v7308
        %v7444 = vpop.f32.mrf.mxu0
        %v7445 = vadd.f32 0.0, %v7444
        %v7446 = vpop.f32.mrf.mxu0
        %v7447 = vpop.f32.mrf.mxu0
        %v7448 = vadd.f32 0.0, %v7447
        %v7449 = vpop.f32.mrf.mxu0
        %7450 = vmatprep.mubr.bf16.mxu0 0
        %7451 = vmatmul.mubr.bf16.gmra.mxu0 %v7311
        %v7452 = vpop.f32.mrf.mxu0
        %v7453 = vadd.f32 0.0, %v7452
        %v7454 = vpop.f32.mrf.mxu0
        %v7455 = vpop.f32.mrf.mxu0
        %v7456 = vadd.f32 0.0, %v7455
        %v7457 = vpop.f32.mrf.mxu0
        %7458 = vmatprep.mubr.bf16.mxu0 0
        %7459 = vmatmul.mubr.bf16.gmra.mxu0 %v7314
        %v7460 = vpop.f32.mrf.mxu0
        %v7461 = vadd.f32 0.0, %v7460
        %v7462 = vpop.f32.mrf.mxu0
        %v7463 = vpop.f32.mrf.mxu0
        %v7464 = vadd.f32 0.0, %v7463
        %v7465 = vpop.f32.mrf.mxu0
        %7466 = vmatprep.mubr.bf16.mxu0 0
        %7467 = vmatmul.mubr.bf16.gmra.mxu0 %v7317
        %v7468 = vpop.f32.mrf.mxu0
        %v7469 = vadd.f32 0.0, %v7468
        %v7470 = vpop.f32.mrf.mxu0
        %v7471 = vpop.f32.mrf.mxu0
        %v7472 = vadd.f32 0.0, %v7471
        %v7473 = vpop.f32.mrf.mxu0
        %7474 = vmatprep.mubr.bf16.mxu0 0
        %7475 = vmatmul.mubr.bf16.gmra.mxu0 %v7320
        %v7476 = vpop.f32.mrf.mxu0
        %v7477 = vadd.f32 0.0, %v7476
        %v7478 = vpop.f32.mrf.mxu0
        %v7479 = vpop.f32.mrf.mxu0
        %v7480 = vadd.f32 0.0, %v7479
        %v7481 = vpop.f32.mrf.mxu0
        %7482 = vmatprep.mubr.bf16.mxu0 0
        %7483 = vmatmul.mubr.bf16.gmra.mxu0 %v7323
        %v7484 = vpop.f32.mrf.mxu0
        %v7485 = vadd.f32 0.0, %v7484
        %v7486 = vpop.f32.mrf.mxu0
        %v7487 = vpop.f32.mrf.mxu0
        %v7488 = vadd.f32 0.0, %v7487
        %v7489 = vpop.f32.mrf.mxu0
        %7490 = vmatprep.mubr.bf16.mxu0 0
        %7491 = vmatmul.mubr.bf16.gmra.mxu0 %v7326
        %v7492 = vpop.f32.mrf.mxu0
        %v7493 = vadd.f32 0.0, %v7492
        %v7494 = vpop.f32.mrf.mxu0
        %v7495 = vpop.f32.mrf.mxu0
        %v7496 = vadd.f32 0.0, %v7495
        %v7497 = vpop.f32.mrf.mxu0
        %7498 = vmatprep.mubr.bf16.mxu0 0
        %7499 = vmatmul.mubr.bf16.gmra.mxu0 %v7329
        %v7500 = vpop.f32.mrf.mxu0
        %v7501 = vadd.f32 0.0, %v7500
        %v7502 = vpop.f32.mrf.mxu0
        %v7503 = vpop.f32.mrf.mxu0
        %v7504 = vadd.f32 0.0, %v7503
        %v7505 = vpop.f32.mrf.mxu0
        %7506 = vmatprep.mubr.bf16.mxu0 0
        %7507 = vmatmul.mubr.bf16.gmra.mxu0 %v7332
        %v7508 = vpop.f32.mrf.mxu0
        %v7509 = vadd.f32 0.0, %v7508
        %v7510 = vpop.f32.mrf.mxu0
        %v7511 = vpop.f32.mrf.mxu0
        %v7512 = vadd.f32 0.0, %v7511
        %v7513 = vpop.f32.mrf.mxu0
        %7514 = vmatprep.mubr.bf16.mxu0 0
        %7515 = vmatmul.mubr.bf16.gmra.mxu0 %v7335
        %v7516 = vpop.f32.mrf.mxu0
        %v7517 = vadd.f32 0.0, %v7516
        %v7518 = vpop.f32.mrf.mxu0
        %v7519 = vpop.f32.mrf.mxu0
        %v7520 = vadd.f32 0.0, %v7519
        %v7521 = vpop.f32.mrf.mxu0
        %7522 = vmatprep.mubr.bf16.mxu0 0
        %7523 = vmatmul.mubr.bf16.gmra.mxu0 %v7338
        %v7524 = vpop.f32.mrf.mxu0
        %v7525 = vadd.f32 0.0, %v7524
        %v7526 = vpop.f32.mrf.mxu0
        %v7527 = vpop.f32.mrf.mxu0
        %v7528 = vadd.f32 0.0, %v7527
        %v7529 = vpop.f32.mrf.mxu0
        %7530 = vmatprep.mubr.bf16.mxu0 0
        %7531 = vmatmul.mubr.bf16.gmra.mxu0 %v7341
        %v7532 = vpop.f32.mrf.mxu0
        %v7533 = vadd.f32 0.0, %v7532
        %v7534 = vpop.f32.mrf.mxu0
        %v7535 = vpop.f32.mrf.mxu0
        %v7536 = vadd.f32 0.0, %v7535
        %v7537 = vpop.f32.mrf.mxu0
        %7538 = vmatprep.mubr.bf16.mxu0 0
        %7539 = vmatmul.mubr.bf16.gmra.mxu0 %v7344
        %v7540 = vpop.f32.mrf.mxu0
        %v7541 = vadd.f32 0.0, %v7540
        %v7542 = vpop.f32.mrf.mxu0
        %v7543 = vpop.f32.mrf.mxu0
        %v7544 = vadd.f32 0.0, %v7543
        %v7545 = vpop.f32.mrf.mxu0
        %7546 = vdwg.mxu0
        %v7547 = vadd.f32 %v6999, %v7381
        %v7548 = vadd.f32 %v7002, %v7384
        %v7549 = vadd.f32 %v7007, %v7389
        %v7550 = vadd.f32 %v7010, %v7392
        %v7551 = vadd.f32 %v7015, %v7397
        %v7552 = vadd.f32 %v7018, %v7400
        %v7553 = vadd.f32 %v7023, %v7405
        %v7554 = vadd.f32 %v7026, %v7408
        %v7555 = vadd.f32 %v7031, %v7413
        %v7556 = vadd.f32 %v7034, %v7416
        %v7557 = vadd.f32 %v7039, %v7421
        %v7558 = vadd.f32 %v7042, %v7424
        %v7559 = vadd.f32 %v7047, %v7429
        %v7560 = vadd.f32 %v7050, %v7432
        %v7561 = vadd.f32 %v7055, %v7437
        %v7562 = vadd.f32 %v7058, %v7440
        %v7563 = vadd.f32 %v7063, %v7445
        %v7564 = vadd.f32 %v7066, %v7448
        %v7565 = vadd.f32 %v7071, %v7453
        %v7566 = vadd.f32 %v7074, %v7456
        %v7567 = vadd.f32 %v7079, %v7461
        %v7568 = vadd.f32 %v7082, %v7464
        %v7569 = vadd.f32 %v7087, %v7469
        %v7570 = vadd.f32 %v7090, %v7472
        %v7571 = vadd.f32 %v7095, %v7477
        %v7572 = vadd.f32 %v7098, %v7480
        %v7573 = vadd.f32 %v7103, %v7485
        %v7574 = vadd.f32 %v7106, %v7488
        %v7575 = vadd.f32 %v7111, %v7493
        %v7576 = vadd.f32 %v7114, %v7496
        %v7577 = vadd.f32 %v7119, %v7501
        %v7578 = vadd.f32 %v7122, %v7504
        %v7579 = vadd.f32 %v7127, %v7509
        %v7580 = vadd.f32 %v7130, %v7512
        %v7581 = vadd.f32 %v7135, %v7517
        %v7582 = vadd.f32 %v7138, %v7520
        %v7583 = vadd.f32 %v7143, %v7525
        %v7584 = vadd.f32 %v7146, %v7528
        %v7585 = vadd.f32 %v7151, %v7533
        %v7586 = vadd.f32 %v7154, %v7536
        %v7587 = vadd.f32 %v7159, %v7541
        %v7588 = vadd.f32 %v7162, %v7544
        %v7589 = vld [vmem:[#allocation2 + $0xc] sm:$0x8]
        %v7590 = vld [vmem:[#allocation2 + $0x10] sm:$0xf]
        %v7591 = vld [vmem:[#allocation2 + $0x14] sm:$0xf]
        %v7592 = vld [vmem:[#allocation2 + $0x18] sm:$0xf]
        %v7593 = vld [vmem:[#allocation2 + $0x1c] sm:$0xf]
        %v7594 = vld [vmem:[#allocation2 + $0x20] sm:$0xf]
        %v7595 = vld [vmem:[#allocation2 + $0x24] sm:$0xf]
        %v7596 = vld [vmem:[#allocation2 + $0x28] sm:$0xf]
        %v7597 = vld [vmem:[#allocation2 + $0x2c] sm:$0xf]
        %v7598 = vld [vmem:[#allocation2 + $0x30] sm:$0xf]
        %v7599 = vld [vmem:[#allocation2 + $0x34] sm:$0xf]
        %v7600 = vld [vmem:[#allocation2 + $0x38] sm:$0xf]
        %v7601 = vld [vmem:[#allocation2 + $0x3c] sm:$0xf]
        %v7602 = vld [vmem:[#allocation2 + $0x40] sm:$0xf]
        %v7603 = vld [vmem:[#allocation2 + $0x44] sm:$0xf]
        %v7604 = vld [vmem:[#allocation2 + $0x48] sm:$0xf]
        %v7605 = vld [vmem:[#allocation2 + $0x4c] sm:$0xf]
        %v7606 = vld [vmem:[#allocation2 + $0x50] sm:$0xf]
        %v7607 = vld [vmem:[#allocation2 + $0x54] sm:$0xf]
        %v7608 = vld [vmem:[#allocation2 + $0x58] sm:$0xf]
        %v7609 = vld [vmem:[#allocation2 + $0x5c] sm:$0xf]
        %v7610 = vld [vmem:[#allocation2 + $0x60] sm:$0xf]
        %v7611 = vld [vmem:[#allocation2 + $0x64] sm:$0xf]
        %v7612 = vld [vmem:[#allocation2 + $0x68] sm:$0xf]
        %v7613 = vld [vmem:[#allocation2 + $0x6c] sm:$0xf]
        %v7614 = vld [vmem:[#allocation2 + $0x70] sm:$0xf]
        %v7615 = vld [vmem:[#allocation2 + $0x74] sm:$0xf]
        %v7616 = vld [vmem:[#allocation2 + $0x78] sm:$0xf]
        %v7617 = vld [vmem:[#allocation2 + $0x7c] sm:$0xf]
        %v7618 = vld [vmem:[#allocation2 + $0x80] sm:$0xf]
        %v7619 = vld [vmem:[#allocation2 + $0x84] sm:$0xf]
        %v7620 = vld [vmem:[#allocation2 + $0x88] sm:$0xf]
        %v7621 = vld [vmem:[#allocation2 + $0x8c] sm:$0xf]
        %v7622 = vld [vmem:[#allocation2 + $0x90] sm:$0xf]
        %v7623 = vld [vmem:[#allocation2 + $0x94] sm:$0xf]
        %v7624 = vld [vmem:[#allocation2 + $0x98] sm:$0xf]
        %v7625 = vld [vmem:[#allocation2 + $0x9c] sm:$0xf]
        %v7626 = vld [vmem:[#allocation2 + $0xa0] sm:$0xf]
        %v7627 = vld [vmem:[#allocation2 + $0xa4] sm:$0xf]
        %v7628 = vld [vmem:[#allocation2 + $0xa8] sm:$0xf]
        %v7629 = vld [vmem:[#allocation2 + $0xac] sm:$0xf]
        %v7630 = vld [vmem:[#allocation2 + $0xb0] sm:$0xf]
        %v7631 = vld [vmem:[#allocation2 + $0xb4] sm:$0xf]
        %s7632 = scalar_lea.vmem %s5, 48
        %v7633 = vld [vmem:[%s7632] sm:$0xf]
        %v7634 = vld [vmem:[%s7632 + $0x4] sm:$0xf]
        %v7635 = vld [vmem:[%s7632 + $0x8] sm:$0xf]
        %v7636 = vld [vmem:[%s7632 + $0xc] sm:$0xf]
        %v7680 = vunpack.c.l.b16 %v7589
        %v7681 = vunpack.c.l.b16 %v7590
        %v7682 = vunpack.c.l.b16 %v7591
        %v7683 = vunpack.c.l.b16 %v7592
        %v7684 = vunpack.c.l.b16 %v7593
        %v7685 = vunpack.c.l.b16 %v7594
        %v7686 = vunpack.c.l.b16 %v7595
        %v7687 = vunpack.c.l.b16 %v7596
        %v7688 = vunpack.c.l.b16 %v7597
        %v7689 = vunpack.c.l.b16 %v7598
        %v7690 = vunpack.c.l.b16 %v7599
        %v7691 = vunpack.c.l.b16 %v7600
        %v7692 = vunpack.c.l.b16 %v7601
        %v7693 = vunpack.c.l.b16 %v7602
        %v7694 = vunpack.c.l.b16 %v7603
        %v7695 = vunpack.c.l.b16 %v7604
        %v7696 = vunpack.c.l.b16 %v7605
        %v7697 = vunpack.c.l.b16 %v7606
        %v7698 = vunpack.c.l.b16 %v7607
        %v7699 = vunpack.c.l.b16 %v7608
        %v7700 = vunpack.c.l.b16 %v7609
        %v7701 = vunpack.c.l.b16 %v7610
        %v7702 = vunpack.c.l.b16 %v7611
        %v7703 = vunpack.c.l.b16 %v7612
        %v7704 = vunpack.c.l.b16 %v7613
        %v7705 = vunpack.c.l.b16 %v7614
        %v7706 = vunpack.c.l.b16 %v7615
        %v7707 = vunpack.c.l.b16 %v7616
        %v7708 = vunpack.c.l.b16 %v7617
        %v7709 = vunpack.c.l.b16 %v7618
        %v7710 = vunpack.c.l.b16 %v7619
        %v7711 = vunpack.c.l.b16 %v7620
        %v7712 = vunpack.c.l.b16 %v7621
        %v7713 = vunpack.c.l.b16 %v7622
        %v7714 = vunpack.c.l.b16 %v7623
        %v7715 = vunpack.c.l.b16 %v7624
        %v7716 = vunpack.c.l.b16 %v7625
        %v7717 = vunpack.c.l.b16 %v7626
        %v7718 = vunpack.c.l.b16 %v7627
        %v7719 = vunpack.c.l.b16 %v7628
        %v7720 = vunpack.c.l.b16 %v7629
        %v7721 = vunpack.c.l.b16 %v7630
        %v7722 = vunpack.c.l.b16 %v7631
        %v7723 = vpack.c.b16 %v7681, %v7680
        %v7724 = vpack.c.b16 %v7683, %v7682
        %v7725 = vpack.c.b16 %v7685, %v7684
        %v7726 = vpack.c.b16 %v7687, %v7686
        %v7727 = vpack.c.b16 %v7689, %v7688
        %v7728 = vpack.c.b16 %v7691, %v7690
        %v7729 = vpack.c.b16 %v7693, %v7692
        %v7730 = vpack.c.b16 %v7695, %v7694
        %v7731 = vpack.c.b16 %v7697, %v7696
        %v7732 = vpack.c.b16 %v7699, %v7698
        %v7733 = vpack.c.b16 %v7701, %v7700
        %v7734 = vpack.c.b16 %v7703, %v7702
        %v7735 = vpack.c.b16 %v7705, %v7704
        %v7736 = vpack.c.b16 %v7707, %v7706
        %v7737 = vpack.c.b16 %v7709, %v7708
        %v7738 = vpack.c.b16 %v7711, %v7710
        %v7739 = vpack.c.b16 %v7713, %v7712
        %v7740 = vpack.c.b16 %v7715, %v7714
        %v7741 = vpack.c.b16 %v7717, %v7716
        %v7742 = vpack.c.b16 %v7719, %v7718
        %v7743 = vpack.c.b16 %v7721, %v7720
        %v7744 = vpack.c.b16 %v7722, %v7722
        %v7746 = vshrl.u32 %v7723, 16
        %v7748 = vrot.slane %v7746, 3
        %v7749 = vshll.u32 %v7723, 16
        %v7751 = vrot.slane %v7749, 4
        %v7752 = vor.u32 %v7748, %v7751
        %v7754 = vshrl.u32 %v7724, 16
        %v7756 = vrot.slane %v7754, 3
        %v7757 = vshll.u32 %v7724, 16
        %v7759 = vrot.slane %v7757, 4
        %v7760 = vor.u32 %v7756, %v7759
        %v7761 = vsel %vm1621, %v7752, %v7760
        %v7763 = vshrl.u32 %v7725, 16
        %v7765 = vrot.slane %v7763, 3
        %v7766 = vshll.u32 %v7725, 16
        %v7768 = vrot.slane %v7766, 4
        %v7769 = vor.u32 %v7765, %v7768
        %v7770 = vsel %vm1621, %v7760, %v7769
        %v7772 = vshrl.u32 %v7726, 16
        %v7774 = vrot.slane %v7772, 3
        %v7775 = vshll.u32 %v7726, 16
        %v7777 = vrot.slane %v7775, 4
        %v7778 = vor.u32 %v7774, %v7777
        %v7779 = vsel %vm1621, %v7769, %v7778
        %v7781 = vshrl.u32 %v7727, 16
        %v7783 = vrot.slane %v7781, 3
        %v7784 = vshll.u32 %v7727, 16
        %v7786 = vrot.slane %v7784, 4
        %v7787 = vor.u32 %v7783, %v7786
        %v7788 = vsel %vm1621, %v7778, %v7787
        %v7790 = vshrl.u32 %v7728, 16
        %v7792 = vrot.slane %v7790, 3
        %v7793 = vshll.u32 %v7728, 16
        %v7795 = vrot.slane %v7793, 4
        %v7796 = vor.u32 %v7792, %v7795
        %v7797 = vsel %vm1621, %v7787, %v7796
        %v7799 = vshrl.u32 %v7729, 16
        %v7801 = vrot.slane %v7799, 3
        %v7802 = vshll.u32 %v7729, 16
        %v7804 = vrot.slane %v7802, 4
        %v7805 = vor.u32 %v7801, %v7804
        %v7806 = vsel %vm1621, %v7796, %v7805
        %v7808 = vshrl.u32 %v7730, 16
        %v7810 = vrot.slane %v7808, 3
        %v7811 = vshll.u32 %v7730, 16
        %v7813 = vrot.slane %v7811, 4
        %v7814 = vor.u32 %v7810, %v7813
        %v7815 = vsel %vm1621, %v7805, %v7814
        %v7817 = vshrl.u32 %v7731, 16
        %v7819 = vrot.slane %v7817, 3
        %v7820 = vshll.u32 %v7731, 16
        %v7822 = vrot.slane %v7820, 4
        %v7823 = vor.u32 %v7819, %v7822
        %v7824 = vsel %vm1621, %v7814, %v7823
        %v7826 = vshrl.u32 %v7732, 16
        %v7828 = vrot.slane %v7826, 3
        %v7829 = vshll.u32 %v7732, 16
        %v7831 = vrot.slane %v7829, 4
        %v7832 = vor.u32 %v7828, %v7831
        %v7833 = vsel %vm1621, %v7823, %v7832
        %v7835 = vshrl.u32 %v7733, 16
        %v7837 = vrot.slane %v7835, 3
        %v7838 = vshll.u32 %v7733, 16
        %v7840 = vrot.slane %v7838, 4
        %v7841 = vor.u32 %v7837, %v7840
        %v7842 = vsel %vm1621, %v7832, %v7841
        %v7844 = vshrl.u32 %v7734, 16
        %v7846 = vrot.slane %v7844, 3
        %v7847 = vshll.u32 %v7734, 16
        %v7849 = vrot.slane %v7847, 4
        %v7850 = vor.u32 %v7846, %v7849
        %v7851 = vsel %vm1621, %v7841, %v7850
        %v7853 = vshrl.u32 %v7735, 16
        %v7855 = vrot.slane %v7853, 3
        %v7856 = vshll.u32 %v7735, 16
        %v7858 = vrot.slane %v7856, 4
        %v7859 = vor.u32 %v7855, %v7858
        %v7860 = vsel %vm1621, %v7850, %v7859
        %v7862 = vshrl.u32 %v7736, 16
        %v7864 = vrot.slane %v7862, 3
        %v7865 = vshll.u32 %v7736, 16
        %v7867 = vrot.slane %v7865, 4
        %v7868 = vor.u32 %v7864, %v7867
        %v7869 = vsel %vm1621, %v7859, %v7868
        %v7871 = vshrl.u32 %v7737, 16
        %v7873 = vrot.slane %v7871, 3
        %v7874 = vshll.u32 %v7737, 16
        %v7876 = vrot.slane %v7874, 4
        %v7877 = vor.u32 %v7873, %v7876
        %v7878 = vsel %vm1621, %v7868, %v7877
        %v7880 = vshrl.u32 %v7738, 16
        %v7882 = vrot.slane %v7880, 3
        %v7883 = vshll.u32 %v7738, 16
        %v7885 = vrot.slane %v7883, 4
        %v7886 = vor.u32 %v7882, %v7885
        %v7887 = vsel %vm1621, %v7877, %v7886
        %v7889 = vshrl.u32 %v7739, 16
        %v7891 = vrot.slane %v7889, 3
        %v7892 = vshll.u32 %v7739, 16
        %v7894 = vrot.slane %v7892, 4
        %v7895 = vor.u32 %v7891, %v7894
        %v7896 = vsel %vm1621, %v7886, %v7895
        %v7898 = vshrl.u32 %v7740, 16
        %v7900 = vrot.slane %v7898, 3
        %v7901 = vshll.u32 %v7740, 16
        %v7903 = vrot.slane %v7901, 4
        %v7904 = vor.u32 %v7900, %v7903
        %v7905 = vsel %vm1621, %v7895, %v7904
        %v7907 = vshrl.u32 %v7741, 16
        %v7909 = vrot.slane %v7907, 3
        %v7910 = vshll.u32 %v7741, 16
        %v7912 = vrot.slane %v7910, 4
        %v7913 = vor.u32 %v7909, %v7912
        %v7914 = vsel %vm1621, %v7904, %v7913
        %v7916 = vshrl.u32 %v7742, 16
        %v7918 = vrot.slane %v7916, 3
        %v7919 = vshll.u32 %v7742, 16
        %v7921 = vrot.slane %v7919, 4
        %v7922 = vor.u32 %v7918, %v7921
        %v7923 = vsel %vm1621, %v7913, %v7922
        %v7925 = vshrl.u32 %v7743, 16
        %v7927 = vrot.slane %v7925, 3
        %v7928 = vshll.u32 %v7743, 16
        %v7930 = vrot.slane %v7928, 4
        %v7931 = vor.u32 %v7927, %v7930
        %v7932 = vsel %vm1621, %v7922, %v7931
        %v7934 = vshrl.u32 %v7744, 16
        %v7936 = vrot.slane %v7934, 3
        %v7937 = vshll.u32 %v7744, 16
        %v7939 = vrot.slane %v7937, 4
        %v7940 = vor.u32 %v7936, %v7939
        %v7941 = vsel %vm1621, %v7931, %v7940
        %v7946 = vunpack.c.l.b16 %v7633
        %v7947 = vunpack.c.l.b16 %v7634
        %v7948 = vunpack.c.l.b16 %v7635
        %v7949 = vunpack.c.l.b16 %v7636
        %v7950 = vpack.c.b16 %v7947, %v7946
        %v7951 = vpack.c.b16 %v7949, %v7948
        %v7955 = vsel %vm6424, %v7761, 0
        %v7958 = vsel %vm6424, %v7770, 0
        %v7961 = vsel %vm6424, %v7779, 0
        %v7964 = vsel %vm6424, %v7788, 0
        %v7967 = vsel %vm6424, %v7797, 0
        %v7970 = vsel %vm6424, %v7806, 0
        %v7973 = vsel %vm6424, %v7815, 0
        %v7976 = vsel %vm6424, %v7824, 0
        %v7979 = vsel %vm6424, %v7833, 0
        %v7982 = vsel %vm6424, %v7842, 0
        %v7985 = vsel %vm6424, %v7851, 0
        %v7988 = vsel %vm6424, %v7860, 0
        %v7991 = vsel %vm6424, %v7869, 0
        %v7994 = vsel %vm6424, %v7878, 0
        %v7997 = vsel %vm6424, %v7887, 0
        %v8000 = vsel %vm6424, %v7896, 0
        %v8003 = vsel %vm6424, %v7905, 0
        %v8006 = vsel %vm6424, %v7914, 0
        %v8009 = vsel %vm6424, %v7923, 0
        %v8012 = vsel %vm6424, %v7932, 0
        %v8015 = vsel %vm6424, %v7941, 0
        %8017 = vmatprep.subr.bf16.mxu0 0
        %8018 = vmatpush1.bf16.msra.mxu0 0
        %8019 = vmatprep.subr.bf16.mxu0 0
        %8020 = vmatpush1.bf16.msra.mxu0 0
        %8021 = vmatprep.subr.bf16.mxu0 0
        %8022 = vmatpush1.bf16.msra.mxu0 0
        %8023 = vmatprep.subr.bf16.mxu0 0
        %8024 = vmatpush1.bf16.msra.mxu0 0
        %8025 = vmatprep.subr.bf16.mxu0 0
        %8026 = vmatpush1.bf16.msra.mxu0 0
        %8027 = vmatprep.subr.bf16.mxu0 0
        %8028 = vmatpush1.bf16.msra.mxu0 0
        %8029 = vmatprep.subr.bf16.mxu0 0
        %8030 = vmatpush1.bf16.msra.mxu0 %v7951
        %8031 = vmatprep.subr.bf16.mxu0 0
        %8032 = vmatpush1.bf16.msra.mxu0 %v7950
        %8033 = vmatprep.subr.bf16.mxu0 0
        %8034 = vmatpush2.bf16.msra.mxu0 0
        %8035 = vmatprep.subr.bf16.mxu0 0
        %8036 = vmatpush2.bf16.msra.mxu0 0
        %8037 = vmatprep.subr.bf16.mxu0 0
        %8038 = vmatpush2.bf16.msra.mxu0 0
        %8039 = vmatprep.subr.bf16.mxu0 0
        %8040 = vmatpush2.bf16.msra.mxu0 0
        %8041 = vmatprep.subr.bf16.mxu0 0
        %8042 = vmatpush2.bf16.msra.mxu0 0
        %8043 = vmatprep.subr.bf16.mxu0 0
        %8044 = vmatpush2.bf16.msra.mxu0 0
        %8045 = vmatprep.subr.bf16.mxu0 0
        %8046 = vmatpush2.bf16.msra.mxu0 0
        %8047 = vmatprep.subr.bf16.mxu0 0
        %8048 = vmatpush2.bf16.msra.mxu0 0
        %8049 = vmatprep.mubr.bf16.mxu0 0
        %8050 = vmatmul.mubr.bf16.gmra.mxu0 %v7955
        %v8051 = vpop.f32.mrf.mxu0
        %v8052 = vadd.f32 0.0, %v8051
        %v8053 = vpop.f32.mrf.mxu0
        %v8054 = vpop.f32.mrf.mxu0
        %v8055 = vadd.f32 0.0, %v8054
        %v8056 = vpop.f32.mrf.mxu0
        %8057 = vmatprep.mubr.bf16.mxu0 0
        %8058 = vmatmul.mubr.bf16.gmra.mxu0 %v7958
        %v8059 = vpop.f32.mrf.mxu0
        %v8060 = vadd.f32 0.0, %v8059
        %v8061 = vpop.f32.mrf.mxu0
        %v8062 = vpop.f32.mrf.mxu0
        %v8063 = vadd.f32 0.0, %v8062
        %v8064 = vpop.f32.mrf.mxu0
        %8065 = vmatprep.mubr.bf16.mxu0 0
        %8066 = vmatmul.mubr.bf16.gmra.mxu0 %v7961
        %v8067 = vpop.f32.mrf.mxu0
        %v8068 = vadd.f32 0.0, %v8067
        %v8069 = vpop.f32.mrf.mxu0
        %v8070 = vpop.f32.mrf.mxu0
        %v8071 = vadd.f32 0.0, %v8070
        %v8072 = vpop.f32.mrf.mxu0
        %8073 = vmatprep.mubr.bf16.mxu0 0
        %8074 = vmatmul.mubr.bf16.gmra.mxu0 %v7964
        %v8075 = vpop.f32.mrf.mxu0
        %v8076 = vadd.f32 0.0, %v8075
        %v8077 = vpop.f32.mrf.mxu0
        %v8078 = vpop.f32.mrf.mxu0
        %v8079 = vadd.f32 0.0, %v8078
        %v8080 = vpop.f32.mrf.mxu0
        %8081 = vmatprep.mubr.bf16.mxu0 0
        %8082 = vmatmul.mubr.bf16.gmra.mxu0 %v7967
        %v8083 = vpop.f32.mrf.mxu0
        %v8084 = vadd.f32 0.0, %v8083
        %v8085 = vpop.f32.mrf.mxu0
        %v8086 = vpop.f32.mrf.mxu0
        %v8087 = vadd.f32 0.0, %v8086
        %v8088 = vpop.f32.mrf.mxu0
        %8089 = vmatprep.mubr.bf16.mxu0 0
        %8090 = vmatmul.mubr.bf16.gmra.mxu0 %v7970
        %v8091 = vpop.f32.mrf.mxu0
        %v8092 = vadd.f32 0.0, %v8091
        %v8093 = vpop.f32.mrf.mxu0
        %v8094 = vpop.f32.mrf.mxu0
        %v8095 = vadd.f32 0.0, %v8094
        %v8096 = vpop.f32.mrf.mxu0
        %8097 = vmatprep.mubr.bf16.mxu0 0
        %8098 = vmatmul.mubr.bf16.gmra.mxu0 %v7973
        %v8099 = vpop.f32.mrf.mxu0
        %v8100 = vadd.f32 0.0, %v8099
        %v8101 = vpop.f32.mrf.mxu0
        %v8102 = vpop.f32.mrf.mxu0
        %v8103 = vadd.f32 0.0, %v8102
        %v8104 = vpop.f32.mrf.mxu0
        %8105 = vmatprep.mubr.bf16.mxu0 0
        %8106 = vmatmul.mubr.bf16.gmra.mxu0 %v7976
        %v8107 = vpop.f32.mrf.mxu0
        %v8108 = vadd.f32 0.0, %v8107
        %v8109 = vpop.f32.mrf.mxu0
        %v8110 = vpop.f32.mrf.mxu0
        %v8111 = vadd.f32 0.0, %v8110
        %v8112 = vpop.f32.mrf.mxu0
        %8113 = vmatprep.mubr.bf16.mxu0 0
        %8114 = vmatmul.mubr.bf16.gmra.mxu0 %v7979
        %v8115 = vpop.f32.mrf.mxu0
        %v8116 = vadd.f32 0.0, %v8115
        %v8117 = vpop.f32.mrf.mxu0
        %v8118 = vpop.f32.mrf.mxu0
        %v8119 = vadd.f32 0.0, %v8118
        %v8120 = vpop.f32.mrf.mxu0
        %8121 = vmatprep.mubr.bf16.mxu0 0
        %8122 = vmatmul.mubr.bf16.gmra.mxu0 %v7982
        %v8123 = vpop.f32.mrf.mxu0
        %v8124 = vadd.f32 0.0, %v8123
        %v8125 = vpop.f32.mrf.mxu0
        %v8126 = vpop.f32.mrf.mxu0
        %v8127 = vadd.f32 0.0, %v8126
        %v8128 = vpop.f32.mrf.mxu0
        %8129 = vmatprep.mubr.bf16.mxu0 0
        %8130 = vmatmul.mubr.bf16.gmra.mxu0 %v7985
        %v8131 = vpop.f32.mrf.mxu0
        %v8132 = vadd.f32 0.0, %v8131
        %v8133 = vpop.f32.mrf.mxu0
        %v8134 = vpop.f32.mrf.mxu0
        %v8135 = vadd.f32 0.0, %v8134
        %v8136 = vpop.f32.mrf.mxu0
        %8137 = vmatprep.mubr.bf16.mxu0 0
        %8138 = vmatmul.mubr.bf16.gmra.mxu0 %v7988
        %v8139 = vpop.f32.mrf.mxu0
        %v8140 = vadd.f32 0.0, %v8139
        %v8141 = vpop.f32.mrf.mxu0
        %v8142 = vpop.f32.mrf.mxu0
        %v8143 = vadd.f32 0.0, %v8142
        %v8144 = vpop.f32.mrf.mxu0
        %8145 = vmatprep.mubr.bf16.mxu0 0
        %8146 = vmatmul.mubr.bf16.gmra.mxu0 %v7991
        %v8147 = vpop.f32.mrf.mxu0
        %v8148 = vadd.f32 0.0, %v8147
        %v8149 = vpop.f32.mrf.mxu0
        %v8150 = vpop.f32.mrf.mxu0
        %v8151 = vadd.f32 0.0, %v8150
        %v8152 = vpop.f32.mrf.mxu0
        %8153 = vmatprep.mubr.bf16.mxu0 0
        %8154 = vmatmul.mubr.bf16.gmra.mxu0 %v7994
        %v8155 = vpop.f32.mrf.mxu0
        %v8156 = vadd.f32 0.0, %v8155
        %v8157 = vpop.f32.mrf.mxu0
        %v8158 = vpop.f32.mrf.mxu0
        %v8159 = vadd.f32 0.0, %v8158
        %v8160 = vpop.f32.mrf.mxu0
        %8161 = vmatprep.mubr.bf16.mxu0 0
        %8162 = vmatmul.mubr.bf16.gmra.mxu0 %v7997
        %v8163 = vpop.f32.mrf.mxu0
        %v8164 = vadd.f32 0.0, %v8163
        %v8165 = vpop.f32.mrf.mxu0
        %v8166 = vpop.f32.mrf.mxu0
        %v8167 = vadd.f32 0.0, %v8166
        %v8168 = vpop.f32.mrf.mxu0
        %8169 = vmatprep.mubr.bf16.mxu0 0
        %8170 = vmatmul.mubr.bf16.gmra.mxu0 %v8000
        %v8171 = vpop.f32.mrf.mxu0
        %v8172 = vadd.f32 0.0, %v8171
        %v8173 = vpop.f32.mrf.mxu0
        %v8174 = vpop.f32.mrf.mxu0
        %v8175 = vadd.f32 0.0, %v8174
        %v8176 = vpop.f32.mrf.mxu0
        %8177 = vmatprep.mubr.bf16.mxu0 0
        %8178 = vmatmul.mubr.bf16.gmra.mxu0 %v8003
        %v8179 = vpop.f32.mrf.mxu0
        %v8180 = vadd.f32 0.0, %v8179
        %v8181 = vpop.f32.mrf.mxu0
        %v8182 = vpop.f32.mrf.mxu0
        %v8183 = vadd.f32 0.0, %v8182
        %v8184 = vpop.f32.mrf.mxu0
        %8185 = vmatprep.mubr.bf16.mxu0 0
        %8186 = vmatmul.mubr.bf16.gmra.mxu0 %v8006
        %v8187 = vpop.f32.mrf.mxu0
        %v8188 = vadd.f32 0.0, %v8187
        %v8189 = vpop.f32.mrf.mxu0
        %v8190 = vpop.f32.mrf.mxu0
        %v8191 = vadd.f32 0.0, %v8190
        %v8192 = vpop.f32.mrf.mxu0
        %8193 = vmatprep.mubr.bf16.mxu0 0
        %8194 = vmatmul.mubr.bf16.gmra.mxu0 %v8009
        %v8195 = vpop.f32.mrf.mxu0
        %v8196 = vadd.f32 0.0, %v8195
        %v8197 = vpop.f32.mrf.mxu0
        %v8198 = vpop.f32.mrf.mxu0
        %v8199 = vadd.f32 0.0, %v8198
        %v8200 = vpop.f32.mrf.mxu0
        %8201 = vmatprep.mubr.bf16.mxu0 0
        %8202 = vmatmul.mubr.bf16.gmra.mxu0 %v8012
        %v8203 = vpop.f32.mrf.mxu0
        %v8204 = vadd.f32 0.0, %v8203
        %v8205 = vpop.f32.mrf.mxu0
        %v8206 = vpop.f32.mrf.mxu0
        %v8207 = vadd.f32 0.0, %v8206
        %v8208 = vpop.f32.mrf.mxu0
        %8209 = vmatprep.mubr.bf16.mxu0 0
        %8210 = vmatmul.mubr.bf16.gmra.mxu0 %v8015
        %v8211 = vpop.f32.mrf.mxu0
        %v8212 = vadd.f32 0.0, %v8211
        %v8213 = vpop.f32.mrf.mxu0
        %v8214 = vpop.f32.mrf.mxu0
        %v8215 = vadd.f32 0.0, %v8214
        %v8216 = vpop.f32.mrf.mxu0
        %8217 = vdwg.mxu0
        %v8218 = vadd.f32 %v7547, %v8052
        %v8219 = vadd.f32 %v7548, %v8055
        %v8220 = vadd.f32 %v7549, %v8060
        %v8221 = vadd.f32 %v7550, %v8063
        %v8222 = vadd.f32 %v7551, %v8068
        %v8223 = vadd.f32 %v7552, %v8071
        %v8224 = vadd.f32 %v7553, %v8076
        %v8225 = vadd.f32 %v7554, %v8079
        %v8226 = vadd.f32 %v7555, %v8084
        %v8227 = vadd.f32 %v7556, %v8087
        %v8228 = vadd.f32 %v7557, %v8092
        %v8229 = vadd.f32 %v7558, %v8095
        %v8230 = vadd.f32 %v7559, %v8100
        %v8231 = vadd.f32 %v7560, %v8103
        %v8232 = vadd.f32 %v7561, %v8108
        %v8233 = vadd.f32 %v7562, %v8111
        %v8234 = vadd.f32 %v7563, %v8116
        %v8235 = vadd.f32 %v7564, %v8119
        %v8236 = vadd.f32 %v7565, %v8124
        %v8237 = vadd.f32 %v7566, %v8127
        %v8238 = vadd.f32 %v7567, %v8132
        %v8239 = vadd.f32 %v7568, %v8135
        %v8240 = vadd.f32 %v7569, %v8140
        %v8241 = vadd.f32 %v7570, %v8143
        %v8242 = vadd.f32 %v7571, %v8148
        %v8243 = vadd.f32 %v7572, %v8151
        %v8244 = vadd.f32 %v7573, %v8156
        %v8245 = vadd.f32 %v7574, %v8159
        %v8246 = vadd.f32 %v7575, %v8164
        %v8247 = vadd.f32 %v7576, %v8167
        %v8248 = vadd.f32 %v7577, %v8172
        %v8249 = vadd.f32 %v7578, %v8175
        %v8250 = vadd.f32 %v7579, %v8180
        %v8251 = vadd.f32 %v7580, %v8183
        %v8252 = vadd.f32 %v7581, %v8188
        %v8253 = vadd.f32 %v7582, %v8191
        %v8254 = vadd.f32 %v7583, %v8196
        %v8255 = vadd.f32 %v7584, %v8199
        %v8256 = vadd.f32 %v7585, %v8204
        %v8257 = vadd.f32 %v7586, %v8207
        %v8258 = vadd.f32 %v7587, %v8212
        %v8259 = vadd.f32 %v7588, %v8215
        %s8260 = scalar_lea.vmem %s5, 64
        %v8261 = vld [vmem:[%s8260] sm:$0xf]
        %v8262 = vld [vmem:[%s8260 + $0x4] sm:$0xf]
        %v8263 = vld [vmem:[%s8260 + $0x8] sm:$0xf]
        %v8264 = vld [vmem:[%s8260 + $0xc] sm:$0xf]
        %v8265 = vpack.c.b16 %v7682, %v7681
        %v8266 = vpack.c.b16 %v7684, %v7683
        %v8267 = vpack.c.b16 %v7686, %v7685
        %v8268 = vpack.c.b16 %v7688, %v7687
        %v8269 = vpack.c.b16 %v7690, %v7689
        %v8270 = vpack.c.b16 %v7692, %v7691
        %v8271 = vpack.c.b16 %v7694, %v7693
        %v8272 = vpack.c.b16 %v7696, %v7695
        %v8273 = vpack.c.b16 %v7698, %v7697
        %v8274 = vpack.c.b16 %v7700, %v7699
        %v8275 = vpack.c.b16 %v7702, %v7701
        %v8276 = vpack.c.b16 %v7704, %v7703
        %v8277 = vpack.c.b16 %v7706, %v7705
        %v8278 = vpack.c.b16 %v7708, %v7707
        %v8279 = vpack.c.b16 %v7710, %v7709
        %v8280 = vpack.c.b16 %v7712, %v7711
        %v8281 = vpack.c.b16 %v7714, %v7713
        %v8282 = vpack.c.b16 %v7716, %v7715
        %v8283 = vpack.c.b16 %v7718, %v7717
        %v8284 = vpack.c.b16 %v7720, %v7719
        %v8285 = vpack.c.b16 %v7722, %v7721
        %v8290 = vunpack.c.l.b16 %v8261
        %v8291 = vunpack.c.l.b16 %v8262
        %v8292 = vunpack.c.l.b16 %v8263
        %v8293 = vunpack.c.l.b16 %v8264
        %v8294 = vpack.c.b16 %v8291, %v8290
        %v8295 = vpack.c.b16 %v8293, %v8292
        %v8299 = vsel %vm6424, %v8265, 0
        %v8302 = vsel %vm6424, %v8266, 0
        %v8305 = vsel %vm6424, %v8267, 0
        %v8308 = vsel %vm6424, %v8268, 0
        %v8311 = vsel %vm6424, %v8269, 0
        %v8314 = vsel %vm6424, %v8270, 0
        %v8317 = vsel %vm6424, %v8271, 0
        %v8320 = vsel %vm6424, %v8272, 0
        %v8323 = vsel %vm6424, %v8273, 0
        %v8326 = vsel %vm6424, %v8274, 0
        %v8329 = vsel %vm6424, %v8275, 0
        %v8332 = vsel %vm6424, %v8276, 0
        %v8335 = vsel %vm6424, %v8277, 0
        %v8338 = vsel %vm6424, %v8278, 0
        %v8341 = vsel %vm6424, %v8279, 0
        %v8344 = vsel %vm6424, %v8280, 0
        %v8347 = vsel %vm6424, %v8281, 0
        %v8350 = vsel %vm6424, %v8282, 0
        %v8353 = vsel %vm6424, %v8283, 0
        %v8356 = vsel %vm6424, %v8284, 0
        %v8359 = vsel %vm6424, %v8285, 0
        %8361 = vmatprep.subr.bf16.mxu0 0
        %8362 = vmatpush1.bf16.msra.mxu0 0
        %8363 = vmatprep.subr.bf16.mxu0 0
        %8364 = vmatpush1.bf16.msra.mxu0 0
        %8365 = vmatprep.subr.bf16.mxu0 0
        %8366 = vmatpush1.bf16.msra.mxu0 0
        %8367 = vmatprep.subr.bf16.mxu0 0
        %8368 = vmatpush1.bf16.msra.mxu0 0
        %8369 = vmatprep.subr.bf16.mxu0 0
        %8370 = vmatpush1.bf16.msra.mxu0 0
        %8371 = vmatprep.subr.bf16.mxu0 0
        %8372 = vmatpush1.bf16.msra.mxu0 0
        %8373 = vmatprep.subr.bf16.mxu0 0
        %8374 = vmatpush1.bf16.msra.mxu0 %v8295
        %8375 = vmatprep.subr.bf16.mxu0 0
        %8376 = vmatpush1.bf16.msra.mxu0 %v8294
        %8377 = vmatprep.subr.bf16.mxu0 0
        %8378 = vmatpush2.bf16.msra.mxu0 0
        %8379 = vmatprep.subr.bf16.mxu0 0
        %8380 = vmatpush2.bf16.msra.mxu0 0
        %8381 = vmatprep.subr.bf16.mxu0 0
        %8382 = vmatpush2.bf16.msra.mxu0 0
        %8383 = vmatprep.subr.bf16.mxu0 0
        %8384 = vmatpush2.bf16.msra.mxu0 0
        %8385 = vmatprep.subr.bf16.mxu0 0
        %8386 = vmatpush2.bf16.msra.mxu0 0
        %8387 = vmatprep.subr.bf16.mxu0 0
        %8388 = vmatpush2.bf16.msra.mxu0 0
        %8389 = vmatprep.subr.bf16.mxu0 0
        %8390 = vmatpush2.bf16.msra.mxu0 0
        %8391 = vmatprep.subr.bf16.mxu0 0
        %8392 = vmatpush2.bf16.msra.mxu0 0
        %8393 = vmatprep.mubr.bf16.mxu0 0
        %8394 = vmatmul.mubr.bf16.gmra.mxu0 %v8299
        %v8395 = vpop.f32.mrf.mxu0
        %v8396 = vadd.f32 0.0, %v8395
        %v8397 = vpop.f32.mrf.mxu0
        %v8398 = vpop.f32.mrf.mxu0
        %v8399 = vadd.f32 0.0, %v8398
        %v8400 = vpop.f32.mrf.mxu0
        %8401 = vmatprep.mubr.bf16.mxu0 0
        %8402 = vmatmul.mubr.bf16.gmra.mxu0 %v8302
        %v8403 = vpop.f32.mrf.mxu0
        %v8404 = vadd.f32 0.0, %v8403
        %v8405 = vpop.f32.mrf.mxu0
        %v8406 = vpop.f32.mrf.mxu0
        %v8407 = vadd.f32 0.0, %v8406
        %v8408 = vpop.f32.mrf.mxu0
        %8409 = vmatprep.mubr.bf16.mxu0 0
        %8410 = vmatmul.mubr.bf16.gmra.mxu0 %v8305
        %v8411 = vpop.f32.mrf.mxu0
        %v8412 = vadd.f32 0.0, %v8411
        %v8413 = vpop.f32.mrf.mxu0
        %v8414 = vpop.f32.mrf.mxu0
        %v8415 = vadd.f32 0.0, %v8414
        %v8416 = vpop.f32.mrf.mxu0
        %8417 = vmatprep.mubr.bf16.mxu0 0
        %8418 = vmatmul.mubr.bf16.gmra.mxu0 %v8308
        %v8419 = vpop.f32.mrf.mxu0
        %v8420 = vadd.f32 0.0, %v8419
        %v8421 = vpop.f32.mrf.mxu0
        %v8422 = vpop.f32.mrf.mxu0
        %v8423 = vadd.f32 0.0, %v8422
        %v8424 = vpop.f32.mrf.mxu0
        %8425 = vmatprep.mubr.bf16.mxu0 0
        %8426 = vmatmul.mubr.bf16.gmra.mxu0 %v8311
        %v8427 = vpop.f32.mrf.mxu0
        %v8428 = vadd.f32 0.0, %v8427
        %v8429 = vpop.f32.mrf.mxu0
        %v8430 = vpop.f32.mrf.mxu0
        %v8431 = vadd.f32 0.0, %v8430
        %v8432 = vpop.f32.mrf.mxu0
        %8433 = vmatprep.mubr.bf16.mxu0 0
        %8434 = vmatmul.mubr.bf16.gmra.mxu0 %v8314
        %v8435 = vpop.f32.mrf.mxu0
        %v8436 = vadd.f32 0.0, %v8435
        %v8437 = vpop.f32.mrf.mxu0
        %v8438 = vpop.f32.mrf.mxu0
        %v8439 = vadd.f32 0.0, %v8438
        %v8440 = vpop.f32.mrf.mxu0
        %8441 = vmatprep.mubr.bf16.mxu0 0
        %8442 = vmatmul.mubr.bf16.gmra.mxu0 %v8317
        %v8443 = vpop.f32.mrf.mxu0
        %v8444 = vadd.f32 0.0, %v8443
        %v8445 = vpop.f32.mrf.mxu0
        %v8446 = vpop.f32.mrf.mxu0
        %v8447 = vadd.f32 0.0, %v8446
        %v8448 = vpop.f32.mrf.mxu0
        %8449 = vmatprep.mubr.bf16.mxu0 0
        %8450 = vmatmul.mubr.bf16.gmra.mxu0 %v8320
        %v8451 = vpop.f32.mrf.mxu0
        %v8452 = vadd.f32 0.0, %v8451
        %v8453 = vpop.f32.mrf.mxu0
        %v8454 = vpop.f32.mrf.mxu0
        %v8455 = vadd.f32 0.0, %v8454
        %v8456 = vpop.f32.mrf.mxu0
        %8457 = vmatprep.mubr.bf16.mxu0 0
        %8458 = vmatmul.mubr.bf16.gmra.mxu0 %v8323
        %v8459 = vpop.f32.mrf.mxu0
        %v8460 = vadd.f32 0.0, %v8459
        %v8461 = vpop.f32.mrf.mxu0
        %v8462 = vpop.f32.mrf.mxu0
        %v8463 = vadd.f32 0.0, %v8462
        %v8464 = vpop.f32.mrf.mxu0
        %8465 = vmatprep.mubr.bf16.mxu0 0
        %8466 = vmatmul.mubr.bf16.gmra.mxu0 %v8326
        %v8467 = vpop.f32.mrf.mxu0
        %v8468 = vadd.f32 0.0, %v8467
        %v8469 = vpop.f32.mrf.mxu0
        %v8470 = vpop.f32.mrf.mxu0
        %v8471 = vadd.f32 0.0, %v8470
        %v8472 = vpop.f32.mrf.mxu0
        %8473 = vmatprep.mubr.bf16.mxu0 0
        %8474 = vmatmul.mubr.bf16.gmra.mxu0 %v8329
        %v8475 = vpop.f32.mrf.mxu0
        %v8476 = vadd.f32 0.0, %v8475
        %v8477 = vpop.f32.mrf.mxu0
        %v8478 = vpop.f32.mrf.mxu0
        %v8479 = vadd.f32 0.0, %v8478
        %v8480 = vpop.f32.mrf.mxu0
        %8481 = vmatprep.mubr.bf16.mxu0 0
        %8482 = vmatmul.mubr.bf16.gmra.mxu0 %v8332
        %v8483 = vpop.f32.mrf.mxu0
        %v8484 = vadd.f32 0.0, %v8483
        %v8485 = vpop.f32.mrf.mxu0
        %v8486 = vpop.f32.mrf.mxu0
        %v8487 = vadd.f32 0.0, %v8486
        %v8488 = vpop.f32.mrf.mxu0
        %8489 = vmatprep.mubr.bf16.mxu0 0
        %8490 = vmatmul.mubr.bf16.gmra.mxu0 %v8335
        %v8491 = vpop.f32.mrf.mxu0
        %v8492 = vadd.f32 0.0, %v8491
        %v8493 = vpop.f32.mrf.mxu0
        %v8494 = vpop.f32.mrf.mxu0
        %v8495 = vadd.f32 0.0, %v8494
        %v8496 = vpop.f32.mrf.mxu0
        %8497 = vmatprep.mubr.bf16.mxu0 0
        %8498 = vmatmul.mubr.bf16.gmra.mxu0 %v8338
        %v8499 = vpop.f32.mrf.mxu0
        %v8500 = vadd.f32 0.0, %v8499
        %v8501 = vpop.f32.mrf.mxu0
        %v8502 = vpop.f32.mrf.mxu0
        %v8503 = vadd.f32 0.0, %v8502
        %v8504 = vpop.f32.mrf.mxu0
        %8505 = vmatprep.mubr.bf16.mxu0 0
        %8506 = vmatmul.mubr.bf16.gmra.mxu0 %v8341
        %v8507 = vpop.f32.mrf.mxu0
        %v8508 = vadd.f32 0.0, %v8507
        %v8509 = vpop.f32.mrf.mxu0
        %v8510 = vpop.f32.mrf.mxu0
        %v8511 = vadd.f32 0.0, %v8510
        %v8512 = vpop.f32.mrf.mxu0
        %8513 = vmatprep.mubr.bf16.mxu0 0
        %8514 = vmatmul.mubr.bf16.gmra.mxu0 %v8344
        %v8515 = vpop.f32.mrf.mxu0
        %v8516 = vadd.f32 0.0, %v8515
        %v8517 = vpop.f32.mrf.mxu0
        %v8518 = vpop.f32.mrf.mxu0
        %v8519 = vadd.f32 0.0, %v8518
        %v8520 = vpop.f32.mrf.mxu0
        %8521 = vmatprep.mubr.bf16.mxu0 0
        %8522 = vmatmul.mubr.bf16.gmra.mxu0 %v8347
        %v8523 = vpop.f32.mrf.mxu0
        %v8524 = vadd.f32 0.0, %v8523
        %v8525 = vpop.f32.mrf.mxu0
        %v8526 = vpop.f32.mrf.mxu0
        %v8527 = vadd.f32 0.0, %v8526
        %v8528 = vpop.f32.mrf.mxu0
        %8529 = vmatprep.mubr.bf16.mxu0 0
        %8530 = vmatmul.mubr.bf16.gmra.mxu0 %v8350
        %v8531 = vpop.f32.mrf.mxu0
        %v8532 = vadd.f32 0.0, %v8531
        %v8533 = vpop.f32.mrf.mxu0
        %v8534 = vpop.f32.mrf.mxu0
        %v8535 = vadd.f32 0.0, %v8534
        %v8536 = vpop.f32.mrf.mxu0
        %8537 = vmatprep.mubr.bf16.mxu0 0
        %8538 = vmatmul.mubr.bf16.gmra.mxu0 %v8353
        %v8539 = vpop.f32.mrf.mxu0
        %v8540 = vadd.f32 0.0, %v8539
        %v8541 = vpop.f32.mrf.mxu0
        %v8542 = vpop.f32.mrf.mxu0
        %v8543 = vadd.f32 0.0, %v8542
        %v8544 = vpop.f32.mrf.mxu0
        %8545 = vmatprep.mubr.bf16.mxu0 0
        %8546 = vmatmul.mubr.bf16.gmra.mxu0 %v8356
        %v8547 = vpop.f32.mrf.mxu0
        %v8548 = vadd.f32 0.0, %v8547
        %v8549 = vpop.f32.mrf.mxu0
        %v8550 = vpop.f32.mrf.mxu0
        %v8551 = vadd.f32 0.0, %v8550
        %v8552 = vpop.f32.mrf.mxu0
        %8553 = vmatprep.mubr.bf16.mxu0 0
        %8554 = vmatmul.mubr.bf16.gmra.mxu0 %v8359
        %v8555 = vpop.f32.mrf.mxu0
        %v8556 = vadd.f32 0.0, %v8555
        %v8557 = vpop.f32.mrf.mxu0
        %v8558 = vpop.f32.mrf.mxu0
        %v8559 = vadd.f32 0.0, %v8558
        %v8560 = vpop.f32.mrf.mxu0
        %8561 = vdwg.mxu0
        %v8562 = vadd.f32 %v8218, %v8396
        %v8563 = vadd.f32 %v8219, %v8399
        %v8564 = vadd.f32 %v8220, %v8404
        %v8565 = vadd.f32 %v8221, %v8407
        %v8566 = vadd.f32 %v8222, %v8412
        %v8567 = vadd.f32 %v8223, %v8415
        %v8568 = vadd.f32 %v8224, %v8420
        %v8569 = vadd.f32 %v8225, %v8423
        %v8570 = vadd.f32 %v8226, %v8428
        %v8571 = vadd.f32 %v8227, %v8431
        %v8572 = vadd.f32 %v8228, %v8436
        %v8573 = vadd.f32 %v8229, %v8439
        %v8574 = vadd.f32 %v8230, %v8444
        %v8575 = vadd.f32 %v8231, %v8447
        %v8576 = vadd.f32 %v8232, %v8452
        %v8577 = vadd.f32 %v8233, %v8455
        %v8578 = vadd.f32 %v8234, %v8460
        %v8579 = vadd.f32 %v8235, %v8463
        %v8580 = vadd.f32 %v8236, %v8468
        %v8581 = vadd.f32 %v8237, %v8471
        %v8582 = vadd.f32 %v8238, %v8476
        %v8583 = vadd.f32 %v8239, %v8479
        %v8584 = vadd.f32 %v8240, %v8484
        %v8585 = vadd.f32 %v8241, %v8487
        %v8586 = vadd.f32 %v8242, %v8492
        %v8587 = vadd.f32 %v8243, %v8495
        %v8588 = vadd.f32 %v8244, %v8500
        %v8589 = vadd.f32 %v8245, %v8503
        %v8590 = vadd.f32 %v8246, %v8508
        %v8591 = vadd.f32 %v8247, %v8511
        %v8592 = vadd.f32 %v8248, %v8516
        %v8593 = vadd.f32 %v8249, %v8519
        %v8594 = vadd.f32 %v8250, %v8524
        %v8595 = vadd.f32 %v8251, %v8527
        %v8596 = vadd.f32 %v8252, %v8532
        %v8597 = vadd.f32 %v8253, %v8535
        %v8598 = vadd.f32 %v8254, %v8540
        %v8599 = vadd.f32 %v8255, %v8543
        %v8600 = vadd.f32 %v8256, %v8548
        %v8601 = vadd.f32 %v8257, %v8551
        %v8602 = vadd.f32 %v8258, %v8556
        %v8603 = vadd.f32 %v8259, %v8559
        %v8604 = vld [vmem:[#allocation2 + $0x10] sm:$0xf]
        %v8605 = vld [vmem:[#allocation2 + $0x14] sm:$0xf]
        %v8606 = vld [vmem:[#allocation2 + $0x18] sm:$0xf]
        %v8607 = vld [vmem:[#allocation2 + $0x1c] sm:$0xf]
        %v8608 = vld [vmem:[#allocation2 + $0x20] sm:$0xf]
        %v8609 = vld [vmem:[#allocation2 + $0x24] sm:$0xf]
        %v8610 = vld [vmem:[#allocation2 + $0x28] sm:$0xf]
        %v8611 = vld [vmem:[#allocation2 + $0x2c] sm:$0xf]
        %v8612 = vld [vmem:[#allocation2 + $0x30] sm:$0xf]
        %v8613 = vld [vmem:[#allocation2 + $0x34] sm:$0xf]
        %v8614 = vld [vmem:[#allocation2 + $0x38] sm:$0xf]
        %v8615 = vld [vmem:[#allocation2 + $0x3c] sm:$0xf]
        %v8616 = vld [vmem:[#allocation2 + $0x40] sm:$0xf]
        %v8617 = vld [vmem:[#allocation2 + $0x44] sm:$0xf]
        %v8618 = vld [vmem:[#allocation2 + $0x48] sm:$0xf]
        %v8619 = vld [vmem:[#allocation2 + $0x4c] sm:$0xf]
        %v8620 = vld [vmem:[#allocation2 + $0x50] sm:$0xf]
        %v8621 = vld [vmem:[#allocation2 + $0x54] sm:$0xf]
        %v8622 = vld [vmem:[#allocation2 + $0x58] sm:$0xf]
        %v8623 = vld [vmem:[#allocation2 + $0x5c] sm:$0xf]
        %v8624 = vld [vmem:[#allocation2 + $0x60] sm:$0xf]
        %v8625 = vld [vmem:[#allocation2 + $0x64] sm:$0xf]
        %v8626 = vld [vmem:[#allocation2 + $0x68] sm:$0xf]
        %v8627 = vld [vmem:[#allocation2 + $0x6c] sm:$0xf]
        %v8628 = vld [vmem:[#allocation2 + $0x70] sm:$0xf]
        %v8629 = vld [vmem:[#allocation2 + $0x74] sm:$0xf]
        %v8630 = vld [vmem:[#allocation2 + $0x78] sm:$0xf]
        %v8631 = vld [vmem:[#allocation2 + $0x7c] sm:$0xf]
        %v8632 = vld [vmem:[#allocation2 + $0x80] sm:$0xf]
        %v8633 = vld [vmem:[#allocation2 + $0x84] sm:$0xf]
        %v8634 = vld [vmem:[#allocation2 + $0x88] sm:$0xf]
        %v8635 = vld [vmem:[#allocation2 + $0x8c] sm:$0xf]
        %v8636 = vld [vmem:[#allocation2 + $0x90] sm:$0xf]
        %v8637 = vld [vmem:[#allocation2 + $0x94] sm:$0xf]
        %v8638 = vld [vmem:[#allocation2 + $0x98] sm:$0xf]
        %v8639 = vld [vmem:[#allocation2 + $0x9c] sm:$0xf]
        %v8640 = vld [vmem:[#allocation2 + $0xa0] sm:$0xf]
        %v8641 = vld [vmem:[#allocation2 + $0xa4] sm:$0xf]
        %v8642 = vld [vmem:[#allocation2 + $0xa8] sm:$0xf]
        %v8643 = vld [vmem:[#allocation2 + $0xac] sm:$0xf]
        %v8644 = vld [vmem:[#allocation2 + $0xb0] sm:$0xf]
        %v8645 = vld [vmem:[#allocation2 + $0xb4] sm:$0xf]
        %v8646 = vld [vmem:[#allocation2 + $0xb8] sm:$0x1]
        %s8647 = scalar_lea.vmem %s5, 80
        %v8648 = vld [vmem:[%s8647] sm:$0xf]
        %v8649 = vld [vmem:[%s8647 + $0x4] sm:$0xf]
        %v8650 = vld [vmem:[%s8647 + $0x8] sm:$0xf]
        %v8651 = vld [vmem:[%s8647 + $0xc] sm:$0xf]
        %v8695 = vunpack.c.l.b16 %v8604
        %v8696 = vunpack.c.l.b16 %v8605
        %v8697 = vunpack.c.l.b16 %v8606
        %v8698 = vunpack.c.l.b16 %v8607
        %v8699 = vunpack.c.l.b16 %v8608
        %v8700 = vunpack.c.l.b16 %v8609
        %v8701 = vunpack.c.l.b16 %v8610
        %v8702 = vunpack.c.l.b16 %v8611
        %v8703 = vunpack.c.l.b16 %v8612
        %v8704 = vunpack.c.l.b16 %v8613
        %v8705 = vunpack.c.l.b16 %v8614
        %v8706 = vunpack.c.l.b16 %v8615
        %v8707 = vunpack.c.l.b16 %v8616
        %v8708 = vunpack.c.l.b16 %v8617
        %v8709 = vunpack.c.l.b16 %v8618
        %v8710 = vunpack.c.l.b16 %v8619
        %v8711 = vunpack.c.l.b16 %v8620
        %v8712 = vunpack.c.l.b16 %v8621
        %v8713 = vunpack.c.l.b16 %v8622
        %v8714 = vunpack.c.l.b16 %v8623
        %v8715 = vunpack.c.l.b16 %v8624
        %v8716 = vunpack.c.l.b16 %v8625
        %v8717 = vunpack.c.l.b16 %v8626
        %v8718 = vunpack.c.l.b16 %v8627
        %v8719 = vunpack.c.l.b16 %v8628
        %v8720 = vunpack.c.l.b16 %v8629
        %v8721 = vunpack.c.l.b16 %v8630
        %v8722 = vunpack.c.l.b16 %v8631
        %v8723 = vunpack.c.l.b16 %v8632
        %v8724 = vunpack.c.l.b16 %v8633
        %v8725 = vunpack.c.l.b16 %v8634
        %v8726 = vunpack.c.l.b16 %v8635
        %v8727 = vunpack.c.l.b16 %v8636
        %v8728 = vunpack.c.l.b16 %v8637
        %v8729 = vunpack.c.l.b16 %v8638
        %v8730 = vunpack.c.l.b16 %v8639
        %v8731 = vunpack.c.l.b16 %v8640
        %v8732 = vunpack.c.l.b16 %v8641
        %v8733 = vunpack.c.l.b16 %v8642
        %v8734 = vunpack.c.l.b16 %v8643
        %v8735 = vunpack.c.l.b16 %v8644
        %v8736 = vunpack.c.l.b16 %v8645
        %v8737 = vunpack.c.l.b16 %v8646
        %v8738 = vpack.c.b16 %v8696, %v8695
        %v8739 = vpack.c.b16 %v8698, %v8697
        %v8740 = vpack.c.b16 %v8700, %v8699
        %v8741 = vpack.c.b16 %v8702, %v8701
        %v8742 = vpack.c.b16 %v8704, %v8703
        %v8743 = vpack.c.b16 %v8706, %v8705
        %v8744 = vpack.c.b16 %v8708, %v8707
        %v8745 = vpack.c.b16 %v8710, %v8709
        %v8746 = vpack.c.b16 %v8712, %v8711
        %v8747 = vpack.c.b16 %v8714, %v8713
        %v8748 = vpack.c.b16 %v8716, %v8715
        %v8749 = vpack.c.b16 %v8718, %v8717
        %v8750 = vpack.c.b16 %v8720, %v8719
        %v8751 = vpack.c.b16 %v8722, %v8721
        %v8752 = vpack.c.b16 %v8724, %v8723
        %v8753 = vpack.c.b16 %v8726, %v8725
        %v8754 = vpack.c.b16 %v8728, %v8727
        %v8755 = vpack.c.b16 %v8730, %v8729
        %v8756 = vpack.c.b16 %v8732, %v8731
        %v8757 = vpack.c.b16 %v8734, %v8733
        %v8758 = vpack.c.b16 %v8736, %v8735
        %v8759 = vpack.c.b16 %v8737, %v8737
        %v8761 = vshrl.u32 %v8738, 16
        %v8763 = vshll.u32 %v8738, 16
        %v8765 = vrot.slane %v8763, 1
        %v8766 = vor.u32 %v8761, %v8765
        %v8768 = vshll.u32 %v8739, 16
        %v8770 = vrot.slane %v8768, 1
        %v8771 = vsel %vm3516, %v8766, %v8770
        %v8772 = vshrl.u32 %v8739, 16
        %v8774 = vor.u32 %v8772, %v8770
        %v8776 = vshll.u32 %v8740, 16
        %v8778 = vrot.slane %v8776, 1
        %v8779 = vsel %vm3516, %v8774, %v8778
        %v8780 = vshrl.u32 %v8740, 16
        %v8782 = vor.u32 %v8780, %v8778
        %v8784 = vshll.u32 %v8741, 16
        %v8786 = vrot.slane %v8784, 1
        %v8787 = vsel %vm3516, %v8782, %v8786
        %v8788 = vshrl.u32 %v8741, 16
        %v8790 = vor.u32 %v8788, %v8786
        %v8792 = vshll.u32 %v8742, 16
        %v8794 = vrot.slane %v8792, 1
        %v8795 = vsel %vm3516, %v8790, %v8794
        %v8796 = vshrl.u32 %v8742, 16
        %v8798 = vor.u32 %v8796, %v8794
        %v8800 = vshll.u32 %v8743, 16
        %v8802 = vrot.slane %v8800, 1
        %v8803 = vsel %vm3516, %v8798, %v8802
        %v8804 = vshrl.u32 %v8743, 16
        %v8806 = vor.u32 %v8804, %v8802
        %v8808 = vshll.u32 %v8744, 16
        %v8810 = vrot.slane %v8808, 1
        %v8811 = vsel %vm3516, %v8806, %v8810
        %v8812 = vshrl.u32 %v8744, 16
        %v8814 = vor.u32 %v8812, %v8810
        %v8816 = vshll.u32 %v8745, 16
        %v8818 = vrot.slane %v8816, 1
        %v8819 = vsel %vm3516, %v8814, %v8818
        %v8820 = vshrl.u32 %v8745, 16
        %v8822 = vor.u32 %v8820, %v8818
        %v8824 = vshll.u32 %v8746, 16
        %v8826 = vrot.slane %v8824, 1
        %v8827 = vsel %vm3516, %v8822, %v8826
        %v8828 = vshrl.u32 %v8746, 16
        %v8830 = vor.u32 %v8828, %v8826
        %v8832 = vshll.u32 %v8747, 16
        %v8834 = vrot.slane %v8832, 1
        %v8835 = vsel %vm3516, %v8830, %v8834
        %v8836 = vshrl.u32 %v8747, 16
        %v8838 = vor.u32 %v8836, %v8834
        %v8840 = vshll.u32 %v8748, 16
        %v8842 = vrot.slane %v8840, 1
        %v8843 = vsel %vm3516, %v8838, %v8842
        %v8844 = vshrl.u32 %v8748, 16
        %v8846 = vor.u32 %v8844, %v8842
        %v8848 = vshll.u32 %v8749, 16
        %v8850 = vrot.slane %v8848, 1
        %v8851 = vsel %vm3516, %v8846, %v8850
        %v8852 = vshrl.u32 %v8749, 16
        %v8854 = vor.u32 %v8852, %v8850
        %v8856 = vshll.u32 %v8750, 16
        %v8858 = vrot.slane %v8856, 1
        %v8859 = vsel %vm3516, %v8854, %v8858
        %v8860 = vshrl.u32 %v8750, 16
        %v8862 = vor.u32 %v8860, %v8858
        %v8864 = vshll.u32 %v8751, 16
        %v8866 = vrot.slane %v8864, 1
        %v8867 = vsel %vm3516, %v8862, %v8866
        %v8868 = vshrl.u32 %v8751, 16
        %v8870 = vor.u32 %v8868, %v8866
        %v8872 = vshll.u32 %v8752, 16
        %v8874 = vrot.slane %v8872, 1
        %v8875 = vsel %vm3516, %v8870, %v8874
        %v8876 = vshrl.u32 %v8752, 16
        %v8878 = vor.u32 %v8876, %v8874
        %v8880 = vshll.u32 %v8753, 16
        %v8882 = vrot.slane %v8880, 1
        %v8883 = vsel %vm3516, %v8878, %v8882
        %v8884 = vshrl.u32 %v8753, 16
        %v8886 = vor.u32 %v8884, %v8882
        %v8888 = vshll.u32 %v8754, 16
        %v8890 = vrot.slane %v8888, 1
        %v8891 = vsel %vm3516, %v8886, %v8890
        %v8892 = vshrl.u32 %v8754, 16
        %v8894 = vor.u32 %v8892, %v8890
        %v8896 = vshll.u32 %v8755, 16
        %v8898 = vrot.slane %v8896, 1
        %v8899 = vsel %vm3516, %v8894, %v8898
        %v8900 = vshrl.u32 %v8755, 16
        %v8902 = vor.u32 %v8900, %v8898
        %v8904 = vshll.u32 %v8756, 16
        %v8906 = vrot.slane %v8904, 1
        %v8907 = vsel %vm3516, %v8902, %v8906
        %v8908 = vshrl.u32 %v8756, 16
        %v8910 = vor.u32 %v8908, %v8906
        %v8912 = vshll.u32 %v8757, 16
        %v8914 = vrot.slane %v8912, 1
        %v8915 = vsel %vm3516, %v8910, %v8914
        %v8916 = vshrl.u32 %v8757, 16
        %v8918 = vor.u32 %v8916, %v8914
        %v8920 = vshll.u32 %v8758, 16
        %v8922 = vrot.slane %v8920, 1
        %v8923 = vsel %vm3516, %v8918, %v8922
        %v8924 = vshrl.u32 %v8758, 16
        %v8926 = vor.u32 %v8924, %v8922
        %v8928 = vshll.u32 %v8759, 16
        %v8930 = vrot.slane %v8928, 1
        %v8931 = vsel %vm3516, %v8926, %v8930
        %v8936 = vunpack.c.l.b16 %v8648
        %v8937 = vunpack.c.l.b16 %v8649
        %v8938 = vunpack.c.l.b16 %v8650
        %v8939 = vunpack.c.l.b16 %v8651
        %v8940 = vpack.c.b16 %v8937, %v8936
        %v8941 = vpack.c.b16 %v8939, %v8938
        %v8945 = vsel %vm6424, %v8771, 0
        %v8948 = vsel %vm6424, %v8779, 0
        %v8951 = vsel %vm6424, %v8787, 0
        %v8954 = vsel %vm6424, %v8795, 0
        %v8957 = vsel %vm6424, %v8803, 0
        %v8960 = vsel %vm6424, %v8811, 0
        %v8963 = vsel %vm6424, %v8819, 0
        %v8966 = vsel %vm6424, %v8827, 0
        %v8969 = vsel %vm6424, %v8835, 0
        %v8972 = vsel %vm6424, %v8843, 0
        %v8975 = vsel %vm6424, %v8851, 0
        %v8978 = vsel %vm6424, %v8859, 0
        %v8981 = vsel %vm6424, %v8867, 0
        %v8984 = vsel %vm6424, %v8875, 0
        %v8987 = vsel %vm6424, %v8883, 0
        %v8990 = vsel %vm6424, %v8891, 0
        %v8993 = vsel %vm6424, %v8899, 0
        %v8996 = vsel %vm6424, %v8907, 0
        %v8999 = vsel %vm6424, %v8915, 0
        %v9002 = vsel %vm6424, %v8923, 0
        %v9005 = vsel %vm6424, %v8931, 0
        %9007 = vmatprep.subr.bf16.mxu0 0
        %9008 = vmatpush1.bf16.msra.mxu0 0
        %9009 = vmatprep.subr.bf16.mxu0 0
        %9010 = vmatpush1.bf16.msra.mxu0 0
        %9011 = vmatprep.subr.bf16.mxu0 0
        %9012 = vmatpush1.bf16.msra.mxu0 0
        %9013 = vmatprep.subr.bf16.mxu0 0
        %9014 = vmatpush1.bf16.msra.mxu0 0
        %9015 = vmatprep.subr.bf16.mxu0 0
        %9016 = vmatpush1.bf16.msra.mxu0 0
        %9017 = vmatprep.subr.bf16.mxu0 0
        %9018 = vmatpush1.bf16.msra.mxu0 0
        %9019 = vmatprep.subr.bf16.mxu0 0
        %9020 = vmatpush1.bf16.msra.mxu0 %v8941
        %9021 = vmatprep.subr.bf16.mxu0 0
        %9022 = vmatpush1.bf16.msra.mxu0 %v8940
        %9023 = vmatprep.subr.bf16.mxu0 0
        %9024 = vmatpush2.bf16.msra.mxu0 0
        %9025 = vmatprep.subr.bf16.mxu0 0
        %9026 = vmatpush2.bf16.msra.mxu0 0
        %9027 = vmatprep.subr.bf16.mxu0 0
        %9028 = vmatpush2.bf16.msra.mxu0 0
        %9029 = vmatprep.subr.bf16.mxu0 0
        %9030 = vmatpush2.bf16.msra.mxu0 0
        %9031 = vmatprep.subr.bf16.mxu0 0
        %9032 = vmatpush2.bf16.msra.mxu0 0
        %9033 = vmatprep.subr.bf16.mxu0 0
        %9034 = vmatpush2.bf16.msra.mxu0 0
        %9035 = vmatprep.subr.bf16.mxu0 0
        %9036 = vmatpush2.bf16.msra.mxu0 0
        %9037 = vmatprep.subr.bf16.mxu0 0
        %9038 = vmatpush2.bf16.msra.mxu0 0
        %9039 = vmatprep.mubr.bf16.mxu0 0
        %9040 = vmatmul.mubr.bf16.gmra.mxu0 %v8945
        %v9041 = vpop.f32.mrf.mxu0
        %v9042 = vadd.f32 0.0, %v9041
        %v9043 = vpop.f32.mrf.mxu0
        %v9044 = vpop.f32.mrf.mxu0
        %v9045 = vadd.f32 0.0, %v9044
        %v9046 = vpop.f32.mrf.mxu0
        %9047 = vmatprep.mubr.bf16.mxu0 0
        %9048 = vmatmul.mubr.bf16.gmra.mxu0 %v8948
        %v9049 = vpop.f32.mrf.mxu0
        %v9050 = vadd.f32 0.0, %v9049
        %v9051 = vpop.f32.mrf.mxu0
        %v9052 = vpop.f32.mrf.mxu0
        %v9053 = vadd.f32 0.0, %v9052
        %v9054 = vpop.f32.mrf.mxu0
        %9055 = vmatprep.mubr.bf16.mxu0 0
        %9056 = vmatmul.mubr.bf16.gmra.mxu0 %v8951
        %v9057 = vpop.f32.mrf.mxu0
        %v9058 = vadd.f32 0.0, %v9057
        %v9059 = vpop.f32.mrf.mxu0
        %v9060 = vpop.f32.mrf.mxu0
        %v9061 = vadd.f32 0.0, %v9060
        %v9062 = vpop.f32.mrf.mxu0
        %9063 = vmatprep.mubr.bf16.mxu0 0
        %9064 = vmatmul.mubr.bf16.gmra.mxu0 %v8954
        %v9065 = vpop.f32.mrf.mxu0
        %v9066 = vadd.f32 0.0, %v9065
        %v9067 = vpop.f32.mrf.mxu0
        %v9068 = vpop.f32.mrf.mxu0
        %v9069 = vadd.f32 0.0, %v9068
        %v9070 = vpop.f32.mrf.mxu0
        %9071 = vmatprep.mubr.bf16.mxu0 0
        %9072 = vmatmul.mubr.bf16.gmra.mxu0 %v8957
        %v9073 = vpop.f32.mrf.mxu0
        %v9074 = vadd.f32 0.0, %v9073
        %v9075 = vpop.f32.mrf.mxu0
        %v9076 = vpop.f32.mrf.mxu0
        %v9077 = vadd.f32 0.0, %v9076
        %v9078 = vpop.f32.mrf.mxu0
        %9079 = vmatprep.mubr.bf16.mxu0 0
        %9080 = vmatmul.mubr.bf16.gmra.mxu0 %v8960
        %v9081 = vpop.f32.mrf.mxu0
        %v9082 = vadd.f32 0.0, %v9081
        %v9083 = vpop.f32.mrf.mxu0
        %v9084 = vpop.f32.mrf.mxu0
        %v9085 = vadd.f32 0.0, %v9084
        %v9086 = vpop.f32.mrf.mxu0
        %9087 = vmatprep.mubr.bf16.mxu0 0
        %9088 = vmatmul.mubr.bf16.gmra.mxu0 %v8963
        %v9089 = vpop.f32.mrf.mxu0
        %v9090 = vadd.f32 0.0, %v9089
        %v9091 = vpop.f32.mrf.mxu0
        %v9092 = vpop.f32.mrf.mxu0
        %v9093 = vadd.f32 0.0, %v9092
        %v9094 = vpop.f32.mrf.mxu0
        %9095 = vmatprep.mubr.bf16.mxu0 0
        %9096 = vmatmul.mubr.bf16.gmra.mxu0 %v8966
        %v9097 = vpop.f32.mrf.mxu0
        %v9098 = vadd.f32 0.0, %v9097
        %v9099 = vpop.f32.mrf.mxu0
        %v9100 = vpop.f32.mrf.mxu0
        %v9101 = vadd.f32 0.0, %v9100
        %v9102 = vpop.f32.mrf.mxu0
        %9103 = vmatprep.mubr.bf16.mxu0 0
        %9104 = vmatmul.mubr.bf16.gmra.mxu0 %v8969
        %v9105 = vpop.f32.mrf.mxu0
        %v9106 = vadd.f32 0.0, %v9105
        %v9107 = vpop.f32.mrf.mxu0
        %v9108 = vpop.f32.mrf.mxu0
        %v9109 = vadd.f32 0.0, %v9108
        %v9110 = vpop.f32.mrf.mxu0
        %9111 = vmatprep.mubr.bf16.mxu0 0
        %9112 = vmatmul.mubr.bf16.gmra.mxu0 %v8972
        %v9113 = vpop.f32.mrf.mxu0
        %v9114 = vadd.f32 0.0, %v9113
        %v9115 = vpop.f32.mrf.mxu0
        %v9116 = vpop.f32.mrf.mxu0
        %v9117 = vadd.f32 0.0, %v9116
        %v9118 = vpop.f32.mrf.mxu0
        %9119 = vmatprep.mubr.bf16.mxu0 0
        %9120 = vmatmul.mubr.bf16.gmra.mxu0 %v8975
        %v9121 = vpop.f32.mrf.mxu0
        %v9122 = vadd.f32 0.0, %v9121
        %v9123 = vpop.f32.mrf.mxu0
        %v9124 = vpop.f32.mrf.mxu0
        %v9125 = vadd.f32 0.0, %v9124
        %v9126 = vpop.f32.mrf.mxu0
        %9127 = vmatprep.mubr.bf16.mxu0 0
        %9128 = vmatmul.mubr.bf16.gmra.mxu0 %v8978
        %v9129 = vpop.f32.mrf.mxu0
        %v9130 = vadd.f32 0.0, %v9129
        %v9131 = vpop.f32.mrf.mxu0
        %v9132 = vpop.f32.mrf.mxu0
        %v9133 = vadd.f32 0.0, %v9132
        %v9134 = vpop.f32.mrf.mxu0
        %9135 = vmatprep.mubr.bf16.mxu0 0
        %9136 = vmatmul.mubr.bf16.gmra.mxu0 %v8981
        %v9137 = vpop.f32.mrf.mxu0
        %v9138 = vadd.f32 0.0, %v9137
        %v9139 = vpop.f32.mrf.mxu0
        %v9140 = vpop.f32.mrf.mxu0
        %v9141 = vadd.f32 0.0, %v9140
        %v9142 = vpop.f32.mrf.mxu0
        %9143 = vmatprep.mubr.bf16.mxu0 0
        %9144 = vmatmul.mubr.bf16.gmra.mxu0 %v8984
        %v9145 = vpop.f32.mrf.mxu0
        %v9146 = vadd.f32 0.0, %v9145
        %v9147 = vpop.f32.mrf.mxu0
        %v9148 = vpop.f32.mrf.mxu0
        %v9149 = vadd.f32 0.0, %v9148
        %v9150 = vpop.f32.mrf.mxu0
        %9151 = vmatprep.mubr.bf16.mxu0 0
        %9152 = vmatmul.mubr.bf16.gmra.mxu0 %v8987
        %v9153 = vpop.f32.mrf.mxu0
        %v9154 = vadd.f32 0.0, %v9153
        %v9155 = vpop.f32.mrf.mxu0
        %v9156 = vpop.f32.mrf.mxu0
        %v9157 = vadd.f32 0.0, %v9156
        %v9158 = vpop.f32.mrf.mxu0
        %9159 = vmatprep.mubr.bf16.mxu0 0
        %9160 = vmatmul.mubr.bf16.gmra.mxu0 %v8990
        %v9161 = vpop.f32.mrf.mxu0
        %v9162 = vadd.f32 0.0, %v9161
        %v9163 = vpop.f32.mrf.mxu0
        %v9164 = vpop.f32.mrf.mxu0
        %v9165 = vadd.f32 0.0, %v9164
        %v9166 = vpop.f32.mrf.mxu0
        %9167 = vmatprep.mubr.bf16.mxu0 0
        %9168 = vmatmul.mubr.bf16.gmra.mxu0 %v8993
        %v9169 = vpop.f32.mrf.mxu0
        %v9170 = vadd.f32 0.0, %v9169
        %v9171 = vpop.f32.mrf.mxu0
        %v9172 = vpop.f32.mrf.mxu0
        %v9173 = vadd.f32 0.0, %v9172
        %v9174 = vpop.f32.mrf.mxu0
        %9175 = vmatprep.mubr.bf16.mxu0 0
        %9176 = vmatmul.mubr.bf16.gmra.mxu0 %v8996
        %v9177 = vpop.f32.mrf.mxu0
        %v9178 = vadd.f32 0.0, %v9177
        %v9179 = vpop.f32.mrf.mxu0
        %v9180 = vpop.f32.mrf.mxu0
        %v9181 = vadd.f32 0.0, %v9180
        %v9182 = vpop.f32.mrf.mxu0
        %9183 = vmatprep.mubr.bf16.mxu0 0
        %9184 = vmatmul.mubr.bf16.gmra.mxu0 %v8999
        %v9185 = vpop.f32.mrf.mxu0
        %v9186 = vadd.f32 0.0, %v9185
        %v9187 = vpop.f32.mrf.mxu0
        %v9188 = vpop.f32.mrf.mxu0
        %v9189 = vadd.f32 0.0, %v9188
        %v9190 = vpop.f32.mrf.mxu0
        %9191 = vmatprep.mubr.bf16.mxu0 0
        %9192 = vmatmul.mubr.bf16.gmra.mxu0 %v9002
        %v9193 = vpop.f32.mrf.mxu0
        %v9194 = vadd.f32 0.0, %v9193
        %v9195 = vpop.f32.mrf.mxu0
        %v9196 = vpop.f32.mrf.mxu0
        %v9197 = vadd.f32 0.0, %v9196
        %v9198 = vpop.f32.mrf.mxu0
        %9199 = vmatprep.mubr.bf16.mxu0 0
        %9200 = vmatmul.mubr.bf16.gmra.mxu0 %v9005
        %v9201 = vpop.f32.mrf.mxu0
        %v9202 = vadd.f32 0.0, %v9201
        %v9203 = vpop.f32.mrf.mxu0
        %v9204 = vpop.f32.mrf.mxu0
        %v9205 = vadd.f32 0.0, %v9204
        %v9206 = vpop.f32.mrf.mxu0
        %9207 = vdwg.mxu0
        %v9208 = vadd.f32 %v8562, %v9042
        %v9209 = vadd.f32 %v8563, %v9045
        %v9210 = vadd.f32 %v8564, %v9050
        %v9211 = vadd.f32 %v8565, %v9053
        %v9212 = vadd.f32 %v8566, %v9058
        %v9213 = vadd.f32 %v8567, %v9061
        %v9214 = vadd.f32 %v8568, %v9066
        %v9215 = vadd.f32 %v8569, %v9069
        %v9216 = vadd.f32 %v8570, %v9074
        %v9217 = vadd.f32 %v8571, %v9077
        %v9218 = vadd.f32 %v8572, %v9082
        %v9219 = vadd.f32 %v8573, %v9085
        %v9220 = vadd.f32 %v8574, %v9090
        %v9221 = vadd.f32 %v8575, %v9093
        %v9222 = vadd.f32 %v8576, %v9098
        %v9223 = vadd.f32 %v8577, %v9101
        %v9224 = vadd.f32 %v8578, %v9106
        %v9225 = vadd.f32 %v8579, %v9109
        %v9226 = vadd.f32 %v8580, %v9114
        %v9227 = vadd.f32 %v8581, %v9117
        %v9228 = vadd.f32 %v8582, %v9122
        %v9229 = vadd.f32 %v8583, %v9125
        %v9230 = vadd.f32 %v8584, %v9130
        %v9231 = vadd.f32 %v8585, %v9133
        %v9232 = vadd.f32 %v8586, %v9138
        %v9233 = vadd.f32 %v8587, %v9141
        %v9234 = vadd.f32 %v8588, %v9146
        %v9235 = vadd.f32 %v8589, %v9149
        %v9236 = vadd.f32 %v8590, %v9154
        %v9237 = vadd.f32 %v8591, %v9157
        %v9238 = vadd.f32 %v8592, %v9162
        %v9239 = vadd.f32 %v8593, %v9165
        %v9240 = vadd.f32 %v8594, %v9170
        %v9241 = vadd.f32 %v8595, %v9173
        %v9242 = vadd.f32 %v8596, %v9178
        %v9243 = vadd.f32 %v8597, %v9181
        %v9244 = vadd.f32 %v8598, %v9186
        %v9245 = vadd.f32 %v8599, %v9189
        %v9246 = vadd.f32 %v8600, %v9194
        %v9247 = vadd.f32 %v8601, %v9197
        %v9248 = vadd.f32 %v8602, %v9202
        %v9249 = vadd.f32 %v8603, %v9205
        %v9250 = vld [vmem:[#allocation2 + $0x18] sm:$0xf]
        %v9251 = vld [vmem:[#allocation2 + $0x1c] sm:$0xf]
        %v9252 = vld [vmem:[#allocation2 + $0x20] sm:$0xf]
        %v9253 = vld [vmem:[#allocation2 + $0x24] sm:$0xf]
        %v9254 = vld [vmem:[#allocation2 + $0x28] sm:$0xf]
        %v9255 = vld [vmem:[#allocation2 + $0x2c] sm:$0xf]
        %v9256 = vld [vmem:[#allocation2 + $0x30] sm:$0xf]
        %v9257 = vld [vmem:[#allocation2 + $0x34] sm:$0xf]
        %v9258 = vld [vmem:[#allocation2 + $0x38] sm:$0xf]
        %v9259 = vld [vmem:[#allocation2 + $0x3c] sm:$0xf]
        %v9260 = vld [vmem:[#allocation2 + $0x40] sm:$0xf]
        %v9261 = vld [vmem:[#allocation2 + $0x44] sm:$0xf]
        %v9262 = vld [vmem:[#allocation2 + $0x48] sm:$0xf]
        %v9263 = vld [vmem:[#allocation2 + $0x4c] sm:$0xf]
        %v9264 = vld [vmem:[#allocation2 + $0x50] sm:$0xf]
        %v9265 = vld [vmem:[#allocation2 + $0x54] sm:$0xf]
        %v9266 = vld [vmem:[#allocation2 + $0x58] sm:$0xf]
        %v9267 = vld [vmem:[#allocation2 + $0x5c] sm:$0xf]
        %v9268 = vld [vmem:[#allocation2 + $0x60] sm:$0xf]
        %v9269 = vld [vmem:[#allocation2 + $0x64] sm:$0xf]
        %v9270 = vld [vmem:[#allocation2 + $0x68] sm:$0xf]
        %v9271 = vld [vmem:[#allocation2 + $0x6c] sm:$0xf]
        %v9272 = vld [vmem:[#allocation2 + $0x70] sm:$0xf]
        %v9273 = vld [vmem:[#allocation2 + $0x74] sm:$0xf]
        %v9274 = vld [vmem:[#allocation2 + $0x78] sm:$0xf]
        %v9275 = vld [vmem:[#allocation2 + $0x7c] sm:$0xf]
        %v9276 = vld [vmem:[#allocation2 + $0x80] sm:$0xf]
        %v9277 = vld [vmem:[#allocation2 + $0x84] sm:$0xf]
        %v9278 = vld [vmem:[#allocation2 + $0x88] sm:$0xf]
        %v9279 = vld [vmem:[#allocation2 + $0x8c] sm:$0xf]
        %v9280 = vld [vmem:[#allocation2 + $0x90] sm:$0xf]
        %v9281 = vld [vmem:[#allocation2 + $0x94] sm:$0xf]
        %v9282 = vld [vmem:[#allocation2 + $0x98] sm:$0xf]
        %v9283 = vld [vmem:[#allocation2 + $0x9c] sm:$0xf]
        %v9284 = vld [vmem:[#allocation2 + $0xa0] sm:$0xf]
        %v9285 = vld [vmem:[#allocation2 + $0xa4] sm:$0xf]
        %v9286 = vld [vmem:[#allocation2 + $0xa8] sm:$0xf]
        %v9287 = vld [vmem:[#allocation2 + $0xac] sm:$0xf]
        %v9288 = vld [vmem:[#allocation2 + $0xb0] sm:$0xf]
        %v9289 = vld [vmem:[#allocation2 + $0xb4] sm:$0xf]
        %v9290 = vld [vmem:[#allocation2 + $0xb8] sm:$0xf]
        %v9291 = vld [vmem:[#allocation2 + $0xbc] sm:$0xf]
        %v9292 = vld [vmem:[#allocation2 + $0xc0] sm:$0x1]
        %s9293 = scalar_lea.vmem %s5, 96
        %v9294 = vld [vmem:[%s9293] sm:$0xf]
        %v9295 = vld [vmem:[%s9293 + $0x4] sm:$0xf]
        %v9296 = vld [vmem:[%s9293 + $0x8] sm:$0xf]
        %v9297 = vld [vmem:[%s9293 + $0xc] sm:$0xf]
        %v9341 = vunpack.c.l.b16 %v9250
        %v9342 = vunpack.c.l.b16 %v9251
        %v9343 = vunpack.c.l.b16 %v9252
        %v9344 = vunpack.c.l.b16 %v9253
        %v9345 = vunpack.c.l.b16 %v9254
        %v9346 = vunpack.c.l.b16 %v9255
        %v9347 = vunpack.c.l.b16 %v9256
        %v9348 = vunpack.c.l.b16 %v9257
        %v9349 = vunpack.c.l.b16 %v9258
        %v9350 = vunpack.c.l.b16 %v9259
        %v9351 = vunpack.c.l.b16 %v9260
        %v9352 = vunpack.c.l.b16 %v9261
        %v9353 = vunpack.c.l.b16 %v9262
        %v9354 = vunpack.c.l.b16 %v9263
        %v9355 = vunpack.c.l.b16 %v9264
        %v9356 = vunpack.c.l.b16 %v9265
        %v9357 = vunpack.c.l.b16 %v9266
        %v9358 = vunpack.c.l.b16 %v9267
        %v9359 = vunpack.c.l.b16 %v9268
        %v9360 = vunpack.c.l.b16 %v9269
        %v9361 = vunpack.c.l.b16 %v9270
        %v9362 = vunpack.c.l.b16 %v9271
        %v9363 = vunpack.c.l.b16 %v9272
        %v9364 = vunpack.c.l.b16 %v9273
        %v9365 = vunpack.c.l.b16 %v9274
        %v9366 = vunpack.c.l.b16 %v9275
        %v9367 = vunpack.c.l.b16 %v9276
        %v9368 = vunpack.c.l.b16 %v9277
        %v9369 = vunpack.c.l.b16 %v9278
        %v9370 = vunpack.c.l.b16 %v9279
        %v9371 = vunpack.c.l.b16 %v9280
        %v9372 = vunpack.c.l.b16 %v9281
        %v9373 = vunpack.c.l.b16 %v9282
        %v9374 = vunpack.c.l.b16 %v9283
        %v9375 = vunpack.c.l.b16 %v9284
        %v9376 = vunpack.c.l.b16 %v9285
        %v9377 = vunpack.c.l.b16 %v9286
        %v9378 = vunpack.c.l.b16 %v9287
        %v9379 = vunpack.c.l.b16 %v9288
        %v9380 = vunpack.c.l.b16 %v9289
        %v9381 = vunpack.c.l.b16 %v9290
        %v9382 = vunpack.c.l.b16 %v9291
        %v9383 = vunpack.c.l.b16 %v9292
        %v9384 = vpack.c.b16 %v9342, %v9341
        %v9385 = vpack.c.b16 %v9344, %v9343
        %v9386 = vpack.c.b16 %v9346, %v9345
        %v9387 = vpack.c.b16 %v9348, %v9347
        %v9388 = vpack.c.b16 %v9350, %v9349
        %v9389 = vpack.c.b16 %v9352, %v9351
        %v9390 = vpack.c.b16 %v9354, %v9353
        %v9391 = vpack.c.b16 %v9356, %v9355
        %v9392 = vpack.c.b16 %v9358, %v9357
        %v9393 = vpack.c.b16 %v9360, %v9359
        %v9394 = vpack.c.b16 %v9362, %v9361
        %v9395 = vpack.c.b16 %v9364, %v9363
        %v9396 = vpack.c.b16 %v9366, %v9365
        %v9397 = vpack.c.b16 %v9368, %v9367
        %v9398 = vpack.c.b16 %v9370, %v9369
        %v9399 = vpack.c.b16 %v9372, %v9371
        %v9400 = vpack.c.b16 %v9374, %v9373
        %v9401 = vpack.c.b16 %v9376, %v9375
        %v9402 = vpack.c.b16 %v9378, %v9377
        %v9403 = vpack.c.b16 %v9380, %v9379
        %v9404 = vpack.c.b16 %v9382, %v9381
        %v9405 = vpack.c.b16 %v9383, %v9383
        %v9407 = vshrl.u32 %v9384, 16
        %v9409 = vshll.u32 %v9384, 16
        %v9411 = vrot.slane %v9409, 1
        %v9412 = vor.u32 %v9407, %v9411
        %v9414 = vshll.u32 %v9385, 16
        %v9416 = vrot.slane %v9414, 1
        %v9417 = vsel %vm3516, %v9412, %v9416
        %v9418 = vshrl.u32 %v9385, 16
        %v9420 = vor.u32 %v9418, %v9416
        %v9422 = vshll.u32 %v9386, 16
        %v9424 = vrot.slane %v9422, 1
        %v9425 = vsel %vm3516, %v9420, %v9424
        %v9426 = vshrl.u32 %v9386, 16
        %v9428 = vor.u32 %v9426, %v9424
        %v9430 = vshll.u32 %v9387, 16
        %v9432 = vrot.slane %v9430, 1
        %v9433 = vsel %vm3516, %v9428, %v9432
        %v9434 = vshrl.u32 %v9387, 16
        %v9436 = vor.u32 %v9434, %v9432
        %v9438 = vshll.u32 %v9388, 16
        %v9440 = vrot.slane %v9438, 1
        %v9441 = vsel %vm3516, %v9436, %v9440
        %v9442 = vshrl.u32 %v9388, 16
        %v9444 = vor.u32 %v9442, %v9440
        %v9446 = vshll.u32 %v9389, 16
        %v9448 = vrot.slane %v9446, 1
        %v9449 = vsel %vm3516, %v9444, %v9448
        %v9450 = vshrl.u32 %v9389, 16
        %v9452 = vor.u32 %v9450, %v9448
        %v9454 = vshll.u32 %v9390, 16
        %v9456 = vrot.slane %v9454, 1
        %v9457 = vsel %vm3516, %v9452, %v9456
        %v9458 = vshrl.u32 %v9390, 16
        %v9460 = vor.u32 %v9458, %v9456
        %v9462 = vshll.u32 %v9391, 16
        %v9464 = vrot.slane %v9462, 1
        %v9465 = vsel %vm3516, %v9460, %v9464
        %v9466 = vshrl.u32 %v9391, 16
        %v9468 = vor.u32 %v9466, %v9464
        %v9470 = vshll.u32 %v9392, 16
        %v9472 = vrot.slane %v9470, 1
        %v9473 = vsel %vm3516, %v9468, %v9472
        %v9474 = vshrl.u32 %v9392, 16
        %v9476 = vor.u32 %v9474, %v9472
        %v9478 = vshll.u32 %v9393, 16
        %v9480 = vrot.slane %v9478, 1
        %v9481 = vsel %vm3516, %v9476, %v9480
        %v9482 = vshrl.u32 %v9393, 16
        %v9484 = vor.u32 %v9482, %v9480
        %v9486 = vshll.u32 %v9394, 16
        %v9488 = vrot.slane %v9486, 1
        %v9489 = vsel %vm3516, %v9484, %v9488
        %v9490 = vshrl.u32 %v9394, 16
        %v9492 = vor.u32 %v9490, %v9488
        %v9494 = vshll.u32 %v9395, 16
        %v9496 = vrot.slane %v9494, 1
        %v9497 = vsel %vm3516, %v9492, %v9496
        %v9498 = vshrl.u32 %v9395, 16
        %v9500 = vor.u32 %v9498, %v9496
        %v9502 = vshll.u32 %v9396, 16
        %v9504 = vrot.slane %v9502, 1
        %v9505 = vsel %vm3516, %v9500, %v9504
        %v9506 = vshrl.u32 %v9396, 16
        %v9508 = vor.u32 %v9506, %v9504
        %v9510 = vshll.u32 %v9397, 16
        %v9512 = vrot.slane %v9510, 1
        %v9513 = vsel %vm3516, %v9508, %v9512
        %v9514 = vshrl.u32 %v9397, 16
        %v9516 = vor.u32 %v9514, %v9512
        %v9518 = vshll.u32 %v9398, 16
        %v9520 = vrot.slane %v9518, 1
        %v9521 = vsel %vm3516, %v9516, %v9520
        %v9522 = vshrl.u32 %v9398, 16
        %v9524 = vor.u32 %v9522, %v9520
        %v9526 = vshll.u32 %v9399, 16
        %v9528 = vrot.slane %v9526, 1
        %v9529 = vsel %vm3516, %v9524, %v9528
        %v9530 = vshrl.u32 %v9399, 16
        %v9532 = vor.u32 %v9530, %v9528
        %v9534 = vshll.u32 %v9400, 16
        %v9536 = vrot.slane %v9534, 1
        %v9537 = vsel %vm3516, %v9532, %v9536
        %v9538 = vshrl.u32 %v9400, 16
        %v9540 = vor.u32 %v9538, %v9536
        %v9542 = vshll.u32 %v9401, 16
        %v9544 = vrot.slane %v9542, 1
        %v9545 = vsel %vm3516, %v9540, %v9544
        %v9546 = vshrl.u32 %v9401, 16
        %v9548 = vor.u32 %v9546, %v9544
        %v9550 = vshll.u32 %v9402, 16
        %v9552 = vrot.slane %v9550, 1
        %v9553 = vsel %vm3516, %v9548, %v9552
        %v9554 = vshrl.u32 %v9402, 16
        %v9556 = vor.u32 %v9554, %v9552
        %v9558 = vshll.u32 %v9403, 16
        %v9560 = vrot.slane %v9558, 1
        %v9561 = vsel %vm3516, %v9556, %v9560
        %v9562 = vshrl.u32 %v9403, 16
        %v9564 = vor.u32 %v9562, %v9560
        %v9566 = vshll.u32 %v9404, 16
        %v9568 = vrot.slane %v9566, 1
        %v9569 = vsel %vm3516, %v9564, %v9568
        %v9570 = vshrl.u32 %v9404, 16
        %v9572 = vor.u32 %v9570, %v9568
        %v9574 = vshll.u32 %v9405, 16
        %v9576 = vrot.slane %v9574, 1
        %v9577 = vsel %vm3516, %v9572, %v9576
        %v9582 = vunpack.c.l.b16 %v9294
        %v9583 = vunpack.c.l.b16 %v9295
        %v9584 = vunpack.c.l.b16 %v9296
        %v9585 = vunpack.c.l.b16 %v9297
        %v9586 = vpack.c.b16 %v9583, %v9582
        %v9587 = vpack.c.b16 %v9585, %v9584
        %v9591 = vsel %vm6424, %v9417, 0
        %v9594 = vsel %vm6424, %v9425, 0
        %v9597 = vsel %vm6424, %v9433, 0
        %v9600 = vsel %vm6424, %v9441, 0
        %v9603 = vsel %vm6424, %v9449, 0
        %v9606 = vsel %vm6424, %v9457, 0
        %v9609 = vsel %vm6424, %v9465, 0
        %v9612 = vsel %vm6424, %v9473, 0
        %v9615 = vsel %vm6424, %v9481, 0
        %v9618 = vsel %vm6424, %v9489, 0
        %v9621 = vsel %vm6424, %v9497, 0
        %v9624 = vsel %vm6424, %v9505, 0
        %v9627 = vsel %vm6424, %v9513, 0
        %v9630 = vsel %vm6424, %v9521, 0
        %v9633 = vsel %vm6424, %v9529, 0
        %v9636 = vsel %vm6424, %v9537, 0
        %v9639 = vsel %vm6424, %v9545, 0
        %v9642 = vsel %vm6424, %v9553, 0
        %v9645 = vsel %vm6424, %v9561, 0
        %v9648 = vsel %vm6424, %v9569, 0
        %v9651 = vsel %vm6424, %v9577, 0
        %9653 = vmatprep.subr.bf16.mxu0 0
        %9654 = vmatpush1.bf16.msra.mxu0 0
        %9655 = vmatprep.subr.bf16.mxu0 0
        %9656 = vmatpush1.bf16.msra.mxu0 0
        %9657 = vmatprep.subr.bf16.mxu0 0
        %9658 = vmatpush1.bf16.msra.mxu0 0
        %9659 = vmatprep.subr.bf16.mxu0 0
        %9660 = vmatpush1.bf16.msra.mxu0 0
        %9661 = vmatprep.subr.bf16.mxu0 0
        %9662 = vmatpush1.bf16.msra.mxu0 0
        %9663 = vmatprep.subr.bf16.mxu0 0
        %9664 = vmatpush1.bf16.msra.mxu0 0
        %9665 = vmatprep.subr.bf16.mxu0 0
        %9666 = vmatpush1.bf16.msra.mxu0 %v9587
        %9667 = vmatprep.subr.bf16.mxu0 0
        %9668 = vmatpush1.bf16.msra.mxu0 %v9586
        %9669 = vmatprep.subr.bf16.mxu0 0
        %9670 = vmatpush2.bf16.msra.mxu0 0
        %9671 = vmatprep.subr.bf16.mxu0 0
        %9672 = vmatpush2.bf16.msra.mxu0 0
        %9673 = vmatprep.subr.bf16.mxu0 0
        %9674 = vmatpush2.bf16.msra.mxu0 0
        %9675 = vmatprep.subr.bf16.mxu0 0
        %9676 = vmatpush2.bf16.msra.mxu0 0
        %9677 = vmatprep.subr.bf16.mxu0 0
        %9678 = vmatpush2.bf16.msra.mxu0 0
        %9679 = vmatprep.subr.bf16.mxu0 0
        %9680 = vmatpush2.bf16.msra.mxu0 0
        %9681 = vmatprep.subr.bf16.mxu0 0
        %9682 = vmatpush2.bf16.msra.mxu0 0
        %9683 = vmatprep.subr.bf16.mxu0 0
        %9684 = vmatpush2.bf16.msra.mxu0 0
        %9685 = vmatprep.mubr.bf16.mxu0 0
        %9686 = vmatmul.mubr.bf16.gmra.mxu0 %v9591
        %v9687 = vpop.f32.mrf.mxu0
        %v9688 = vadd.f32 0.0, %v9687
        %v9689 = vpop.f32.mrf.mxu0
        %v9690 = vpop.f32.mrf.mxu0
        %v9691 = vadd.f32 0.0, %v9690
        %v9692 = vpop.f32.mrf.mxu0
        %9693 = vmatprep.mubr.bf16.mxu0 0
        %9694 = vmatmul.mubr.bf16.gmra.mxu0 %v9594
        %v9695 = vpop.f32.mrf.mxu0
        %v9696 = vadd.f32 0.0, %v9695
        %v9697 = vpop.f32.mrf.mxu0
        %v9698 = vpop.f32.mrf.mxu0
        %v9699 = vadd.f32 0.0, %v9698
        %v9700 = vpop.f32.mrf.mxu0
        %9701 = vmatprep.mubr.bf16.mxu0 0
        %9702 = vmatmul.mubr.bf16.gmra.mxu0 %v9597
        %v9703 = vpop.f32.mrf.mxu0
        %v9704 = vadd.f32 0.0, %v9703
        %v9705 = vpop.f32.mrf.mxu0
        %v9706 = vpop.f32.mrf.mxu0
        %v9707 = vadd.f32 0.0, %v9706
        %v9708 = vpop.f32.mrf.mxu0
        %9709 = vmatprep.mubr.bf16.mxu0 0
        %9710 = vmatmul.mubr.bf16.gmra.mxu0 %v9600
        %v9711 = vpop.f32.mrf.mxu0
        %v9712 = vadd.f32 0.0, %v9711
        %v9713 = vpop.f32.mrf.mxu0
        %v9714 = vpop.f32.mrf.mxu0
        %v9715 = vadd.f32 0.0, %v9714
        %v9716 = vpop.f32.mrf.mxu0
        %9717 = vmatprep.mubr.bf16.mxu0 0
        %9718 = vmatmul.mubr.bf16.gmra.mxu0 %v9603
        %v9719 = vpop.f32.mrf.mxu0
        %v9720 = vadd.f32 0.0, %v9719
        %v9721 = vpop.f32.mrf.mxu0
        %v9722 = vpop.f32.mrf.mxu0
        %v9723 = vadd.f32 0.0, %v9722
        %v9724 = vpop.f32.mrf.mxu0
        %9725 = vmatprep.mubr.bf16.mxu0 0
        %9726 = vmatmul.mubr.bf16.gmra.mxu0 %v9606
        %v9727 = vpop.f32.mrf.mxu0
        %v9728 = vadd.f32 0.0, %v9727
        %v9729 = vpop.f32.mrf.mxu0
        %v9730 = vpop.f32.mrf.mxu0
        %v9731 = vadd.f32 0.0, %v9730
        %v9732 = vpop.f32.mrf.mxu0
        %9733 = vmatprep.mubr.bf16.mxu0 0
        %9734 = vmatmul.mubr.bf16.gmra.mxu0 %v9609
        %v9735 = vpop.f32.mrf.mxu0
        %v9736 = vadd.f32 0.0, %v9735
        %v9737 = vpop.f32.mrf.mxu0
        %v9738 = vpop.f32.mrf.mxu0
        %v9739 = vadd.f32 0.0, %v9738
        %v9740 = vpop.f32.mrf.mxu0
        %9741 = vmatprep.mubr.bf16.mxu0 0
        %9742 = vmatmul.mubr.bf16.gmra.mxu0 %v9612
        %v9743 = vpop.f32.mrf.mxu0
        %v9744 = vadd.f32 0.0, %v9743
        %v9745 = vpop.f32.mrf.mxu0
        %v9746 = vpop.f32.mrf.mxu0
        %v9747 = vadd.f32 0.0, %v9746
        %v9748 = vpop.f32.mrf.mxu0
        %9749 = vmatprep.mubr.bf16.mxu0 0
        %9750 = vmatmul.mubr.bf16.gmra.mxu0 %v9615
        %v9751 = vpop.f32.mrf.mxu0
        %v9752 = vadd.f32 0.0, %v9751
        %v9753 = vpop.f32.mrf.mxu0
        %v9754 = vpop.f32.mrf.mxu0
        %v9755 = vadd.f32 0.0, %v9754
        %v9756 = vpop.f32.mrf.mxu0
        %9757 = vmatprep.mubr.bf16.mxu0 0
        %9758 = vmatmul.mubr.bf16.gmra.mxu0 %v9618
        %v9759 = vpop.f32.mrf.mxu0
        %v9760 = vadd.f32 0.0, %v9759
        %v9761 = vpop.f32.mrf.mxu0
        %v9762 = vpop.f32.mrf.mxu0
        %v9763 = vadd.f32 0.0, %v9762
        %v9764 = vpop.f32.mrf.mxu0
        %9765 = vmatprep.mubr.bf16.mxu0 0
        %9766 = vmatmul.mubr.bf16.gmra.mxu0 %v9621
        %v9767 = vpop.f32.mrf.mxu0
        %v9768 = vadd.f32 0.0, %v9767
        %v9769 = vpop.f32.mrf.mxu0
        %v9770 = vpop.f32.mrf.mxu0
        %v9771 = vadd.f32 0.0, %v9770
        %v9772 = vpop.f32.mrf.mxu0
        %9773 = vmatprep.mubr.bf16.mxu0 0
        %9774 = vmatmul.mubr.bf16.gmra.mxu0 %v9624
        %v9775 = vpop.f32.mrf.mxu0
        %v9776 = vadd.f32 0.0, %v9775
        %v9777 = vpop.f32.mrf.mxu0
        %v9778 = vpop.f32.mrf.mxu0
        %v9779 = vadd.f32 0.0, %v9778
        %v9780 = vpop.f32.mrf.mxu0
        %9781 = vmatprep.mubr.bf16.mxu0 0
        %9782 = vmatmul.mubr.bf16.gmra.mxu0 %v9627
        %v9783 = vpop.f32.mrf.mxu0
        %v9784 = vadd.f32 0.0, %v9783
        %v9785 = vpop.f32.mrf.mxu0
        %v9786 = vpop.f32.mrf.mxu0
        %v9787 = vadd.f32 0.0, %v9786
        %v9788 = vpop.f32.mrf.mxu0
        %9789 = vmatprep.mubr.bf16.mxu0 0
        %9790 = vmatmul.mubr.bf16.gmra.mxu0 %v9630
        %v9791 = vpop.f32.mrf.mxu0
        %v9792 = vadd.f32 0.0, %v9791
        %v9793 = vpop.f32.mrf.mxu0
        %v9794 = vpop.f32.mrf.mxu0
        %v9795 = vadd.f32 0.0, %v9794
        %v9796 = vpop.f32.mrf.mxu0
        %9797 = vmatprep.mubr.bf16.mxu0 0
        %9798 = vmatmul.mubr.bf16.gmra.mxu0 %v9633
        %v9799 = vpop.f32.mrf.mxu0
        %v9800 = vadd.f32 0.0, %v9799
        %v9801 = vpop.f32.mrf.mxu0
        %v9802 = vpop.f32.mrf.mxu0
        %v9803 = vadd.f32 0.0, %v9802
        %v9804 = vpop.f32.mrf.mxu0
        %9805 = vmatprep.mubr.bf16.mxu0 0
        %9806 = vmatmul.mubr.bf16.gmra.mxu0 %v9636
        %v9807 = vpop.f32.mrf.mxu0
        %v9808 = vadd.f32 0.0, %v9807
        %v9809 = vpop.f32.mrf.mxu0
        %v9810 = vpop.f32.mrf.mxu0
        %v9811 = vadd.f32 0.0, %v9810
        %v9812 = vpop.f32.mrf.mxu0
        %9813 = vmatprep.mubr.bf16.mxu0 0
        %9814 = vmatmul.mubr.bf16.gmra.mxu0 %v9639
        %v9815 = vpop.f32.mrf.mxu0
        %v9816 = vadd.f32 0.0, %v9815
        %v9817 = vpop.f32.mrf.mxu0
        %v9818 = vpop.f32.mrf.mxu0
        %v9819 = vadd.f32 0.0, %v9818
        %v9820 = vpop.f32.mrf.mxu0
        %9821 = vmatprep.mubr.bf16.mxu0 0
        %9822 = vmatmul.mubr.bf16.gmra.mxu0 %v9642
        %v9823 = vpop.f32.mrf.mxu0
        %v9824 = vadd.f32 0.0, %v9823
        %v9825 = vpop.f32.mrf.mxu0
        %v9826 = vpop.f32.mrf.mxu0
        %v9827 = vadd.f32 0.0, %v9826
        %v9828 = vpop.f32.mrf.mxu0
        %9829 = vmatprep.mubr.bf16.mxu0 0
        %9830 = vmatmul.mubr.bf16.gmra.mxu0 %v9645
        %v9831 = vpop.f32.mrf.mxu0
        %v9832 = vadd.f32 0.0, %v9831
        %v9833 = vpop.f32.mrf.mxu0
        %v9834 = vpop.f32.mrf.mxu0
        %v9835 = vadd.f32 0.0, %v9834
        %v9836 = vpop.f32.mrf.mxu0
        %9837 = vmatprep.mubr.bf16.mxu0 0
        %9838 = vmatmul.mubr.bf16.gmra.mxu0 %v9648
        %v9839 = vpop.f32.mrf.mxu0
        %v9840 = vadd.f32 0.0, %v9839
        %v9841 = vpop.f32.mrf.mxu0
        %v9842 = vpop.f32.mrf.mxu0
        %v9843 = vadd.f32 0.0, %v9842
        %v9844 = vpop.f32.mrf.mxu0
        %9845 = vmatprep.mubr.bf16.mxu0 0
        %9846 = vmatmul.mubr.bf16.gmra.mxu0 %v9651
        %v9847 = vpop.f32.mrf.mxu0
        %v9848 = vadd.f32 0.0, %v9847
        %v9849 = vpop.f32.mrf.mxu0
        %v9850 = vpop.f32.mrf.mxu0
        %v9851 = vadd.f32 0.0, %v9850
        %v9852 = vpop.f32.mrf.mxu0
        %9853 = vdwg.mxu0
        %v9854 = vadd.f32 %v9208, %v9688
        %v9855 = vadd.f32 %v9209, %v9691
        %v9856 = vadd.f32 %v9210, %v9696
        %v9857 = vadd.f32 %v9211, %v9699
        %v9858 = vadd.f32 %v9212, %v9704
        %v9859 = vadd.f32 %v9213, %v9707
        %v9860 = vadd.f32 %v9214, %v9712
        %v9861 = vadd.f32 %v9215, %v9715
        %v9862 = vadd.f32 %v9216, %v9720
        %v9863 = vadd.f32 %v9217, %v9723
        %v9864 = vadd.f32 %v9218, %v9728
        %v9865 = vadd.f32 %v9219, %v9731
        %v9866 = vadd.f32 %v9220, %v9736
        %v9867 = vadd.f32 %v9221, %v9739
        %v9868 = vadd.f32 %v9222, %v9744
        %v9869 = vadd.f32 %v9223, %v9747
        %v9870 = vadd.f32 %v9224, %v9752
        %v9871 = vadd.f32 %v9225, %v9755
        %v9872 = vadd.f32 %v9226, %v9760
        %v9873 = vadd.f32 %v9227, %v9763
        %v9874 = vadd.f32 %v9228, %v9768
        %v9875 = vadd.f32 %v9229, %v9771
        %v9876 = vadd.f32 %v9230, %v9776
        %v9877 = vadd.f32 %v9231, %v9779
        %v9878 = vadd.f32 %v9232, %v9784
        %v9879 = vadd.f32 %v9233, %v9787
        %v9880 = vadd.f32 %v9234, %v9792
        %v9881 = vadd.f32 %v9235, %v9795
        %v9882 = vadd.f32 %v9236, %v9800
        %v9883 = vadd.f32 %v9237, %v9803
        %v9884 = vadd.f32 %v9238, %v9808
        %v9885 = vadd.f32 %v9239, %v9811
        %v9886 = vadd.f32 %v9240, %v9816
        %v9887 = vadd.f32 %v9241, %v9819
        %v9888 = vadd.f32 %v9242, %v9824
        %v9889 = vadd.f32 %v9243, %v9827
        %v9890 = vadd.f32 %v9244, %v9832
        %v9891 = vadd.f32 %v9245, %v9835
        %v9892 = vadd.f32 %v9246, %v9840
        %v9893 = vadd.f32 %v9247, %v9843
        %v9894 = vadd.f32 %v9248, %v9848
        %v9895 = vadd.f32 %v9249, %v9851
        %v9896 = vld [vmem:[#allocation2 + $0x18] sm:$0xe]
        %s9897 = scalar_lea.vmem %s5, 112
        %v9898 = vld [vmem:[%s9897] sm:$0xf]
        %v9899 = vld [vmem:[%s9897 + $0x4] sm:$0xf]
        %v9900 = vld [vmem:[%s9897 + $0x8] sm:$0xf]
        %v9901 = vld [vmem:[%s9897 + $0xc] sm:$0xf]
        %v9903 = vunpack.c.l.b16 %v9896
        %v9904 = vpack.c.b16 %v9342, %v9903
        %v9905 = vrot.slane %v9904, 1
        %v9906 = vrot.slane %v9385, 1
        %v9907 = vsel %vm4836, %v9905, %v9906
        %v9908 = vrot.slane %v9386, 1
        %v9909 = vsel %vm4836, %v9906, %v9908
        %v9910 = vrot.slane %v9387, 1
        %v9911 = vsel %vm4836, %v9908, %v9910
        %v9912 = vrot.slane %v9388, 1
        %v9913 = vsel %vm4836, %v9910, %v9912
        %v9914 = vrot.slane %v9389, 1
        %v9915 = vsel %vm4836, %v9912, %v9914
        %v9916 = vrot.slane %v9390, 1
        %v9917 = vsel %vm4836, %v9914, %v9916
        %v9918 = vrot.slane %v9391, 1
        %v9919 = vsel %vm4836, %v9916, %v9918
        %v9920 = vrot.slane %v9392, 1
        %v9921 = vsel %vm4836, %v9918, %v9920
        %v9922 = vrot.slane %v9393, 1
        %v9923 = vsel %vm4836, %v9920, %v9922
        %v9924 = vrot.slane %v9394, 1
        %v9925 = vsel %vm4836, %v9922, %v9924
        %v9926 = vrot.slane %v9395, 1
        %v9927 = vsel %vm4836, %v9924, %v9926
        %v9928 = vrot.slane %v9396, 1
        %v9929 = vsel %vm4836, %v9926, %v9928
        %v9930 = vrot.slane %v9397, 1
        %v9931 = vsel %vm4836, %v9928, %v9930
        %v9932 = vrot.slane %v9398, 1
        %v9933 = vsel %vm4836, %v9930, %v9932
        %v9934 = vrot.slane %v9399, 1
        %v9935 = vsel %vm4836, %v9932, %v9934
        %v9936 = vrot.slane %v9400, 1
        %v9937 = vsel %vm4836, %v9934, %v9936
        %v9938 = vrot.slane %v9401, 1
        %v9939 = vsel %vm4836, %v9936, %v9938
        %v9940 = vrot.slane %v9402, 1
        %v9941 = vsel %vm4836, %v9938, %v9940
        %v9942 = vrot.slane %v9403, 1
        %v9943 = vsel %vm4836, %v9940, %v9942
        %v9944 = vrot.slane %v9404, 1
        %v9945 = vsel %vm4836, %v9942, %v9944
        %v9946 = vrot.slane %v9405, 1
        %v9947 = vsel %vm4836, %v9944, %v9946
        %v9952 = vunpack.c.l.b16 %v9898
        %v9953 = vunpack.c.l.b16 %v9899
        %v9954 = vunpack.c.l.b16 %v9900
        %v9955 = vunpack.c.l.b16 %v9901
        %v9956 = vpack.c.b16 %v9953, %v9952
        %v9957 = vpack.c.b16 %v9955, %v9954
        %v9961 = vsel %vm6424, %v9907, 0
        %v9964 = vsel %vm6424, %v9909, 0
        %v9967 = vsel %vm6424, %v9911, 0
        %v9970 = vsel %vm6424, %v9913, 0
        %v9973 = vsel %vm6424, %v9915, 0
        %v9976 = vsel %vm6424, %v9917, 0
        %v9979 = vsel %vm6424, %v9919, 0
        %v9982 = vsel %vm6424, %v9921, 0
        %v9985 = vsel %vm6424, %v9923, 0
        %v9988 = vsel %vm6424, %v9925, 0
        %v9991 = vsel %vm6424, %v9927, 0
        %v9994 = vsel %vm6424, %v9929, 0
        %v9997 = vsel %vm6424, %v9931, 0
        %v10000 = vsel %vm6424, %v9933, 0
        %v10003 = vsel %vm6424, %v9935, 0
        %v10006 = vsel %vm6424, %v9937, 0
        %v10009 = vsel %vm6424, %v9939, 0
        %v10012 = vsel %vm6424, %v9941, 0
        %v10015 = vsel %vm6424, %v9943, 0
        %v10018 = vsel %vm6424, %v9945, 0
        %v10021 = vsel %vm6424, %v9947, 0
        %10023 = vmatprep.subr.bf16.mxu0 0
        %10024 = vmatpush1.bf16.msra.mxu0 0
        %10025 = vmatprep.subr.bf16.mxu0 0
        %10026 = vmatpush1.bf16.msra.mxu0 0
        %10027 = vmatprep.subr.bf16.mxu0 0
        %10028 = vmatpush1.bf16.msra.mxu0 0
        %10029 = vmatprep.subr.bf16.mxu0 0
        %10030 = vmatpush1.bf16.msra.mxu0 0
        %10031 = vmatprep.subr.bf16.mxu0 0
        %10032 = vmatpush1.bf16.msra.mxu0 0
        %10033 = vmatprep.subr.bf16.mxu0 0
        %10034 = vmatpush1.bf16.msra.mxu0 0
        %10035 = vmatprep.subr.bf16.mxu0 0
        %10036 = vmatpush1.bf16.msra.mxu0 %v9957
        %10037 = vmatprep.subr.bf16.mxu0 0
        %10038 = vmatpush1.bf16.msra.mxu0 %v9956
        %10039 = vmatprep.subr.bf16.mxu0 0
        %10040 = vmatpush2.bf16.msra.mxu0 0
        %10041 = vmatprep.subr.bf16.mxu0 0
        %10042 = vmatpush2.bf16.msra.mxu0 0
        %10043 = vmatprep.subr.bf16.mxu0 0
        %10044 = vmatpush2.bf16.msra.mxu0 0
        %10045 = vmatprep.subr.bf16.mxu0 0
        %10046 = vmatpush2.bf16.msra.mxu0 0
        %10047 = vmatprep.subr.bf16.mxu0 0
        %10048 = vmatpush2.bf16.msra.mxu0 0
        %10049 = vmatprep.subr.bf16.mxu0 0
        %10050 = vmatpush2.bf16.msra.mxu0 0
        %10051 = vmatprep.subr.bf16.mxu0 0
        %10052 = vmatpush2.bf16.msra.mxu0 0
        %10053 = vmatprep.subr.bf16.mxu0 0
        %10054 = vmatpush2.bf16.msra.mxu0 0
        %10055 = vmatprep.mubr.bf16.mxu0 0
        %10056 = vmatmul.mubr.bf16.gmra.mxu0 %v9961
        %v10057 = vpop.f32.mrf.mxu0
        %v10058 = vadd.f32 0.0, %v10057
        %v10059 = vpop.f32.mrf.mxu0
        %v10060 = vpop.f32.mrf.mxu0
        %v10061 = vadd.f32 0.0, %v10060
        %v10062 = vpop.f32.mrf.mxu0
        %10063 = vmatprep.mubr.bf16.mxu0 0
        %10064 = vmatmul.mubr.bf16.gmra.mxu0 %v9964
        %v10065 = vpop.f32.mrf.mxu0
        %v10066 = vadd.f32 0.0, %v10065
        %v10067 = vpop.f32.mrf.mxu0
        %v10068 = vpop.f32.mrf.mxu0
        %v10069 = vadd.f32 0.0, %v10068
        %v10070 = vpop.f32.mrf.mxu0
        %10071 = vmatprep.mubr.bf16.mxu0 0
        %10072 = vmatmul.mubr.bf16.gmra.mxu0 %v9967
        %v10073 = vpop.f32.mrf.mxu0
        %v10074 = vadd.f32 0.0, %v10073
        %v10075 = vpop.f32.mrf.mxu0
        %v10076 = vpop.f32.mrf.mxu0
        %v10077 = vadd.f32 0.0, %v10076
        %v10078 = vpop.f32.mrf.mxu0
        %10079 = vmatprep.mubr.bf16.mxu0 0
        %10080 = vmatmul.mubr.bf16.gmra.mxu0 %v9970
        %v10081 = vpop.f32.mrf.mxu0
        %v10082 = vadd.f32 0.0, %v10081
        %v10083 = vpop.f32.mrf.mxu0
        %v10084 = vpop.f32.mrf.mxu0
        %v10085 = vadd.f32 0.0, %v10084
        %v10086 = vpop.f32.mrf.mxu0
        %10087 = vmatprep.mubr.bf16.mxu0 0
        %10088 = vmatmul.mubr.bf16.gmra.mxu0 %v9973
        %v10089 = vpop.f32.mrf.mxu0
        %v10090 = vadd.f32 0.0, %v10089
        %v10091 = vpop.f32.mrf.mxu0
        %v10092 = vpop.f32.mrf.mxu0
        %v10093 = vadd.f32 0.0, %v10092
        %v10094 = vpop.f32.mrf.mxu0
        %10095 = vmatprep.mubr.bf16.mxu0 0
        %10096 = vmatmul.mubr.bf16.gmra.mxu0 %v9976
        %v10097 = vpop.f32.mrf.mxu0
        %v10098 = vadd.f32 0.0, %v10097
        %v10099 = vpop.f32.mrf.mxu0
        %v10100 = vpop.f32.mrf.mxu0
        %v10101 = vadd.f32 0.0, %v10100
        %v10102 = vpop.f32.mrf.mxu0
        %10103 = vmatprep.mubr.bf16.mxu0 0
        %10104 = vmatmul.mubr.bf16.gmra.mxu0 %v9979
        %v10105 = vpop.f32.mrf.mxu0
        %v10106 = vadd.f32 0.0, %v10105
        %v10107 = vpop.f32.mrf.mxu0
        %v10108 = vpop.f32.mrf.mxu0
        %v10109 = vadd.f32 0.0, %v10108
        %v10110 = vpop.f32.mrf.mxu0
        %10111 = vmatprep.mubr.bf16.mxu0 0
        %10112 = vmatmul.mubr.bf16.gmra.mxu0 %v9982
        %v10113 = vpop.f32.mrf.mxu0
        %v10114 = vadd.f32 0.0, %v10113
        %v10115 = vpop.f32.mrf.mxu0
        %v10116 = vpop.f32.mrf.mxu0
        %v10117 = vadd.f32 0.0, %v10116
        %v10118 = vpop.f32.mrf.mxu0
        %10119 = vmatprep.mubr.bf16.mxu0 0
        %10120 = vmatmul.mubr.bf16.gmra.mxu0 %v9985
        %v10121 = vpop.f32.mrf.mxu0
        %v10122 = vadd.f32 0.0, %v10121
        %v10123 = vpop.f32.mrf.mxu0
        %v10124 = vpop.f32.mrf.mxu0
        %v10125 = vadd.f32 0.0, %v10124
        %v10126 = vpop.f32.mrf.mxu0
        %10127 = vmatprep.mubr.bf16.mxu0 0
        %10128 = vmatmul.mubr.bf16.gmra.mxu0 %v9988
        %v10129 = vpop.f32.mrf.mxu0
        %v10130 = vadd.f32 0.0, %v10129
        %v10131 = vpop.f32.mrf.mxu0
        %v10132 = vpop.f32.mrf.mxu0
        %v10133 = vadd.f32 0.0, %v10132
        %v10134 = vpop.f32.mrf.mxu0
        %10135 = vmatprep.mubr.bf16.mxu0 0
        %10136 = vmatmul.mubr.bf16.gmra.mxu0 %v9991
        %v10137 = vpop.f32.mrf.mxu0
        %v10138 = vadd.f32 0.0, %v10137
        %v10139 = vpop.f32.mrf.mxu0
        %v10140 = vpop.f32.mrf.mxu0
        %v10141 = vadd.f32 0.0, %v10140
        %v10142 = vpop.f32.mrf.mxu0
        %10143 = vmatprep.mubr.bf16.mxu0 0
        %10144 = vmatmul.mubr.bf16.gmra.mxu0 %v9994
        %v10145 = vpop.f32.mrf.mxu0
        %v10146 = vadd.f32 0.0, %v10145
        %v10147 = vpop.f32.mrf.mxu0
        %v10148 = vpop.f32.mrf.mxu0
        %v10149 = vadd.f32 0.0, %v10148
        %v10150 = vpop.f32.mrf.mxu0
        %10151 = vmatprep.mubr.bf16.mxu0 0
        %10152 = vmatmul.mubr.bf16.gmra.mxu0 %v9997
        %v10153 = vpop.f32.mrf.mxu0
        %v10154 = vadd.f32 0.0, %v10153
        %v10155 = vpop.f32.mrf.mxu0
        %v10156 = vpop.f32.mrf.mxu0
        %v10157 = vadd.f32 0.0, %v10156
        %v10158 = vpop.f32.mrf.mxu0
        %10159 = vmatprep.mubr.bf16.mxu0 0
        %10160 = vmatmul.mubr.bf16.gmra.mxu0 %v10000
        %v10161 = vpop.f32.mrf.mxu0
        %v10162 = vadd.f32 0.0, %v10161
        %v10163 = vpop.f32.mrf.mxu0
        %v10164 = vpop.f32.mrf.mxu0
        %v10165 = vadd.f32 0.0, %v10164
        %v10166 = vpop.f32.mrf.mxu0
        %10167 = vmatprep.mubr.bf16.mxu0 0
        %10168 = vmatmul.mubr.bf16.gmra.mxu0 %v10003
        %v10169 = vpop.f32.mrf.mxu0
        %v10170 = vadd.f32 0.0, %v10169
        %v10171 = vpop.f32.mrf.mxu0
        %v10172 = vpop.f32.mrf.mxu0
        %v10173 = vadd.f32 0.0, %v10172
        %v10174 = vpop.f32.mrf.mxu0
        %10175 = vmatprep.mubr.bf16.mxu0 0
        %10176 = vmatmul.mubr.bf16.gmra.mxu0 %v10006
        %v10177 = vpop.f32.mrf.mxu0
        %v10178 = vadd.f32 0.0, %v10177
        %v10179 = vpop.f32.mrf.mxu0
        %v10180 = vpop.f32.mrf.mxu0
        %v10181 = vadd.f32 0.0, %v10180
        %v10182 = vpop.f32.mrf.mxu0
        %10183 = vmatprep.mubr.bf16.mxu0 0
        %10184 = vmatmul.mubr.bf16.gmra.mxu0 %v10009
        %v10185 = vpop.f32.mrf.mxu0
        %v10186 = vadd.f32 0.0, %v10185
        %v10187 = vpop.f32.mrf.mxu0
        %v10188 = vpop.f32.mrf.mxu0
        %v10189 = vadd.f32 0.0, %v10188
        %v10190 = vpop.f32.mrf.mxu0
        %10191 = vmatprep.mubr.bf16.mxu0 0
        %10192 = vmatmul.mubr.bf16.gmra.mxu0 %v10012
        %v10193 = vpop.f32.mrf.mxu0
        %v10194 = vadd.f32 0.0, %v10193
        %v10195 = vpop.f32.mrf.mxu0
        %v10196 = vpop.f32.mrf.mxu0
        %v10197 = vadd.f32 0.0, %v10196
        %v10198 = vpop.f32.mrf.mxu0
        %10199 = vmatprep.mubr.bf16.mxu0 0
        %10200 = vmatmul.mubr.bf16.gmra.mxu0 %v10015
        %v10201 = vpop.f32.mrf.mxu0
        %v10202 = vadd.f32 0.0, %v10201
        %v10203 = vpop.f32.mrf.mxu0
        %v10204 = vpop.f32.mrf.mxu0
        %v10205 = vadd.f32 0.0, %v10204
        %v10206 = vpop.f32.mrf.mxu0
        %10207 = vmatprep.mubr.bf16.mxu0 0
        %10208 = vmatmul.mubr.bf16.gmra.mxu0 %v10018
        %v10209 = vpop.f32.mrf.mxu0
        %v10210 = vadd.f32 0.0, %v10209
        %v10211 = vpop.f32.mrf.mxu0
        %v10212 = vpop.f32.mrf.mxu0
        %v10213 = vadd.f32 0.0, %v10212
        %v10214 = vpop.f32.mrf.mxu0
        %10215 = vmatprep.mubr.bf16.mxu0 0
        %10216 = vmatmul.mubr.bf16.gmra.mxu0 %v10021
        %v10217 = vpop.f32.mrf.mxu0
        %v10218 = vadd.f32 0.0, %v10217
        %v10219 = vpop.f32.mrf.mxu0
        %v10220 = vpop.f32.mrf.mxu0
        %v10221 = vadd.f32 0.0, %v10220
        %v10222 = vpop.f32.mrf.mxu0
        %10223 = vdwg.mxu0
        %v10224 = vadd.f32 %v9854, %v10058
        %v10225 = vadd.f32 %v9855, %v10061
        %v10226 = vadd.f32 %v9856, %v10066
        %v10227 = vadd.f32 %v9857, %v10069
        %v10228 = vadd.f32 %v9858, %v10074
        %v10229 = vadd.f32 %v9859, %v10077
        %v10230 = vadd.f32 %v9860, %v10082
        %v10231 = vadd.f32 %v9861, %v10085
        %v10232 = vadd.f32 %v9862, %v10090
        %v10233 = vadd.f32 %v9863, %v10093
        %v10234 = vadd.f32 %v9864, %v10098
        %v10235 = vadd.f32 %v9865, %v10101
        %v10236 = vadd.f32 %v9866, %v10106
        %v10237 = vadd.f32 %v9867, %v10109
        %v10238 = vadd.f32 %v9868, %v10114
        %v10239 = vadd.f32 %v9869, %v10117
        %v10240 = vadd.f32 %v9870, %v10122
        %v10241 = vadd.f32 %v9871, %v10125
        %v10242 = vadd.f32 %v9872, %v10130
        %v10243 = vadd.f32 %v9873, %v10133
        %v10244 = vadd.f32 %v9874, %v10138
        %v10245 = vadd.f32 %v9875, %v10141
        %v10246 = vadd.f32 %v9876, %v10146
        %v10247 = vadd.f32 %v9877, %v10149
        %v10248 = vadd.f32 %v9878, %v10154
        %v10249 = vadd.f32 %v9879, %v10157
        %v10250 = vadd.f32 %v9880, %v10162
        %v10251 = vadd.f32 %v9881, %v10165
        %v10252 = vadd.f32 %v9882, %v10170
        %v10253 = vadd.f32 %v9883, %v10173
        %v10254 = vadd.f32 %v9884, %v10178
        %v10255 = vadd.f32 %v9885, %v10181
        %v10256 = vadd.f32 %v9886, %v10186
        %v10257 = vadd.f32 %v9887, %v10189
        %v10258 = vadd.f32 %v9888, %v10194
        %v10259 = vadd.f32 %v9889, %v10197
        %v10260 = vadd.f32 %v9890, %v10202
        %v10261 = vadd.f32 %v9891, %v10205
        %v10262 = vadd.f32 %v9892, %v10210
        %v10263 = vadd.f32 %v9893, %v10213
        %v10264 = vadd.f32 %v9894, %v10218
        %v10265 = vadd.f32 %v9895, %v10221
        %v10266 = vld [vmem:[#allocation2 + $0xc0] sm:$0x3]
        %s10267 = scalar_lea.vmem %s5, 128
        %v10268 = vld [vmem:[%s10267] sm:$0xf]
        %v10269 = vld [vmem:[%s10267 + $0x4] sm:$0xf]
        %v10270 = vld [vmem:[%s10267 + $0x8] sm:$0xf]
        %v10271 = vld [vmem:[%s10267 + $0xc] sm:$0xf]
        %v10273 = vunpack.c.l.b16 %v10266
        %v10274 = vpack.c.b16 %v10273, %v10273
        %v10276 = vshrl.u32 %v9904, 16
        %v10278 = vrot.slane %v10276, 1
        %v10279 = vshll.u32 %v9904, 16
        %v10281 = vrot.slane %v10279, 2
        %v10282 = vor.u32 %v10278, %v10281
        %v10283 = vrot.slane %v9418, 1
        %v10284 = vrot.slane %v9414, 2
        %v10285 = vor.u32 %v10283, %v10284
        %v10286 = vsel %vm5199, %v10282, %v10285
        %v10287 = vrot.slane %v9426, 1
        %v10288 = vrot.slane %v9422, 2
        %v10289 = vor.u32 %v10287, %v10288
        %v10290 = vsel %vm5199, %v10285, %v10289
        %v10291 = vrot.slane %v9434, 1
        %v10292 = vrot.slane %v9430, 2
        %v10293 = vor.u32 %v10291, %v10292
        %v10294 = vsel %vm5199, %v10289, %v10293
        %v10295 = vrot.slane %v9442, 1
        %v10296 = vrot.slane %v9438, 2
        %v10297 = vor.u32 %v10295, %v10296
        %v10298 = vsel %vm5199, %v10293, %v10297
        %v10299 = vrot.slane %v9450, 1
        %v10300 = vrot.slane %v9446, 2
        %v10301 = vor.u32 %v10299, %v10300
        %v10302 = vsel %vm5199, %v10297, %v10301
        %v10303 = vrot.slane %v9458, 1
        %v10304 = vrot.slane %v9454, 2
        %v10305 = vor.u32 %v10303, %v10304
        %v10306 = vsel %vm5199, %v10301, %v10305
        %v10307 = vrot.slane %v9466, 1
        %v10308 = vrot.slane %v9462, 2
        %v10309 = vor.u32 %v10307, %v10308
        %v10310 = vsel %vm5199, %v10305, %v10309
        %v10311 = vrot.slane %v9474, 1
        %v10312 = vrot.slane %v9470, 2
        %v10313 = vor.u32 %v10311, %v10312
        %v10314 = vsel %vm5199, %v10309, %v10313
        %v10315 = vrot.slane %v9482, 1
        %v10316 = vrot.slane %v9478, 2
        %v10317 = vor.u32 %v10315, %v10316
        %v10318 = vsel %vm5199, %v10313, %v10317
        %v10319 = vrot.slane %v9490, 1
        %v10320 = vrot.slane %v9486, 2
        %v10321 = vor.u32 %v10319, %v10320
        %v10322 = vsel %vm5199, %v10317, %v10321
        %v10323 = vrot.slane %v9498, 1
        %v10324 = vrot.slane %v9494, 2
        %v10325 = vor.u32 %v10323, %v10324
        %v10326 = vsel %vm5199, %v10321, %v10325
        %v10327 = vrot.slane %v9506, 1
        %v10328 = vrot.slane %v9502, 2
        %v10329 = vor.u32 %v10327, %v10328
        %v10330 = vsel %vm5199, %v10325, %v10329
        %v10331 = vrot.slane %v9514, 1
        %v10332 = vrot.slane %v9510, 2
        %v10333 = vor.u32 %v10331, %v10332
        %v10334 = vsel %vm5199, %v10329, %v10333
        %v10335 = vrot.slane %v9522, 1
        %v10336 = vrot.slane %v9518, 2
        %v10337 = vor.u32 %v10335, %v10336
        %v10338 = vsel %vm5199, %v10333, %v10337
        %v10339 = vrot.slane %v9530, 1
        %v10340 = vrot.slane %v9526, 2
        %v10341 = vor.u32 %v10339, %v10340
        %v10342 = vsel %vm5199, %v10337, %v10341
        %v10343 = vrot.slane %v9538, 1
        %v10344 = vrot.slane %v9534, 2
        %v10345 = vor.u32 %v10343, %v10344
        %v10346 = vsel %vm5199, %v10341, %v10345
        %v10347 = vrot.slane %v9546, 1
        %v10348 = vrot.slane %v9542, 2
        %v10349 = vor.u32 %v10347, %v10348
        %v10350 = vsel %vm5199, %v10345, %v10349
        %v10351 = vrot.slane %v9554, 1
        %v10352 = vrot.slane %v9550, 2
        %v10353 = vor.u32 %v10351, %v10352
        %v10354 = vsel %vm5199, %v10349, %v10353
        %v10355 = vrot.slane %v9562, 1
        %v10356 = vrot.slane %v9558, 2
        %v10357 = vor.u32 %v10355, %v10356
        %v10358 = vsel %vm5199, %v10353, %v10357
        %v10359 = vrot.slane %v9570, 1
        %v10360 = vrot.slane %v9566, 2
        %v10361 = vor.u32 %v10359, %v10360
        %v10362 = vsel %vm5199, %v10357, %v10361
        %v10364 = vshrl.u32 %v10274, 16
        %v10366 = vrot.slane %v10364, 1
        %v10367 = vshll.u32 %v10274, 16
        %v10369 = vrot.slane %v10367, 2
        %v10370 = vor.u32 %v10366, %v10369
        %v10371 = vsel %vm5199, %v10361, %v10370
        %v10376 = vunpack.c.l.b16 %v10268
        %v10377 = vunpack.c.l.b16 %v10269
        %v10378 = vunpack.c.l.b16 %v10270
        %v10379 = vunpack.c.l.b16 %v10271
        %v10380 = vpack.c.b16 %v10377, %v10376
        %v10381 = vpack.c.b16 %v10379, %v10378
        %v10385 = vsel %vm6424, %v10286, 0
        %v10388 = vsel %vm6424, %v10290, 0
        %v10391 = vsel %vm6424, %v10294, 0
        %v10394 = vsel %vm6424, %v10298, 0
        %v10397 = vsel %vm6424, %v10302, 0
        %v10400 = vsel %vm6424, %v10306, 0
        %v10403 = vsel %vm6424, %v10310, 0
        %v10406 = vsel %vm6424, %v10314, 0
        %v10409 = vsel %vm6424, %v10318, 0
        %v10412 = vsel %vm6424, %v10322, 0
        %v10415 = vsel %vm6424, %v10326, 0
        %v10418 = vsel %vm6424, %v10330, 0
        %v10421 = vsel %vm6424, %v10334, 0
        %v10424 = vsel %vm6424, %v10338, 0
        %v10427 = vsel %vm6424, %v10342, 0
        %v10430 = vsel %vm6424, %v10346, 0
        %v10433 = vsel %vm6424, %v10350, 0
        %v10436 = vsel %vm6424, %v10354, 0
        %v10439 = vsel %vm6424, %v10358, 0
        %v10442 = vsel %vm6424, %v10362, 0
        %v10445 = vsel %vm6424, %v10371, 0
        %10447 = vmatprep.subr.bf16.mxu0 0
        %10448 = vmatpush1.bf16.msra.mxu0 0
        %10449 = vmatprep.subr.bf16.mxu0 0
        %10450 = vmatpush1.bf16.msra.mxu0 0
        %10451 = vmatprep.subr.bf16.mxu0 0
        %10452 = vmatpush1.bf16.msra.mxu0 0
        %10453 = vmatprep.subr.bf16.mxu0 0
        %10454 = vmatpush1.bf16.msra.mxu0 0
        %10455 = vmatprep.subr.bf16.mxu0 0
        %10456 = vmatpush1.bf16.msra.mxu0 0
        %10457 = vmatprep.subr.bf16.mxu0 0
        %10458 = vmatpush1.bf16.msra.mxu0 0
        %10459 = vmatprep.subr.bf16.mxu0 0
        %10460 = vmatpush1.bf16.msra.mxu0 %v10381
        %10461 = vmatprep.subr.bf16.mxu0 0
        %10462 = vmatpush1.bf16.msra.mxu0 %v10380
        %10463 = vmatprep.subr.bf16.mxu0 0
        %10464 = vmatpush2.bf16.msra.mxu0 0
        %10465 = vmatprep.subr.bf16.mxu0 0
        %10466 = vmatpush2.bf16.msra.mxu0 0
        %10467 = vmatprep.subr.bf16.mxu0 0
        %10468 = vmatpush2.bf16.msra.mxu0 0
        %10469 = vmatprep.subr.bf16.mxu0 0
        %10470 = vmatpush2.bf16.msra.mxu0 0
        %10471 = vmatprep.subr.bf16.mxu0 0
        %10472 = vmatpush2.bf16.msra.mxu0 0
        %10473 = vmatprep.subr.bf16.mxu0 0
        %10474 = vmatpush2.bf16.msra.mxu0 0
        %10475 = vmatprep.subr.bf16.mxu0 0
        %10476 = vmatpush2.bf16.msra.mxu0 0
        %10477 = vmatprep.subr.bf16.mxu0 0
        %10478 = vmatpush2.bf16.msra.mxu0 0
        %10479 = vmatprep.mubr.bf16.mxu0 0
        %10480 = vmatmul.mubr.bf16.gmra.mxu0 %v10385
        %v10481 = vpop.f32.mrf.mxu0
        %v10482 = vadd.f32 0.0, %v10481
        %v10483 = vpop.f32.mrf.mxu0
        %v10484 = vpop.f32.mrf.mxu0
        %v10485 = vadd.f32 0.0, %v10484
        %v10486 = vpop.f32.mrf.mxu0
        %10487 = vmatprep.mubr.bf16.mxu0 0
        %10488 = vmatmul.mubr.bf16.gmra.mxu0 %v10388
        %v10489 = vpop.f32.mrf.mxu0
        %v10490 = vadd.f32 0.0, %v10489
        %v10491 = vpop.f32.mrf.mxu0
        %v10492 = vpop.f32.mrf.mxu0
        %v10493 = vadd.f32 0.0, %v10492
        %v10494 = vpop.f32.mrf.mxu0
        %10495 = vmatprep.mubr.bf16.mxu0 0
        %10496 = vmatmul.mubr.bf16.gmra.mxu0 %v10391
        %v10497 = vpop.f32.mrf.mxu0
        %v10498 = vadd.f32 0.0, %v10497
        %v10499 = vpop.f32.mrf.mxu0
        %v10500 = vpop.f32.mrf.mxu0
        %v10501 = vadd.f32 0.0, %v10500
        %v10502 = vpop.f32.mrf.mxu0
        %10503 = vmatprep.mubr.bf16.mxu0 0
        %10504 = vmatmul.mubr.bf16.gmra.mxu0 %v10394
        %v10505 = vpop.f32.mrf.mxu0
        %v10506 = vadd.f32 0.0, %v10505
        %v10507 = vpop.f32.mrf.mxu0
        %v10508 = vpop.f32.mrf.mxu0
        %v10509 = vadd.f32 0.0, %v10508
        %v10510 = vpop.f32.mrf.mxu0
        %10511 = vmatprep.mubr.bf16.mxu0 0
        %10512 = vmatmul.mubr.bf16.gmra.mxu0 %v10397
        %v10513 = vpop.f32.mrf.mxu0
        %v10514 = vadd.f32 0.0, %v10513
        %v10515 = vpop.f32.mrf.mxu0
        %v10516 = vpop.f32.mrf.mxu0
        %v10517 = vadd.f32 0.0, %v10516
        %v10518 = vpop.f32.mrf.mxu0
        %10519 = vmatprep.mubr.bf16.mxu0 0
        %10520 = vmatmul.mubr.bf16.gmra.mxu0 %v10400
        %v10521 = vpop.f32.mrf.mxu0
        %v10522 = vadd.f32 0.0, %v10521
        %v10523 = vpop.f32.mrf.mxu0
        %v10524 = vpop.f32.mrf.mxu0
        %v10525 = vadd.f32 0.0, %v10524
        %v10526 = vpop.f32.mrf.mxu0
        %10527 = vmatprep.mubr.bf16.mxu0 0
        %10528 = vmatmul.mubr.bf16.gmra.mxu0 %v10403
        %v10529 = vpop.f32.mrf.mxu0
        %v10530 = vadd.f32 0.0, %v10529
        %v10531 = vpop.f32.mrf.mxu0
        %v10532 = vpop.f32.mrf.mxu0
        %v10533 = vadd.f32 0.0, %v10532
        %v10534 = vpop.f32.mrf.mxu0
        %10535 = vmatprep.mubr.bf16.mxu0 0
        %10536 = vmatmul.mubr.bf16.gmra.mxu0 %v10406
        %v10537 = vpop.f32.mrf.mxu0
        %v10538 = vadd.f32 0.0, %v10537
        %v10539 = vpop.f32.mrf.mxu0
        %v10540 = vpop.f32.mrf.mxu0
        %v10541 = vadd.f32 0.0, %v10540
        %v10542 = vpop.f32.mrf.mxu0
        %10543 = vmatprep.mubr.bf16.mxu0 0
        %10544 = vmatmul.mubr.bf16.gmra.mxu0 %v10409
        %v10545 = vpop.f32.mrf.mxu0
        %v10546 = vadd.f32 0.0, %v10545
        %v10547 = vpop.f32.mrf.mxu0
        %v10548 = vpop.f32.mrf.mxu0
        %v10549 = vadd.f32 0.0, %v10548
        %v10550 = vpop.f32.mrf.mxu0
        %10551 = vmatprep.mubr.bf16.mxu0 0
        %10552 = vmatmul.mubr.bf16.gmra.mxu0 %v10412
        %v10553 = vpop.f32.mrf.mxu0
        %v10554 = vadd.f32 0.0, %v10553
        %v10555 = vpop.f32.mrf.mxu0
        %v10556 = vpop.f32.mrf.mxu0
        %v10557 = vadd.f32 0.0, %v10556
        %v10558 = vpop.f32.mrf.mxu0
        %10559 = vmatprep.mubr.bf16.mxu0 0
        %10560 = vmatmul.mubr.bf16.gmra.mxu0 %v10415
        %v10561 = vpop.f32.mrf.mxu0
        %v10562 = vadd.f32 0.0, %v10561
        %v10563 = vpop.f32.mrf.mxu0
        %v10564 = vpop.f32.mrf.mxu0
        %v10565 = vadd.f32 0.0, %v10564
        %v10566 = vpop.f32.mrf.mxu0
        %10567 = vmatprep.mubr.bf16.mxu0 0
        %10568 = vmatmul.mubr.bf16.gmra.mxu0 %v10418
        %v10569 = vpop.f32.mrf.mxu0
        %v10570 = vadd.f32 0.0, %v10569
        %v10571 = vpop.f32.mrf.mxu0
        %v10572 = vpop.f32.mrf.mxu0
        %v10573 = vadd.f32 0.0, %v10572
        %v10574 = vpop.f32.mrf.mxu0
        %10575 = vmatprep.mubr.bf16.mxu0 0
        %10576 = vmatmul.mubr.bf16.gmra.mxu0 %v10421
        %v10577 = vpop.f32.mrf.mxu0
        %v10578 = vadd.f32 0.0, %v10577
        %v10579 = vpop.f32.mrf.mxu0
        %v10580 = vpop.f32.mrf.mxu0
        %v10581 = vadd.f32 0.0, %v10580
        %v10582 = vpop.f32.mrf.mxu0
        %10583 = vmatprep.mubr.bf16.mxu0 0
        %10584 = vmatmul.mubr.bf16.gmra.mxu0 %v10424
        %v10585 = vpop.f32.mrf.mxu0
        %v10586 = vadd.f32 0.0, %v10585
        %v10587 = vpop.f32.mrf.mxu0
        %v10588 = vpop.f32.mrf.mxu0
        %v10589 = vadd.f32 0.0, %v10588
        %v10590 = vpop.f32.mrf.mxu0
        %10591 = vmatprep.mubr.bf16.mxu0 0
        %10592 = vmatmul.mubr.bf16.gmra.mxu0 %v10427
        %v10593 = vpop.f32.mrf.mxu0
        %v10594 = vadd.f32 0.0, %v10593
        %v10595 = vpop.f32.mrf.mxu0
        %v10596 = vpop.f32.mrf.mxu0
        %v10597 = vadd.f32 0.0, %v10596
        %v10598 = vpop.f32.mrf.mxu0
        %10599 = vmatprep.mubr.bf16.mxu0 0
        %10600 = vmatmul.mubr.bf16.gmra.mxu0 %v10430
        %v10601 = vpop.f32.mrf.mxu0
        %v10602 = vadd.f32 0.0, %v10601
        %v10603 = vpop.f32.mrf.mxu0
        %v10604 = vpop.f32.mrf.mxu0
        %v10605 = vadd.f32 0.0, %v10604
        %v10606 = vpop.f32.mrf.mxu0
        %10607 = vmatprep.mubr.bf16.mxu0 0
        %10608 = vmatmul.mubr.bf16.gmra.mxu0 %v10433
        %v10609 = vpop.f32.mrf.mxu0
        %v10610 = vadd.f32 0.0, %v10609
        %v10611 = vpop.f32.mrf.mxu0
        %v10612 = vpop.f32.mrf.mxu0
        %v10613 = vadd.f32 0.0, %v10612
        %v10614 = vpop.f32.mrf.mxu0
        %10615 = vmatprep.mubr.bf16.mxu0 0
        %10616 = vmatmul.mubr.bf16.gmra.mxu0 %v10436
        %v10617 = vpop.f32.mrf.mxu0
        %v10618 = vadd.f32 0.0, %v10617
        %v10619 = vpop.f32.mrf.mxu0
        %v10620 = vpop.f32.mrf.mxu0
        %v10621 = vadd.f32 0.0, %v10620
        %v10622 = vpop.f32.mrf.mxu0
        %10623 = vmatprep.mubr.bf16.mxu0 0
        %10624 = vmatmul.mubr.bf16.gmra.mxu0 %v10439
        %v10625 = vpop.f32.mrf.mxu0
        %v10626 = vadd.f32 0.0, %v10625
        %v10627 = vpop.f32.mrf.mxu0
        %v10628 = vpop.f32.mrf.mxu0
        %v10629 = vadd.f32 0.0, %v10628
        %v10630 = vpop.f32.mrf.mxu0
        %10631 = vmatprep.mubr.bf16.mxu0 0
        %10632 = vmatmul.mubr.bf16.gmra.mxu0 %v10442
        %v10633 = vpop.f32.mrf.mxu0
        %v10634 = vadd.f32 0.0, %v10633
        %v10635 = vpop.f32.mrf.mxu0
        %v10636 = vpop.f32.mrf.mxu0
        %v10637 = vadd.f32 0.0, %v10636
        %v10638 = vpop.f32.mrf.mxu0
        %10639 = vmatprep.mubr.bf16.mxu0 0
        %10640 = vmatmul.mubr.bf16.gmra.mxu0 %v10445
        %v10641 = vpop.f32.mrf.mxu0
        %v10642 = vadd.f32 0.0, %v10641
        %v10643 = vpop.f32.mrf.mxu0
        %v10644 = vpop.f32.mrf.mxu0
        %v10645 = vadd.f32 0.0, %v10644
        %v10646 = vpop.f32.mrf.mxu0
        %10647 = vdwg.mxu0
        %v10648 = vadd.f32 %v10224, %v10482
        %v10649 = vadd.f32 %v10225, %v10485
        %v10650 = vadd.f32 %v10226, %v10490
        %v10651 = vadd.f32 %v10227, %v10493
        %v10652 = vadd.f32 %v10228, %v10498
        %v10653 = vadd.f32 %v10229, %v10501
        %v10654 = vadd.f32 %v10230, %v10506
        %v10655 = vadd.f32 %v10231, %v10509
        %v10656 = vadd.f32 %v10232, %v10514
        %v10657 = vadd.f32 %v10233, %v10517
        %v10658 = vadd.f32 %v10234, %v10522
        %v10659 = vadd.f32 %v10235, %v10525
        %v10660 = vadd.f32 %v10236, %v10530
        %v10661 = vadd.f32 %v10237, %v10533
        %v10662 = vadd.f32 %v10238, %v10538
        %v10663 = vadd.f32 %v10239, %v10541
        %v10664 = vadd.f32 %v10240, %v10546
        %v10665 = vadd.f32 %v10241, %v10549
        %v10666 = vadd.f32 %v10242, %v10554
        %v10667 = vadd.f32 %v10243, %v10557
        %v10668 = vadd.f32 %v10244, %v10562
        %v10669 = vadd.f32 %v10245, %v10565
        %v10670 = vadd.f32 %v10246, %v10570
        %v10671 = vadd.f32 %v10247, %v10573
        %v10672 = vadd.f32 %v10248, %v10578
        %v10673 = vadd.f32 %v10249, %v10581
        %v10674 = vadd.f32 %v10250, %v10586
        %v10675 = vadd.f32 %v10251, %v10589
        %v10676 = vadd.f32 %v10252, %v10594
        %v10677 = vadd.f32 %v10253, %v10597
        %v10678 = vadd.f32 %v10254, %v10602
        %v10679 = vadd.f32 %v10255, %v10605
        %v10680 = vadd.f32 %v10256, %v10610
        %v10681 = vadd.f32 %v10257, %v10613
        %v10682 = vadd.f32 %v10258, %v10618
        %v10683 = vadd.f32 %v10259, %v10621
        %v10684 = vadd.f32 %v10260, %v10626
        %v10685 = vadd.f32 %v10261, %v10629
        %v10686 = vadd.f32 %v10262, %v10634
        %v10687 = vadd.f32 %v10263, %v10637
        %v10688 = vadd.f32 %v10264, %v10642
        %v10689 = vadd.f32 %v10265, %v10645
        %v10690 = vld [vmem:[%s6] sm:$0x1]
        %v10692 = vlaneseq
        %v10693 = vshrl.u32 %v10692, 7
        %v10694 = vsub.s32 0, %v10693
        %v10695 = vrot.slane %v10690, %v10694
        %v10697 = vadd.f32 %v10648, %v10695
        %v10698 = vadd.f32 %v10649, %v10695
        %v10699 = vadd.f32 %v10650, %v10695
        %v10700 = vadd.f32 %v10651, %v10695
        %v10701 = vadd.f32 %v10652, %v10695
        %v10702 = vadd.f32 %v10653, %v10695
        %v10703 = vadd.f32 %v10654, %v10695
        %v10704 = vadd.f32 %v10655, %v10695
        %v10705 = vadd.f32 %v10656, %v10695
        %v10706 = vadd.f32 %v10657, %v10695
        %v10707 = vadd.f32 %v10658, %v10695
        %v10708 = vadd.f32 %v10659, %v10695
        %v10709 = vadd.f32 %v10660, %v10695
        %v10710 = vadd.f32 %v10661, %v10695
        %v10711 = vadd.f32 %v10662, %v10695
        %v10712 = vadd.f32 %v10663, %v10695
        %v10713 = vadd.f32 %v10664, %v10695
        %v10714 = vadd.f32 %v10665, %v10695
        %v10715 = vadd.f32 %v10666, %v10695
        %v10716 = vadd.f32 %v10667, %v10695
        %v10717 = vadd.f32 %v10668, %v10695
        %v10718 = vadd.f32 %v10669, %v10695
        %v10719 = vadd.f32 %v10670, %v10695
        %v10720 = vadd.f32 %v10671, %v10695
        %v10721 = vadd.f32 %v10672, %v10695
        %v10722 = vadd.f32 %v10673, %v10695
        %v10723 = vadd.f32 %v10674, %v10695
        %v10724 = vadd.f32 %v10675, %v10695
        %v10725 = vadd.f32 %v10676, %v10695
        %v10726 = vadd.f32 %v10677, %v10695
        %v10727 = vadd.f32 %v10678, %v10695
        %v10728 = vadd.f32 %v10679, %v10695
        %v10729 = vadd.f32 %v10680, %v10695
        %v10730 = vadd.f32 %v10681, %v10695
        %v10731 = vadd.f32 %v10682, %v10695
        %v10732 = vadd.f32 %v10683, %v10695
        %v10733 = vadd.f32 %v10684, %v10695
        %v10734 = vadd.f32 %v10685, %v10695
        %v10735 = vadd.f32 %v10686, %v10695
        %v10736 = vadd.f32 %v10687, %v10695
        %v10737 = vadd.f32 %v10688, %v10695
        %v10738 = vadd.f32 %v10689, %v10695
        %v10739 = vld [vmem:[%s373 + $0x10] sm:$0xf]
        %v10740 = vld [vmem:[%s373 + $0x14] sm:$0xf]
        %v10741 = vld [vmem:[%s373 + $0x18] sm:$0xf]
        %v10742 = vld [vmem:[%s373 + $0x1c] sm:$0xf]
        %v10743 = vld [vmem:[%s373 + $0x20] sm:$0xf]
        %v10744 = vld [vmem:[%s373 + $0x24] sm:$0xf]
        %v10745 = vld [vmem:[%s373 + $0x28] sm:$0xf]
        %v10746 = vld [vmem:[%s373 + $0x2c] sm:$0xf]
        %v10747 = vld [vmem:[%s373 + $0x30] sm:$0xf]
        %v10748 = vld [vmem:[%s373 + $0x34] sm:$0xf]
        %v10749 = vld [vmem:[%s373 + $0x38] sm:$0xf]
        %v10750 = vld [vmem:[%s373 + $0x3c] sm:$0xf]
        %v10751 = vld [vmem:[%s373 + $0x40] sm:$0xf]
        %v10752 = vld [vmem:[%s373 + $0x44] sm:$0xf]
        %v10753 = vld [vmem:[%s373 + $0x48] sm:$0xf]
        %v10754 = vld [vmem:[%s373 + $0x4c] sm:$0xf]
        %v10755 = vld [vmem:[%s373 + $0x50] sm:$0xf]
        %v10756 = vld [vmem:[%s373 + $0x54] sm:$0xf]
        %v10757 = vld [vmem:[%s373 + $0x58] sm:$0xf]
        %v10758 = vld [vmem:[%s373 + $0x5c] sm:$0xf]
        %v10759 = vld [vmem:[%s373 + $0x60] sm:$0xf]
        %v10760 = vld [vmem:[%s373 + $0x64] sm:$0xf]
        %v10761 = vld [vmem:[%s373 + $0x68] sm:$0xf]
        %v10762 = vld [vmem:[%s373 + $0x6c] sm:$0xf]
        %v10763 = vld [vmem:[%s373 + $0x70] sm:$0xf]
        %v10764 = vld [vmem:[%s373 + $0x74] sm:$0xf]
        %v10765 = vld [vmem:[%s373 + $0x78] sm:$0xf]
        %v10766 = vld [vmem:[%s373 + $0x7c] sm:$0xf]
        %v10767 = vld [vmem:[%s373 + $0x80] sm:$0xf]
        %v10768 = vld [vmem:[%s373 + $0x84] sm:$0xf]
        %v10769 = vld [vmem:[%s373 + $0x88] sm:$0xf]
        %v10770 = vld [vmem:[%s373 + $0x8c] sm:$0xf]
        %v10771 = vld [vmem:[%s373 + $0x90] sm:$0xf]
        %v10772 = vld [vmem:[%s373 + $0x94] sm:$0xf]
        %v10773 = vld [vmem:[%s373 + $0x98] sm:$0xf]
        %v10774 = vld [vmem:[%s373 + $0x9c] sm:$0xf]
        %v10775 = vld [vmem:[%s373 + $0xa0] sm:$0xf]
        %v10776 = vld [vmem:[%s373 + $0xa4] sm:$0xf]
        %v10777 = vld [vmem:[%s373 + $0xa8] sm:$0xf]
        %v10778 = vld [vmem:[%s373 + $0xac] sm:$0xf]
        %v10779 = vld [vmem:[%s373 + $0xb0] sm:$0xf]
        %v10780 = vld [vmem:[%s373 + $0xb4] sm:$0xf]
        %v10781 = vunpack.c.l.bf16 %v10739
        %v10782 = vunpack.c.l.bf16 %v10740
        %v10783 = vunpack.c.l.bf16 %v10741
        %v10784 = vunpack.c.l.bf16 %v10742
        %v10785 = vunpack.c.l.bf16 %v10743
        %v10786 = vunpack.c.l.bf16 %v10744
        %v10787 = vunpack.c.l.bf16 %v10745
        %v10788 = vunpack.c.l.bf16 %v10746
        %v10789 = vunpack.c.l.bf16 %v10747
        %v10790 = vunpack.c.l.bf16 %v10748
        %v10791 = vunpack.c.l.bf16 %v10749
        %v10792 = vunpack.c.l.bf16 %v10750
        %v10793 = vunpack.c.l.bf16 %v10751
        %v10794 = vunpack.c.l.bf16 %v10752
        %v10795 = vunpack.c.l.bf16 %v10753
        %v10796 = vunpack.c.l.bf16 %v10754
        %v10797 = vunpack.c.l.bf16 %v10755
        %v10798 = vunpack.c.l.bf16 %v10756
        %v10799 = vunpack.c.l.bf16 %v10757
        %v10800 = vunpack.c.l.bf16 %v10758
        %v10801 = vunpack.c.l.bf16 %v10759
        %v10802 = vunpack.c.l.bf16 %v10760
        %v10803 = vunpack.c.l.bf16 %v10761
        %v10804 = vunpack.c.l.bf16 %v10762
        %v10805 = vunpack.c.l.bf16 %v10763
        %v10806 = vunpack.c.l.bf16 %v10764
        %v10807 = vunpack.c.l.bf16 %v10765
        %v10808 = vunpack.c.l.bf16 %v10766
        %v10809 = vunpack.c.l.bf16 %v10767
        %v10810 = vunpack.c.l.bf16 %v10768
        %v10811 = vunpack.c.l.bf16 %v10769
        %v10812 = vunpack.c.l.bf16 %v10770
        %v10813 = vunpack.c.l.bf16 %v10771
        %v10814 = vunpack.c.l.bf16 %v10772
        %v10815 = vunpack.c.l.bf16 %v10773
        %v10816 = vunpack.c.l.bf16 %v10774
        %v10817 = vunpack.c.l.bf16 %v10775
        %v10818 = vunpack.c.l.bf16 %v10776
        %v10819 = vunpack.c.l.bf16 %v10777
        %v10820 = vunpack.c.l.bf16 %v10778
        %v10821 = vunpack.c.l.bf16 %v10779
        %v10822 = vunpack.c.l.bf16 %v10780
        %v10823 = vsub.f32 %v10697, %v10781
        %v10824 = vsub.f32 %v10698, %v10782
        %v10825 = vsub.f32 %v10699, %v10783
        %v10826 = vsub.f32 %v10700, %v10784
        %v10827 = vsub.f32 %v10701, %v10785
        %v10828 = vsub.f32 %v10702, %v10786
        %v10829 = vsub.f32 %v10703, %v10787
        %v10830 = vsub.f32 %v10704, %v10788
        %v10831 = vsub.f32 %v10705, %v10789
        %v10832 = vsub.f32 %v10706, %v10790
        %v10833 = vsub.f32 %v10707, %v10791
        %v10834 = vsub.f32 %v10708, %v10792
        %v10835 = vsub.f32 %v10709, %v10793
        %v10836 = vsub.f32 %v10710, %v10794
        %v10837 = vsub.f32 %v10711, %v10795
        %v10838 = vsub.f32 %v10712, %v10796
        %v10839 = vsub.f32 %v10713, %v10797
        %v10840 = vsub.f32 %v10714, %v10798
        %v10841 = vsub.f32 %v10715, %v10799
        %v10842 = vsub.f32 %v10716, %v10800
        %v10843 = vsub.f32 %v10717, %v10801
        %v10844 = vsub.f32 %v10718, %v10802
        %v10845 = vsub.f32 %v10719, %v10803
        %v10846 = vsub.f32 %v10720, %v10804
        %v10847 = vsub.f32 %v10721, %v10805
        %v10848 = vsub.f32 %v10722, %v10806
        %v10849 = vsub.f32 %v10723, %v10807
        %v10850 = vsub.f32 %v10724, %v10808
        %v10851 = vsub.f32 %v10725, %v10809
        %v10852 = vsub.f32 %v10726, %v10810
        %v10853 = vsub.f32 %v10727, %v10811
        %v10854 = vsub.f32 %v10728, %v10812
        %v10855 = vsub.f32 %v10729, %v10813
        %v10856 = vsub.f32 %v10730, %v10814
        %v10857 = vsub.f32 %v10731, %v10815
        %v10858 = vsub.f32 %v10732, %v10816
        %v10859 = vsub.f32 %v10733, %v10817
        %v10860 = vsub.f32 %v10734, %v10818
        %v10861 = vsub.f32 %v10735, %v10819
        %v10862 = vsub.f32 %v10736, %v10820
        %v10863 = vsub.f32 %v10737, %v10821
        %v10864 = vsub.f32 %v10738, %v10822
        %v10865 = vmul.f32 %v10823, %v5749
        %v10866 = vmul.f32 %v10824, %v5754
        %v10867 = vmul.f32 %v10825, %v5759
        %v10868 = vmul.f32 %v10826, %v5764
        %v10869 = vmul.f32 %v10827, %v5769
        %v10870 = vmul.f32 %v10828, %v5774
        %v10871 = vmul.f32 %v10829, %v5779
        %v10872 = vmul.f32 %v10830, %v5784
        %v10873 = vmul.f32 %v10831, %v5789
        %v10874 = vmul.f32 %v10832, %v5794
        %v10875 = vmul.f32 %v10833, %v5799
        %v10876 = vmul.f32 %v10834, %v5804
        %v10877 = vmul.f32 %v10835, %v5809
        %v10878 = vmul.f32 %v10836, %v5814
        %v10879 = vmul.f32 %v10837, %v5819
        %v10880 = vmul.f32 %v10838, %v5824
        %v10881 = vmul.f32 %v10839, %v5829
        %v10882 = vmul.f32 %v10840, %v5834
        %v10883 = vmul.f32 %v10841, %v5839
        %v10884 = vmul.f32 %v10842, %v5844
        %v10885 = vmul.f32 %v10843, %v5849
        %v10886 = vmul.f32 %v10844, %v5854
        %v10887 = vmul.f32 %v10845, %v5859
        %v10888 = vmul.f32 %v10846, %v5864
        %v10889 = vmul.f32 %v10847, %v5869
        %v10890 = vmul.f32 %v10848, %v5874
        %v10891 = vmul.f32 %v10849, %v5879
        %v10892 = vmul.f32 %v10850, %v5884
        %v10893 = vmul.f32 %v10851, %v5889
        %v10894 = vmul.f32 %v10852, %v5894
        %v10895 = vmul.f32 %v10853, %v5899
        %v10896 = vmul.f32 %v10854, %v5904
        %v10897 = vmul.f32 %v10855, %v5909
        %v10898 = vmul.f32 %v10856, %v5914
        %v10899 = vmul.f32 %v10857, %v5919
        %v10900 = vmul.f32 %v10858, %v5924
        %v10901 = vmul.f32 %v10859, %v5929
        %v10902 = vmul.f32 %v10860, %v5934
        %v10903 = vmul.f32 %v10861, %v5939
        %v10904 = vmul.f32 %v10862, %v5944
        %v10905 = vmul.f32 %v10863, %v5949
        %v10906 = vmul.f32 %v10864, %v5954
        %v10907 = vmul.f32 %v10865, %v10865
        %v10908 = vmul.f32 %v10866, %v10866
        %v10909 = vmul.f32 %v10867, %v10867
        %v10910 = vmul.f32 %v10868, %v10868
        %v10911 = vmul.f32 %v10869, %v10869
        %v10912 = vmul.f32 %v10870, %v10870
        %v10913 = vmul.f32 %v10871, %v10871
        %v10914 = vmul.f32 %v10872, %v10872
        %v10915 = vmul.f32 %v10873, %v10873
        %v10916 = vmul.f32 %v10874, %v10874
        %v10917 = vmul.f32 %v10875, %v10875
        %v10918 = vmul.f32 %v10876, %v10876
        %v10919 = vmul.f32 %v10877, %v10877
        %v10920 = vmul.f32 %v10878, %v10878
        %v10921 = vmul.f32 %v10879, %v10879
        %v10922 = vmul.f32 %v10880, %v10880
        %v10923 = vmul.f32 %v10881, %v10881
        %v10924 = vmul.f32 %v10882, %v10882
        %v10925 = vmul.f32 %v10883, %v10883
        %v10926 = vmul.f32 %v10884, %v10884
        %v10927 = vmul.f32 %v10885, %v10885
        %v10928 = vmul.f32 %v10886, %v10886
        %v10929 = vmul.f32 %v10887, %v10887
        %v10930 = vmul.f32 %v10888, %v10888
        %v10931 = vmul.f32 %v10889, %v10889
        %v10932 = vmul.f32 %v10890, %v10890
        %v10933 = vmul.f32 %v10891, %v10891
        %v10934 = vmul.f32 %v10892, %v10892
        %v10935 = vmul.f32 %v10893, %v10893
        %v10936 = vmul.f32 %v10894, %v10894
        %v10937 = vmul.f32 %v10895, %v10895
        %v10938 = vmul.f32 %v10896, %v10896
        %v10939 = vmul.f32 %v10897, %v10897
        %v10940 = vmul.f32 %v10898, %v10898
        %v10941 = vmul.f32 %v10899, %v10899
        %v10942 = vmul.f32 %v10900, %v10900
        %v10943 = vmul.f32 %v10901, %v10901
        %v10944 = vmul.f32 %v10902, %v10902
        %v10945 = vmul.f32 %v10903, %v10903
        %v10946 = vmul.f32 %v10904, %v10904
        %v10947 = vmul.f32 %v10905, %v10905
        %v10948 = vmul.f32 %v10906, %v10906
        %v10949 = vsel %vm877, %v10907, 0.0
        %v10950 = vsel %vm877, %v10908, 0.0
        %v10951 = vadd.f32 %v10949, %v10950
        %v10952 = vsel %vm877, %v10909, 0.0
        %v10953 = vadd.f32 %v10951, %v10952
        %v10954 = vsel %vm877, %v10910, 0.0
        %v10955 = vadd.f32 %v10953, %v10954
        %v10956 = vsel %vm877, %v10911, 0.0
        %v10957 = vadd.f32 %v10955, %v10956
        %v10958 = vsel %vm877, %v10912, 0.0
        %v10959 = vadd.f32 %v10957, %v10958
        %v10960 = vsel %vm877, %v10913, 0.0
        %v10961 = vadd.f32 %v10959, %v10960
        %v10962 = vsel %vm877, %v10914, 0.0
        %v10963 = vadd.f32 %v10961, %v10962
        %v10964 = vsel %vm877, %v10915, 0.0
        %v10965 = vadd.f32 %v10963, %v10964
        %v10966 = vsel %vm877, %v10916, 0.0
        %v10967 = vadd.f32 %v10965, %v10966
        %v10968 = vsel %vm877, %v10917, 0.0
        %v10969 = vadd.f32 %v10967, %v10968
        %v10970 = vsel %vm877, %v10918, 0.0
        %v10971 = vadd.f32 %v10969, %v10970
        %v10972 = vsel %vm877, %v10919, 0.0
        %v10973 = vadd.f32 %v10971, %v10972
        %v10974 = vsel %vm877, %v10920, 0.0
        %v10975 = vadd.f32 %v10973, %v10974
        %v10976 = vsel %vm877, %v10921, 0.0
        %v10977 = vadd.f32 %v10975, %v10976
        %v10978 = vsel %vm877, %v10922, 0.0
        %v10979 = vadd.f32 %v10977, %v10978
        %v10980 = vsel %vm877, %v10923, 0.0
        %v10981 = vadd.f32 %v10979, %v10980
        %v10982 = vsel %vm877, %v10924, 0.0
        %v10983 = vadd.f32 %v10981, %v10982
        %v10984 = vsel %vm877, %v10925, 0.0
        %v10985 = vadd.f32 %v10983, %v10984
        %v10986 = vsel %vm877, %v10926, 0.0
        %v10987 = vadd.f32 %v10985, %v10986
        %v10988 = vsel %vm877, %v10927, 0.0
        %v10989 = vadd.f32 %v10987, %v10988
        %v10990 = vsel %vm877, %v10928, 0.0
        %v10991 = vadd.f32 %v10989, %v10990
        %v10992 = vsel %vm877, %v10929, 0.0
        %v10993 = vadd.f32 %v10991, %v10992
        %v10994 = vsel %vm877, %v10930, 0.0
        %v10995 = vadd.f32 %v10993, %v10994
        %v10996 = vsel %vm877, %v10931, 0.0
        %v10997 = vadd.f32 %v10995, %v10996
        %v10998 = vsel %vm877, %v10932, 0.0
        %v10999 = vadd.f32 %v10997, %v10998
        %v11000 = vsel %vm877, %v10933, 0.0
        %v11001 = vadd.f32 %v10999, %v11000
        %v11002 = vsel %vm877, %v10934, 0.0
        %v11003 = vadd.f32 %v11001, %v11002
        %v11004 = vsel %vm877, %v10935, 0.0
        %v11005 = vadd.f32 %v11003, %v11004
        %v11006 = vsel %vm877, %v10936, 0.0
        %v11007 = vadd.f32 %v11005, %v11006
        %v11008 = vsel %vm877, %v10937, 0.0
        %v11009 = vadd.f32 %v11007, %v11008
        %v11010 = vsel %vm877, %v10938, 0.0
        %v11011 = vadd.f32 %v11009, %v11010
        %v11012 = vsel %vm877, %v10939, 0.0
        %v11013 = vadd.f32 %v11011, %v11012
        %v11014 = vsel %vm877, %v10940, 0.0
        %v11015 = vadd.f32 %v11013, %v11014
        %v11016 = vsel %vm877, %v10941, 0.0
        %v11017 = vadd.f32 %v11015, %v11016
        %v11018 = vsel %vm877, %v10942, 0.0
        %v11019 = vadd.f32 %v11017, %v11018
        %v11020 = vsel %vm877, %v10943, 0.0
        %v11021 = vadd.f32 %v11019, %v11020
        %v11022 = vsel %vm877, %v10944, 0.0
        %v11023 = vadd.f32 %v11021, %v11022
        %v11024 = vsel %vm877, %v10945, 0.0
        %v11025 = vadd.f32 %v11023, %v11024
        %v11026 = vsel %vm877, %v10946, 0.0
        %v11027 = vadd.f32 %v11025, %v11026
        %v11028 = vsel %vm877, %v10947, 0.0
        %v11029 = vadd.f32 %v11027, %v11028
        %v11030 = vsel %vm877, %v10948, 0.0
        %v11031 = vadd.f32 %v11029, %v11030
        %11032 = vadd.xlane.f32.xlu0 %v11031
        %v11033 = vpop.xlane.xlu0 %11032
        %v11034 = vrot.slane %v11033, 4
        %v11035 = vadd.f32 %v11033, %v11034
        %v11036 = vrot.slane %v11035, 2
        %v11037 = vadd.f32 %v11035, %v11036
        %v11038 = vrot.slane %v11037, 1
        %v11039 = vadd.f32 %v11037, %v11038
        %s11040 = vtos %v11039
        %v11041 = vstv %s11040
        %vm11042 = vcmask 0
        %11043 = vst.msk [vmem:[%s376] sm:$0x1] %vm11042, %v11041
        %p11044 = scmp.lt.s32.totalorder %s21, 1
        %s11045 = scalar_select %p11044, %s21, 1
        %s11046 = scalar_lea.vmem %s9, %s11045
        // Predicated region
        $region61: #{gaussian_diffusion_forward.1} parent=55 // pred_check
          %p11047 = pneg %p243
        $region62: #{gaussian_diffusion_forward.1} parent=55 // pred_check_branch
          %11049 = sbr.rel (%p11047) target = $region64
        $region63: #{gaussian_diffusion_forward.1} parent=55 // pred_region
          _
        $region64: #{gaussian_diffusion_forward.1} parent=55 // pred_fallthru
          _
      $region56: #{gaussian_diffusion_forward.1} parent=5 // pred_fallthru
        _
      %p11050 = scmp.le.s32.totalorder 2, %s16
      // Predicated region
      $region65: #{gaussian_diffusion_forward.1} parent=5 // pred_check
        %p11051 = pneg %p11050
      $region66: #{gaussian_diffusion_forward.1} parent=5 // pred_check_branch
        %11053 = sbr.rel (%p11051) target = $region68
      $region67: #{gaussian_diffusion_forward.1} parent=5 // pred_region
        %s11054 = ssub.s32 %s16, 2
        // Predicated region
        $region69: #{gaussian_diffusion_forward.1} parent=67 // pred_check
          %p11055 = pneg %p249
        $region70: #{gaussian_diffusion_forward.1} parent=67 // pred_check_branch
          %11057 = sbr.rel (%p11055) target = $region72
        $region71: #{gaussian_diffusion_forward.1} parent=67 // pred_region
          %p11058 = scmp.lt.s32.totalorder %s22, 1
          %s11059 = scalar_select %p11058, %s22, 1
          %s11060 = scalar_lea.vmem %s9, %s11059
        $region72: #{gaussian_diffusion_forward.1} parent=67 // pred_fallthru
          _
      $region68: #{gaussian_diffusion_forward.1} parent=5 // pred_fallthru
        _
    $region6: #{gaussian_diffusion_forward.1} parent=1 // loop_footer
      %s20 = sadd.s32 1, %s16
    $region7: #{gaussian_diffusion_forward.1} parent=1 // loop_footer_branch
      %15 = sbr.rel target = $region3
    $region8: #{gaussian_diffusion_forward.1} parent=1 // loop_exit
      _
    %11061 = vsyncpa [#allocation4], 1
    %s11062 = scalar_lea.sflag [#allocation4], 1
    %11063 = vsyncpa %s11062, 1

</llo_original>
